<compile_context>
chip_gen: v7x
topology: tpu7x:2x2x1
jax: 0.10.0
libtpu: 0.0.40
codegen_flags: <defaults>
</compile_context>

<pallas_src>
import jax
import jax.numpy as jnp
from jax.experimental import pallas as pl
from jax.experimental.pallas import tpu as pltpu

NEG_SLOPE = 0.01      # nn.LeakyReLU default
IN_EPS = 1e-5         # nn.InstanceNorm2d default


def _round_up(x, m):
    return (x + m - 1) // m * m


# ---------------------------------------------------------------- kernel body

def _instance_norm(xb, hw):
    """xb: (B, HW, C) f32.  Per-(sample, channel) normalization over the spatial
    axis, biased variance, no affine.  Two-pass form for better numerics."""
    inv_hw = 1.0 / float(hw)
    mean = jnp.sum(xb, axis=1, keepdims=True) * inv_hw
    xc = xb - mean
    var = jnp.sum(xc * xc, axis=1, keepdims=True) * inv_hw
    return xc * jax.lax.rsqrt(var + IN_EPS)


def _leaky_relu(x):
    return jnp.maximum(x, NEG_SLOPE * x)


def _conv3x3_taps(pad_ref, c_in, w_ref, b, h, w):
    """3x3 / stride 1 / pad 1 conv as 9 accumulated matmuls (K = c_in each),
    instead of a materialized (b*h*w, 9*c_in) im2col slab.
    pad_ref: (b, h+2, Wp, Cmax) bf16 halo scratch (zero border, interior = input).
    w_ref:   (9, c_in, c_out) bf16 taps.  Returns (b*h*w, c_out) f32."""
    hw = h * w
    acc = None
    for dy in range(3):
        for dx in range(3):
            tap = pad_ref[:, dy:dy + h, dx:dx + w, :c_in]        # (b,h,w,c_in) bf16
            part = jnp.dot(tap.reshape(b * hw, c_in), w_ref[dy * 3 + dx],
                           preferred_element_type=jnp.float32)
            acc = part if acc is None else acc + part
    return acc


def _make_resblock_kernel(b_blk, H, W, Cin, Cout, Wp):
    HW = H * W
    Cm = max(Cin, Cout)

    def kernel(x_ref, w1_ref, w2_ref, w3_ref, o_ref, pad_ref):
        # x_ref:   (b_blk, H*W, Cin)   bf16, channel-last slab (real Cin, no pad)
        # w1_ref:  (9, Cin, Cout)      bf16 conv1 taps
        # w2_ref:  (9, Cout, Cout)     bf16 conv2 taps
        # w3_ref:  (Cin, Cout)         bf16 1x1 shortcut weight
        # o_ref:   (b_blk, H*W, Cout)  output (real Cout, no pad)
        # pad_ref: VMEM (b_blk, H+2, Wp, Cm) bf16 halo scratch
        #
        # Zero only the 1-pixel halo border strips (unconditional each step:
        # megacore-safe; the interior is fully rewritten before every read).
        pad_ref[:, 0:1, :, :] = jnp.zeros((b_blk, 1, Wp, Cm), jnp.bfloat16)
        pad_ref[:, H + 1:H + 2, :, :] = jnp.zeros((b_blk, 1, Wp, Cm), jnp.bfloat16)
        pad_ref[:, :, 0:1, :] = jnp.zeros((b_blk, H + 2, 1, Cm), jnp.bfloat16)
        pad_ref[:, :, W + 1:W + 2, :] = jnp.zeros((b_blk, H + 2, 1, Cm), jnp.bfloat16)

        x_bf = x_ref[...]                                        # (b, HW, Cin) bf16

        # main branch: IN1 -> LeakyReLU -> conv1 (9 accumulated tap matmuls)
        h = _leaky_relu(_instance_norm(x_bf.astype(jnp.float32), HW))
        pad_ref[:, 1:H + 1, 1:W + 1, :Cin] = (
            h.reshape(b_blk, H, W, Cin).astype(jnp.bfloat16))
        h = _conv3x3_taps(pad_ref, Cin, w1_ref, b_blk, H, W)     # (b*HW, Cout) f32

        # IN2 -> LeakyReLU -> conv2
        h = _leaky_relu(_instance_norm(h.reshape(b_blk, HW, Cout), HW))
        pad_ref[:, 1:H + 1, 1:W + 1, :Cout] = (
            h.reshape(b_blk, H, W, Cout).astype(jnp.bfloat16))
        h = _conv3x3_taps(pad_ref, Cout, w2_ref, b_blk, H, W)    # (b*HW, Cout) f32

        # shortcut computed last, straight from the resident x_ref
        # (no (b*HW, Cout) f32 value live across the two convs)
        res = jnp.dot(x_bf.reshape(b_blk * HW, Cin), w3_ref[...],
                      preferred_element_type=jnp.float32)

        o_ref[...] = (h + res).reshape(b_blk, HW, Cout).astype(o_ref.dtype)

    return kernel


# ---------------------------------------------------------------- wrapper

def _pick_batch_block(n, per_sample_bytes, vmem_budget_bytes):
    """Largest divisor of n whose block fits the VMEM budget while keeping at
    least min(n, 4) grid steps (DMA/compute overlap + megacore sharding)."""
    target_steps = min(n, 4)
    best = 1
    for b in range(1, n + 1):
        if n % b:
            continue
        if b * per_sample_bytes > vmem_budget_bytes:
            break
        if n // b >= target_steps:
            best = b
    return best


def from_torch_oihw(w_oihw):
    """PyTorch conv weights are stored (Cout, Cin, kH, kW); this kernel expects
    (kH, kW, Cin, Cout)."""
    return jnp.transpose(w_oihw, (2, 3, 1, 0))


def resblock_forward(x_nchw, w1, w2, w3, out_dtype=jnp.float32):
    """x_nchw: (N, Cin, H, W).  w1: (3,3,Cin,Cout), w2: (3,3,Cout,Cout),
    w3: (Cin, Cout) — all already spectral-normalized.
    Returns (N, Cout, H, W) in out_dtype (f32 default to match the module;
    pass jnp.bfloat16 to halve the output HBM bytes when chaining blocks)."""
    N, Cin, H, W = x_nchw.shape
    Cout = w3.shape[-1]
    HW = H * W
    Cm = max(Cin, Cout)
    Wp = _round_up(W + 2, 8)          # 8-aligned sublane axis for the halo scratch

    # Activations: NCHW -> channel-last (N, H*W, Cin) bf16 slab at the REAL
    # channel count (no pad-to-128 in HBM).
    # TODO(synk): keep activations channel-last across the network to drop this
    # transpose (a pure layout pass over HBM).
    x_slab = (jnp.transpose(x_nchw, (0, 2, 3, 1))
              .astype(jnp.bfloat16).reshape(N, HW, Cin))

    # Weights at real sizes, bf16 (tiny; grid-invariant).
    w1m = w1.reshape(9, Cin, Cout).astype(jnp.bfloat16)
    w2m = w2.reshape(9, Cout, Cout).astype(jnp.bfloat16)
    w3m = w3.astype(jnp.bfloat16)

    # Budget-driven batch blocking (keep >= 4 grid steps when N allows).
    out_bytes = jnp.dtype(out_dtype).itemsize
    per_sample = (2 * HW * Cin * 2              # x block, double-buffered, bf16
                  + 2 * HW * Cout * out_bytes   # out block, double-buffered
                  + (H + 2) * Wp * Cm * 2       # halo scratch, bf16
                  + 6 * HW * Cm * 4)            # f32 intermediates headroom
    b_blk = _pick_batch_block(N, per_sample, vmem_budget_bytes=24 << 20)
    grid_n = N // b_blk

    kernel = _make_resblock_kernel(b_blk, H, W, Cin, Cout, Wp)

    out = pl.pallas_call(
        kernel,
        out_shape=jax.ShapeDtypeStruct((N, HW, Cout), out_dtype),
        grid_spec=pltpu.PrefetchScalarGridSpec(
            num_scalar_prefetch=0,
            grid=(grid_n,),
            in_specs=[
                pl.BlockSpec((b_blk, HW, Cin), lambda n: (n, 0, 0)),
                pl.BlockSpec((9, Cin, Cout), lambda n: (0, 0, 0)),
                pl.BlockSpec((9, Cout, Cout), lambda n: (0, 0, 0)),
                pl.BlockSpec((Cin, Cout), lambda n: (0, 0)),
            ],
            out_specs=pl.BlockSpec((b_blk, HW, Cout), lambda n: (n, 0, 0)),
            scratch_shapes=[pltpu.VMEM((b_blk, H + 2, Wp, Cm), jnp.bfloat16)],
        ),
        compiler_params=pltpu.CompilerParams(
            dimension_semantics=("parallel",),
            # Explicit scoped-VMEM budget: above the 32 MiB default, well under
            # the 64 MiB physical ceiling on v7x (128 MiB on v5e/v6e).
            vmem_limit_bytes=48 * 1024 * 1024),
    )(x_slab, w1m, w2m, w3m)

    out = out.reshape(N, H, W, Cout)
    return jnp.transpose(out, (0, 3, 1, 2))


# -------------------------------------------------- spectral norm (param glue)

def spectral_normalize(w_kkio, n_iter=10):
    """Deterministic spectral normalization of a conv weight stored as
    (k, k, Cin, Cout), matching PyTorch's flattening (Cout, Cin*k*k).
    NOTE: PyTorch keeps persistent u/v buffers (1 iteration per forward), so a
    trained checkpoint's sigma will not match bit-for-bit."""
    k1, k2, cin, cout = w_kkio.shape
    wmat = jnp.transpose(w_kkio, (3, 2, 0, 1)).reshape(cout, -1)
    u = jnp.ones((cout,), jnp.float32) / jnp.sqrt(jnp.float32(cout))
    v = None
    for _ in range(n_iter):
        v = wmat.T @ u
        v = v / (jnp.linalg.norm(v) + 1e-12)
        u = wmat @ v
        u = u / (jnp.linalg.norm(u) + 1e-12)
    sigma = u @ (wmat @ v)
    return w_kkio / sigma


# ---------------------------------------------------------------- reference

def resblock_reference(x, w1, w2, w3):
    """Pure-JAX f32 reference of the PyTorch forward (NCHW in / NCHW out)."""
    def inorm(t):
        mean = jnp.mean(t, axis=(2, 3), keepdims=True)
        var = jnp.var(t, axis=(2, 3), keepdims=True)      # biased, like PyTorch
        return (t - mean) / jnp.sqrt(var + IN_EPS)

    def lrelu(t):
        return jnp.where(t >= 0, t, NEG_SLOPE * t)

    def conv(t, w_hwio, padding):
        return jax.lax.conv_general_dilated(
            t, w_hwio, window_strides=(1, 1), padding=padding,
            dimension_numbers=("NCHW", "HWIO", "NCHW"),
            precision=jax.lax.Precision.HIGHEST)

    res = conv(x, w3[None, None], "VALID")
    out = conv(lrelu(inorm(x)), w1, "SAME")
    out = conv(lrelu(inorm(out)), w2, "SAME")
    return out + res


# ---------------------------------------------------------------- main

if __name__ == "__main__":
    key = jax.random.PRNGKey(0)
    N, Cin, Cout, H, W = 2, 4, 8, 16, 16

    kx, k1, k2, k3 = jax.random.split(key, 4)
    x = jax.random.normal(kx, (N, Cin, H, W), jnp.float32)

    # Deterministic synthetic parameters (same shapes as the nn.Module convs,
    # already in (kH, kW, Cin, Cout) order — use from_torch_oihw for real
    # PyTorch OIHW weights).
    w1 = 0.1 * jax.random.normal(k1, (3, 3, Cin, Cout), jnp.float32)   # conv1
    w2 = 0.1 * jax.random.normal(k2, (3, 3, Cout, Cout), jnp.float32)  # conv2
    w3 = 0.1 * jax.random.normal(k3, (1, 1, Cin, Cout), jnp.float32)   # conv3 (1x1)

    w1 = spectral_normalize(w1)
    w2 = spectral_normalize(w2)
    w3 = spectral_normalize(w3).reshape(Cin, Cout)

    out = resblock_forward(x, w1, w2, w3)
    jax.block_until_ready(out)
    assert out.shape == (N, Cout, H, W), out.shape

    # Correctness check against a pure-JAX reference fed the same bf16-rounded
    # inputs/weights the kernel consumes (remaining deltas: in-kernel bf16
    # activation casts + accumulation order).
    q = lambda a: a.astype(jnp.bfloat16).astype(jnp.float32)
    ref = resblock_reference(q(x), q(w1), q(w2), q(w3))
    err = float(jnp.max(jnp.abs(out - ref)))
    assert err < 7e-2, f"max abs err vs reference = {err}"

    print("KERNEL_OK")
</pallas_src>

<mosaic_0001>
module attributes {stable_mosaic.version = 11 : i64} {
  func.func @kernel(%arg0: i32, %arg1: memref<1x256x4xbf16, #tpu.memory_space<vmem>>, %arg2: memref<9x4x8xbf16, #tpu.memory_space<vmem>>, %arg3: memref<9x8x8xbf16, #tpu.memory_space<vmem>>, %arg4: memref<4x8xbf16, #tpu.memory_space<vmem>>, %arg5: memref<1x256x8xf32, #tpu.memory_space<vmem>>, %arg6: memref<1x18x24x8xbf16, #tpu.memory_space<vmem>>) attributes {dimension_semantics = [#tpu.dimension_semantics<parallel>], iteration_bounds = array<i64: 2>, scalar_prefetch = 0 : i64, scratch_operands = 1 : i64, tpu.core_type = #tpu.core_type<tc>, window_params = [{transform_indices = @transform_0, window_bounds = array<i64: 1, 256, 4>}, {pipeline_mode = #tpu.pipeline_mode<synchronous>, transform_indices = @transform_1, window_bounds = array<i64: 9, 4, 8>}, {pipeline_mode = #tpu.pipeline_mode<synchronous>, transform_indices = @transform_2, window_bounds = array<i64: 9, 8, 8>}, {pipeline_mode = #tpu.pipeline_mode<synchronous>, transform_indices = @transform_3, window_bounds = array<i64: 4, 8>}, {transform_indices = @transform_4, window_bounds = array<i64: 1, 256, 8>}]} {
    %cst = arith.constant 0.000000e+00 : bf16
    %0 = vector.broadcast %cst : bf16 to vector<1x1x24x8xbf16>
    %c0 = arith.constant 0 : index
    %c0_0 = arith.constant 0 : index
    %c0_1 = arith.constant 0 : index
    %c0_2 = arith.constant 0 : index
    %1 = vector.load %arg6[%c0, %c0_0, %c0_1, %c0_2] : memref<1x18x24x8xbf16, #tpu.memory_space<vmem>>, vector<1x1x24x8xbf16>
    tpu.vector_store %arg6[%c0, %c0_0, %c0_1, %c0_2], %0 {strides = array<i32>} : memref<1x18x24x8xbf16, #tpu.memory_space<vmem>>, vector<1x1x24x8xbf16>,
    %cst_3 = arith.constant 0.000000e+00 : bf16
    %2 = vector.broadcast %cst_3 : bf16 to vector<1x1x24x8xbf16>
    %c0_4 = arith.constant 0 : index
    %c17 = arith.constant 17 : index
    %c0_5 = arith.constant 0 : index
    %c0_6 = arith.constant 0 : index
    %3 = vector.load %arg6[%c0_4, %c17, %c0_5, %c0_6] : memref<1x18x24x8xbf16, #tpu.memory_space<vmem>>, vector<1x1x24x8xbf16>
    tpu.vector_store %arg6[%c0_4, %c17, %c0_5, %c0_6], %2 {strides = array<i32>} : memref<1x18x24x8xbf16, #tpu.memory_space<vmem>>, vector<1x1x24x8xbf16>,
    %cst_7 = arith.constant 0.000000e+00 : bf16
    %4 = vector.broadcast %cst_7 : bf16 to vector<1x18x1x8xbf16>
    %c0_8 = arith.constant 0 : index
    %c0_9 = arith.constant 0 : index
    %c0_10 = arith.constant 0 : index
    %c0_11 = arith.constant 0 : index
    %5 = vector.load %arg6[%c0_8, %c0_9, %c0_10, %c0_11] : memref<1x18x24x8xbf16, #tpu.memory_space<vmem>>, vector<1x18x1x8xbf16>
    tpu.vector_store %arg6[%c0_8, %c0_9, %c0_10, %c0_11], %4 {strides = array<i32>} : memref<1x18x24x8xbf16, #tpu.memory_space<vmem>>, vector<1x18x1x8xbf16>,
    %cst_12 = arith.constant 0.000000e+00 : bf16
    %6 = vector.broadcast %cst_12 : bf16 to vector<1x18x1x8xbf16>
    %c0_13 = arith.constant 0 : index
    %c0_14 = arith.constant 0 : index
    %c17_15 = arith.constant 17 : index
    %c0_16 = arith.constant 0 : index
    %7 = vector.load %arg6[%c0_13, %c0_14, %c17_15, %c0_16] : memref<1x18x24x8xbf16, #tpu.memory_space<vmem>>, vector<1x18x1x8xbf16>
    tpu.vector_store %arg6[%c0_13, %c0_14, %c17_15, %c0_16], %6 {strides = array<i32>} : memref<1x18x24x8xbf16, #tpu.memory_space<vmem>>, vector<1x18x1x8xbf16>,
    %c0_17 = arith.constant 0 : index
    %c0_18 = arith.constant 0 : index
    %c0_19 = arith.constant 0 : index
    %8 = vector.load %arg1[%c0_17, %c0_18, %c0_19] : memref<1x256x4xbf16, #tpu.memory_space<vmem>>, vector<1x256x4xbf16>
    %9 = arith.extf %8 : vector<1x256x4xbf16> to vector<1x256x4xf32>
    %cst_20 = arith.constant dense<0.000000e+00> : vector<1x4xf32>
    %10 = vector.multi_reduction <add>, %9, %cst_20 [1] : vector<1x256x4xf32> to vector<1x4xf32>
    %11 = vector.shape_cast %10 : vector<1x4xf32> to vector<1x1x4xf32>
    %cst_21 = arith.constant 3.906250e-03 : f32
    %12 = vector.broadcast %cst_21 : f32 to vector<1x1x4xf32>
    %13 = arith.mulf %11, %12 : vector<1x1x4xf32>
    %14 = vector.broadcast %13 : vector<1x1x4xf32> to vector<1x256x4xf32>
    %15 = arith.subf %9, %14 : vector<1x256x4xf32>
    %16 = arith.mulf %15, %15 : vector<1x256x4xf32>
    %cst_22 = arith.constant dense<0.000000e+00> : vector<1x4xf32>
    %17 = vector.multi_reduction <add>, %16, %cst_22 [1] : vector<1x256x4xf32> to vector<1x4xf32>
    %18 = vector.shape_cast %17 : vector<1x4xf32> to vector<1x1x4xf32>
    %cst_23 = arith.constant 3.906250e-03 : f32
    %19 = vector.broadcast %cst_23 : f32 to vector<1x1x4xf32>
    %20 = arith.mulf %18, %19 : vector<1x1x4xf32>
    %cst_24 = arith.constant 9.99999974E-6 : f32
    %21 = vector.broadcast %cst_24 : f32 to vector<1x1x4xf32>
    %22 = arith.addf %20, %21 : vector<1x1x4xf32>
    %23 = math.rsqrt %22 : vector<1x1x4xf32>
    %24 = vector.broadcast %23 : vector<1x1x4xf32> to vector<1x256x4xf32>
    %25 = arith.mulf %15, %24 : vector<1x256x4xf32>
    %cst_25 = arith.constant 0.00999999977 : f32
    %26 = vector.broadcast %cst_25 : f32 to vector<1x256x4xf32>
    %27 = arith.mulf %26, %25 : vector<1x256x4xf32>
    %28 = arith.maximumf %25, %27 : vector<1x256x4xf32>
    %29 = vector.shape_cast %28 : vector<1x256x4xf32> to vector<1x16x16x4xf32>
    %30 = arith.truncf %29 : vector<1x16x16x4xf32> to vector<1x16x16x4xbf16>
    %c0_26 = arith.constant 0 : index
    %c1 = arith.constant 1 : index
    %c1_27 = arith.constant 1 : index
    %c0_28 = arith.constant 0 : index
    %31 = vector.load %arg6[%c0_26, %c1, %c1_27, %c0_28] : memref<1x18x24x8xbf16, #tpu.memory_space<vmem>>, vector<1x16x16x4xbf16>
    tpu.vector_store %arg6[%c0_26, %c1, %c1_27, %c0_28], %30 {strides = array<i32>} : memref<1x18x24x8xbf16, #tpu.memory_space<vmem>>, vector<1x16x16x4xbf16>,
    %c0_29 = arith.constant 0 : index
    %c0_30 = arith.constant 0 : index
    %c0_31 = arith.constant 0 : index
    %c0_32 = arith.constant 0 : index
    %32 = vector.load %arg6[%c0_29, %c0_30, %c0_31, %c0_32] : memref<1x18x24x8xbf16, #tpu.memory_space<vmem>>, vector<1x16x16x4xbf16>
    %33 = vector.shape_cast %32 : vector<1x16x16x4xbf16> to vector<256x4xbf16>
    %c0_33 = arith.constant 0 : index
    %c0_34 = arith.constant 0 : index
    %c0_35 = arith.constant 0 : index
    %34 = vector.load %arg2[%c0_33, %c0_34, %c0_35] : memref<9x4x8xbf16, #tpu.memory_space<vmem>>, vector<1x4x8xbf16>
    %35 = vector.shape_cast %34 : vector<1x4x8xbf16> to vector<4x8xbf16>
    %cst_36 = arith.constant dense<0.000000e+00> : vector<256x8xf32>
    %36 = tpu.matmul %33, %35, %cst_36 {dimension_numbers = #tpu.dot_dimension_numbers<[1], [0], [0], [1], [0, 0, 1, 1], [], []>} : vector<256x4xbf16>, vector<4x8xbf16>, vector<256x8xf32> -> vector<256x8xf32>
    %c0_37 = arith.constant 0 : index
    %c0_38 = arith.constant 0 : index
    %c1_39 = arith.constant 1 : index
    %c0_40 = arith.constant 0 : index
    %37 = vector.load %arg6[%c0_37, %c0_38, %c1_39, %c0_40] : memref<1x18x24x8xbf16, #tpu.memory_space<vmem>>, vector<1x16x16x4xbf16>
    %38 = vector.shape_cast %37 : vector<1x16x16x4xbf16> to vector<256x4xbf16>
    %c1_41 = arith.constant 1 : index
    %c0_42 = arith.constant 0 : index
    %c0_43 = arith.constant 0 : index
    %39 = vector.load %arg2[%c1_41, %c0_42, %c0_43] : memref<9x4x8xbf16, #tpu.memory_space<vmem>>, vector<1x4x8xbf16>
    %40 = vector.shape_cast %39 : vector<1x4x8xbf16> to vector<4x8xbf16>
    %cst_44 = arith.constant dense<0.000000e+00> : vector<256x8xf32>
    %41 = tpu.matmul %38, %40, %cst_44 {dimension_numbers = #tpu.dot_dimension_numbers<[1], [0], [0], [1], [0, 0, 1, 1], [], []>} : vector<256x4xbf16>, vector<4x8xbf16>, vector<256x8xf32> -> vector<256x8xf32>
    %42 = arith.addf %36, %41 : vector<256x8xf32>
    %c0_45 = arith.constant 0 : index
    %c0_46 = arith.constant 0 : index
    %c2 = arith.constant 2 : index
    %c0_47 = arith.constant 0 : index
    %43 = vector.load %arg6[%c0_45, %c0_46, %c2, %c0_47] : memref<1x18x24x8xbf16, #tpu.memory_space<vmem>>, vector<1x16x16x4xbf16>
    %44 = vector.shape_cast %43 : vector<1x16x16x4xbf16> to vector<256x4xbf16>
    %c2_48 = arith.constant 2 : index
    %c0_49 = arith.constant 0 : index
    %c0_50 = arith.constant 0 : index
    %45 = vector.load %arg2[%c2_48, %c0_49, %c0_50] : memref<9x4x8xbf16, #tpu.memory_space<vmem>>, vector<1x4x8xbf16>
    %46 = vector.shape_cast %45 : vector<1x4x8xbf16> to vector<4x8xbf16>
    %cst_51 = arith.constant dense<0.000000e+00> : vector<256x8xf32>
    %47 = tpu.matmul %44, %46, %cst_51 {dimension_numbers = #tpu.dot_dimension_numbers<[1], [0], [0], [1], [0, 0, 1, 1], [], []>} : vector<256x4xbf16>, vector<4x8xbf16>, vector<256x8xf32> -> vector<256x8xf32>
    %48 = arith.addf %42, %47 : vector<256x8xf32>
    %c0_52 = arith.constant 0 : index
    %c1_53 = arith.constant 1 : index
    %c0_54 = arith.constant 0 : index
    %c0_55 = arith.constant 0 : index
    %49 = vector.load %arg6[%c0_52, %c1_53, %c0_54, %c0_55] : memref<1x18x24x8xbf16, #tpu.memory_space<vmem>>, vector<1x16x16x4xbf16>
    %50 = vector.shape_cast %49 : vector<1x16x16x4xbf16> to vector<256x4xbf16>
    %c3 = arith.constant 3 : index
    %c0_56 = arith.constant 0 : index
    %c0_57 = arith.constant 0 : index
    %51 = vector.load %arg2[%c3, %c0_56, %c0_57] : memref<9x4x8xbf16, #tpu.memory_space<vmem>>, vector<1x4x8xbf16>
    %52 = vector.shape_cast %51 : vector<1x4x8xbf16> to vector<4x8xbf16>
    %cst_58 = arith.constant dense<0.000000e+00> : vector<256x8xf32>
    %53 = tpu.matmul %50, %52, %cst_58 {dimension_numbers = #tpu.dot_dimension_numbers<[1], [0], [0], [1], [0, 0, 1, 1], [], []>} : vector<256x4xbf16>, vector<4x8xbf16>, vector<256x8xf32> -> vector<256x8xf32>
    %54 = arith.addf %48, %53 : vector<256x8xf32>
    %c0_59 = arith.constant 0 : index
    %c1_60 = arith.constant 1 : index
    %c1_61 = arith.constant 1 : index
    %c0_62 = arith.constant 0 : index
    %55 = vector.load %arg6[%c0_59, %c1_60, %c1_61, %c0_62] : memref<1x18x24x8xbf16, #tpu.memory_space<vmem>>, vector<1x16x16x4xbf16>
    %56 = vector.shape_cast %55 : vector<1x16x16x4xbf16> to vector<256x4xbf16>
    %c4 = arith.constant 4 : index
    %c0_63 = arith.constant 0 : index
    %c0_64 = arith.constant 0 : index
    %57 = vector.load %arg2[%c4, %c0_63, %c0_64] : memref<9x4x8xbf16, #tpu.memory_space<vmem>>, vector<1x4x8xbf16>
    %58 = vector.shape_cast %57 : vector<1x4x8xbf16> to vector<4x8xbf16>
    %cst_65 = arith.constant dense<0.000000e+00> : vector<256x8xf32>
    %59 = tpu.matmul %56, %58, %cst_65 {dimension_numbers = #tpu.dot_dimension_numbers<[1], [0], [0], [1], [0, 0, 1, 1], [], []>} : vector<256x4xbf16>, vector<4x8xbf16>, vector<256x8xf32> -> vector<256x8xf32>
    %60 = arith.addf %54, %59 : vector<256x8xf32>
    %c0_66 = arith.constant 0 : index
    %c1_67 = arith.constant 1 : index
    %c2_68 = arith.constant 2 : index
    %c0_69 = arith.constant 0 : index
    %61 = vector.load %arg6[%c0_66, %c1_67, %c2_68, %c0_69] : memref<1x18x24x8xbf16, #tpu.memory_space<vmem>>, vector<1x16x16x4xbf16>
    %62 = vector.shape_cast %61 : vector<1x16x16x4xbf16> to vector<256x4xbf16>
    %c5 = arith.constant 5 : index
    %c0_70 = arith.constant 0 : index
    %c0_71 = arith.constant 0 : index
    %63 = vector.load %arg2[%c5, %c0_70, %c0_71] : memref<9x4x8xbf16, #tpu.memory_space<vmem>>, vector<1x4x8xbf16>
    %64 = vector.shape_cast %63 : vector<1x4x8xbf16> to vector<4x8xbf16>
    %cst_72 = arith.constant dense<0.000000e+00> : vector<256x8xf32>
    %65 = tpu.matmul %62, %64, %cst_72 {dimension_numbers = #tpu.dot_dimension_numbers<[1], [0], [0], [1], [0, 0, 1, 1], [], []>} : vector<256x4xbf16>, vector<4x8xbf16>, vector<256x8xf32> -> vector<256x8xf32>
    %66 = arith.addf %60, %65 : vector<256x8xf32>
    %c0_73 = arith.constant 0 : index
    %c2_74 = arith.constant 2 : index
    %c0_75 = arith.constant 0 : index
    %c0_76 = arith.constant 0 : index
    %67 = vector.load %arg6[%c0_73, %c2_74, %c0_75, %c0_76] : memref<1x18x24x8xbf16, #tpu.memory_space<vmem>>, vector<1x16x16x4xbf16>
    %68 = vector.shape_cast %67 : vector<1x16x16x4xbf16> to vector<256x4xbf16>
    %c6 = arith.constant 6 : index
    %c0_77 = arith.constant 0 : index
    %c0_78 = arith.constant 0 : index
    %69 = vector.load %arg2[%c6, %c0_77, %c0_78] : memref<9x4x8xbf16, #tpu.memory_space<vmem>>, vector<1x4x8xbf16>
    %70 = vector.shape_cast %69 : vector<1x4x8xbf16> to vector<4x8xbf16>
    %cst_79 = arith.constant dense<0.000000e+00> : vector<256x8xf32>
    %71 = tpu.matmul %68, %70, %cst_79 {dimension_numbers = #tpu.dot_dimension_numbers<[1], [0], [0], [1], [0, 0, 1, 1], [], []>} : vector<256x4xbf16>, vector<4x8xbf16>, vector<256x8xf32> -> vector<256x8xf32>
    %72 = arith.addf %66, %71 : vector<256x8xf32>
    %c0_80 = arith.constant 0 : index
    %c2_81 = arith.constant 2 : index
    %c1_82 = arith.constant 1 : index
    %c0_83 = arith.constant 0 : index
    %73 = vector.load %arg6[%c0_80, %c2_81, %c1_82, %c0_83] : memref<1x18x24x8xbf16, #tpu.memory_space<vmem>>, vector<1x16x16x4xbf16>
    %74 = vector.shape_cast %73 : vector<1x16x16x4xbf16> to vector<256x4xbf16>
    %c7 = arith.constant 7 : index
    %c0_84 = arith.constant 0 : index
    %c0_85 = arith.constant 0 : index
    %75 = vector.load %arg2[%c7, %c0_84, %c0_85] : memref<9x4x8xbf16, #tpu.memory_space<vmem>>, vector<1x4x8xbf16>
    %76 = vector.shape_cast %75 : vector<1x4x8xbf16> to vector<4x8xbf16>
    %cst_86 = arith.constant dense<0.000000e+00> : vector<256x8xf32>
    %77 = tpu.matmul %74, %76, %cst_86 {dimension_numbers = #tpu.dot_dimension_numbers<[1], [0], [0], [1], [0, 0, 1, 1], [], []>} : vector<256x4xbf16>, vector<4x8xbf16>, vector<256x8xf32> -> vector<256x8xf32>
    %78 = arith.addf %72, %77 : vector<256x8xf32>
    %c0_87 = arith.constant 0 : index
    %c2_88 = arith.constant 2 : index
    %c2_89 = arith.constant 2 : index
    %c0_90 = arith.constant 0 : index
    %79 = vector.load %arg6[%c0_87, %c2_88, %c2_89, %c0_90] : memref<1x18x24x8xbf16, #tpu.memory_space<vmem>>, vector<1x16x16x4xbf16>
    %80 = vector.shape_cast %79 : vector<1x16x16x4xbf16> to vector<256x4xbf16>
    %c8 = arith.constant 8 : index
    %c0_91 = arith.constant 0 : index
    %c0_92 = arith.constant 0 : index
    %81 = vector.load %arg2[%c8, %c0_91, %c0_92] : memref<9x4x8xbf16, #tpu.memory_space<vmem>>, vector<1x4x8xbf16>
    %82 = vector.shape_cast %81 : vector<1x4x8xbf16> to vector<4x8xbf16>
    %cst_93 = arith.constant dense<0.000000e+00> : vector<256x8xf32>
    %83 = tpu.matmul %80, %82, %cst_93 {dimension_numbers = #tpu.dot_dimension_numbers<[1], [0], [0], [1], [0, 0, 1, 1], [], []>} : vector<256x4xbf16>, vector<4x8xbf16>, vector<256x8xf32> -> vector<256x8xf32>
    %84 = arith.addf %78, %83 : vector<256x8xf32>
    %85 = vector.shape_cast %84 : vector<256x8xf32> to vector<1x256x8xf32>
    %cst_94 = arith.constant dense<0.000000e+00> : vector<1x8xf32>
    %86 = vector.multi_reduction <add>, %85, %cst_94 [1] : vector<1x256x8xf32> to vector<1x8xf32>
    %87 = vector.shape_cast %86 : vector<1x8xf32> to vector<1x1x8xf32>
    %cst_95 = arith.constant 3.906250e-03 : f32
    %88 = vector.broadcast %cst_95 : f32 to vector<1x1x8xf32>
    %89 = arith.mulf %87, %88 : vector<1x1x8xf32>
    %90 = vector.broadcast %89 : vector<1x1x8xf32> to vector<1x256x8xf32>
    %91 = arith.subf %85, %90 : vector<1x256x8xf32>
    %92 = arith.mulf %91, %91 : vector<1x256x8xf32>
    %cst_96 = arith.constant dense<0.000000e+00> : vector<1x8xf32>
    %93 = vector.multi_reduction <add>, %92, %cst_96 [1] : vector<1x256x8xf32> to vector<1x8xf32>
    %94 = vector.shape_cast %93 : vector<1x8xf32> to vector<1x1x8xf32>
    %cst_97 = arith.constant 3.906250e-03 : f32
    %95 = vector.broadcast %cst_97 : f32 to vector<1x1x8xf32>
    %96 = arith.mulf %94, %95 : vector<1x1x8xf32>
    %cst_98 = arith.constant 9.99999974E-6 : f32
    %97 = vector.broadcast %cst_98 : f32 to vector<1x1x8xf32>
    %98 = arith.addf %96, %97 : vector<1x1x8xf32>
    %99 = math.rsqrt %98 : vector<1x1x8xf32>
    %100 = vector.broadcast %99 : vector<1x1x8xf32> to vector<1x256x8xf32>
    %101 = arith.mulf %91, %100 : vector<1x256x8xf32>
    %cst_99 = arith.constant 0.00999999977 : f32
    %102 = vector.broadcast %cst_99 : f32 to vector<1x256x8xf32>
    %103 = arith.mulf %102, %101 : vector<1x256x8xf32>
    %104 = arith.maximumf %101, %103 : vector<1x256x8xf32>
    %105 = vector.shape_cast %104 : vector<1x256x8xf32> to vector<1x16x16x8xf32>
    %106 = arith.truncf %105 : vector<1x16x16x8xf32> to vector<1x16x16x8xbf16>
    %c0_100 = arith.constant 0 : index
    %c1_101 = arith.constant 1 : index
    %c1_102 = arith.constant 1 : index
    %c0_103 = arith.constant 0 : index
    %107 = vector.load %arg6[%c0_100, %c1_101, %c1_102, %c0_103] : memref<1x18x24x8xbf16, #tpu.memory_space<vmem>>, vector<1x16x16x8xbf16>
    tpu.vector_store %arg6[%c0_100, %c1_101, %c1_102, %c0_103], %106 {strides = array<i32>} : memref<1x18x24x8xbf16, #tpu.memory_space<vmem>>, vector<1x16x16x8xbf16>,
    %c0_104 = arith.constant 0 : index
    %c0_105 = arith.constant 0 : index
    %c0_106 = arith.constant 0 : index
    %c0_107 = arith.constant 0 : index
    %108 = vector.load %arg6[%c0_104, %c0_105, %c0_106, %c0_107] : memref<1x18x24x8xbf16, #tpu.memory_space<vmem>>, vector<1x16x16x8xbf16>
    %109 = vector.shape_cast %108 : vector<1x16x16x8xbf16> to vector<256x8xbf16>
    %c0_108 = arith.constant 0 : index
    %c0_109 = arith.constant 0 : index
    %c0_110 = arith.constant 0 : index
    %110 = vector.load %arg3[%c0_108, %c0_109, %c0_110] : memref<9x8x8xbf16, #tpu.memory_space<vmem>>, vector<1x8x8xbf16>
    %111 = vector.shape_cast %110 : vector<1x8x8xbf16> to vector<8x8xbf16>
    %cst_111 = arith.constant dense<0.000000e+00> : vector<256x8xf32>
    %112 = tpu.matmul %109, %111, %cst_111 {dimension_numbers = #tpu.dot_dimension_numbers<[1], [0], [0], [1], [0, 0, 1, 1], [], []>} : vector<256x8xbf16>, vector<8x8xbf16>, vector<256x8xf32> -> vector<256x8xf32>
    %c0_112 = arith.constant 0 : index
    %c0_113 = arith.constant 0 : index
    %c1_114 = arith.constant 1 : index
    %c0_115 = arith.constant 0 : index
    %113 = vector.load %arg6[%c0_112, %c0_113, %c1_114, %c0_115] : memref<1x18x24x8xbf16, #tpu.memory_space<vmem>>, vector<1x16x16x8xbf16>
    %114 = vector.shape_cast %113 : vector<1x16x16x8xbf16> to vector<256x8xbf16>
    %c1_116 = arith.constant 1 : index
    %c0_117 = arith.constant 0 : index
    %c0_118 = arith.constant 0 : index
    %115 = vector.load %arg3[%c1_116, %c0_117, %c0_118] : memref<9x8x8xbf16, #tpu.memory_space<vmem>>, vector<1x8x8xbf16>
    %116 = vector.shape_cast %115 : vector<1x8x8xbf16> to vector<8x8xbf16>
    %cst_119 = arith.constant dense<0.000000e+00> : vector<256x8xf32>
    %117 = tpu.matmul %114, %116, %cst_119 {dimension_numbers = #tpu.dot_dimension_numbers<[1], [0], [0], [1], [0, 0, 1, 1], [], []>} : vector<256x8xbf16>, vector<8x8xbf16>, vector<256x8xf32> -> vector<256x8xf32>
    %118 = arith.addf %112, %117 : vector<256x8xf32>
    %c0_120 = arith.constant 0 : index
    %c0_121 = arith.constant 0 : index
    %c2_122 = arith.constant 2 : index
    %c0_123 = arith.constant 0 : index
    %119 = vector.load %arg6[%c0_120, %c0_121, %c2_122, %c0_123] : memref<1x18x24x8xbf16, #tpu.memory_space<vmem>>, vector<1x16x16x8xbf16>
    %120 = vector.shape_cast %119 : vector<1x16x16x8xbf16> to vector<256x8xbf16>
    %c2_124 = arith.constant 2 : index
    %c0_125 = arith.constant 0 : index
    %c0_126 = arith.constant 0 : index
    %121 = vector.load %arg3[%c2_124, %c0_125, %c0_126] : memref<9x8x8xbf16, #tpu.memory_space<vmem>>, vector<1x8x8xbf16>
    %122 = vector.shape_cast %121 : vector<1x8x8xbf16> to vector<8x8xbf16>
    %cst_127 = arith.constant dense<0.000000e+00> : vector<256x8xf32>
    %123 = tpu.matmul %120, %122, %cst_127 {dimension_numbers = #tpu.dot_dimension_numbers<[1], [0], [0], [1], [0, 0, 1, 1], [], []>} : vector<256x8xbf16>, vector<8x8xbf16>, vector<256x8xf32> -> vector<256x8xf32>
    %124 = arith.addf %118, %123 : vector<256x8xf32>
    %c0_128 = arith.constant 0 : index
    %c1_129 = arith.constant 1 : index
    %c0_130 = arith.constant 0 : index
    %c0_131 = arith.constant 0 : index
    %125 = vector.load %arg6[%c0_128, %c1_129, %c0_130, %c0_131] : memref<1x18x24x8xbf16, #tpu.memory_space<vmem>>, vector<1x16x16x8xbf16>
    %126 = vector.shape_cast %125 : vector<1x16x16x8xbf16> to vector<256x8xbf16>
    %c3_132 = arith.constant 3 : index
    %c0_133 = arith.constant 0 : index
    %c0_134 = arith.constant 0 : index
    %127 = vector.load %arg3[%c3_132, %c0_133, %c0_134] : memref<9x8x8xbf16, #tpu.memory_space<vmem>>, vector<1x8x8xbf16>
    %128 = vector.shape_cast %127 : vector<1x8x8xbf16> to vector<8x8xbf16>
    %cst_135 = arith.constant dense<0.000000e+00> : vector<256x8xf32>
    %129 = tpu.matmul %126, %128, %cst_135 {dimension_numbers = #tpu.dot_dimension_numbers<[1], [0], [0], [1], [0, 0, 1, 1], [], []>} : vector<256x8xbf16>, vector<8x8xbf16>, vector<256x8xf32> -> vector<256x8xf32>
    %130 = arith.addf %124, %129 : vector<256x8xf32>
    %c0_136 = arith.constant 0 : index
    %c1_137 = arith.constant 1 : index
    %c1_138 = arith.constant 1 : index
    %c0_139 = arith.constant 0 : index
    %131 = vector.load %arg6[%c0_136, %c1_137, %c1_138, %c0_139] : memref<1x18x24x8xbf16, #tpu.memory_space<vmem>>, vector<1x16x16x8xbf16>
    %132 = vector.shape_cast %131 : vector<1x16x16x8xbf16> to vector<256x8xbf16>
    %c4_140 = arith.constant 4 : index
    %c0_141 = arith.constant 0 : index
    %c0_142 = arith.constant 0 : index
    %133 = vector.load %arg3[%c4_140, %c0_141, %c0_142] : memref<9x8x8xbf16, #tpu.memory_space<vmem>>, vector<1x8x8xbf16>
    %134 = vector.shape_cast %133 : vector<1x8x8xbf16> to vector<8x8xbf16>
    %cst_143 = arith.constant dense<0.000000e+00> : vector<256x8xf32>
    %135 = tpu.matmul %132, %134, %cst_143 {dimension_numbers = #tpu.dot_dimension_numbers<[1], [0], [0], [1], [0, 0, 1, 1], [], []>} : vector<256x8xbf16>, vector<8x8xbf16>, vector<256x8xf32> -> vector<256x8xf32>
    %136 = arith.addf %130, %135 : vector<256x8xf32>
    %c0_144 = arith.constant 0 : index
    %c1_145 = arith.constant 1 : index
    %c2_146 = arith.constant 2 : index
    %c0_147 = arith.constant 0 : index
    %137 = vector.load %arg6[%c0_144, %c1_145, %c2_146, %c0_147] : memref<1x18x24x8xbf16, #tpu.memory_space<vmem>>, vector<1x16x16x8xbf16>
    %138 = vector.shape_cast %137 : vector<1x16x16x8xbf16> to vector<256x8xbf16>
    %c5_148 = arith.constant 5 : index
    %c0_149 = arith.constant 0 : index
    %c0_150 = arith.constant 0 : index
    %139 = vector.load %arg3[%c5_148, %c0_149, %c0_150] : memref<9x8x8xbf16, #tpu.memory_space<vmem>>, vector<1x8x8xbf16>
    %140 = vector.shape_cast %139 : vector<1x8x8xbf16> to vector<8x8xbf16>
    %cst_151 = arith.constant dense<0.000000e+00> : vector<256x8xf32>
    %141 = tpu.matmul %138, %140, %cst_151 {dimension_numbers = #tpu.dot_dimension_numbers<[1], [0], [0], [1], [0, 0, 1, 1], [], []>} : vector<256x8xbf16>, vector<8x8xbf16>, vector<256x8xf32> -> vector<256x8xf32>
    %142 = arith.addf %136, %141 : vector<256x8xf32>
    %c0_152 = arith.constant 0 : index
    %c2_153 = arith.constant 2 : index
    %c0_154 = arith.constant 0 : index
    %c0_155 = arith.constant 0 : index
    %143 = vector.load %arg6[%c0_152, %c2_153, %c0_154, %c0_155] : memref<1x18x24x8xbf16, #tpu.memory_space<vmem>>, vector<1x16x16x8xbf16>
    %144 = vector.shape_cast %143 : vector<1x16x16x8xbf16> to vector<256x8xbf16>
    %c6_156 = arith.constant 6 : index
    %c0_157 = arith.constant 0 : index
    %c0_158 = arith.constant 0 : index
    %145 = vector.load %arg3[%c6_156, %c0_157, %c0_158] : memref<9x8x8xbf16, #tpu.memory_space<vmem>>, vector<1x8x8xbf16>
    %146 = vector.shape_cast %145 : vector<1x8x8xbf16> to vector<8x8xbf16>
    %cst_159 = arith.constant dense<0.000000e+00> : vector<256x8xf32>
    %147 = tpu.matmul %144, %146, %cst_159 {dimension_numbers = #tpu.dot_dimension_numbers<[1], [0], [0], [1], [0, 0, 1, 1], [], []>} : vector<256x8xbf16>, vector<8x8xbf16>, vector<256x8xf32> -> vector<256x8xf32>
    %148 = arith.addf %142, %147 : vector<256x8xf32>
    %c0_160 = arith.constant 0 : index
    %c2_161 = arith.constant 2 : index
    %c1_162 = arith.constant 1 : index
    %c0_163 = arith.constant 0 : index
    %149 = vector.load %arg6[%c0_160, %c2_161, %c1_162, %c0_163] : memref<1x18x24x8xbf16, #tpu.memory_space<vmem>>, vector<1x16x16x8xbf16>
    %150 = vector.shape_cast %149 : vector<1x16x16x8xbf16> to vector<256x8xbf16>
    %c7_164 = arith.constant 7 : index
    %c0_165 = arith.constant 0 : index
    %c0_166 = arith.constant 0 : index
    %151 = vector.load %arg3[%c7_164, %c0_165, %c0_166] : memref<9x8x8xbf16, #tpu.memory_space<vmem>>, vector<1x8x8xbf16>
    %152 = vector.shape_cast %151 : vector<1x8x8xbf16> to vector<8x8xbf16>
    %cst_167 = arith.constant dense<0.000000e+00> : vector<256x8xf32>
    %153 = tpu.matmul %150, %152, %cst_167 {dimension_numbers = #tpu.dot_dimension_numbers<[1], [0], [0], [1], [0, 0, 1, 1], [], []>} : vector<256x8xbf16>, vector<8x8xbf16>, vector<256x8xf32> -> vector<256x8xf32>
    %154 = arith.addf %148, %153 : vector<256x8xf32>
    %c0_168 = arith.constant 0 : index
    %c2_169 = arith.constant 2 : index
    %c2_170 = arith.constant 2 : index
    %c0_171 = arith.constant 0 : index
    %155 = vector.load %arg6[%c0_168, %c2_169, %c2_170, %c0_171] : memref<1x18x24x8xbf16, #tpu.memory_space<vmem>>, vector<1x16x16x8xbf16>
    %156 = vector.shape_cast %155 : vector<1x16x16x8xbf16> to vector<256x8xbf16>
    %c8_172 = arith.constant 8 : index
    %c0_173 = arith.constant 0 : index
    %c0_174 = arith.constant 0 : index
    %157 = vector.load %arg3[%c8_172, %c0_173, %c0_174] : memref<9x8x8xbf16, #tpu.memory_space<vmem>>, vector<1x8x8xbf16>
    %158 = vector.shape_cast %157 : vector<1x8x8xbf16> to vector<8x8xbf16>
    %cst_175 = arith.constant dense<0.000000e+00> : vector<256x8xf32>
    %159 = tpu.matmul %156, %158, %cst_175 {dimension_numbers = #tpu.dot_dimension_numbers<[1], [0], [0], [1], [0, 0, 1, 1], [], []>} : vector<256x8xbf16>, vector<8x8xbf16>, vector<256x8xf32> -> vector<256x8xf32>
    %160 = arith.addf %154, %159 : vector<256x8xf32>
    %161 = vector.shape_cast %8 : vector<1x256x4xbf16> to vector<256x4xbf16>
    %c0_176 = arith.constant 0 : index
    %c0_177 = arith.constant 0 : index
    %162 = vector.load %arg4[%c0_176, %c0_177] : memref<4x8xbf16, #tpu.memory_space<vmem>>, vector<4x8xbf16>
    %cst_178 = arith.constant dense<0.000000e+00> : vector<256x8xf32>
    %163 = tpu.matmul %161, %162, %cst_178 {dimension_numbers = #tpu.dot_dimension_numbers<[1], [0], [0], [1], [0, 0, 1, 1], [], []>} : vector<256x4xbf16>, vector<4x8xbf16>, vector<256x8xf32> -> vector<256x8xf32>
    %164 = arith.addf %160, %163 : vector<256x8xf32>
    %165 = vector.shape_cast %164 : vector<256x8xf32> to vector<1x256x8xf32>
    %c0_179 = arith.constant 0 : index
    %c0_180 = arith.constant 0 : index
    %c0_181 = arith.constant 0 : index
    %166 = vector.load %arg5[%c0_179, %c0_180, %c0_181] : memref<1x256x8xf32, #tpu.memory_space<vmem>>, vector<1x256x8xf32>
    tpu.vector_store %arg5[%c0_179, %c0_180, %c0_181], %165 {strides = array<i32>} : memref<1x256x8xf32, #tpu.memory_space<vmem>>, vector<1x256x8xf32>,
    return
  }
  func.func @transform_0(%arg0: i32) -> (i32, i32, i32) {
    %c0_i32 = arith.constant 0 : i32
    %c0_i32_0 = arith.constant 0 : i32
    %c0_i32_1 = arith.constant 0 : i32
    return %arg0, %c0_i32, %c0_i32_0 : i32, i32, i32
  }
  func.func @transform_1(%arg0: i32) -> (i32, i32, i32) {
    %c0_i32 = arith.constant 0 : i32
    %c0_i32_0 = arith.constant 0 : i32
    %c0_i32_1 = arith.constant 0 : i32
    %c0_i32_2 = arith.constant 0 : i32
    return %c0_i32, %c0_i32_0, %c0_i32_1 : i32, i32, i32
  }
  func.func @transform_2(%arg0: i32) -> (i32, i32, i32) {
    %c0_i32 = arith.constant 0 : i32
    %c0_i32_0 = arith.constant 0 : i32
    %c0_i32_1 = arith.constant 0 : i32
    %c0_i32_2 = arith.constant 0 : i32
    return %c0_i32, %c0_i32_0, %c0_i32_1 : i32, i32, i32
  }
  func.func @transform_3(%arg0: i32) -> (i32, i32) {
    %c0_i32 = arith.constant 0 : i32
    %c0_i32_0 = arith.constant 0 : i32
    %c0_i32_1 = arith.constant 0 : i32
    return %c0_i32, %c0_i32_0 : i32, i32
  }
  func.func @transform_4(%arg0: i32) -> (i32, i32, i32) {
    %c0_i32 = arith.constant 0 : i32
    %c0_i32_0 = arith.constant 0 : i32
    %c0_i32_1 = arith.constant 0 : i32
    return %arg0, %c0_i32, %c0_i32_0 : i32, i32, i32
  }
}

</mosaic_0001>

<llo_original>
// kernel: tpu_custom_call.1
$region0: #{tpu_custom_call.1}
  #allocation0 [shape = 'u32[]', space=smem, size = 0x4, offset = 0x4, fixed_abs, tag = 'smem constant byte address 0x4 - core index']
  #allocation1 [shape = 'u32[144,128]{1,0:T(1,128)}', space=vmem, size = 0x12000, scoped, tag = 'internal scratch']
  #allocation2 [shape = 'bf16[1,18,24,8]{3,2,1,0:T(8,128)(2,1)}', space=vmem, size = 0x1b000, scoped, tag = 'scratch operand']
  %s0 = inlined_call_operand.vmem [shape: bf16[2,256,4], index: 0, kind: input, shape index: {}]
  %s1 = inlined_call_operand.vmem [shape: bf16[9,4,8], index: 1, kind: input, shape index: {}]
  %s2 = inlined_call_operand.vmem [shape: bf16[9,8,8], index: 2, kind: input, shape index: {}]
  %s3 = inlined_call_operand.vmem [shape: bf16[4,8], index: 3, kind: input, shape index: {}]
  %s4 = inlined_call_operand.vmem [shape: f32[2,256,8], index: 4, kind: output, shape index: {}]
  %s5 = sld [smem:[#allocation0]]
  $region49: #{tpu_custom_call.1} parent=0
    _
  %s7 = ssub.s32 1, %s5
  %s8 = scalar_select 0, %s7, %s5
  loop: start=0, step=1, limit=4
  $region2: #{tpu_custom_call.1} parent=0 // loop_pre_header
    _
  $region3: #{tpu_custom_call.1} parent=0 // loop_header
    %s10 = sphi 0, %s14
    %p11 = scmp.ge.s32.totalorder %s10, 4
    %s20 = sphi 0, %s22
    %s23 = sphi 0, %s20
    %s24 = sphi 0, %s23
    %s40 = sphi 0, %s24
    %s44 = sphi 0, %s44
    %s46 = sphi 0, %s44
    %s47 = sphi 0, %s46
    %s61 = sphi 0, %s47
    %s65 = sphi 0, %s65
    %s67 = sphi 0, %s65
    %s68 = sphi 0, %s67
    %s82 = sphi 0, %s68
    %s86 = sphi 0, %s86
    %s88 = sphi 0, %s86
    %s89 = sphi 0, %s88
    %s103 = sphi 0, %s89
    %s109 = sphi 0, %s111
    %s112 = sphi 0, %s109
    %s113 = sphi 0, %s112
    %s129 = sphi 0, %s113
  $region4: #{tpu_custom_call.1} parent=0 // loop_header_branch
    %13 = sbr.rel (%p11) target = $region8
  $region5: #{tpu_custom_call.1} parent=0 // loop_body
    %s15 = ssub.s32 %s10, 1
    %s16 = ssub.s32 %s10, 2
    %s17 = sadd.s32 %s10, 1
    %s18 = ssub.s32 %s10, %s17
    %p19 = scmp.eq.s32.totalorder %s18, 0
    %s21 = sadd.s32 %s20, 1
    %s22 = scalar_select %p19, %s20, %s21
    %p25 = pneg %p19
    %p26 = scmp.eq.s32.totalorder %s10, 1
    %p27 = por %p25, %p26
    %p28 = scmp.ne.s32.totalorder %s20, %s23
    %p29 = scmp.eq.s32.totalorder %s10, 0
    %p30 = por %p28, %p29
    %p31 = scmp.ne.s32.totalorder %s20, %s23
    %p32 = scmp.eq.s32.totalorder %s15, 1
    %p33 = por %p31, %p32
    %p34 = scmp.ne.s32.totalorder %s23, %s24
    %p35 = scmp.eq.s32.totalorder %s15, 0
    %p36 = por %p34, %p35
    %p37 = scmp.ne.s32.totalorder %s23, %s24
    %p38 = scmp.eq.s32.totalorder %s16, 1
    %p39 = por %p37, %p38
    %p41 = scmp.ne.s32.totalorder %s24, %s40
    %p42 = scmp.eq.s32.totalorder %s16, 0
    %p43 = por %p41, %p42
    %s45 = sadd.s32 %s44, 1
    %p48 = scmp.eq.s32.totalorder %s10, 1
    %p49 = scmp.ne.s32.totalorder %s44, %s46
    %p50 = scmp.eq.s32.totalorder %s10, 0
    %p51 = por %p49, %p50
    %p52 = scmp.ne.s32.totalorder %s44, %s46
    %p53 = scmp.eq.s32.totalorder %s15, 1
    %p54 = por %p52, %p53
    %p55 = scmp.ne.s32.totalorder %s46, %s47
    %p56 = scmp.eq.s32.totalorder %s15, 0
    %p57 = por %p55, %p56
    %p58 = scmp.ne.s32.totalorder %s46, %s47
    %p59 = scmp.eq.s32.totalorder %s16, 1
    %p60 = por %p58, %p59
    %p62 = scmp.ne.s32.totalorder %s47, %s61
    %p63 = scmp.eq.s32.totalorder %s16, 0
    %p64 = por %p62, %p63
    %s66 = sadd.s32 %s65, 1
    %p69 = scmp.eq.s32.totalorder %s10, 1
    %p70 = scmp.ne.s32.totalorder %s65, %s67
    %p71 = scmp.eq.s32.totalorder %s10, 0
    %p72 = por %p70, %p71
    %p73 = scmp.ne.s32.totalorder %s65, %s67
    %p74 = scmp.eq.s32.totalorder %s15, 1
    %p75 = por %p73, %p74
    %p76 = scmp.ne.s32.totalorder %s67, %s68
    %p77 = scmp.eq.s32.totalorder %s15, 0
    %p78 = por %p76, %p77
    %p79 = scmp.ne.s32.totalorder %s67, %s68
    %p80 = scmp.eq.s32.totalorder %s16, 1
    %p81 = por %p79, %p80
    %p83 = scmp.ne.s32.totalorder %s68, %s82
    %p84 = scmp.eq.s32.totalorder %s16, 0
    %p85 = por %p83, %p84
    %s87 = sadd.s32 %s86, 1
    %p90 = scmp.eq.s32.totalorder %s10, 1
    %p91 = scmp.ne.s32.totalorder %s86, %s88
    %p92 = scmp.eq.s32.totalorder %s10, 0
    %p93 = por %p91, %p92
    %p94 = scmp.ne.s32.totalorder %s86, %s88
    %p95 = scmp.eq.s32.totalorder %s15, 1
    %p96 = por %p94, %p95
    %p97 = scmp.ne.s32.totalorder %s88, %s89
    %p98 = scmp.eq.s32.totalorder %s15, 0
    %p99 = por %p97, %p98
    %p100 = scmp.ne.s32.totalorder %s88, %s89
    %p101 = scmp.eq.s32.totalorder %s16, 1
    %p102 = por %p100, %p101
    %p104 = scmp.ne.s32.totalorder %s89, %s103
    %p105 = scmp.eq.s32.totalorder %s16, 0
    %p106 = por %p104, %p105
    %s107 = ssub.s32 %s10, %s17
    %p108 = scmp.eq.s32.totalorder %s107, 0
    %s110 = sadd.s32 %s109, 1
    %s111 = scalar_select %p108, %s109, %s110
    %p114 = pneg %p108
    %p115 = scmp.eq.s32.totalorder %s10, 1
    %p116 = por %p114, %p115
    %p117 = scmp.ne.s32.totalorder %s109, %s112
    %p118 = scmp.eq.s32.totalorder %s10, 0
    %p119 = por %p117, %p118
    %p120 = scmp.ne.s32.totalorder %s109, %s112
    %p121 = scmp.eq.s32.totalorder %s15, 1
    %p122 = por %p120, %p121
    %p123 = scmp.ne.s32.totalorder %s112, %s113
    %p124 = scmp.eq.s32.totalorder %s15, 0
    %p125 = por %p123, %p124
    %p126 = scmp.ne.s32.totalorder %s112, %s113
    %p127 = scmp.eq.s32.totalorder %s16, 1
    %p128 = por %p126, %p127
    %p130 = scmp.ne.s32.totalorder %s113, %s129
    %p131 = scmp.eq.s32.totalorder %s16, 0
    %p132 = por %p130, %p131
    %p133 = scmp.le.s32.totalorder 1, %s10
    %p134 = scmp.lt.s32.totalorder %s10, 3
    %p135 = pnand %p133, %p134
    %p136 = pneg %p135
    // Predicated region
    $region9: #{tpu_custom_call.1} parent=5 // pred_check
      _
    $region10: #{tpu_custom_call.1} parent=5 // pred_check_branch
      %138 = sbr.rel (%p135) target = $region12
    $region11: #{tpu_custom_call.1} parent=5 // pred_region
      %s139 = ssub.s32 %s10, 1
      // Predicated region
      $region13: #{tpu_custom_call.1} parent=11 // pred_check
        %p140 = pneg %p57
      $region14: #{tpu_custom_call.1} parent=11 // pred_check_branch
        %142 = sbr.rel (%p140) target = $region16
      $region15: #{tpu_custom_call.1} parent=11 // pred_region
        _
      $region16: #{tpu_custom_call.1} parent=11 // pred_fallthru
        _
      // Predicated region
      $region17: #{tpu_custom_call.1} parent=11 // pred_check
        %p143 = pneg %p78
      $region18: #{tpu_custom_call.1} parent=11 // pred_check_branch
        %145 = sbr.rel (%p143) target = $region20
      $region19: #{tpu_custom_call.1} parent=11 // pred_region
        _
      $region20: #{tpu_custom_call.1} parent=11 // pred_fallthru
        _
      // Predicated region
      $region21: #{tpu_custom_call.1} parent=11 // pred_check
        %p146 = pneg %p99
      $region22: #{tpu_custom_call.1} parent=11 // pred_check_branch
        %148 = sbr.rel (%p146) target = $region24
      $region23: #{tpu_custom_call.1} parent=11 // pred_region
        _
      $region24: #{tpu_custom_call.1} parent=11 // pred_fallthru
        _
    $region12: #{tpu_custom_call.1} parent=5 // pred_fallthru
      _
    %p149 = scmp.lt.s32.totalorder %s10, 2
    // Predicated region
    $region25: #{tpu_custom_call.1} parent=5 // pred_check
      %p150 = pneg %p149
    $region26: #{tpu_custom_call.1} parent=5 // pred_check_branch
      %152 = sbr.rel (%p150) target = $region28
    $region27: #{tpu_custom_call.1} parent=5 // pred_region
      // Predicated region
      $region29: #{tpu_custom_call.1} parent=27 // pred_check
        %p153 = pneg %p30
      $region30: #{tpu_custom_call.1} parent=27 // pred_check_branch
        %155 = sbr.rel (%p153) target = $region32
      $region31: #{tpu_custom_call.1} parent=27 // pred_region
        %p156 = scmp.lt.s32.totalorder %s10, 1
        %s157 = scalar_select %p156, %s10, 1
        %s158 = smul.addr %s157, 32
        %s159 = smul.addr %s158, 4
        %s160 = scalar_lea.vmem %s0, %s159
      $region32: #{tpu_custom_call.1} parent=27 // pred_fallthru
        _
    $region28: #{tpu_custom_call.1} parent=5 // pred_fallthru
      _
    %p161 = scmp.le.s32.totalorder 1, %s10
    %p162 = scmp.lt.s32.totalorder %s10, 3
    %p163 = pnand %p161, %p162
    %p164 = pneg %p163
    // Predicated region
    $region33: #{tpu_custom_call.1} parent=5 // pred_check
      _
    $region34: #{tpu_custom_call.1} parent=5 // pred_check_branch
      %166 = sbr.rel (%p163) target = $region36
    $region35: #{tpu_custom_call.1} parent=5 // pred_region
      %s167 = ssub.s32 %s10, 1
      %p168 = scmp.lt.s32.totalorder %s15, 1
      %s169 = scalar_select %p168, %s15, 1
      %s170 = smul.addr %s169, 32
      %s171 = smul.addr %s170, 4
      %s172 = scalar_lea.vmem %s0, %s171
      %p173 = pneg %p36
      %p174 = pneg %p33
      %p175 = pneg %p57
      %p176 = pneg %p54
      %p177 = pneg %p78
      %p178 = pneg %p75
      %p179 = pneg %p99
      %p180 = pneg %p96
      %p181 = pneg %p125
      %p182 = pneg %p122
      %p183 = scmp.lt.s32.totalorder %s15, 1
      %s184 = scalar_select %p183, %s15, 1
      %s185 = smul.addr %s184, 32
      %s186 = smul.addr %s185, 8
      %s187 = scalar_lea.vmem %s4, %s186
      %p188 = scmp.lt.s32.totalorder %s15, 1
      %s189 = scalar_select %p188, %s15, 1
      %s190 = smul.addr %s189, 32
      %s191 = smul.addr %s190, 4
      %s192 = scalar_lea.vmem %s0, %s191
      %p193 = scmp.lt.s32.totalorder %s15, 1
      %s194 = scalar_select %p193, %s15, 1
      %s195 = smul.addr %s194, 32
      %s196 = smul.addr %s195, 8
      %s197 = scalar_lea.vmem %s4, %s196
      %vm199 = vcmask 60416
      %200 = vst.msk [vmem:[#allocation2] sm:$0xf] %vm199, 0
      %201 = vst.msk [vmem:[#allocation2 + $0x4] sm:$0xf] %vm199, 0
      %202 = vst.msk [vmem:[#allocation2 + $0x8] sm:$0xf] %vm199, 0
      %s203 = scalar_lea.vmem [#allocation2], 204
      %204 = vst.msk [vmem:[%s203] sm:$0xf] %vm199, 0
      %205 = vst.msk [vmem:[%s203 + $0x4] sm:$0xf] %vm199, 0
      %206 = vst.msk [vmem:[%s203 + $0x8] sm:$0xf] %vm199, 0
      %vm207 = vcmask 57344
      %vm208 = vsmask.f32 256
      %vm209 = vmand %vm207, %vm208
      %v210 = vld [vmem:[#allocation2] sm:$0x1]
      %v211 = vsel %vm209, 0, %v210
      %212 = vst [vmem:[#allocation2] sm:$0x1] %v211
      %v213 = vld [vmem:[#allocation2 + $0xc] sm:$0x1]
      %v214 = vsel %vm209, 0, %v213
      %215 = vst [vmem:[#allocation2 + $0xc] sm:$0x1] %v214
      %v216 = vld [vmem:[#allocation2 + $0x18] sm:$0x1]
      %v217 = vsel %vm209, 0, %v216
      %218 = vst [vmem:[#allocation2 + $0x18] sm:$0x1] %v217
      %v219 = vld [vmem:[#allocation2 + $0x24] sm:$0x1]
      %v220 = vsel %vm209, 0, %v219
      %221 = vst [vmem:[#allocation2 + $0x24] sm:$0x1] %v220
      %v222 = vld [vmem:[#allocation2 + $0x30] sm:$0x1]
      %v223 = vsel %vm209, 0, %v222
      %224 = vst [vmem:[#allocation2 + $0x30] sm:$0x1] %v223
      %v225 = vld [vmem:[#allocation2 + $0x3c] sm:$0x1]
      %v226 = vsel %vm209, 0, %v225
      %227 = vst [vmem:[#allocation2 + $0x3c] sm:$0x1] %v226
      %v228 = vld [vmem:[#allocation2 + $0x48] sm:$0x1]
      %v229 = vsel %vm209, 0, %v228
      %230 = vst [vmem:[#allocation2 + $0x48] sm:$0x1] %v229
      %v231 = vld [vmem:[#allocation2 + $0x54] sm:$0x1]
      %v232 = vsel %vm209, 0, %v231
      %233 = vst [vmem:[#allocation2 + $0x54] sm:$0x1] %v232
      %v234 = vld [vmem:[#allocation2 + $0x60] sm:$0x1]
      %v235 = vsel %vm209, 0, %v234
      %236 = vst [vmem:[#allocation2 + $0x60] sm:$0x1] %v235
      %v237 = vld [vmem:[#allocation2 + $0x6c] sm:$0x1]
      %v238 = vsel %vm209, 0, %v237
      %239 = vst [vmem:[#allocation2 + $0x6c] sm:$0x1] %v238
      %v240 = vld [vmem:[#allocation2 + $0x78] sm:$0x1]
      %v241 = vsel %vm209, 0, %v240
      %242 = vst [vmem:[#allocation2 + $0x78] sm:$0x1] %v241
      %v243 = vld [vmem:[#allocation2 + $0x84] sm:$0x1]
      %v244 = vsel %vm209, 0, %v243
      %245 = vst [vmem:[#allocation2 + $0x84] sm:$0x1] %v244
      %v246 = vld [vmem:[#allocation2 + $0x90] sm:$0x1]
      %v247 = vsel %vm209, 0, %v246
      %248 = vst [vmem:[#allocation2 + $0x90] sm:$0x1] %v247
      %v249 = vld [vmem:[#allocation2 + $0x9c] sm:$0x1]
      %v250 = vsel %vm209, 0, %v249
      %251 = vst [vmem:[#allocation2 + $0x9c] sm:$0x1] %v250
      %v252 = vld [vmem:[#allocation2 + $0xa8] sm:$0x1]
      %v253 = vsel %vm209, 0, %v252
      %254 = vst [vmem:[#allocation2 + $0xa8] sm:$0x1] %v253
      %v255 = vld [vmem:[#allocation2 + $0xb4] sm:$0x1]
      %v256 = vsel %vm209, 0, %v255
      %257 = vst [vmem:[#allocation2 + $0xb4] sm:$0x1] %v256
      %v258 = vld [vmem:[#allocation2 + $0xc0] sm:$0x1]
      %v259 = vsel %vm209, 0, %v258
      %260 = vst [vmem:[#allocation2 + $0xc0] sm:$0x1] %v259
      %v261 = vld [vmem:[#allocation2 + $0xcc] sm:$0x1]
      %v262 = vsel %vm209, 0, %v261
      %263 = vst [vmem:[#allocation2 + $0xcc] sm:$0x1] %v262
      %vm264 = vsmask.f32 7938
      %vm265 = vmand %vm207, %vm264
      %v266 = vld [vmem:[#allocation2 + $0x8] sm:$0x1]
      %v267 = vsel %vm265, 0, %v266
      %268 = vst [vmem:[#allocation2 + $0x8] sm:$0x1] %v267
      %v269 = vld [vmem:[#allocation2 + $0x14] sm:$0x1]
      %v270 = vsel %vm265, 0, %v269
      %271 = vst [vmem:[#allocation2 + $0x14] sm:$0x1] %v270
      %v272 = vld [vmem:[#allocation2 + $0x20] sm:$0x1]
      %v273 = vsel %vm265, 0, %v272
      %274 = vst [vmem:[#allocation2 + $0x20] sm:$0x1] %v273
      %v275 = vld [vmem:[#allocation2 + $0x2c] sm:$0x1]
      %v276 = vsel %vm265, 0, %v275
      %277 = vst [vmem:[#allocation2 + $0x2c] sm:$0x1] %v276
      %v278 = vld [vmem:[#allocation2 + $0x38] sm:$0x1]
      %v279 = vsel %vm265, 0, %v278
      %280 = vst [vmem:[#allocation2 + $0x38] sm:$0x1] %v279
      %v281 = vld [vmem:[#allocation2 + $0x44] sm:$0x1]
      %v282 = vsel %vm265, 0, %v281
      %283 = vst [vmem:[#allocation2 + $0x44] sm:$0x1] %v282
      %v284 = vld [vmem:[#allocation2 + $0x50] sm:$0x1]
      %v285 = vsel %vm265, 0, %v284
      %286 = vst [vmem:[#allocation2 + $0x50] sm:$0x1] %v285
      %v287 = vld [vmem:[#allocation2 + $0x5c] sm:$0x1]
      %v288 = vsel %vm265, 0, %v287
      %289 = vst [vmem:[#allocation2 + $0x5c] sm:$0x1] %v288
      %v290 = vld [vmem:[#allocation2 + $0x68] sm:$0x1]
      %v291 = vsel %vm265, 0, %v290
      %292 = vst [vmem:[#allocation2 + $0x68] sm:$0x1] %v291
      %v293 = vld [vmem:[#allocation2 + $0x74] sm:$0x1]
      %v294 = vsel %vm265, 0, %v293
      %295 = vst [vmem:[#allocation2 + $0x74] sm:$0x1] %v294
      %v296 = vld [vmem:[#allocation2 + $0x80] sm:$0x1]
      %v297 = vsel %vm265, 0, %v296
      %298 = vst [vmem:[#allocation2 + $0x80] sm:$0x1] %v297
      %v299 = vld [vmem:[#allocation2 + $0x8c] sm:$0x1]
      %v300 = vsel %vm265, 0, %v299
      %301 = vst [vmem:[#allocation2 + $0x8c] sm:$0x1] %v300
      %v302 = vld [vmem:[#allocation2 + $0x98] sm:$0x1]
      %v303 = vsel %vm265, 0, %v302
      %304 = vst [vmem:[#allocation2 + $0x98] sm:$0x1] %v303
      %v305 = vld [vmem:[#allocation2 + $0xa4] sm:$0x1]
      %v306 = vsel %vm265, 0, %v305
      %307 = vst [vmem:[#allocation2 + $0xa4] sm:$0x1] %v306
      %v308 = vld [vmem:[#allocation2 + $0xb0] sm:$0x1]
      %v309 = vsel %vm265, 0, %v308
      %310 = vst [vmem:[#allocation2 + $0xb0] sm:$0x1] %v309
      %v311 = vld [vmem:[#allocation2 + $0xbc] sm:$0x1]
      %v312 = vsel %vm265, 0, %v311
      %313 = vst [vmem:[#allocation2 + $0xbc] sm:$0x1] %v312
      %v314 = vld [vmem:[#allocation2 + $0xc8] sm:$0x1]
      %v315 = vsel %vm265, 0, %v314
      %316 = vst [vmem:[#allocation2 + $0xc8] sm:$0x1] %v315
      %v317 = vld [vmem:[#allocation2 + $0xd4] sm:$0x1]
      %v318 = vsel %vm265, 0, %v317
      %319 = vst [vmem:[#allocation2 + $0xd4] sm:$0x1] %v318
      %v320 = vld [vmem:[%s192] sm:$0xf]
      %v321 = vld [vmem:[%s192 + $0x4] sm:$0xf]
      %v322 = vld [vmem:[%s192 + $0x8] sm:$0xf]
      %v323 = vld [vmem:[%s192 + $0xc] sm:$0xf]
      %v324 = vld [vmem:[%s192 + $0x10] sm:$0xf]
      %v325 = vld [vmem:[%s192 + $0x14] sm:$0xf]
      %v326 = vld [vmem:[%s192 + $0x18] sm:$0xf]
      %v327 = vld [vmem:[%s192 + $0x1c] sm:$0xf]
      %v328 = vld [vmem:[%s192 + $0x20] sm:$0xf]
      %v329 = vld [vmem:[%s192 + $0x24] sm:$0xf]
      %v330 = vld [vmem:[%s192 + $0x28] sm:$0xf]
      %v331 = vld [vmem:[%s192 + $0x2c] sm:$0xf]
      %v332 = vld [vmem:[%s192 + $0x30] sm:$0xf]
      %v333 = vld [vmem:[%s192 + $0x34] sm:$0xf]
      %v334 = vld [vmem:[%s192 + $0x38] sm:$0xf]
      %v335 = vld [vmem:[%s192 + $0x3c] sm:$0xf]
      %v336 = vld [vmem:[%s192 + $0x40] sm:$0xf]
      %v337 = vld [vmem:[%s192 + $0x44] sm:$0xf]
      %v338 = vld [vmem:[%s192 + $0x48] sm:$0xf]
      %v339 = vld [vmem:[%s192 + $0x4c] sm:$0xf]
      %v340 = vld [vmem:[%s192 + $0x50] sm:$0xf]
      %v341 = vld [vmem:[%s192 + $0x54] sm:$0xf]
      %v342 = vld [vmem:[%s192 + $0x58] sm:$0xf]
      %v343 = vld [vmem:[%s192 + $0x5c] sm:$0xf]
      %v344 = vld [vmem:[%s192 + $0x60] sm:$0xf]
      %v345 = vld [vmem:[%s192 + $0x64] sm:$0xf]
      %v346 = vld [vmem:[%s192 + $0x68] sm:$0xf]
      %v347 = vld [vmem:[%s192 + $0x6c] sm:$0xf]
      %v348 = vld [vmem:[%s192 + $0x70] sm:$0xf]
      %v349 = vld [vmem:[%s192 + $0x74] sm:$0xf]
      %v350 = vld [vmem:[%s192 + $0x78] sm:$0xf]
      %v351 = vld [vmem:[%s192 + $0x7c] sm:$0xf]
      %v352 = vunpack.c.l.bf16 %v320
      %v353 = vunpack.c.l.bf16 %v321
      %v354 = vunpack.c.l.bf16 %v322
      %v355 = vunpack.c.l.bf16 %v323
      %v356 = vunpack.c.l.bf16 %v324
      %v357 = vunpack.c.l.bf16 %v325
      %v358 = vunpack.c.l.bf16 %v326
      %v359 = vunpack.c.l.bf16 %v327
      %v360 = vunpack.c.l.bf16 %v328
      %v361 = vunpack.c.l.bf16 %v329
      %v362 = vunpack.c.l.bf16 %v330
      %v363 = vunpack.c.l.bf16 %v331
      %v364 = vunpack.c.l.bf16 %v332
      %v365 = vunpack.c.l.bf16 %v333
      %v366 = vunpack.c.l.bf16 %v334
      %v367 = vunpack.c.l.bf16 %v335
      %v368 = vunpack.c.l.bf16 %v336
      %v369 = vunpack.c.l.bf16 %v337
      %v370 = vunpack.c.l.bf16 %v338
      %v371 = vunpack.c.l.bf16 %v339
      %v372 = vunpack.c.l.bf16 %v340
      %v373 = vunpack.c.l.bf16 %v341
      %v374 = vunpack.c.l.bf16 %v342
      %v375 = vunpack.c.l.bf16 %v343
      %v376 = vunpack.c.l.bf16 %v344
      %v377 = vunpack.c.l.bf16 %v345
      %v378 = vunpack.c.l.bf16 %v346
      %v379 = vunpack.c.l.bf16 %v347
      %v380 = vunpack.c.l.bf16 %v348
      %v381 = vunpack.c.l.bf16 %v349
      %v382 = vunpack.c.l.bf16 %v350
      %v383 = vunpack.c.l.bf16 %v351
      %vm384 = vcmask 31744
      %v385 = vsel %vm384, %v352, 0.0
      %v386 = vsel %vm384, %v353, 0.0
      %v387 = vadd.f32 %v385, %v386
      %v388 = vsel %vm384, %v354, 0.0
      %v389 = vadd.f32 %v387, %v388
      %v390 = vsel %vm384, %v355, 0.0
      %v391 = vadd.f32 %v389, %v390
      %v392 = vsel %vm384, %v356, 0.0
      %v393 = vadd.f32 %v391, %v392
      %v394 = vsel %vm384, %v357, 0.0
      %v395 = vadd.f32 %v393, %v394
      %v396 = vsel %vm384, %v358, 0.0
      %v397 = vadd.f32 %v395, %v396
      %v398 = vsel %vm384, %v359, 0.0
      %v399 = vadd.f32 %v397, %v398
      %v400 = vsel %vm384, %v360, 0.0
      %v401 = vadd.f32 %v399, %v400
      %v402 = vsel %vm384, %v361, 0.0
      %v403 = vadd.f32 %v401, %v402
      %v404 = vsel %vm384, %v362, 0.0
      %v405 = vadd.f32 %v403, %v404
      %v406 = vsel %vm384, %v363, 0.0
      %v407 = vadd.f32 %v405, %v406
      %v408 = vsel %vm384, %v364, 0.0
      %v409 = vadd.f32 %v407, %v408
      %v410 = vsel %vm384, %v365, 0.0
      %v411 = vadd.f32 %v409, %v410
      %v412 = vsel %vm384, %v366, 0.0
      %v413 = vadd.f32 %v411, %v412
      %v414 = vsel %vm384, %v367, 0.0
      %v415 = vadd.f32 %v413, %v414
      %v416 = vsel %vm384, %v368, 0.0
      %v417 = vadd.f32 %v415, %v416
      %v418 = vsel %vm384, %v369, 0.0
      %v419 = vadd.f32 %v417, %v418
      %v420 = vsel %vm384, %v370, 0.0
      %v421 = vadd.f32 %v419, %v420
      %v422 = vsel %vm384, %v371, 0.0
      %v423 = vadd.f32 %v421, %v422
      %v424 = vsel %vm384, %v372, 0.0
      %v425 = vadd.f32 %v423, %v424
      %v426 = vsel %vm384, %v373, 0.0
      %v427 = vadd.f32 %v425, %v426
      %v428 = vsel %vm384, %v374, 0.0
      %v429 = vadd.f32 %v427, %v428
      %v430 = vsel %vm384, %v375, 0.0
      %v431 = vadd.f32 %v429, %v430
      %v432 = vsel %vm384, %v376, 0.0
      %v433 = vadd.f32 %v431, %v432
      %v434 = vsel %vm384, %v377, 0.0
      %v435 = vadd.f32 %v433, %v434
      %v436 = vsel %vm384, %v378, 0.0
      %v437 = vadd.f32 %v435, %v436
      %v438 = vsel %vm384, %v379, 0.0
      %v439 = vadd.f32 %v437, %v438
      %v440 = vsel %vm384, %v380, 0.0
      %v441 = vadd.f32 %v439, %v440
      %v442 = vsel %vm384, %v381, 0.0
      %v443 = vadd.f32 %v441, %v442
      %v444 = vsel %vm384, %v382, 0.0
      %v445 = vadd.f32 %v443, %v444
      %v446 = vsel %vm384, %v383, 0.0
      %v447 = vadd.f32 %v445, %v446
      %v448 = vrot.slane %v447, 4
      %v449 = vadd.f32 %v447, %v448
      %v450 = vrot.slane %v449, 2
      %v451 = vadd.f32 %v449, %v450
      %v452 = vrot.slane %v451, 1
      %v453 = vadd.f32 %v451, %v452
      %v454 = vmul.f32 %v453, 0.00390625
      %v455 = vsub.f32 %v352, %v454
      %v456 = vsub.f32 %v353, %v454
      %v457 = vsub.f32 %v354, %v454
      %v458 = vsub.f32 %v355, %v454
      %v459 = vsub.f32 %v356, %v454
      %v460 = vsub.f32 %v357, %v454
      %v461 = vsub.f32 %v358, %v454
      %v462 = vsub.f32 %v359, %v454
      %v463 = vsub.f32 %v360, %v454
      %v464 = vsub.f32 %v361, %v454
      %v465 = vsub.f32 %v362, %v454
      %v466 = vsub.f32 %v363, %v454
      %v467 = vsub.f32 %v364, %v454
      %v468 = vsub.f32 %v365, %v454
      %v469 = vsub.f32 %v366, %v454
      %v470 = vsub.f32 %v367, %v454
      %v471 = vsub.f32 %v368, %v454
      %v472 = vsub.f32 %v369, %v454
      %v473 = vsub.f32 %v370, %v454
      %v474 = vsub.f32 %v371, %v454
      %v475 = vsub.f32 %v372, %v454
      %v476 = vsub.f32 %v373, %v454
      %v477 = vsub.f32 %v374, %v454
      %v478 = vsub.f32 %v375, %v454
      %v479 = vsub.f32 %v376, %v454
      %v480 = vsub.f32 %v377, %v454
      %v481 = vsub.f32 %v378, %v454
      %v482 = vsub.f32 %v379, %v454
      %v483 = vsub.f32 %v380, %v454
      %v484 = vsub.f32 %v381, %v454
      %v485 = vsub.f32 %v382, %v454
      %v486 = vsub.f32 %v383, %v454
      %v487 = vmul.f32 %v455, %v455
      %v488 = vmul.f32 %v456, %v456
      %v489 = vmul.f32 %v457, %v457
      %v490 = vmul.f32 %v458, %v458
      %v491 = vmul.f32 %v459, %v459
      %v492 = vmul.f32 %v460, %v460
      %v493 = vmul.f32 %v461, %v461
      %v494 = vmul.f32 %v462, %v462
      %v495 = vmul.f32 %v463, %v463
      %v496 = vmul.f32 %v464, %v464
      %v497 = vmul.f32 %v465, %v465
      %v498 = vmul.f32 %v466, %v466
      %v499 = vmul.f32 %v467, %v467
      %v500 = vmul.f32 %v468, %v468
      %v501 = vmul.f32 %v469, %v469
      %v502 = vmul.f32 %v470, %v470
      %v503 = vmul.f32 %v471, %v471
      %v504 = vmul.f32 %v472, %v472
      %v505 = vmul.f32 %v473, %v473
      %v506 = vmul.f32 %v474, %v474
      %v507 = vmul.f32 %v475, %v475
      %v508 = vmul.f32 %v476, %v476
      %v509 = vmul.f32 %v477, %v477
      %v510 = vmul.f32 %v478, %v478
      %v511 = vmul.f32 %v479, %v479
      %v512 = vmul.f32 %v480, %v480
      %v513 = vmul.f32 %v481, %v481
      %v514 = vmul.f32 %v482, %v482
      %v515 = vmul.f32 %v483, %v483
      %v516 = vmul.f32 %v484, %v484
      %v517 = vmul.f32 %v485, %v485
      %v518 = vmul.f32 %v486, %v486
      %v519 = vsel %vm384, %v487, 0.0
      %v520 = vsel %vm384, %v488, 0.0
      %v521 = vadd.f32 %v519, %v520
      %v522 = vsel %vm384, %v489, 0.0
      %v523 = vadd.f32 %v521, %v522
      %v524 = vsel %vm384, %v490, 0.0
      %v525 = vadd.f32 %v523, %v524
      %v526 = vsel %vm384, %v491, 0.0
      %v527 = vadd.f32 %v525, %v526
      %v528 = vsel %vm384, %v492, 0.0
      %v529 = vadd.f32 %v527, %v528
      %v530 = vsel %vm384, %v493, 0.0
      %v531 = vadd.f32 %v529, %v530
      %v532 = vsel %vm384, %v494, 0.0
      %v533 = vadd.f32 %v531, %v532
      %v534 = vsel %vm384, %v495, 0.0
      %v535 = vadd.f32 %v533, %v534
      %v536 = vsel %vm384, %v496, 0.0
      %v537 = vadd.f32 %v535, %v536
      %v538 = vsel %vm384, %v497, 0.0
      %v539 = vadd.f32 %v537, %v538
      %v540 = vsel %vm384, %v498, 0.0
      %v541 = vadd.f32 %v539, %v540
      %v542 = vsel %vm384, %v499, 0.0
      %v543 = vadd.f32 %v541, %v542
      %v544 = vsel %vm384, %v500, 0.0
      %v545 = vadd.f32 %v543, %v544
      %v546 = vsel %vm384, %v501, 0.0
      %v547 = vadd.f32 %v545, %v546
      %v548 = vsel %vm384, %v502, 0.0
      %v549 = vadd.f32 %v547, %v548
      %v550 = vsel %vm384, %v503, 0.0
      %v551 = vadd.f32 %v549, %v550
      %v552 = vsel %vm384, %v504, 0.0
      %v553 = vadd.f32 %v551, %v552
      %v554 = vsel %vm384, %v505, 0.0
      %v555 = vadd.f32 %v553, %v554
      %v556 = vsel %vm384, %v506, 0.0
      %v557 = vadd.f32 %v555, %v556
      %v558 = vsel %vm384, %v507, 0.0
      %v559 = vadd.f32 %v557, %v558
      %v560 = vsel %vm384, %v508, 0.0
      %v561 = vadd.f32 %v559, %v560
      %v562 = vsel %vm384, %v509, 0.0
      %v563 = vadd.f32 %v561, %v562
      %v564 = vsel %vm384, %v510, 0.0
      %v565 = vadd.f32 %v563, %v564
      %v566 = vsel %vm384, %v511, 0.0
      %v567 = vadd.f32 %v565, %v566
      %v568 = vsel %vm384, %v512, 0.0
      %v569 = vadd.f32 %v567, %v568
      %v570 = vsel %vm384, %v513, 0.0
      %v571 = vadd.f32 %v569, %v570
      %v572 = vsel %vm384, %v514, 0.0
      %v573 = vadd.f32 %v571, %v572
      %v574 = vsel %vm384, %v515, 0.0
      %v575 = vadd.f32 %v573, %v574
      %v576 = vsel %vm384, %v516, 0.0
      %v577 = vadd.f32 %v575, %v576
      %v578 = vsel %vm384, %v517, 0.0
      %v579 = vadd.f32 %v577, %v578
      %v580 = vsel %vm384, %v518, 0.0
      %v581 = vadd.f32 %v579, %v580
      %v582 = vrot.slane %v581, 4
      %v583 = vadd.f32 %v581, %v582
      %v584 = vrot.slane %v583, 2
      %v585 = vadd.f32 %v583, %v584
      %v586 = vrot.slane %v585, 1
      %v587 = vadd.f32 %v585, %v586
      %v588 = vmul.f32 %v587, 0.00390625
      %v589 = vadd.f32 %v588, 1e-05
      %v590 = vrsqrt.pop %v589
      %v591 = vmul.f32 %v455, %v590
      %v592 = vmul.f32 %v456, %v590
      %v593 = vmul.f32 %v457, %v590
      %v594 = vmul.f32 %v458, %v590
      %v595 = vmul.f32 %v459, %v590
      %v596 = vmul.f32 %v460, %v590
      %v597 = vmul.f32 %v461, %v590
      %v598 = vmul.f32 %v462, %v590
      %v599 = vmul.f32 %v463, %v590
      %v600 = vmul.f32 %v464, %v590
      %v601 = vmul.f32 %v465, %v590
      %v602 = vmul.f32 %v466, %v590
      %v603 = vmul.f32 %v467, %v590
      %v604 = vmul.f32 %v468, %v590
      %v605 = vmul.f32 %v469, %v590
      %v606 = vmul.f32 %v470, %v590
      %v607 = vmul.f32 %v471, %v590
      %v608 = vmul.f32 %v472, %v590
      %v609 = vmul.f32 %v473, %v590
      %v610 = vmul.f32 %v474, %v590
      %v611 = vmul.f32 %v475, %v590
      %v612 = vmul.f32 %v476, %v590
      %v613 = vmul.f32 %v477, %v590
      %v614 = vmul.f32 %v478, %v590
      %v615 = vmul.f32 %v479, %v590
      %v616 = vmul.f32 %v480, %v590
      %v617 = vmul.f32 %v481, %v590
      %v618 = vmul.f32 %v482, %v590
      %v619 = vmul.f32 %v483, %v590
      %v620 = vmul.f32 %v484, %v590
      %v621 = vmul.f32 %v485, %v590
      %v622 = vmul.f32 %v486, %v590
      %v623 = vmul.f32 %v591, 0.01
      %v624 = vmul.f32 %v592, 0.01
      %v625 = vmul.f32 %v593, 0.01
      %v626 = vmul.f32 %v594, 0.01
      %v627 = vmul.f32 %v595, 0.01
      %v628 = vmul.f32 %v596, 0.01
      %v629 = vmul.f32 %v597, 0.01
      %v630 = vmul.f32 %v598, 0.01
      %v631 = vmul.f32 %v599, 0.01
      %v632 = vmul.f32 %v600, 0.01
      %v633 = vmul.f32 %v601, 0.01
      %v634 = vmul.f32 %v602, 0.01
      %v635 = vmul.f32 %v603, 0.01
      %v636 = vmul.f32 %v604, 0.01
      %v637 = vmul.f32 %v605, 0.01
      %v638 = vmul.f32 %v606, 0.01
      %v639 = vmul.f32 %v607, 0.01
      %v640 = vmul.f32 %v608, 0.01
      %v641 = vmul.f32 %v609, 0.01
      %v642 = vmul.f32 %v610, 0.01
      %v643 = vmul.f32 %v611, 0.01
      %v644 = vmul.f32 %v612, 0.01
      %v645 = vmul.f32 %v613, 0.01
      %v646 = vmul.f32 %v614, 0.01
      %v647 = vmul.f32 %v615, 0.01
      %v648 = vmul.f32 %v616, 0.01
      %v649 = vmul.f32 %v617, 0.01
      %v650 = vmul.f32 %v618, 0.01
      %v651 = vmul.f32 %v619, 0.01
      %v652 = vmul.f32 %v620, 0.01
      %v653 = vmul.f32 %v621, 0.01
      %v654 = vmul.f32 %v622, 0.01
      %v655 = vmax.f32 %v591, %v623
      %v656 = vmax.f32 %v592, %v624
      %v657 = vmax.f32 %v593, %v625
      %v658 = vmax.f32 %v594, %v626
      %v659 = vmax.f32 %v595, %v627
      %v660 = vmax.f32 %v596, %v628
      %v661 = vmax.f32 %v597, %v629
      %v662 = vmax.f32 %v598, %v630
      %v663 = vmax.f32 %v599, %v631
      %v664 = vmax.f32 %v600, %v632
      %v665 = vmax.f32 %v601, %v633
      %v666 = vmax.f32 %v602, %v634
      %v667 = vmax.f32 %v603, %v635
      %v668 = vmax.f32 %v604, %v636
      %v669 = vmax.f32 %v605, %v637
      %v670 = vmax.f32 %v606, %v638
      %v671 = vmax.f32 %v607, %v639
      %v672 = vmax.f32 %v608, %v640
      %v673 = vmax.f32 %v609, %v641
      %v674 = vmax.f32 %v610, %v642
      %v675 = vmax.f32 %v611, %v643
      %v676 = vmax.f32 %v612, %v644
      %v677 = vmax.f32 %v613, %v645
      %v678 = vmax.f32 %v614, %v646
      %v679 = vmax.f32 %v615, %v647
      %v680 = vmax.f32 %v616, %v648
      %v681 = vmax.f32 %v617, %v649
      %v682 = vmax.f32 %v618, %v650
      %v683 = vmax.f32 %v619, %v651
      %v684 = vmax.f32 %v620, %v652
      %v685 = vmax.f32 %v621, %v653
      %v686 = vmax.f32 %v622, %v654
      %v687 = vpack.c.bf16 %v656, %v655
      %v688 = vpack.c.bf16 %v658, %v657
      %v689 = vpack.c.bf16 %v660, %v659
      %v690 = vpack.c.bf16 %v662, %v661
      %v691 = vpack.c.bf16 %v664, %v663
      %v692 = vpack.c.bf16 %v666, %v665
      %v693 = vpack.c.bf16 %v668, %v667
      %v694 = vpack.c.bf16 %v670, %v669
      %v695 = vpack.c.bf16 %v672, %v671
      %v696 = vpack.c.bf16 %v674, %v673
      %v697 = vpack.c.bf16 %v676, %v675
      %v698 = vpack.c.bf16 %v678, %v677
      %v699 = vpack.c.bf16 %v680, %v679
      %v700 = vpack.c.bf16 %v682, %v681
      %v701 = vpack.c.bf16 %v684, %v683
      %v702 = vpack.c.bf16 %v686, %v685
      %v719 = vunpack.c.l.b16 %v687
      %v720 = vunpack.c.h.b16 %v687
      %v721 = vunpack.c.l.b16 %v688
      %v722 = vunpack.c.h.b16 %v688
      %v723 = vunpack.c.l.b16 %v689
      %v724 = vunpack.c.h.b16 %v689
      %v725 = vunpack.c.l.b16 %v690
      %v726 = vunpack.c.h.b16 %v690
      %v727 = vunpack.c.l.b16 %v691
      %v728 = vunpack.c.h.b16 %v691
      %v729 = vunpack.c.l.b16 %v692
      %v730 = vunpack.c.h.b16 %v692
      %v731 = vunpack.c.l.b16 %v693
      %v732 = vunpack.c.h.b16 %v693
      %v733 = vunpack.c.l.b16 %v694
      %v734 = vunpack.c.h.b16 %v694
      %v735 = vunpack.c.l.b16 %v695
      %v736 = vunpack.c.h.b16 %v695
      %v737 = vunpack.c.l.b16 %v696
      %v738 = vunpack.c.h.b16 %v696
      %v739 = vunpack.c.l.b16 %v697
      %v740 = vunpack.c.h.b16 %v697
      %v741 = vunpack.c.l.b16 %v698
      %v742 = vunpack.c.h.b16 %v698
      %v743 = vunpack.c.l.b16 %v699
      %v744 = vunpack.c.h.b16 %v699
      %v745 = vunpack.c.l.b16 %v700
      %v746 = vunpack.c.h.b16 %v700
      %v747 = vunpack.c.l.b16 %v701
      %v748 = vunpack.c.h.b16 %v701
      %v749 = vunpack.c.l.b16 %v702
      %v750 = vunpack.c.h.b16 %v702
      %v751 = vpack.c.b16 %v719, %v719
      %v752 = vpack.c.b16 %v720, %v720
      %v753 = vpack.c.b16 %v721, %v721
      %v754 = vpack.c.b16 %v722, %v722
      %v755 = vpack.c.b16 %v723, %v723
      %v756 = vpack.c.b16 %v724, %v724
      %v757 = vpack.c.b16 %v725, %v725
      %v758 = vpack.c.b16 %v726, %v726
      %v759 = vpack.c.b16 %v727, %v727
      %v760 = vpack.c.b16 %v728, %v728
      %v761 = vpack.c.b16 %v729, %v729
      %v762 = vpack.c.b16 %v730, %v730
      %v763 = vpack.c.b16 %v731, %v731
      %v764 = vpack.c.b16 %v732, %v732
      %v765 = vpack.c.b16 %v733, %v733
      %v766 = vpack.c.b16 %v734, %v734
      %v767 = vpack.c.b16 %v735, %v735
      %v768 = vpack.c.b16 %v736, %v736
      %v769 = vpack.c.b16 %v737, %v737
      %v770 = vpack.c.b16 %v738, %v738
      %v771 = vpack.c.b16 %v739, %v739
      %v772 = vpack.c.b16 %v740, %v740
      %v773 = vpack.c.b16 %v741, %v741
      %v774 = vpack.c.b16 %v742, %v742
      %v775 = vpack.c.b16 %v743, %v743
      %v776 = vpack.c.b16 %v744, %v744
      %v777 = vpack.c.b16 %v745, %v745
      %v778 = vpack.c.b16 %v746, %v746
      %v779 = vpack.c.b16 %v747, %v747
      %v780 = vpack.c.b16 %v748, %v748
      %v781 = vpack.c.b16 %v749, %v749
      %v782 = vpack.c.b16 %v750, %v750
      %vm783 = vsmask.f32 4368
      %vm784 = vmor %vm208, %vm783
      %v786 = vshrl.u32 %v751, 16
      %v788 = vrot.slane %v786, 7
      %v789 = vshll.u32 %v751, 16
      %v791 = vor.u32 %v788, %v789
      %v792 = vrot.slane %v788, 4
      %v794 = vshrl.u32 %v752, 16
      %v796 = vrot.slane %v794, 7
      %v797 = vshll.u32 %v752, 16
      %v799 = vor.u32 %v796, %v797
      %v800 = vsel %vm784, %v792, %v799
      %v801 = vrot.slane %v796, 4
      %v803 = vshrl.u32 %v753, 16
      %v805 = vrot.slane %v803, 7
      %v806 = vshll.u32 %v753, 16
      %v808 = vor.u32 %v805, %v806
      %v809 = vrot.slane %v805, 4
      %v811 = vshrl.u32 %v754, 16
      %v813 = vrot.slane %v811, 7
      %v814 = vshll.u32 %v754, 16
      %v816 = vor.u32 %v813, %v814
      %v817 = vsel %vm784, %v809, %v816
      %v818 = vrot.slane %v813, 4
      %v820 = vshrl.u32 %v755, 16
      %v822 = vrot.slane %v820, 7
      %v823 = vshll.u32 %v755, 16
      %v825 = vor.u32 %v822, %v823
      %v826 = vrot.slane %v822, 4
      %v828 = vshrl.u32 %v756, 16
      %v830 = vrot.slane %v828, 7
      %v831 = vshll.u32 %v756, 16
      %v833 = vor.u32 %v830, %v831
      %v834 = vsel %vm784, %v826, %v833
      %v835 = vrot.slane %v830, 4
      %v837 = vshrl.u32 %v757, 16
      %v839 = vrot.slane %v837, 7
      %v840 = vshll.u32 %v757, 16
      %v842 = vor.u32 %v839, %v840
      %v843 = vrot.slane %v839, 4
      %v845 = vshrl.u32 %v758, 16
      %v847 = vrot.slane %v845, 7
      %v848 = vshll.u32 %v758, 16
      %v850 = vor.u32 %v847, %v848
      %v851 = vsel %vm784, %v843, %v850
      %v852 = vrot.slane %v847, 4
      %v854 = vshrl.u32 %v759, 16
      %v856 = vrot.slane %v854, 7
      %v857 = vshll.u32 %v759, 16
      %v859 = vor.u32 %v856, %v857
      %v860 = vrot.slane %v856, 4
      %v862 = vshrl.u32 %v760, 16
      %v864 = vrot.slane %v862, 7
      %v865 = vshll.u32 %v760, 16
      %v867 = vor.u32 %v864, %v865
      %v868 = vsel %vm784, %v860, %v867
      %v869 = vrot.slane %v864, 4
      %v871 = vshrl.u32 %v761, 16
      %v873 = vrot.slane %v871, 7
      %v874 = vshll.u32 %v761, 16
      %v876 = vor.u32 %v873, %v874
      %v877 = vrot.slane %v873, 4
      %v879 = vshrl.u32 %v762, 16
      %v881 = vrot.slane %v879, 7
      %v882 = vshll.u32 %v762, 16
      %v884 = vor.u32 %v881, %v882
      %v885 = vsel %vm784, %v877, %v884
      %v886 = vrot.slane %v881, 4
      %v888 = vshrl.u32 %v763, 16
      %v890 = vrot.slane %v888, 7
      %v891 = vshll.u32 %v763, 16
      %v893 = vor.u32 %v890, %v891
      %v894 = vrot.slane %v890, 4
      %v896 = vshrl.u32 %v764, 16
      %v898 = vrot.slane %v896, 7
      %v899 = vshll.u32 %v764, 16
      %v901 = vor.u32 %v898, %v899
      %v902 = vsel %vm784, %v894, %v901
      %v903 = vrot.slane %v898, 4
      %v905 = vshrl.u32 %v765, 16
      %v907 = vrot.slane %v905, 7
      %v908 = vshll.u32 %v765, 16
      %v910 = vor.u32 %v907, %v908
      %v911 = vrot.slane %v907, 4
      %v913 = vshrl.u32 %v766, 16
      %v915 = vrot.slane %v913, 7
      %v916 = vshll.u32 %v766, 16
      %v918 = vor.u32 %v915, %v916
      %v919 = vsel %vm784, %v911, %v918
      %v920 = vrot.slane %v915, 4
      %v922 = vshrl.u32 %v767, 16
      %v924 = vrot.slane %v922, 7
      %v925 = vshll.u32 %v767, 16
      %v927 = vor.u32 %v924, %v925
      %v928 = vrot.slane %v924, 4
      %v930 = vshrl.u32 %v768, 16
      %v932 = vrot.slane %v930, 7
      %v933 = vshll.u32 %v768, 16
      %v935 = vor.u32 %v932, %v933
      %v936 = vsel %vm784, %v928, %v935
      %v937 = vrot.slane %v932, 4
      %v939 = vshrl.u32 %v769, 16
      %v941 = vrot.slane %v939, 7
      %v942 = vshll.u32 %v769, 16
      %v944 = vor.u32 %v941, %v942
      %v945 = vrot.slane %v941, 4
      %v947 = vshrl.u32 %v770, 16
      %v949 = vrot.slane %v947, 7
      %v950 = vshll.u32 %v770, 16
      %v952 = vor.u32 %v949, %v950
      %v953 = vsel %vm784, %v945, %v952
      %v954 = vrot.slane %v949, 4
      %v956 = vshrl.u32 %v771, 16
      %v958 = vrot.slane %v956, 7
      %v959 = vshll.u32 %v771, 16
      %v961 = vor.u32 %v958, %v959
      %v962 = vrot.slane %v958, 4
      %v964 = vshrl.u32 %v772, 16
      %v966 = vrot.slane %v964, 7
      %v967 = vshll.u32 %v772, 16
      %v969 = vor.u32 %v966, %v967
      %v970 = vsel %vm784, %v962, %v969
      %v971 = vrot.slane %v966, 4
      %v973 = vshrl.u32 %v773, 16
      %v975 = vrot.slane %v973, 7
      %v976 = vshll.u32 %v773, 16
      %v978 = vor.u32 %v975, %v976
      %v979 = vrot.slane %v975, 4
      %v981 = vshrl.u32 %v774, 16
      %v983 = vrot.slane %v981, 7
      %v984 = vshll.u32 %v774, 16
      %v986 = vor.u32 %v983, %v984
      %v987 = vsel %vm784, %v979, %v986
      %v988 = vrot.slane %v983, 4
      %v990 = vshrl.u32 %v775, 16
      %v992 = vrot.slane %v990, 7
      %v993 = vshll.u32 %v775, 16
      %v995 = vor.u32 %v992, %v993
      %v996 = vrot.slane %v992, 4
      %v998 = vshrl.u32 %v776, 16
      %v1000 = vrot.slane %v998, 7
      %v1001 = vshll.u32 %v776, 16
      %v1003 = vor.u32 %v1000, %v1001
      %v1004 = vsel %vm784, %v996, %v1003
      %v1005 = vrot.slane %v1000, 4
      %v1007 = vshrl.u32 %v777, 16
      %v1009 = vrot.slane %v1007, 7
      %v1010 = vshll.u32 %v777, 16
      %v1012 = vor.u32 %v1009, %v1010
      %v1013 = vrot.slane %v1009, 4
      %v1015 = vshrl.u32 %v778, 16
      %v1017 = vrot.slane %v1015, 7
      %v1018 = vshll.u32 %v778, 16
      %v1020 = vor.u32 %v1017, %v1018
      %v1021 = vsel %vm784, %v1013, %v1020
      %v1022 = vrot.slane %v1017, 4
      %v1024 = vshrl.u32 %v779, 16
      %v1026 = vrot.slane %v1024, 7
      %v1027 = vshll.u32 %v779, 16
      %v1029 = vor.u32 %v1026, %v1027
      %v1030 = vrot.slane %v1026, 4
      %v1032 = vshrl.u32 %v780, 16
      %v1034 = vrot.slane %v1032, 7
      %v1035 = vshll.u32 %v780, 16
      %v1037 = vor.u32 %v1034, %v1035
      %v1038 = vsel %vm784, %v1030, %v1037
      %v1039 = vrot.slane %v1034, 4
      %v1041 = vshrl.u32 %v781, 16
      %v1043 = vrot.slane %v1041, 7
      %v1044 = vshll.u32 %v781, 16
      %v1046 = vor.u32 %v1043, %v1044
      %v1047 = vrot.slane %v1043, 4
      %v1049 = vshrl.u32 %v782, 16
      %v1051 = vrot.slane %v1049, 7
      %v1052 = vshll.u32 %v782, 16
      %v1054 = vor.u32 %v1051, %v1052
      %v1055 = vsel %vm784, %v1047, %v1054
      %v1056 = vrot.slane %v1051, 4
      %s1105 = scalar_lea.vmem [#allocation2], 12
      %vm1106 = vcmask 27648
      %vm1107 = vmand %vm1106, %vm264
      %v1108 = vld [vmem:[%s1105] sm:$0xf]
      %v1109 = vsel %vm1107, %v791, %v1108
      %1110 = vst [vmem:[%s1105] sm:$0xf] %v1109
      %vm1111 = vcmask 27648
      %1112 = vst.msk [vmem:[%s1105 + $0x4] sm:$0xf] %vm1111, %v800
      %vm1113 = vcmask 24576
      %vm1114 = vmand %vm1113, %vm208
      %v1115 = vld [vmem:[%s1105 + $0x8] sm:$0x1]
      %v1116 = vsel %vm1114, %v801, %v1115
      %1117 = vst [vmem:[%s1105 + $0x8] sm:$0x1] %v1116
      %v1118 = vld [vmem:[%s1105 + $0xc] sm:$0xf]
      %v1119 = vsel %vm1107, %v808, %v1118
      %1120 = vst [vmem:[%s1105 + $0xc] sm:$0xf] %v1119
      %1121 = vst.msk [vmem:[%s1105 + $0x10] sm:$0xf] %vm1111, %v817
      %v1122 = vld [vmem:[%s1105 + $0x14] sm:$0x1]
      %v1123 = vsel %vm1114, %v818, %v1122
      %1124 = vst [vmem:[%s1105 + $0x14] sm:$0x1] %v1123
      %v1125 = vld [vmem:[%s1105 + $0x18] sm:$0xf]
      %v1126 = vsel %vm1107, %v825, %v1125
      %1127 = vst [vmem:[%s1105 + $0x18] sm:$0xf] %v1126
      %1128 = vst.msk [vmem:[%s1105 + $0x1c] sm:$0xf] %vm1111, %v834
      %v1129 = vld [vmem:[%s1105 + $0x20] sm:$0x1]
      %v1130 = vsel %vm1114, %v835, %v1129
      %1131 = vst [vmem:[%s1105 + $0x20] sm:$0x1] %v1130
      %v1132 = vld [vmem:[%s1105 + $0x24] sm:$0xf]
      %v1133 = vsel %vm1107, %v842, %v1132
      %1134 = vst [vmem:[%s1105 + $0x24] sm:$0xf] %v1133
      %1135 = vst.msk [vmem:[%s1105 + $0x28] sm:$0xf] %vm1111, %v851
      %v1136 = vld [vmem:[%s1105 + $0x2c] sm:$0x1]
      %v1137 = vsel %vm1114, %v852, %v1136
      %1138 = vst [vmem:[%s1105 + $0x2c] sm:$0x1] %v1137
      %v1139 = vld [vmem:[%s1105 + $0x30] sm:$0xf]
      %v1140 = vsel %vm1107, %v859, %v1139
      %1141 = vst [vmem:[%s1105 + $0x30] sm:$0xf] %v1140
      %1142 = vst.msk [vmem:[%s1105 + $0x34] sm:$0xf] %vm1111, %v868
      %v1143 = vld [vmem:[%s1105 + $0x38] sm:$0x1]
      %v1144 = vsel %vm1114, %v869, %v1143
      %1145 = vst [vmem:[%s1105 + $0x38] sm:$0x1] %v1144
      %v1146 = vld [vmem:[%s1105 + $0x3c] sm:$0xf]
      %v1147 = vsel %vm1107, %v876, %v1146
      %1148 = vst [vmem:[%s1105 + $0x3c] sm:$0xf] %v1147
      %1149 = vst.msk [vmem:[%s1105 + $0x40] sm:$0xf] %vm1111, %v885
      %v1150 = vld [vmem:[%s1105 + $0x44] sm:$0x1]
      %v1151 = vsel %vm1114, %v886, %v1150
      %1152 = vst [vmem:[%s1105 + $0x44] sm:$0x1] %v1151
      %v1153 = vld [vmem:[%s1105 + $0x48] sm:$0xf]
      %v1154 = vsel %vm1107, %v893, %v1153
      %1155 = vst [vmem:[%s1105 + $0x48] sm:$0xf] %v1154
      %1156 = vst.msk [vmem:[%s1105 + $0x4c] sm:$0xf] %vm1111, %v902
      %v1157 = vld [vmem:[%s1105 + $0x50] sm:$0x1]
      %v1158 = vsel %vm1114, %v903, %v1157
      %1159 = vst [vmem:[%s1105 + $0x50] sm:$0x1] %v1158
      %v1160 = vld [vmem:[%s1105 + $0x54] sm:$0xf]
      %v1161 = vsel %vm1107, %v910, %v1160
      %1162 = vst [vmem:[%s1105 + $0x54] sm:$0xf] %v1161
      %1163 = vst.msk [vmem:[%s1105 + $0x58] sm:$0xf] %vm1111, %v919
      %v1164 = vld [vmem:[%s1105 + $0x5c] sm:$0x1]
      %v1165 = vsel %vm1114, %v920, %v1164
      %1166 = vst [vmem:[%s1105 + $0x5c] sm:$0x1] %v1165
      %v1167 = vld [vmem:[%s1105 + $0x60] sm:$0xf]
      %v1168 = vsel %vm1107, %v927, %v1167
      %1169 = vst [vmem:[%s1105 + $0x60] sm:$0xf] %v1168
      %1170 = vst.msk [vmem:[%s1105 + $0x64] sm:$0xf] %vm1111, %v936
      %v1171 = vld [vmem:[%s1105 + $0x68] sm:$0x1]
      %v1172 = vsel %vm1114, %v937, %v1171
      %1173 = vst [vmem:[%s1105 + $0x68] sm:$0x1] %v1172
      %v1174 = vld [vmem:[%s1105 + $0x6c] sm:$0xf]
      %v1175 = vsel %vm1107, %v944, %v1174
      %1176 = vst [vmem:[%s1105 + $0x6c] sm:$0xf] %v1175
      %1177 = vst.msk [vmem:[%s1105 + $0x70] sm:$0xf] %vm1111, %v953
      %v1178 = vld [vmem:[%s1105 + $0x74] sm:$0x1]
      %v1179 = vsel %vm1114, %v954, %v1178
      %1180 = vst [vmem:[%s1105 + $0x74] sm:$0x1] %v1179
      %v1181 = vld [vmem:[%s1105 + $0x78] sm:$0xf]
      %v1182 = vsel %vm1107, %v961, %v1181
      %1183 = vst [vmem:[%s1105 + $0x78] sm:$0xf] %v1182
      %1184 = vst.msk [vmem:[%s1105 + $0x7c] sm:$0xf] %vm1111, %v970
      %v1185 = vld [vmem:[%s1105 + $0x80] sm:$0x1]
      %v1186 = vsel %vm1114, %v971, %v1185
      %1187 = vst [vmem:[%s1105 + $0x80] sm:$0x1] %v1186
      %v1188 = vld [vmem:[%s1105 + $0x84] sm:$0xf]
      %v1189 = vsel %vm1107, %v978, %v1188
      %1190 = vst [vmem:[%s1105 + $0x84] sm:$0xf] %v1189
      %1191 = vst.msk [vmem:[%s1105 + $0x88] sm:$0xf] %vm1111, %v987
      %v1192 = vld [vmem:[%s1105 + $0x8c] sm:$0x1]
      %v1193 = vsel %vm1114, %v988, %v1192
      %1194 = vst [vmem:[%s1105 + $0x8c] sm:$0x1] %v1193
      %v1195 = vld [vmem:[%s1105 + $0x90] sm:$0xf]
      %v1196 = vsel %vm1107, %v995, %v1195
      %1197 = vst [vmem:[%s1105 + $0x90] sm:$0xf] %v1196
      %1198 = vst.msk [vmem:[%s1105 + $0x94] sm:$0xf] %vm1111, %v1004
      %v1199 = vld [vmem:[%s1105 + $0x98] sm:$0x1]
      %v1200 = vsel %vm1114, %v1005, %v1199
      %1201 = vst [vmem:[%s1105 + $0x98] sm:$0x1] %v1200
      %v1202 = vld [vmem:[%s1105 + $0x9c] sm:$0xf]
      %v1203 = vsel %vm1107, %v1012, %v1202
      %1204 = vst [vmem:[%s1105 + $0x9c] sm:$0xf] %v1203
      %1205 = vst.msk [vmem:[%s1105 + $0xa0] sm:$0xf] %vm1111, %v1021
      %v1206 = vld [vmem:[%s1105 + $0xa4] sm:$0x1]
      %v1207 = vsel %vm1114, %v1022, %v1206
      %1208 = vst [vmem:[%s1105 + $0xa4] sm:$0x1] %v1207
      %v1209 = vld [vmem:[%s1105 + $0xa8] sm:$0xf]
      %v1210 = vsel %vm1107, %v1029, %v1209
      %1211 = vst [vmem:[%s1105 + $0xa8] sm:$0xf] %v1210
      %1212 = vst.msk [vmem:[%s1105 + $0xac] sm:$0xf] %vm1111, %v1038
      %v1213 = vld [vmem:[%s1105 + $0xb0] sm:$0x1]
      %v1214 = vsel %vm1114, %v1039, %v1213
      %1215 = vst [vmem:[%s1105 + $0xb0] sm:$0x1] %v1214
      %v1216 = vld [vmem:[%s1105 + $0xb4] sm:$0xf]
      %v1217 = vsel %vm1107, %v1046, %v1216
      %1218 = vst [vmem:[%s1105 + $0xb4] sm:$0xf] %v1217
      %1219 = vst.msk [vmem:[%s1105 + $0xb8] sm:$0xf] %vm1111, %v1055
      %v1220 = vld [vmem:[%s1105 + $0xbc] sm:$0x1]
      %v1221 = vsel %vm1114, %v1056, %v1220
      %1222 = vst [vmem:[%s1105 + $0xbc] sm:$0x1] %v1221
      %v1223 = vld [vmem:[#allocation2] sm:$0xf]
      %v1224 = vld [vmem:[#allocation2 + $0x4] sm:$0xf]
      %v1225 = vld [vmem:[#allocation2 + $0xc] sm:$0xf]
      %v1226 = vld [vmem:[#allocation2 + $0x10] sm:$0xf]
      %v1227 = vld [vmem:[#allocation2 + $0x18] sm:$0xf]
      %v1228 = vld [vmem:[#allocation2 + $0x1c] sm:$0xf]
      %v1229 = vld [vmem:[#allocation2 + $0x24] sm:$0xf]
      %v1230 = vld [vmem:[#allocation2 + $0x28] sm:$0xf]
      %v1231 = vld [vmem:[#allocation2 + $0x30] sm:$0xf]
      %v1232 = vld [vmem:[#allocation2 + $0x34] sm:$0xf]
      %v1233 = vld [vmem:[#allocation2 + $0x3c] sm:$0xf]
      %v1234 = vld [vmem:[#allocation2 + $0x40] sm:$0xf]
      %v1235 = vld [vmem:[#allocation2 + $0x48] sm:$0xf]
      %v1236 = vld [vmem:[#allocation2 + $0x4c] sm:$0xf]
      %v1237 = vld [vmem:[#allocation2 + $0x54] sm:$0xf]
      %v1238 = vld [vmem:[#allocation2 + $0x58] sm:$0xf]
      %v1239 = vld [vmem:[#allocation2 + $0x60] sm:$0xf]
      %v1240 = vld [vmem:[#allocation2 + $0x64] sm:$0xf]
      %v1241 = vld [vmem:[#allocation2 + $0x6c] sm:$0xf]
      %v1242 = vld [vmem:[#allocation2 + $0x70] sm:$0xf]
      %v1243 = vld [vmem:[#allocation2 + $0x78] sm:$0xf]
      %v1244 = vld [vmem:[#allocation2 + $0x7c] sm:$0xf]
      %v1245 = vld [vmem:[#allocation2 + $0x84] sm:$0xf]
      %v1246 = vld [vmem:[#allocation2 + $0x88] sm:$0xf]
      %v1247 = vld [vmem:[#allocation2 + $0x90] sm:$0xf]
      %v1248 = vld [vmem:[#allocation2 + $0x94] sm:$0xf]
      %v1249 = vld [vmem:[#allocation2 + $0x9c] sm:$0xf]
      %v1250 = vld [vmem:[#allocation2 + $0xa0] sm:$0xf]
      %v1251 = vld [vmem:[#allocation2 + $0xa8] sm:$0xf]
      %v1252 = vld [vmem:[#allocation2 + $0xac] sm:$0xf]
      %v1253 = vld [vmem:[#allocation2 + $0xb4] sm:$0xf]
      %v1254 = vld [vmem:[#allocation2 + $0xb8] sm:$0xf]
      %v1255 = vld [vmem:[%s1] sm:$0x3]
      %v1256 = vld [vmem:[#allocation2 + $0x8] sm:$0x1]
      %v1257 = vld [vmem:[#allocation2 + $0x14] sm:$0x1]
      %v1258 = vld [vmem:[#allocation2 + $0x20] sm:$0x1]
      %v1259 = vld [vmem:[#allocation2 + $0x2c] sm:$0x1]
      %v1260 = vld [vmem:[#allocation2 + $0x38] sm:$0x1]
      %v1261 = vld [vmem:[#allocation2 + $0x44] sm:$0x1]
      %v1262 = vld [vmem:[#allocation2 + $0x50] sm:$0x1]
      %v1263 = vld [vmem:[#allocation2 + $0x5c] sm:$0x1]
      %v1264 = vld [vmem:[#allocation2 + $0x68] sm:$0x1]
      %v1265 = vld [vmem:[#allocation2 + $0x74] sm:$0x1]
      %v1266 = vld [vmem:[#allocation2 + $0x80] sm:$0x1]
      %v1267 = vld [vmem:[#allocation2 + $0x8c] sm:$0x1]
      %v1268 = vld [vmem:[#allocation2 + $0x98] sm:$0x1]
      %v1269 = vld [vmem:[#allocation2 + $0xa4] sm:$0x1]
      %v1270 = vld [vmem:[#allocation2 + $0xb0] sm:$0x1]
      %v1271 = vld [vmem:[#allocation2 + $0xbc] sm:$0x1]
      %vm1272 = vsmask.f32 3328
      %vm1273 = vsmask.f32 7440
      %vm1274 = vmor %vm1272, %vm1273
      %v1276 = vshrl.u32 %v1223, 16
      %v1278 = vrot.slane %v1276, 4
      %v1279 = vshll.u32 %v1223, 16
      %v1281 = vrot.slane %v1279, 5
      %v1282 = vor.u32 %v1278, %v1281
      %v1283 = vrot.slane %v1282, 4
      %v1285 = vshll.u32 %v1224, 16
      %v1287 = vrot.slane %v1285, 5
      %v1288 = vsel %vm1274, %v1283, %v1287
      %v1289 = vshrl.u32 %v1224, 16
      %v1291 = vrot.slane %v1289, 4
      %v1292 = vor.u32 %v1291, %v1287
      %v1293 = vrot.slane %v1292, 4
      %v1295 = vshll.u32 %v1256, 16
      %v1297 = vrot.slane %v1295, 5
      %v1298 = vsel %vm1274, %v1293, %v1297
      %v1300 = vshrl.u32 %v1225, 16
      %v1302 = vrot.slane %v1300, 4
      %v1303 = vshll.u32 %v1225, 16
      %v1305 = vrot.slane %v1303, 5
      %v1306 = vor.u32 %v1302, %v1305
      %v1307 = vrot.slane %v1306, 4
      %v1309 = vshll.u32 %v1226, 16
      %v1311 = vrot.slane %v1309, 5
      %v1312 = vsel %vm1274, %v1307, %v1311
      %v1313 = vshrl.u32 %v1226, 16
      %v1315 = vrot.slane %v1313, 4
      %v1316 = vor.u32 %v1315, %v1311
      %v1317 = vrot.slane %v1316, 4
      %v1319 = vshll.u32 %v1257, 16
      %v1321 = vrot.slane %v1319, 5
      %v1322 = vsel %vm1274, %v1317, %v1321
      %v1324 = vshrl.u32 %v1227, 16
      %v1326 = vrot.slane %v1324, 4
      %v1327 = vshll.u32 %v1227, 16
      %v1329 = vrot.slane %v1327, 5
      %v1330 = vor.u32 %v1326, %v1329
      %v1331 = vrot.slane %v1330, 4
      %v1333 = vshll.u32 %v1228, 16
      %v1335 = vrot.slane %v1333, 5
      %v1336 = vsel %vm1274, %v1331, %v1335
      %v1337 = vshrl.u32 %v1228, 16
      %v1339 = vrot.slane %v1337, 4
      %v1340 = vor.u32 %v1339, %v1335
      %v1341 = vrot.slane %v1340, 4
      %v1343 = vshll.u32 %v1258, 16
      %v1345 = vrot.slane %v1343, 5
      %v1346 = vsel %vm1274, %v1341, %v1345
      %v1348 = vshrl.u32 %v1229, 16
      %v1350 = vrot.slane %v1348, 4
      %v1351 = vshll.u32 %v1229, 16
      %v1353 = vrot.slane %v1351, 5
      %v1354 = vor.u32 %v1350, %v1353
      %v1355 = vrot.slane %v1354, 4
      %v1357 = vshll.u32 %v1230, 16
      %v1359 = vrot.slane %v1357, 5
      %v1360 = vsel %vm1274, %v1355, %v1359
      %v1361 = vshrl.u32 %v1230, 16
      %v1363 = vrot.slane %v1361, 4
      %v1364 = vor.u32 %v1363, %v1359
      %v1365 = vrot.slane %v1364, 4
      %v1367 = vshll.u32 %v1259, 16
      %v1369 = vrot.slane %v1367, 5
      %v1370 = vsel %vm1274, %v1365, %v1369
      %v1372 = vshrl.u32 %v1231, 16
      %v1374 = vrot.slane %v1372, 4
      %v1375 = vshll.u32 %v1231, 16
      %v1377 = vrot.slane %v1375, 5
      %v1378 = vor.u32 %v1374, %v1377
      %v1379 = vrot.slane %v1378, 4
      %v1381 = vshll.u32 %v1232, 16
      %v1383 = vrot.slane %v1381, 5
      %v1384 = vsel %vm1274, %v1379, %v1383
      %v1385 = vshrl.u32 %v1232, 16
      %v1387 = vrot.slane %v1385, 4
      %v1388 = vor.u32 %v1387, %v1383
      %v1389 = vrot.slane %v1388, 4
      %v1391 = vshll.u32 %v1260, 16
      %v1393 = vrot.slane %v1391, 5
      %v1394 = vsel %vm1274, %v1389, %v1393
      %v1396 = vshrl.u32 %v1233, 16
      %v1398 = vrot.slane %v1396, 4
      %v1399 = vshll.u32 %v1233, 16
      %v1401 = vrot.slane %v1399, 5
      %v1402 = vor.u32 %v1398, %v1401
      %v1403 = vrot.slane %v1402, 4
      %v1405 = vshll.u32 %v1234, 16
      %v1407 = vrot.slane %v1405, 5
      %v1408 = vsel %vm1274, %v1403, %v1407
      %v1409 = vshrl.u32 %v1234, 16
      %v1411 = vrot.slane %v1409, 4
      %v1412 = vor.u32 %v1411, %v1407
      %v1413 = vrot.slane %v1412, 4
      %v1415 = vshll.u32 %v1261, 16
      %v1417 = vrot.slane %v1415, 5
      %v1418 = vsel %vm1274, %v1413, %v1417
      %v1420 = vshrl.u32 %v1235, 16
      %v1422 = vrot.slane %v1420, 4
      %v1423 = vshll.u32 %v1235, 16
      %v1425 = vrot.slane %v1423, 5
      %v1426 = vor.u32 %v1422, %v1425
      %v1427 = vrot.slane %v1426, 4
      %v1429 = vshll.u32 %v1236, 16
      %v1431 = vrot.slane %v1429, 5
      %v1432 = vsel %vm1274, %v1427, %v1431
      %v1433 = vshrl.u32 %v1236, 16
      %v1435 = vrot.slane %v1433, 4
      %v1436 = vor.u32 %v1435, %v1431
      %v1437 = vrot.slane %v1436, 4
      %v1439 = vshll.u32 %v1262, 16
      %v1441 = vrot.slane %v1439, 5
      %v1442 = vsel %vm1274, %v1437, %v1441
      %v1444 = vshrl.u32 %v1237, 16
      %v1446 = vrot.slane %v1444, 4
      %v1447 = vshll.u32 %v1237, 16
      %v1449 = vrot.slane %v1447, 5
      %v1450 = vor.u32 %v1446, %v1449
      %v1451 = vrot.slane %v1450, 4
      %v1453 = vshll.u32 %v1238, 16
      %v1455 = vrot.slane %v1453, 5
      %v1456 = vsel %vm1274, %v1451, %v1455
      %v1457 = vshrl.u32 %v1238, 16
      %v1459 = vrot.slane %v1457, 4
      %v1460 = vor.u32 %v1459, %v1455
      %v1461 = vrot.slane %v1460, 4
      %v1463 = vshll.u32 %v1263, 16
      %v1465 = vrot.slane %v1463, 5
      %v1466 = vsel %vm1274, %v1461, %v1465
      %v1468 = vshrl.u32 %v1239, 16
      %v1470 = vrot.slane %v1468, 4
      %v1471 = vshll.u32 %v1239, 16
      %v1473 = vrot.slane %v1471, 5
      %v1474 = vor.u32 %v1470, %v1473
      %v1475 = vrot.slane %v1474, 4
      %v1477 = vshll.u32 %v1240, 16
      %v1479 = vrot.slane %v1477, 5
      %v1480 = vsel %vm1274, %v1475, %v1479
      %v1481 = vshrl.u32 %v1240, 16
      %v1483 = vrot.slane %v1481, 4
      %v1484 = vor.u32 %v1483, %v1479
      %v1485 = vrot.slane %v1484, 4
      %v1487 = vshll.u32 %v1264, 16
      %v1489 = vrot.slane %v1487, 5
      %v1490 = vsel %vm1274, %v1485, %v1489
      %v1492 = vshrl.u32 %v1241, 16
      %v1494 = vrot.slane %v1492, 4
      %v1495 = vshll.u32 %v1241, 16
      %v1497 = vrot.slane %v1495, 5
      %v1498 = vor.u32 %v1494, %v1497
      %v1499 = vrot.slane %v1498, 4
      %v1501 = vshll.u32 %v1242, 16
      %v1503 = vrot.slane %v1501, 5
      %v1504 = vsel %vm1274, %v1499, %v1503
      %v1505 = vshrl.u32 %v1242, 16
      %v1507 = vrot.slane %v1505, 4
      %v1508 = vor.u32 %v1507, %v1503
      %v1509 = vrot.slane %v1508, 4
      %v1511 = vshll.u32 %v1265, 16
      %v1513 = vrot.slane %v1511, 5
      %v1514 = vsel %vm1274, %v1509, %v1513
      %v1516 = vshrl.u32 %v1243, 16
      %v1518 = vrot.slane %v1516, 4
      %v1519 = vshll.u32 %v1243, 16
      %v1521 = vrot.slane %v1519, 5
      %v1522 = vor.u32 %v1518, %v1521
      %v1523 = vrot.slane %v1522, 4
      %v1525 = vshll.u32 %v1244, 16
      %v1527 = vrot.slane %v1525, 5
      %v1528 = vsel %vm1274, %v1523, %v1527
      %v1529 = vshrl.u32 %v1244, 16
      %v1531 = vrot.slane %v1529, 4
      %v1532 = vor.u32 %v1531, %v1527
      %v1533 = vrot.slane %v1532, 4
      %v1535 = vshll.u32 %v1266, 16
      %v1537 = vrot.slane %v1535, 5
      %v1538 = vsel %vm1274, %v1533, %v1537
      %v1540 = vshrl.u32 %v1245, 16
      %v1542 = vrot.slane %v1540, 4
      %v1543 = vshll.u32 %v1245, 16
      %v1545 = vrot.slane %v1543, 5
      %v1546 = vor.u32 %v1542, %v1545
      %v1547 = vrot.slane %v1546, 4
      %v1549 = vshll.u32 %v1246, 16
      %v1551 = vrot.slane %v1549, 5
      %v1552 = vsel %vm1274, %v1547, %v1551
      %v1553 = vshrl.u32 %v1246, 16
      %v1555 = vrot.slane %v1553, 4
      %v1556 = vor.u32 %v1555, %v1551
      %v1557 = vrot.slane %v1556, 4
      %v1559 = vshll.u32 %v1267, 16
      %v1561 = vrot.slane %v1559, 5
      %v1562 = vsel %vm1274, %v1557, %v1561
      %v1564 = vshrl.u32 %v1247, 16
      %v1566 = vrot.slane %v1564, 4
      %v1567 = vshll.u32 %v1247, 16
      %v1569 = vrot.slane %v1567, 5
      %v1570 = vor.u32 %v1566, %v1569
      %v1571 = vrot.slane %v1570, 4
      %v1573 = vshll.u32 %v1248, 16
      %v1575 = vrot.slane %v1573, 5
      %v1576 = vsel %vm1274, %v1571, %v1575
      %v1577 = vshrl.u32 %v1248, 16
      %v1579 = vrot.slane %v1577, 4
      %v1580 = vor.u32 %v1579, %v1575
      %v1581 = vrot.slane %v1580, 4
      %v1583 = vshll.u32 %v1268, 16
      %v1585 = vrot.slane %v1583, 5
      %v1586 = vsel %vm1274, %v1581, %v1585
      %v1588 = vshrl.u32 %v1249, 16
      %v1590 = vrot.slane %v1588, 4
      %v1591 = vshll.u32 %v1249, 16
      %v1593 = vrot.slane %v1591, 5
      %v1594 = vor.u32 %v1590, %v1593
      %v1595 = vrot.slane %v1594, 4
      %v1597 = vshll.u32 %v1250, 16
      %v1599 = vrot.slane %v1597, 5
      %v1600 = vsel %vm1274, %v1595, %v1599
      %v1601 = vshrl.u32 %v1250, 16
      %v1603 = vrot.slane %v1601, 4
      %v1604 = vor.u32 %v1603, %v1599
      %v1605 = vrot.slane %v1604, 4
      %v1607 = vshll.u32 %v1269, 16
      %v1609 = vrot.slane %v1607, 5
      %v1610 = vsel %vm1274, %v1605, %v1609
      %v1612 = vshrl.u32 %v1251, 16
      %v1614 = vrot.slane %v1612, 4
      %v1615 = vshll.u32 %v1251, 16
      %v1617 = vrot.slane %v1615, 5
      %v1618 = vor.u32 %v1614, %v1617
      %v1619 = vrot.slane %v1618, 4
      %v1621 = vshll.u32 %v1252, 16
      %v1623 = vrot.slane %v1621, 5
      %v1624 = vsel %vm1274, %v1619, %v1623
      %v1625 = vshrl.u32 %v1252, 16
      %v1627 = vrot.slane %v1625, 4
      %v1628 = vor.u32 %v1627, %v1623
      %v1629 = vrot.slane %v1628, 4
      %v1631 = vshll.u32 %v1270, 16
      %v1633 = vrot.slane %v1631, 5
      %v1634 = vsel %vm1274, %v1629, %v1633
      %v1636 = vshrl.u32 %v1253, 16
      %v1638 = vrot.slane %v1636, 4
      %v1639 = vshll.u32 %v1253, 16
      %v1641 = vrot.slane %v1639, 5
      %v1642 = vor.u32 %v1638, %v1641
      %v1643 = vrot.slane %v1642, 4
      %v1645 = vshll.u32 %v1254, 16
      %v1647 = vrot.slane %v1645, 5
      %v1648 = vsel %vm1274, %v1643, %v1647
      %v1649 = vshrl.u32 %v1254, 16
      %v1651 = vrot.slane %v1649, 4
      %v1652 = vor.u32 %v1651, %v1647
      %v1653 = vrot.slane %v1652, 4
      %v1655 = vshll.u32 %v1271, 16
      %v1657 = vrot.slane %v1655, 5
      %v1658 = vsel %vm1274, %v1653, %v1657
      %s1659 = scalar_lea.vmem %s1, 2
      %v1660 = vld [vmem:[%s1659] sm:$0x3]
      %v1661 = vunpack.c.l.b16 %v1288
      %v1662 = vunpack.c.l.b16 %v1298
      %v1663 = vunpack.c.l.b16 %v1312
      %v1664 = vunpack.c.l.b16 %v1322
      %v1665 = vunpack.c.l.b16 %v1336
      %v1666 = vunpack.c.l.b16 %v1346
      %v1667 = vunpack.c.l.b16 %v1360
      %v1668 = vunpack.c.l.b16 %v1370
      %v1669 = vunpack.c.l.b16 %v1384
      %v1670 = vunpack.c.l.b16 %v1394
      %v1671 = vunpack.c.l.b16 %v1408
      %v1672 = vunpack.c.l.b16 %v1418
      %v1673 = vunpack.c.l.b16 %v1432
      %v1674 = vunpack.c.l.b16 %v1442
      %v1675 = vunpack.c.l.b16 %v1456
      %v1676 = vunpack.c.l.b16 %v1466
      %v1677 = vunpack.c.l.b16 %v1480
      %v1678 = vunpack.c.l.b16 %v1490
      %v1679 = vunpack.c.l.b16 %v1504
      %v1680 = vunpack.c.l.b16 %v1514
      %v1681 = vunpack.c.l.b16 %v1528
      %v1682 = vunpack.c.l.b16 %v1538
      %v1683 = vunpack.c.l.b16 %v1552
      %v1684 = vunpack.c.l.b16 %v1562
      %v1685 = vunpack.c.l.b16 %v1576
      %v1686 = vunpack.c.l.b16 %v1586
      %v1687 = vunpack.c.l.b16 %v1600
      %v1688 = vunpack.c.l.b16 %v1610
      %v1689 = vunpack.c.l.b16 %v1624
      %v1690 = vunpack.c.l.b16 %v1634
      %v1691 = vunpack.c.l.b16 %v1648
      %v1692 = vunpack.c.l.b16 %v1658
      %v1693 = vpack.c.b16 %v1662, %v1661
      %v1694 = vpack.c.b16 %v1664, %v1663
      %v1695 = vpack.c.b16 %v1666, %v1665
      %v1696 = vpack.c.b16 %v1668, %v1667
      %v1697 = vpack.c.b16 %v1670, %v1669
      %v1698 = vpack.c.b16 %v1672, %v1671
      %v1699 = vpack.c.b16 %v1674, %v1673
      %v1700 = vpack.c.b16 %v1676, %v1675
      %v1701 = vpack.c.b16 %v1678, %v1677
      %v1702 = vpack.c.b16 %v1680, %v1679
      %v1703 = vpack.c.b16 %v1682, %v1681
      %v1704 = vpack.c.b16 %v1684, %v1683
      %v1705 = vpack.c.b16 %v1686, %v1685
      %v1706 = vpack.c.b16 %v1688, %v1687
      %v1707 = vpack.c.b16 %v1690, %v1689
      %v1708 = vpack.c.b16 %v1692, %v1691
      %v1710 = vsel %vm384, %v1693, 0
      %v1713 = vsel %vm384, %v1694, 0
      %v1716 = vsel %vm384, %v1695, 0
      %v1719 = vsel %vm384, %v1696, 0
      %v1722 = vsel %vm384, %v1697, 0
      %v1725 = vsel %vm384, %v1698, 0
      %v1728 = vsel %vm384, %v1699, 0
      %v1731 = vsel %vm384, %v1700, 0
      %v1734 = vsel %vm384, %v1701, 0
      %v1737 = vsel %vm384, %v1702, 0
      %v1740 = vsel %vm384, %v1703, 0
      %v1743 = vsel %vm384, %v1704, 0
      %v1746 = vsel %vm384, %v1705, 0
      %v1749 = vsel %vm384, %v1706, 0
      %v1752 = vsel %vm384, %v1707, 0
      %v1755 = vsel %vm384, %v1708, 0
      %vm1757 = vcmask 1041408
      %v1759 = vsel %vm1757, %v1660, 0
      %1761 = vmatprep.subr.bf16.mxu0 0
      %1762 = vmatpush1.bf16.msra.mxu0 %v1759
      %1763 = vmatprep.subr.bf16.mxu0 0
      %1764 = vmatpush1.bf16.msra.mxu0 0
      %1765 = vmatprep.subr.bf16.mxu0 0
      %1766 = vmatpush1.bf16.msra.mxu0 0
      %1767 = vmatprep.subr.bf16.mxu0 0
      %1768 = vmatpush1.bf16.msra.mxu0 0
      %1769 = vmatprep.subr.bf16.mxu0 0
      %1770 = vmatpush1.bf16.msra.mxu0 0
      %1771 = vmatprep.subr.bf16.mxu0 0
      %1772 = vmatpush1.bf16.msra.mxu0 0
      %1773 = vmatprep.subr.bf16.mxu0 0
      %1774 = vmatpush1.bf16.msra.mxu0 0
      %1775 = vmatprep.subr.bf16.mxu0 0
      %1776 = vmatpush1.bf16.msra.mxu0 0
      %1777 = vmatprep.subr.bf16.mxu0 0
      %1778 = vmatpush1.bf16.msra.mxu0 0
      %1779 = vmatprep.subr.bf16.mxu0 0
      %1780 = vmatpush1.bf16.msra.mxu0 0
      %1781 = vmatprep.subr.bf16.mxu0 0
      %1782 = vmatpush1.bf16.msra.mxu0 0
      %1783 = vmatprep.subr.bf16.mxu0 0
      %1784 = vmatpush1.bf16.msra.mxu0 0
      %1785 = vmatprep.subr.bf16.mxu0 0
      %1786 = vmatpush1.bf16.msra.mxu0 0
      %1787 = vmatprep.subr.bf16.mxu0 0
      %1788 = vmatpush1.bf16.msra.mxu0 0
      %1789 = vmatprep.subr.bf16.mxu0 0
      %1790 = vmatpush1.bf16.msra.mxu0 0
      %1791 = vmatprep.subr.bf16.mxu0 0
      %1792 = vmatpush1.bf16.msra.mxu0 0
      %1793 = vmatprep.mubr.bf16.mxu0 0
      %1794 = vmatmul.mubr.bf16.gmra.mrb[0].mxu0 %v1710
      %v1795 = vpop.f32.mrb[0].mxu0
      %v1796 = vadd.f32 0.0, %v1795
      %v1797 = vpop.f32.mrb[0].mxu0
      %v1798 = vpop.f32.mrb[0].mxu0
      %v1799 = vadd.f32 0.0, %v1798
      %v1800 = vpop.f32.mrb[0].mxu0
      %1801 = vmatprep.mubr.bf16.mxu0 0
      %1802 = vmatmul.mubr.bf16.gmra.mrb[0].mxu0 %v1713
      %v1803 = vpop.f32.mrb[0].mxu0
      %v1804 = vadd.f32 0.0, %v1803
      %v1805 = vpop.f32.mrb[0].mxu0
      %v1806 = vpop.f32.mrb[0].mxu0
      %v1807 = vadd.f32 0.0, %v1806
      %v1808 = vpop.f32.mrb[0].mxu0
      %1809 = vmatprep.mubr.bf16.mxu0 0
      %1810 = vmatmul.mubr.bf16.gmra.mrb[0].mxu0 %v1716
      %v1811 = vpop.f32.mrb[0].mxu0
      %v1812 = vadd.f32 0.0, %v1811
      %v1813 = vpop.f32.mrb[0].mxu0
      %v1814 = vpop.f32.mrb[0].mxu0
      %v1815 = vadd.f32 0.0, %v1814
      %v1816 = vpop.f32.mrb[0].mxu0
      %1817 = vmatprep.mubr.bf16.mxu0 0
      %1818 = vmatmul.mubr.bf16.gmra.mrb[0].mxu0 %v1719
      %v1819 = vpop.f32.mrb[0].mxu0
      %v1820 = vadd.f32 0.0, %v1819
      %v1821 = vpop.f32.mrb[0].mxu0
      %v1822 = vpop.f32.mrb[0].mxu0
      %v1823 = vadd.f32 0.0, %v1822
      %v1824 = vpop.f32.mrb[0].mxu0
      %1825 = vmatprep.mubr.bf16.mxu0 0
      %1826 = vmatmul.mubr.bf16.gmra.mrb[0].mxu0 %v1722
      %v1827 = vpop.f32.mrb[0].mxu0
      %v1828 = vadd.f32 0.0, %v1827
      %v1829 = vpop.f32.mrb[0].mxu0
      %v1830 = vpop.f32.mrb[0].mxu0
      %v1831 = vadd.f32 0.0, %v1830
      %v1832 = vpop.f32.mrb[0].mxu0
      %1833 = vmatprep.mubr.bf16.mxu0 0
      %1834 = vmatmul.mubr.bf16.gmra.mrb[0].mxu0 %v1725
      %v1835 = vpop.f32.mrb[0].mxu0
      %v1836 = vadd.f32 0.0, %v1835
      %v1837 = vpop.f32.mrb[0].mxu0
      %v1838 = vpop.f32.mrb[0].mxu0
      %v1839 = vadd.f32 0.0, %v1838
      %v1840 = vpop.f32.mrb[0].mxu0
      %1841 = vmatprep.mubr.bf16.mxu0 0
      %1842 = vmatmul.mubr.bf16.gmra.mrb[0].mxu0 %v1728
      %v1843 = vpop.f32.mrb[0].mxu0
      %v1844 = vadd.f32 0.0, %v1843
      %v1845 = vpop.f32.mrb[0].mxu0
      %v1846 = vpop.f32.mrb[0].mxu0
      %v1847 = vadd.f32 0.0, %v1846
      %v1848 = vpop.f32.mrb[0].mxu0
      %1849 = vmatprep.mubr.bf16.mxu0 0
      %1850 = vmatmul.mubr.bf16.gmra.mrb[0].mxu0 %v1731
      %v1851 = vpop.f32.mrb[0].mxu0
      %v1852 = vadd.f32 0.0, %v1851
      %v1853 = vpop.f32.mrb[0].mxu0
      %v1854 = vpop.f32.mrb[0].mxu0
      %v1855 = vadd.f32 0.0, %v1854
      %v1856 = vpop.f32.mrb[0].mxu0
      %1857 = vmatprep.mubr.bf16.mxu0 0
      %1858 = vmatmul.mubr.bf16.gmra.mrb[0].mxu0 %v1734
      %v1859 = vpop.f32.mrb[0].mxu0
      %v1860 = vadd.f32 0.0, %v1859
      %v1861 = vpop.f32.mrb[0].mxu0
      %v1862 = vpop.f32.mrb[0].mxu0
      %v1863 = vadd.f32 0.0, %v1862
      %v1864 = vpop.f32.mrb[0].mxu0
      %1865 = vmatprep.mubr.bf16.mxu0 0
      %1866 = vmatmul.mubr.bf16.gmra.mrb[0].mxu0 %v1737
      %v1867 = vpop.f32.mrb[0].mxu0
      %v1868 = vadd.f32 0.0, %v1867
      %v1869 = vpop.f32.mrb[0].mxu0
      %v1870 = vpop.f32.mrb[0].mxu0
      %v1871 = vadd.f32 0.0, %v1870
      %v1872 = vpop.f32.mrb[0].mxu0
      %1873 = vmatprep.mubr.bf16.mxu0 0
      %1874 = vmatmul.mubr.bf16.gmra.mrb[0].mxu0 %v1740
      %v1875 = vpop.f32.mrb[0].mxu0
      %v1876 = vadd.f32 0.0, %v1875
      %v1877 = vpop.f32.mrb[0].mxu0
      %v1878 = vpop.f32.mrb[0].mxu0
      %v1879 = vadd.f32 0.0, %v1878
      %v1880 = vpop.f32.mrb[0].mxu0
      %1881 = vmatprep.mubr.bf16.mxu0 0
      %1882 = vmatmul.mubr.bf16.gmra.mrb[0].mxu0 %v1743
      %v1883 = vpop.f32.mrb[0].mxu0
      %v1884 = vadd.f32 0.0, %v1883
      %v1885 = vpop.f32.mrb[0].mxu0
      %v1886 = vpop.f32.mrb[0].mxu0
      %v1887 = vadd.f32 0.0, %v1886
      %v1888 = vpop.f32.mrb[0].mxu0
      %1889 = vmatprep.mubr.bf16.mxu0 0
      %1890 = vmatmul.mubr.bf16.gmra.mrb[0].mxu0 %v1746
      %v1891 = vpop.f32.mrb[0].mxu0
      %v1892 = vadd.f32 0.0, %v1891
      %v1893 = vpop.f32.mrb[0].mxu0
      %v1894 = vpop.f32.mrb[0].mxu0
      %v1895 = vadd.f32 0.0, %v1894
      %v1896 = vpop.f32.mrb[0].mxu0
      %1897 = vmatprep.mubr.bf16.mxu0 0
      %1898 = vmatmul.mubr.bf16.gmra.mrb[0].mxu0 %v1749
      %v1899 = vpop.f32.mrb[0].mxu0
      %v1900 = vadd.f32 0.0, %v1899
      %v1901 = vpop.f32.mrb[0].mxu0
      %v1902 = vpop.f32.mrb[0].mxu0
      %v1903 = vadd.f32 0.0, %v1902
      %v1904 = vpop.f32.mrb[0].mxu0
      %1905 = vmatprep.mubr.bf16.mxu0 0
      %1906 = vmatmul.mubr.bf16.gmra.mrb[0].mxu0 %v1752
      %v1907 = vpop.f32.mrb[0].mxu0
      %v1908 = vadd.f32 0.0, %v1907
      %v1909 = vpop.f32.mrb[0].mxu0
      %v1910 = vpop.f32.mrb[0].mxu0
      %v1911 = vadd.f32 0.0, %v1910
      %v1912 = vpop.f32.mrb[0].mxu0
      %1913 = vmatprep.mubr.bf16.mxu0 0
      %1914 = vmatmul.mubr.bf16.gmra.mrb[0].mxu0 %v1755
      %v1915 = vpop.f32.mrb[0].mxu0
      %v1916 = vadd.f32 0.0, %v1915
      %v1917 = vpop.f32.mrb[0].mxu0
      %v1918 = vpop.f32.mrb[0].mxu0
      %v1919 = vadd.f32 0.0, %v1918
      %v1920 = vpop.f32.mrb[0].mxu0
      %1921 = vdwg.mxu0
      %v1954 = vunpack.c.l.b16 %v1223
      %v1955 = vunpack.c.l.b16 %v1224
      %v1956 = vunpack.c.l.b16 %v1225
      %v1957 = vunpack.c.l.b16 %v1226
      %v1958 = vunpack.c.l.b16 %v1227
      %v1959 = vunpack.c.l.b16 %v1228
      %v1960 = vunpack.c.l.b16 %v1229
      %v1961 = vunpack.c.l.b16 %v1230
      %v1962 = vunpack.c.l.b16 %v1231
      %v1963 = vunpack.c.l.b16 %v1232
      %v1964 = vunpack.c.l.b16 %v1233
      %v1965 = vunpack.c.l.b16 %v1234
      %v1966 = vunpack.c.l.b16 %v1235
      %v1967 = vunpack.c.l.b16 %v1236
      %v1968 = vunpack.c.l.b16 %v1237
      %v1969 = vunpack.c.l.b16 %v1238
      %v1970 = vunpack.c.l.b16 %v1239
      %v1971 = vunpack.c.l.b16 %v1240
      %v1972 = vunpack.c.l.b16 %v1241
      %v1973 = vunpack.c.l.b16 %v1242
      %v1974 = vunpack.c.l.b16 %v1243
      %v1975 = vunpack.c.l.b16 %v1244
      %v1976 = vunpack.c.l.b16 %v1245
      %v1977 = vunpack.c.l.b16 %v1246
      %v1978 = vunpack.c.l.b16 %v1247
      %v1979 = vunpack.c.l.b16 %v1248
      %v1980 = vunpack.c.l.b16 %v1249
      %v1981 = vunpack.c.l.b16 %v1250
      %v1982 = vunpack.c.l.b16 %v1251
      %v1983 = vunpack.c.l.b16 %v1252
      %v1984 = vunpack.c.l.b16 %v1253
      %v1985 = vunpack.c.l.b16 %v1254
      %v1986 = vpack.c.b16 %v1955, %v1954
      %v1987 = vpack.c.b16 %v1957, %v1956
      %v1988 = vpack.c.b16 %v1959, %v1958
      %v1989 = vpack.c.b16 %v1961, %v1960
      %v1990 = vpack.c.b16 %v1963, %v1962
      %v1991 = vpack.c.b16 %v1965, %v1964
      %v1992 = vpack.c.b16 %v1967, %v1966
      %v1993 = vpack.c.b16 %v1969, %v1968
      %v1994 = vpack.c.b16 %v1971, %v1970
      %v1995 = vpack.c.b16 %v1973, %v1972
      %v1996 = vpack.c.b16 %v1975, %v1974
      %v1997 = vpack.c.b16 %v1977, %v1976
      %v1998 = vpack.c.b16 %v1979, %v1978
      %v1999 = vpack.c.b16 %v1981, %v1980
      %v2000 = vpack.c.b16 %v1983, %v1982
      %v2001 = vpack.c.b16 %v1985, %v1984
      %v2003 = vsel %vm384, %v1986, 0
      %v2006 = vsel %vm384, %v1987, 0
      %v2009 = vsel %vm384, %v1988, 0
      %v2012 = vsel %vm384, %v1989, 0
      %v2015 = vsel %vm384, %v1990, 0
      %v2018 = vsel %vm384, %v1991, 0
      %v2021 = vsel %vm384, %v1992, 0
      %v2024 = vsel %vm384, %v1993, 0
      %v2027 = vsel %vm384, %v1994, 0
      %v2030 = vsel %vm384, %v1995, 0
      %v2033 = vsel %vm384, %v1996, 0
      %v2036 = vsel %vm384, %v1997, 0
      %v2039 = vsel %vm384, %v1998, 0
      %v2042 = vsel %vm384, %v1999, 0
      %v2045 = vsel %vm384, %v2000, 0
      %v2048 = vsel %vm384, %v2001, 0
      %v2051 = vsel %vm1757, %v1255, 0
      %2053 = vmatprep.subr.bf16.mxu0 0
      %2054 = vmatpush1.bf16.msra.mxu0 %v2051
      %2055 = vmatprep.subr.bf16.mxu0 0
      %2056 = vmatpush1.bf16.msra.mxu0 0
      %2057 = vmatprep.subr.bf16.mxu0 0
      %2058 = vmatpush1.bf16.msra.mxu0 0
      %2059 = vmatprep.subr.bf16.mxu0 0
      %2060 = vmatpush1.bf16.msra.mxu0 0
      %2061 = vmatprep.subr.bf16.mxu0 0
      %2062 = vmatpush1.bf16.msra.mxu0 0
      %2063 = vmatprep.subr.bf16.mxu0 0
      %2064 = vmatpush1.bf16.msra.mxu0 0
      %2065 = vmatprep.subr.bf16.mxu0 0
      %2066 = vmatpush1.bf16.msra.mxu0 0
      %2067 = vmatprep.subr.bf16.mxu0 0
      %2068 = vmatpush1.bf16.msra.mxu0 0
      %2069 = vmatprep.subr.bf16.mxu0 0
      %2070 = vmatpush1.bf16.msra.mxu0 0
      %2071 = vmatprep.subr.bf16.mxu0 0
      %2072 = vmatpush1.bf16.msra.mxu0 0
      %2073 = vmatprep.subr.bf16.mxu0 0
      %2074 = vmatpush1.bf16.msra.mxu0 0
      %2075 = vmatprep.subr.bf16.mxu0 0
      %2076 = vmatpush1.bf16.msra.mxu0 0
      %2077 = vmatprep.subr.bf16.mxu0 0
      %2078 = vmatpush1.bf16.msra.mxu0 0
      %2079 = vmatprep.subr.bf16.mxu0 0
      %2080 = vmatpush1.bf16.msra.mxu0 0
      %2081 = vmatprep.subr.bf16.mxu0 0
      %2082 = vmatpush1.bf16.msra.mxu0 0
      %2083 = vmatprep.subr.bf16.mxu0 0
      %2084 = vmatpush1.bf16.msra.mxu0 0
      %2085 = vmatprep.mubr.bf16.mxu0 0
      %2086 = vmatmul.mubr.bf16.gmra.mrb[0].mxu0 %v2003
      %v2087 = vpop.f32.mrb[0].mxu0
      %v2088 = vadd.f32 %v1796, %v2087
      %v2089 = vpop.f32.mrb[0].mxu0
      %v2090 = vpop.f32.mrb[0].mxu0
      %v2091 = vadd.f32 %v1799, %v2090
      %v2092 = vpop.f32.mrb[0].mxu0
      %2093 = vmatprep.mubr.bf16.mxu0 0
      %2094 = vmatmul.mubr.bf16.gmra.mrb[0].mxu0 %v2006
      %v2095 = vpop.f32.mrb[0].mxu0
      %v2096 = vadd.f32 %v1804, %v2095
      %v2097 = vpop.f32.mrb[0].mxu0
      %v2098 = vpop.f32.mrb[0].mxu0
      %v2099 = vadd.f32 %v1807, %v2098
      %v2100 = vpop.f32.mrb[0].mxu0
      %2101 = vmatprep.mubr.bf16.mxu0 0
      %2102 = vmatmul.mubr.bf16.gmra.mrb[0].mxu0 %v2009
      %v2103 = vpop.f32.mrb[0].mxu0
      %v2104 = vadd.f32 %v1812, %v2103
      %v2105 = vpop.f32.mrb[0].mxu0
      %v2106 = vpop.f32.mrb[0].mxu0
      %v2107 = vadd.f32 %v1815, %v2106
      %v2108 = vpop.f32.mrb[0].mxu0
      %2109 = vmatprep.mubr.bf16.mxu0 0
      %2110 = vmatmul.mubr.bf16.gmra.mrb[0].mxu0 %v2012
      %v2111 = vpop.f32.mrb[0].mxu0
      %v2112 = vadd.f32 %v1820, %v2111
      %v2113 = vpop.f32.mrb[0].mxu0
      %v2114 = vpop.f32.mrb[0].mxu0
      %v2115 = vadd.f32 %v1823, %v2114
      %v2116 = vpop.f32.mrb[0].mxu0
      %2117 = vmatprep.mubr.bf16.mxu0 0
      %2118 = vmatmul.mubr.bf16.gmra.mrb[0].mxu0 %v2015
      %v2119 = vpop.f32.mrb[0].mxu0
      %v2120 = vadd.f32 %v1828, %v2119
      %v2121 = vpop.f32.mrb[0].mxu0
      %v2122 = vpop.f32.mrb[0].mxu0
      %v2123 = vadd.f32 %v1831, %v2122
      %v2124 = vpop.f32.mrb[0].mxu0
      %2125 = vmatprep.mubr.bf16.mxu0 0
      %2126 = vmatmul.mubr.bf16.gmra.mrb[0].mxu0 %v2018
      %v2127 = vpop.f32.mrb[0].mxu0
      %v2128 = vadd.f32 %v1836, %v2127
      %v2129 = vpop.f32.mrb[0].mxu0
      %v2130 = vpop.f32.mrb[0].mxu0
      %v2131 = vadd.f32 %v1839, %v2130
      %v2132 = vpop.f32.mrb[0].mxu0
      %2133 = vmatprep.mubr.bf16.mxu0 0
      %2134 = vmatmul.mubr.bf16.gmra.mrb[0].mxu0 %v2021
      %v2135 = vpop.f32.mrb[0].mxu0
      %v2136 = vadd.f32 %v1844, %v2135
      %v2137 = vpop.f32.mrb[0].mxu0
      %v2138 = vpop.f32.mrb[0].mxu0
      %v2139 = vadd.f32 %v1847, %v2138
      %v2140 = vpop.f32.mrb[0].mxu0
      %2141 = vmatprep.mubr.bf16.mxu0 0
      %2142 = vmatmul.mubr.bf16.gmra.mrb[0].mxu0 %v2024
      %v2143 = vpop.f32.mrb[0].mxu0
      %v2144 = vadd.f32 %v1852, %v2143
      %v2145 = vpop.f32.mrb[0].mxu0
      %v2146 = vpop.f32.mrb[0].mxu0
      %v2147 = vadd.f32 %v1855, %v2146
      %v2148 = vpop.f32.mrb[0].mxu0
      %2149 = vmatprep.mubr.bf16.mxu0 0
      %2150 = vmatmul.mubr.bf16.gmra.mrb[0].mxu0 %v2027
      %v2151 = vpop.f32.mrb[0].mxu0
      %v2152 = vadd.f32 %v1860, %v2151
      %v2153 = vpop.f32.mrb[0].mxu0
      %v2154 = vpop.f32.mrb[0].mxu0
      %v2155 = vadd.f32 %v1863, %v2154
      %v2156 = vpop.f32.mrb[0].mxu0
      %2157 = vmatprep.mubr.bf16.mxu0 0
      %2158 = vmatmul.mubr.bf16.gmra.mrb[0].mxu0 %v2030
      %v2159 = vpop.f32.mrb[0].mxu0
      %v2160 = vadd.f32 %v1868, %v2159
      %v2161 = vpop.f32.mrb[0].mxu0
      %v2162 = vpop.f32.mrb[0].mxu0
      %v2163 = vadd.f32 %v1871, %v2162
      %v2164 = vpop.f32.mrb[0].mxu0
      %2165 = vmatprep.mubr.bf16.mxu0 0
      %2166 = vmatmul.mubr.bf16.gmra.mrb[0].mxu0 %v2033
      %v2167 = vpop.f32.mrb[0].mxu0
      %v2168 = vadd.f32 %v1876, %v2167
      %v2169 = vpop.f32.mrb[0].mxu0
      %v2170 = vpop.f32.mrb[0].mxu0
      %v2171 = vadd.f32 %v1879, %v2170
      %v2172 = vpop.f32.mrb[0].mxu0
      %2173 = vmatprep.mubr.bf16.mxu0 0
      %2174 = vmatmul.mubr.bf16.gmra.mrb[0].mxu0 %v2036
      %v2175 = vpop.f32.mrb[0].mxu0
      %v2176 = vadd.f32 %v1884, %v2175
      %v2177 = vpop.f32.mrb[0].mxu0
      %v2178 = vpop.f32.mrb[0].mxu0
      %v2179 = vadd.f32 %v1887, %v2178
      %v2180 = vpop.f32.mrb[0].mxu0
      %2181 = vmatprep.mubr.bf16.mxu0 0
      %2182 = vmatmul.mubr.bf16.gmra.mrb[0].mxu0 %v2039
      %v2183 = vpop.f32.mrb[0].mxu0
      %v2184 = vadd.f32 %v1892, %v2183
      %v2185 = vpop.f32.mrb[0].mxu0
      %v2186 = vpop.f32.mrb[0].mxu0
      %v2187 = vadd.f32 %v1895, %v2186
      %v2188 = vpop.f32.mrb[0].mxu0
      %2189 = vmatprep.mubr.bf16.mxu0 0
      %2190 = vmatmul.mubr.bf16.gmra.mrb[0].mxu0 %v2042
      %v2191 = vpop.f32.mrb[0].mxu0
      %v2192 = vadd.f32 %v1900, %v2191
      %v2193 = vpop.f32.mrb[0].mxu0
      %v2194 = vpop.f32.mrb[0].mxu0
      %v2195 = vadd.f32 %v1903, %v2194
      %v2196 = vpop.f32.mrb[0].mxu0
      %2197 = vmatprep.mubr.bf16.mxu0 0
      %2198 = vmatmul.mubr.bf16.gmra.mrb[0].mxu0 %v2045
      %v2199 = vpop.f32.mrb[0].mxu0
      %v2200 = vadd.f32 %v1908, %v2199
      %v2201 = vpop.f32.mrb[0].mxu0
      %v2202 = vpop.f32.mrb[0].mxu0
      %v2203 = vadd.f32 %v1911, %v2202
      %v2204 = vpop.f32.mrb[0].mxu0
      %2205 = vmatprep.mubr.bf16.mxu0 0
      %2206 = vmatmul.mubr.bf16.gmra.mrb[0].mxu0 %v2048
      %v2207 = vpop.f32.mrb[0].mxu0
      %v2208 = vadd.f32 %v1916, %v2207
      %v2209 = vpop.f32.mrb[0].mxu0
      %v2210 = vpop.f32.mrb[0].mxu0
      %v2211 = vadd.f32 %v1919, %v2210
      %v2212 = vpop.f32.mrb[0].mxu0
      %2213 = vdwg.mxu0
      %v2214 = vld [vmem:[#allocation2] sm:$0xe]
      %v2215 = vld [vmem:[#allocation2 + $0xc] sm:$0xe]
      %v2216 = vld [vmem:[#allocation2 + $0x18] sm:$0xe]
      %v2217 = vld [vmem:[#allocation2 + $0x24] sm:$0xe]
      %v2218 = vld [vmem:[#allocation2 + $0x30] sm:$0xe]
      %v2219 = vld [vmem:[#allocation2 + $0x3c] sm:$0xe]
      %v2220 = vld [vmem:[#allocation2 + $0x48] sm:$0xe]
      %v2221 = vld [vmem:[#allocation2 + $0x54] sm:$0xe]
      %v2222 = vld [vmem:[#allocation2 + $0x60] sm:$0xe]
      %v2223 = vld [vmem:[#allocation2 + $0x6c] sm:$0xe]
      %v2224 = vld [vmem:[#allocation2 + $0x78] sm:$0xe]
      %v2225 = vld [vmem:[#allocation2 + $0x84] sm:$0xe]
      %v2226 = vld [vmem:[#allocation2 + $0x90] sm:$0xe]
      %v2227 = vld [vmem:[#allocation2 + $0x9c] sm:$0xe]
      %v2228 = vld [vmem:[#allocation2 + $0xa8] sm:$0xe]
      %v2229 = vld [vmem:[#allocation2 + $0xb4] sm:$0xe]
      %vm2262 = vcmask 1042432
      %vm2263 = vcmask 1046532
      %vm2264 = vmor %vm2262, %vm2263
      %v2265 = vrot.slane %v2214, 5
      %v2266 = vrot.slane %v2265, 4
      %v2267 = vrot.slane %v1224, 5
      %v2268 = vsel %vm2264, %v2266, %v2267
      %v2269 = vrot.slane %v2267, 4
      %v2270 = vrot.slane %v1256, 5
      %v2271 = vsel %vm2264, %v2269, %v2270
      %v2272 = vrot.slane %v2215, 5
      %v2273 = vrot.slane %v2272, 4
      %v2274 = vrot.slane %v1226, 5
      %v2275 = vsel %vm2264, %v2273, %v2274
      %v2276 = vrot.slane %v2274, 4
      %v2277 = vrot.slane %v1257, 5
      %v2278 = vsel %vm2264, %v2276, %v2277
      %v2279 = vrot.slane %v2216, 5
      %v2280 = vrot.slane %v2279, 4
      %v2281 = vrot.slane %v1228, 5
      %v2282 = vsel %vm2264, %v2280, %v2281
      %v2283 = vrot.slane %v2281, 4
      %v2284 = vrot.slane %v1258, 5
      %v2285 = vsel %vm2264, %v2283, %v2284
      %v2286 = vrot.slane %v2217, 5
      %v2287 = vrot.slane %v2286, 4
      %v2288 = vrot.slane %v1230, 5
      %v2289 = vsel %vm2264, %v2287, %v2288
      %v2290 = vrot.slane %v2288, 4
      %v2291 = vrot.slane %v1259, 5
      %v2292 = vsel %vm2264, %v2290, %v2291
      %v2293 = vrot.slane %v2218, 5
      %v2294 = vrot.slane %v2293, 4
      %v2295 = vrot.slane %v1232, 5
      %v2296 = vsel %vm2264, %v2294, %v2295
      %v2297 = vrot.slane %v2295, 4
      %v2298 = vrot.slane %v1260, 5
      %v2299 = vsel %vm2264, %v2297, %v2298
      %v2300 = vrot.slane %v2219, 5
      %v2301 = vrot.slane %v2300, 4
      %v2302 = vrot.slane %v1234, 5
      %v2303 = vsel %vm2264, %v2301, %v2302
      %v2304 = vrot.slane %v2302, 4
      %v2305 = vrot.slane %v1261, 5
      %v2306 = vsel %vm2264, %v2304, %v2305
      %v2307 = vrot.slane %v2220, 5
      %v2308 = vrot.slane %v2307, 4
      %v2309 = vrot.slane %v1236, 5
      %v2310 = vsel %vm2264, %v2308, %v2309
      %v2311 = vrot.slane %v2309, 4
      %v2312 = vrot.slane %v1262, 5
      %v2313 = vsel %vm2264, %v2311, %v2312
      %v2314 = vrot.slane %v2221, 5
      %v2315 = vrot.slane %v2314, 4
      %v2316 = vrot.slane %v1238, 5
      %v2317 = vsel %vm2264, %v2315, %v2316
      %v2318 = vrot.slane %v2316, 4
      %v2319 = vrot.slane %v1263, 5
      %v2320 = vsel %vm2264, %v2318, %v2319
      %v2321 = vrot.slane %v2222, 5
      %v2322 = vrot.slane %v2321, 4
      %v2323 = vrot.slane %v1240, 5
      %v2324 = vsel %vm2264, %v2322, %v2323
      %v2325 = vrot.slane %v2323, 4
      %v2326 = vrot.slane %v1264, 5
      %v2327 = vsel %vm2264, %v2325, %v2326
      %v2328 = vrot.slane %v2223, 5
      %v2329 = vrot.slane %v2328, 4
      %v2330 = vrot.slane %v1242, 5
      %v2331 = vsel %vm2264, %v2329, %v2330
      %v2332 = vrot.slane %v2330, 4
      %v2333 = vrot.slane %v1265, 5
      %v2334 = vsel %vm2264, %v2332, %v2333
      %v2335 = vrot.slane %v2224, 5
      %v2336 = vrot.slane %v2335, 4
      %v2337 = vrot.slane %v1244, 5
      %v2338 = vsel %vm2264, %v2336, %v2337
      %v2339 = vrot.slane %v2337, 4
      %v2340 = vrot.slane %v1266, 5
      %v2341 = vsel %vm2264, %v2339, %v2340
      %v2342 = vrot.slane %v2225, 5
      %v2343 = vrot.slane %v2342, 4
      %v2344 = vrot.slane %v1246, 5
      %v2345 = vsel %vm2264, %v2343, %v2344
      %v2346 = vrot.slane %v2344, 4
      %v2347 = vrot.slane %v1267, 5
      %v2348 = vsel %vm2264, %v2346, %v2347
      %v2349 = vrot.slane %v2226, 5
      %v2350 = vrot.slane %v2349, 4
      %v2351 = vrot.slane %v1248, 5
      %v2352 = vsel %vm2264, %v2350, %v2351
      %v2353 = vrot.slane %v2351, 4
      %v2354 = vrot.slane %v1268, 5
      %v2355 = vsel %vm2264, %v2353, %v2354
      %v2356 = vrot.slane %v2227, 5
      %v2357 = vrot.slane %v2356, 4
      %v2358 = vrot.slane %v1250, 5
      %v2359 = vsel %vm2264, %v2357, %v2358
      %v2360 = vrot.slane %v2358, 4
      %v2361 = vrot.slane %v1269, 5
      %v2362 = vsel %vm2264, %v2360, %v2361
      %v2363 = vrot.slane %v2228, 5
      %v2364 = vrot.slane %v2363, 4
      %v2365 = vrot.slane %v1252, 5
      %v2366 = vsel %vm2264, %v2364, %v2365
      %v2367 = vrot.slane %v2365, 4
      %v2368 = vrot.slane %v1270, 5
      %v2369 = vsel %vm2264, %v2367, %v2368
      %v2370 = vrot.slane %v2229, 5
      %v2371 = vrot.slane %v2370, 4
      %v2372 = vrot.slane %v1254, 5
      %v2373 = vsel %vm2264, %v2371, %v2372
      %v2374 = vrot.slane %v2372, 4
      %v2375 = vrot.slane %v1271, 5
      %v2376 = vsel %vm2264, %v2374, %v2375
      %s2377 = scalar_lea.vmem %s1, 4
      %v2378 = vld [vmem:[%s2377] sm:$0x3]
      %v2379 = vunpack.c.l.b16 %v2268
      %v2380 = vunpack.c.l.b16 %v2271
      %v2381 = vunpack.c.l.b16 %v2275
      %v2382 = vunpack.c.l.b16 %v2278
      %v2383 = vunpack.c.l.b16 %v2282
      %v2384 = vunpack.c.l.b16 %v2285
      %v2385 = vunpack.c.l.b16 %v2289
      %v2386 = vunpack.c.l.b16 %v2292
      %v2387 = vunpack.c.l.b16 %v2296
      %v2388 = vunpack.c.l.b16 %v2299
      %v2389 = vunpack.c.l.b16 %v2303
      %v2390 = vunpack.c.l.b16 %v2306
      %v2391 = vunpack.c.l.b16 %v2310
      %v2392 = vunpack.c.l.b16 %v2313
      %v2393 = vunpack.c.l.b16 %v2317
      %v2394 = vunpack.c.l.b16 %v2320
      %v2395 = vunpack.c.l.b16 %v2324
      %v2396 = vunpack.c.l.b16 %v2327
      %v2397 = vunpack.c.l.b16 %v2331
      %v2398 = vunpack.c.l.b16 %v2334
      %v2399 = vunpack.c.l.b16 %v2338
      %v2400 = vunpack.c.l.b16 %v2341
      %v2401 = vunpack.c.l.b16 %v2345
      %v2402 = vunpack.c.l.b16 %v2348
      %v2403 = vunpack.c.l.b16 %v2352
      %v2404 = vunpack.c.l.b16 %v2355
      %v2405 = vunpack.c.l.b16 %v2359
      %v2406 = vunpack.c.l.b16 %v2362
      %v2407 = vunpack.c.l.b16 %v2366
      %v2408 = vunpack.c.l.b16 %v2369
      %v2409 = vunpack.c.l.b16 %v2373
      %v2410 = vunpack.c.l.b16 %v2376
      %v2411 = vpack.c.b16 %v2380, %v2379
      %v2412 = vpack.c.b16 %v2382, %v2381
      %v2413 = vpack.c.b16 %v2384, %v2383
      %v2414 = vpack.c.b16 %v2386, %v2385
      %v2415 = vpack.c.b16 %v2388, %v2387
      %v2416 = vpack.c.b16 %v2390, %v2389
      %v2417 = vpack.c.b16 %v2392, %v2391
      %v2418 = vpack.c.b16 %v2394, %v2393
      %v2419 = vpack.c.b16 %v2396, %v2395
      %v2420 = vpack.c.b16 %v2398, %v2397
      %v2421 = vpack.c.b16 %v2400, %v2399
      %v2422 = vpack.c.b16 %v2402, %v2401
      %v2423 = vpack.c.b16 %v2404, %v2403
      %v2424 = vpack.c.b16 %v2406, %v2405
      %v2425 = vpack.c.b16 %v2408, %v2407
      %v2426 = vpack.c.b16 %v2410, %v2409
      %v2428 = vsel %vm384, %v2411, 0
      %v2431 = vsel %vm384, %v2412, 0
      %v2434 = vsel %vm384, %v2413, 0
      %v2437 = vsel %vm384, %v2414, 0
      %v2440 = vsel %vm384, %v2415, 0
      %v2443 = vsel %vm384, %v2416, 0
      %v2446 = vsel %vm384, %v2417, 0
      %v2449 = vsel %vm384, %v2418, 0
      %v2452 = vsel %vm384, %v2419, 0
      %v2455 = vsel %vm384, %v2420, 0
      %v2458 = vsel %vm384, %v2421, 0
      %v2461 = vsel %vm384, %v2422, 0
      %v2464 = vsel %vm384, %v2423, 0
      %v2467 = vsel %vm384, %v2424, 0
      %v2470 = vsel %vm384, %v2425, 0
      %v2473 = vsel %vm384, %v2426, 0
      %v2476 = vsel %vm1757, %v2378, 0
      %2478 = vmatprep.subr.bf16.mxu0 0
      %2479 = vmatpush1.bf16.msra.mxu0 %v2476
      %2480 = vmatprep.subr.bf16.mxu0 0
      %2481 = vmatpush1.bf16.msra.mxu0 0
      %2482 = vmatprep.subr.bf16.mxu0 0
      %2483 = vmatpush1.bf16.msra.mxu0 0
      %2484 = vmatprep.subr.bf16.mxu0 0
      %2485 = vmatpush1.bf16.msra.mxu0 0
      %2486 = vmatprep.subr.bf16.mxu0 0
      %2487 = vmatpush1.bf16.msra.mxu0 0
      %2488 = vmatprep.subr.bf16.mxu0 0
      %2489 = vmatpush1.bf16.msra.mxu0 0
      %2490 = vmatprep.subr.bf16.mxu0 0
      %2491 = vmatpush1.bf16.msra.mxu0 0
      %2492 = vmatprep.subr.bf16.mxu0 0
      %2493 = vmatpush1.bf16.msra.mxu0 0
      %2494 = vmatprep.subr.bf16.mxu0 0
      %2495 = vmatpush1.bf16.msra.mxu0 0
      %2496 = vmatprep.subr.bf16.mxu0 0
      %2497 = vmatpush1.bf16.msra.mxu0 0
      %2498 = vmatprep.subr.bf16.mxu0 0
      %2499 = vmatpush1.bf16.msra.mxu0 0
      %2500 = vmatprep.subr.bf16.mxu0 0
      %2501 = vmatpush1.bf16.msra.mxu0 0
      %2502 = vmatprep.subr.bf16.mxu0 0
      %2503 = vmatpush1.bf16.msra.mxu0 0
      %2504 = vmatprep.subr.bf16.mxu0 0
      %2505 = vmatpush1.bf16.msra.mxu0 0
      %2506 = vmatprep.subr.bf16.mxu0 0
      %2507 = vmatpush1.bf16.msra.mxu0 0
      %2508 = vmatprep.subr.bf16.mxu0 0
      %2509 = vmatpush1.bf16.msra.mxu0 0
      %2510 = vmatprep.mubr.bf16.mxu0 0
      %2511 = vmatmul.mubr.bf16.gmra.mrb[0].mxu0 %v2428
      %v2512 = vpop.f32.mrb[0].mxu0
      %v2513 = vadd.f32 0.0, %v2512
      %v2514 = vpop.f32.mrb[0].mxu0
      %v2515 = vpop.f32.mrb[0].mxu0
      %v2516 = vadd.f32 0.0, %v2515
      %v2517 = vpop.f32.mrb[0].mxu0
      %2518 = vmatprep.mubr.bf16.mxu0 0
      %2519 = vmatmul.mubr.bf16.gmra.mrb[0].mxu0 %v2431
      %v2520 = vpop.f32.mrb[0].mxu0
      %v2521 = vadd.f32 0.0, %v2520
      %v2522 = vpop.f32.mrb[0].mxu0
      %v2523 = vpop.f32.mrb[0].mxu0
      %v2524 = vadd.f32 0.0, %v2523
      %v2525 = vpop.f32.mrb[0].mxu0
      %2526 = vmatprep.mubr.bf16.mxu0 0
      %2527 = vmatmul.mubr.bf16.gmra.mrb[0].mxu0 %v2434
      %v2528 = vpop.f32.mrb[0].mxu0
      %v2529 = vadd.f32 0.0, %v2528
      %v2530 = vpop.f32.mrb[0].mxu0
      %v2531 = vpop.f32.mrb[0].mxu0
      %v2532 = vadd.f32 0.0, %v2531
      %v2533 = vpop.f32.mrb[0].mxu0
      %2534 = vmatprep.mubr.bf16.mxu0 0
      %2535 = vmatmul.mubr.bf16.gmra.mrb[0].mxu0 %v2437
      %v2536 = vpop.f32.mrb[0].mxu0
      %v2537 = vadd.f32 0.0, %v2536
      %v2538 = vpop.f32.mrb[0].mxu0
      %v2539 = vpop.f32.mrb[0].mxu0
      %v2540 = vadd.f32 0.0, %v2539
      %v2541 = vpop.f32.mrb[0].mxu0
      %2542 = vmatprep.mubr.bf16.mxu0 0
      %2543 = vmatmul.mubr.bf16.gmra.mrb[0].mxu0 %v2440
      %v2544 = vpop.f32.mrb[0].mxu0
      %v2545 = vadd.f32 0.0, %v2544
      %v2546 = vpop.f32.mrb[0].mxu0
      %v2547 = vpop.f32.mrb[0].mxu0
      %v2548 = vadd.f32 0.0, %v2547
      %v2549 = vpop.f32.mrb[0].mxu0
      %2550 = vmatprep.mubr.bf16.mxu0 0
      %2551 = vmatmul.mubr.bf16.gmra.mrb[0].mxu0 %v2443
      %v2552 = vpop.f32.mrb[0].mxu0
      %v2553 = vadd.f32 0.0, %v2552
      %v2554 = vpop.f32.mrb[0].mxu0
      %v2555 = vpop.f32.mrb[0].mxu0
      %v2556 = vadd.f32 0.0, %v2555
      %v2557 = vpop.f32.mrb[0].mxu0
      %2558 = vmatprep.mubr.bf16.mxu0 0
      %2559 = vmatmul.mubr.bf16.gmra.mrb[0].mxu0 %v2446
      %v2560 = vpop.f32.mrb[0].mxu0
      %v2561 = vadd.f32 0.0, %v2560
      %v2562 = vpop.f32.mrb[0].mxu0
      %v2563 = vpop.f32.mrb[0].mxu0
      %v2564 = vadd.f32 0.0, %v2563
      %v2565 = vpop.f32.mrb[0].mxu0
      %2566 = vmatprep.mubr.bf16.mxu0 0
      %2567 = vmatmul.mubr.bf16.gmra.mrb[0].mxu0 %v2449
      %v2568 = vpop.f32.mrb[0].mxu0
      %v2569 = vadd.f32 0.0, %v2568
      %v2570 = vpop.f32.mrb[0].mxu0
      %v2571 = vpop.f32.mrb[0].mxu0
      %v2572 = vadd.f32 0.0, %v2571
      %v2573 = vpop.f32.mrb[0].mxu0
      %2574 = vmatprep.mubr.bf16.mxu0 0
      %2575 = vmatmul.mubr.bf16.gmra.mrb[0].mxu0 %v2452
      %v2576 = vpop.f32.mrb[0].mxu0
      %v2577 = vadd.f32 0.0, %v2576
      %v2578 = vpop.f32.mrb[0].mxu0
      %v2579 = vpop.f32.mrb[0].mxu0
      %v2580 = vadd.f32 0.0, %v2579
      %v2581 = vpop.f32.mrb[0].mxu0
      %2582 = vmatprep.mubr.bf16.mxu0 0
      %2583 = vmatmul.mubr.bf16.gmra.mrb[0].mxu0 %v2455
      %v2584 = vpop.f32.mrb[0].mxu0
      %v2585 = vadd.f32 0.0, %v2584
      %v2586 = vpop.f32.mrb[0].mxu0
      %v2587 = vpop.f32.mrb[0].mxu0
      %v2588 = vadd.f32 0.0, %v2587
      %v2589 = vpop.f32.mrb[0].mxu0
      %2590 = vmatprep.mubr.bf16.mxu0 0
      %2591 = vmatmul.mubr.bf16.gmra.mrb[0].mxu0 %v2458
      %v2592 = vpop.f32.mrb[0].mxu0
      %v2593 = vadd.f32 0.0, %v2592
      %v2594 = vpop.f32.mrb[0].mxu0
      %v2595 = vpop.f32.mrb[0].mxu0
      %v2596 = vadd.f32 0.0, %v2595
      %v2597 = vpop.f32.mrb[0].mxu0
      %2598 = vmatprep.mubr.bf16.mxu0 0
      %2599 = vmatmul.mubr.bf16.gmra.mrb[0].mxu0 %v2461
      %v2600 = vpop.f32.mrb[0].mxu0
      %v2601 = vadd.f32 0.0, %v2600
      %v2602 = vpop.f32.mrb[0].mxu0
      %v2603 = vpop.f32.mrb[0].mxu0
      %v2604 = vadd.f32 0.0, %v2603
      %v2605 = vpop.f32.mrb[0].mxu0
      %2606 = vmatprep.mubr.bf16.mxu0 0
      %2607 = vmatmul.mubr.bf16.gmra.mrb[0].mxu0 %v2464
      %v2608 = vpop.f32.mrb[0].mxu0
      %v2609 = vadd.f32 0.0, %v2608
      %v2610 = vpop.f32.mrb[0].mxu0
      %v2611 = vpop.f32.mrb[0].mxu0
      %v2612 = vadd.f32 0.0, %v2611
      %v2613 = vpop.f32.mrb[0].mxu0
      %2614 = vmatprep.mubr.bf16.mxu0 0
      %2615 = vmatmul.mubr.bf16.gmra.mrb[0].mxu0 %v2467
      %v2616 = vpop.f32.mrb[0].mxu0
      %v2617 = vadd.f32 0.0, %v2616
      %v2618 = vpop.f32.mrb[0].mxu0
      %v2619 = vpop.f32.mrb[0].mxu0
      %v2620 = vadd.f32 0.0, %v2619
      %v2621 = vpop.f32.mrb[0].mxu0
      %2622 = vmatprep.mubr.bf16.mxu0 0
      %2623 = vmatmul.mubr.bf16.gmra.mrb[0].mxu0 %v2470
      %v2624 = vpop.f32.mrb[0].mxu0
      %v2625 = vadd.f32 0.0, %v2624
      %v2626 = vpop.f32.mrb[0].mxu0
      %v2627 = vpop.f32.mrb[0].mxu0
      %v2628 = vadd.f32 0.0, %v2627
      %v2629 = vpop.f32.mrb[0].mxu0
      %2630 = vmatprep.mubr.bf16.mxu0 0
      %2631 = vmatmul.mubr.bf16.gmra.mrb[0].mxu0 %v2473
      %v2632 = vpop.f32.mrb[0].mxu0
      %v2633 = vadd.f32 0.0, %v2632
      %v2634 = vpop.f32.mrb[0].mxu0
      %v2635 = vpop.f32.mrb[0].mxu0
      %v2636 = vadd.f32 0.0, %v2635
      %v2637 = vpop.f32.mrb[0].mxu0
      %2638 = vdwg.mxu0
      %v2639 = vadd.f32 %v2088, %v2513
      %v2640 = vadd.f32 %v2091, %v2516
      %v2641 = vadd.f32 %v2096, %v2521
      %v2642 = vadd.f32 %v2099, %v2524
      %v2643 = vadd.f32 %v2104, %v2529
      %v2644 = vadd.f32 %v2107, %v2532
      %v2645 = vadd.f32 %v2112, %v2537
      %v2646 = vadd.f32 %v2115, %v2540
      %v2647 = vadd.f32 %v2120, %v2545
      %v2648 = vadd.f32 %v2123, %v2548
      %v2649 = vadd.f32 %v2128, %v2553
      %v2650 = vadd.f32 %v2131, %v2556
      %v2651 = vadd.f32 %v2136, %v2561
      %v2652 = vadd.f32 %v2139, %v2564
      %v2653 = vadd.f32 %v2144, %v2569
      %v2654 = vadd.f32 %v2147, %v2572
      %v2655 = vadd.f32 %v2152, %v2577
      %v2656 = vadd.f32 %v2155, %v2580
      %v2657 = vadd.f32 %v2160, %v2585
      %v2658 = vadd.f32 %v2163, %v2588
      %v2659 = vadd.f32 %v2168, %v2593
      %v2660 = vadd.f32 %v2171, %v2596
      %v2661 = vadd.f32 %v2176, %v2601
      %v2662 = vadd.f32 %v2179, %v2604
      %v2663 = vadd.f32 %v2184, %v2609
      %v2664 = vadd.f32 %v2187, %v2612
      %v2665 = vadd.f32 %v2192, %v2617
      %v2666 = vadd.f32 %v2195, %v2620
      %v2667 = vadd.f32 %v2200, %v2625
      %v2668 = vadd.f32 %v2203, %v2628
      %v2669 = vadd.f32 %v2208, %v2633
      %v2670 = vadd.f32 %v2211, %v2636
      %v2671 = vld [vmem:[%s1105] sm:$0xf]
      %v2672 = vld [vmem:[%s1105 + $0x4] sm:$0xf]
      %v2673 = vld [vmem:[%s1105 + $0xc] sm:$0xf]
      %v2674 = vld [vmem:[%s1105 + $0x10] sm:$0xf]
      %v2675 = vld [vmem:[%s1105 + $0x18] sm:$0xf]
      %v2676 = vld [vmem:[%s1105 + $0x1c] sm:$0xf]
      %v2677 = vld [vmem:[%s1105 + $0x24] sm:$0xf]
      %v2678 = vld [vmem:[%s1105 + $0x28] sm:$0xf]
      %v2679 = vld [vmem:[%s1105 + $0x30] sm:$0xf]
      %v2680 = vld [vmem:[%s1105 + $0x34] sm:$0xf]
      %v2681 = vld [vmem:[%s1105 + $0x3c] sm:$0xf]
      %v2682 = vld [vmem:[%s1105 + $0x40] sm:$0xf]
      %v2683 = vld [vmem:[%s1105 + $0x48] sm:$0xf]
      %v2684 = vld [vmem:[%s1105 + $0x4c] sm:$0xf]
      %v2685 = vld [vmem:[%s1105 + $0x54] sm:$0xf]
      %v2686 = vld [vmem:[%s1105 + $0x58] sm:$0xf]
      %v2687 = vld [vmem:[%s1105 + $0x60] sm:$0xf]
      %v2688 = vld [vmem:[%s1105 + $0x64] sm:$0xf]
      %v2689 = vld [vmem:[%s1105 + $0x6c] sm:$0xf]
      %v2690 = vld [vmem:[%s1105 + $0x70] sm:$0xf]
      %v2691 = vld [vmem:[%s1105 + $0x78] sm:$0xf]
      %v2692 = vld [vmem:[%s1105 + $0x7c] sm:$0xf]
      %v2693 = vld [vmem:[%s1105 + $0x84] sm:$0xf]
      %v2694 = vld [vmem:[%s1105 + $0x88] sm:$0xf]
      %v2695 = vld [vmem:[%s1105 + $0x90] sm:$0xf]
      %v2696 = vld [vmem:[%s1105 + $0x94] sm:$0xf]
      %v2697 = vld [vmem:[%s1105 + $0x9c] sm:$0xf]
      %v2698 = vld [vmem:[%s1105 + $0xa0] sm:$0xf]
      %v2699 = vld [vmem:[%s1105 + $0xa8] sm:$0xf]
      %v2700 = vld [vmem:[%s1105 + $0xac] sm:$0xf]
      %v2701 = vld [vmem:[%s1105 + $0xb4] sm:$0xf]
      %v2702 = vld [vmem:[%s1105 + $0xb8] sm:$0xf]
      %s2703 = scalar_lea.vmem %s1, 6
      %v2704 = vld [vmem:[%s2703] sm:$0x3]
      %v2737 = vunpack.c.l.b16 %v2671
      %v2738 = vunpack.c.l.b16 %v2672
      %v2739 = vunpack.c.l.b16 %v2673
      %v2740 = vunpack.c.l.b16 %v2674
      %v2741 = vunpack.c.l.b16 %v2675
      %v2742 = vunpack.c.l.b16 %v2676
      %v2743 = vunpack.c.l.b16 %v2677
      %v2744 = vunpack.c.l.b16 %v2678
      %v2745 = vunpack.c.l.b16 %v2679
      %v2746 = vunpack.c.l.b16 %v2680
      %v2747 = vunpack.c.l.b16 %v2681
      %v2748 = vunpack.c.l.b16 %v2682
      %v2749 = vunpack.c.l.b16 %v2683
      %v2750 = vunpack.c.l.b16 %v2684
      %v2751 = vunpack.c.l.b16 %v2685
      %v2752 = vunpack.c.l.b16 %v2686
      %v2753 = vunpack.c.l.b16 %v2687
      %v2754 = vunpack.c.l.b16 %v2688
      %v2755 = vunpack.c.l.b16 %v2689
      %v2756 = vunpack.c.l.b16 %v2690
      %v2757 = vunpack.c.l.b16 %v2691
      %v2758 = vunpack.c.l.b16 %v2692
      %v2759 = vunpack.c.l.b16 %v2693
      %v2760 = vunpack.c.l.b16 %v2694
      %v2761 = vunpack.c.l.b16 %v2695
      %v2762 = vunpack.c.l.b16 %v2696
      %v2763 = vunpack.c.l.b16 %v2697
      %v2764 = vunpack.c.l.b16 %v2698
      %v2765 = vunpack.c.l.b16 %v2699
      %v2766 = vunpack.c.l.b16 %v2700
      %v2767 = vunpack.c.l.b16 %v2701
      %v2768 = vunpack.c.l.b16 %v2702
      %v2769 = vpack.c.b16 %v2738, %v2737
      %v2770 = vpack.c.b16 %v2740, %v2739
      %v2771 = vpack.c.b16 %v2742, %v2741
      %v2772 = vpack.c.b16 %v2744, %v2743
      %v2773 = vpack.c.b16 %v2746, %v2745
      %v2774 = vpack.c.b16 %v2748, %v2747
      %v2775 = vpack.c.b16 %v2750, %v2749
      %v2776 = vpack.c.b16 %v2752, %v2751
      %v2777 = vpack.c.b16 %v2754, %v2753
      %v2778 = vpack.c.b16 %v2756, %v2755
      %v2779 = vpack.c.b16 %v2758, %v2757
      %v2780 = vpack.c.b16 %v2760, %v2759
      %v2781 = vpack.c.b16 %v2762, %v2761
      %v2782 = vpack.c.b16 %v2764, %v2763
      %v2783 = vpack.c.b16 %v2766, %v2765
      %v2784 = vpack.c.b16 %v2768, %v2767
      %v2786 = vsel %vm384, %v2769, 0
      %v2789 = vsel %vm384, %v2770, 0
      %v2792 = vsel %vm384, %v2771, 0
      %v2795 = vsel %vm384, %v2772, 0
      %v2798 = vsel %vm384, %v2773, 0
      %v2801 = vsel %vm384, %v2774, 0
      %v2804 = vsel %vm384, %v2775, 0
      %v2807 = vsel %vm384, %v2776, 0
      %v2810 = vsel %vm384, %v2777, 0
      %v2813 = vsel %vm384, %v2778, 0
      %v2816 = vsel %vm384, %v2779, 0
      %v2819 = vsel %vm384, %v2780, 0
      %v2822 = vsel %vm384, %v2781, 0
      %v2825 = vsel %vm384, %v2782, 0
      %v2828 = vsel %vm384, %v2783, 0
      %v2831 = vsel %vm384, %v2784, 0
      %v2834 = vsel %vm1757, %v2704, 0
      %2836 = vmatprep.subr.bf16.mxu0 0
      %2837 = vmatpush1.bf16.msra.mxu0 %v2834
      %2838 = vmatprep.subr.bf16.mxu0 0
      %2839 = vmatpush1.bf16.msra.mxu0 0
      %2840 = vmatprep.subr.bf16.mxu0 0
      %2841 = vmatpush1.bf16.msra.mxu0 0
      %2842 = vmatprep.subr.bf16.mxu0 0
      %2843 = vmatpush1.bf16.msra.mxu0 0
      %2844 = vmatprep.subr.bf16.mxu0 0
      %2845 = vmatpush1.bf16.msra.mxu0 0
      %2846 = vmatprep.subr.bf16.mxu0 0
      %2847 = vmatpush1.bf16.msra.mxu0 0
      %2848 = vmatprep.subr.bf16.mxu0 0
      %2849 = vmatpush1.bf16.msra.mxu0 0
      %2850 = vmatprep.subr.bf16.mxu0 0
      %2851 = vmatpush1.bf16.msra.mxu0 0
      %2852 = vmatprep.subr.bf16.mxu0 0
      %2853 = vmatpush1.bf16.msra.mxu0 0
      %2854 = vmatprep.subr.bf16.mxu0 0
      %2855 = vmatpush1.bf16.msra.mxu0 0
      %2856 = vmatprep.subr.bf16.mxu0 0
      %2857 = vmatpush1.bf16.msra.mxu0 0
      %2858 = vmatprep.subr.bf16.mxu0 0
      %2859 = vmatpush1.bf16.msra.mxu0 0
      %2860 = vmatprep.subr.bf16.mxu0 0
      %2861 = vmatpush1.bf16.msra.mxu0 0
      %2862 = vmatprep.subr.bf16.mxu0 0
      %2863 = vmatpush1.bf16.msra.mxu0 0
      %2864 = vmatprep.subr.bf16.mxu0 0
      %2865 = vmatpush1.bf16.msra.mxu0 0
      %2866 = vmatprep.subr.bf16.mxu0 0
      %2867 = vmatpush1.bf16.msra.mxu0 0
      %2868 = vmatprep.mubr.bf16.mxu0 0
      %2869 = vmatmul.mubr.bf16.gmra.mrb[0].mxu0 %v2786
      %v2870 = vpop.f32.mrb[0].mxu0
      %v2871 = vadd.f32 0.0, %v2870
      %v2872 = vpop.f32.mrb[0].mxu0
      %v2873 = vpop.f32.mrb[0].mxu0
      %v2874 = vadd.f32 0.0, %v2873
      %v2875 = vpop.f32.mrb[0].mxu0
      %2876 = vmatprep.mubr.bf16.mxu0 0
      %2877 = vmatmul.mubr.bf16.gmra.mrb[0].mxu0 %v2789
      %v2878 = vpop.f32.mrb[0].mxu0
      %v2879 = vadd.f32 0.0, %v2878
      %v2880 = vpop.f32.mrb[0].mxu0
      %v2881 = vpop.f32.mrb[0].mxu0
      %v2882 = vadd.f32 0.0, %v2881
      %v2883 = vpop.f32.mrb[0].mxu0
      %2884 = vmatprep.mubr.bf16.mxu0 0
      %2885 = vmatmul.mubr.bf16.gmra.mrb[0].mxu0 %v2792
      %v2886 = vpop.f32.mrb[0].mxu0
      %v2887 = vadd.f32 0.0, %v2886
      %v2888 = vpop.f32.mrb[0].mxu0
      %v2889 = vpop.f32.mrb[0].mxu0
      %v2890 = vadd.f32 0.0, %v2889
      %v2891 = vpop.f32.mrb[0].mxu0
      %2892 = vmatprep.mubr.bf16.mxu0 0
      %2893 = vmatmul.mubr.bf16.gmra.mrb[0].mxu0 %v2795
      %v2894 = vpop.f32.mrb[0].mxu0
      %v2895 = vadd.f32 0.0, %v2894
      %v2896 = vpop.f32.mrb[0].mxu0
      %v2897 = vpop.f32.mrb[0].mxu0
      %v2898 = vadd.f32 0.0, %v2897
      %v2899 = vpop.f32.mrb[0].mxu0
      %2900 = vmatprep.mubr.bf16.mxu0 0
      %2901 = vmatmul.mubr.bf16.gmra.mrb[0].mxu0 %v2798
      %v2902 = vpop.f32.mrb[0].mxu0
      %v2903 = vadd.f32 0.0, %v2902
      %v2904 = vpop.f32.mrb[0].mxu0
      %v2905 = vpop.f32.mrb[0].mxu0
      %v2906 = vadd.f32 0.0, %v2905
      %v2907 = vpop.f32.mrb[0].mxu0
      %2908 = vmatprep.mubr.bf16.mxu0 0
      %2909 = vmatmul.mubr.bf16.gmra.mrb[0].mxu0 %v2801
      %v2910 = vpop.f32.mrb[0].mxu0
      %v2911 = vadd.f32 0.0, %v2910
      %v2912 = vpop.f32.mrb[0].mxu0
      %v2913 = vpop.f32.mrb[0].mxu0
      %v2914 = vadd.f32 0.0, %v2913
      %v2915 = vpop.f32.mrb[0].mxu0
      %2916 = vmatprep.mubr.bf16.mxu0 0
      %2917 = vmatmul.mubr.bf16.gmra.mrb[0].mxu0 %v2804
      %v2918 = vpop.f32.mrb[0].mxu0
      %v2919 = vadd.f32 0.0, %v2918
      %v2920 = vpop.f32.mrb[0].mxu0
      %v2921 = vpop.f32.mrb[0].mxu0
      %v2922 = vadd.f32 0.0, %v2921
      %v2923 = vpop.f32.mrb[0].mxu0
      %2924 = vmatprep.mubr.bf16.mxu0 0
      %2925 = vmatmul.mubr.bf16.gmra.mrb[0].mxu0 %v2807
      %v2926 = vpop.f32.mrb[0].mxu0
      %v2927 = vadd.f32 0.0, %v2926
      %v2928 = vpop.f32.mrb[0].mxu0
      %v2929 = vpop.f32.mrb[0].mxu0
      %v2930 = vadd.f32 0.0, %v2929
      %v2931 = vpop.f32.mrb[0].mxu0
      %2932 = vmatprep.mubr.bf16.mxu0 0
      %2933 = vmatmul.mubr.bf16.gmra.mrb[0].mxu0 %v2810
      %v2934 = vpop.f32.mrb[0].mxu0
      %v2935 = vadd.f32 0.0, %v2934
      %v2936 = vpop.f32.mrb[0].mxu0
      %v2937 = vpop.f32.mrb[0].mxu0
      %v2938 = vadd.f32 0.0, %v2937
      %v2939 = vpop.f32.mrb[0].mxu0
      %2940 = vmatprep.mubr.bf16.mxu0 0
      %2941 = vmatmul.mubr.bf16.gmra.mrb[0].mxu0 %v2813
      %v2942 = vpop.f32.mrb[0].mxu0
      %v2943 = vadd.f32 0.0, %v2942
      %v2944 = vpop.f32.mrb[0].mxu0
      %v2945 = vpop.f32.mrb[0].mxu0
      %v2946 = vadd.f32 0.0, %v2945
      %v2947 = vpop.f32.mrb[0].mxu0
      %2948 = vmatprep.mubr.bf16.mxu0 0
      %2949 = vmatmul.mubr.bf16.gmra.mrb[0].mxu0 %v2816
      %v2950 = vpop.f32.mrb[0].mxu0
      %v2951 = vadd.f32 0.0, %v2950
      %v2952 = vpop.f32.mrb[0].mxu0
      %v2953 = vpop.f32.mrb[0].mxu0
      %v2954 = vadd.f32 0.0, %v2953
      %v2955 = vpop.f32.mrb[0].mxu0
      %2956 = vmatprep.mubr.bf16.mxu0 0
      %2957 = vmatmul.mubr.bf16.gmra.mrb[0].mxu0 %v2819
      %v2958 = vpop.f32.mrb[0].mxu0
      %v2959 = vadd.f32 0.0, %v2958
      %v2960 = vpop.f32.mrb[0].mxu0
      %v2961 = vpop.f32.mrb[0].mxu0
      %v2962 = vadd.f32 0.0, %v2961
      %v2963 = vpop.f32.mrb[0].mxu0
      %2964 = vmatprep.mubr.bf16.mxu0 0
      %2965 = vmatmul.mubr.bf16.gmra.mrb[0].mxu0 %v2822
      %v2966 = vpop.f32.mrb[0].mxu0
      %v2967 = vadd.f32 0.0, %v2966
      %v2968 = vpop.f32.mrb[0].mxu0
      %v2969 = vpop.f32.mrb[0].mxu0
      %v2970 = vadd.f32 0.0, %v2969
      %v2971 = vpop.f32.mrb[0].mxu0
      %2972 = vmatprep.mubr.bf16.mxu0 0
      %2973 = vmatmul.mubr.bf16.gmra.mrb[0].mxu0 %v2825
      %v2974 = vpop.f32.mrb[0].mxu0
      %v2975 = vadd.f32 0.0, %v2974
      %v2976 = vpop.f32.mrb[0].mxu0
      %v2977 = vpop.f32.mrb[0].mxu0
      %v2978 = vadd.f32 0.0, %v2977
      %v2979 = vpop.f32.mrb[0].mxu0
      %2980 = vmatprep.mubr.bf16.mxu0 0
      %2981 = vmatmul.mubr.bf16.gmra.mrb[0].mxu0 %v2828
      %v2982 = vpop.f32.mrb[0].mxu0
      %v2983 = vadd.f32 0.0, %v2982
      %v2984 = vpop.f32.mrb[0].mxu0
      %v2985 = vpop.f32.mrb[0].mxu0
      %v2986 = vadd.f32 0.0, %v2985
      %v2987 = vpop.f32.mrb[0].mxu0
      %2988 = vmatprep.mubr.bf16.mxu0 0
      %2989 = vmatmul.mubr.bf16.gmra.mrb[0].mxu0 %v2831
      %v2990 = vpop.f32.mrb[0].mxu0
      %v2991 = vadd.f32 0.0, %v2990
      %v2992 = vpop.f32.mrb[0].mxu0
      %v2993 = vpop.f32.mrb[0].mxu0
      %v2994 = vadd.f32 0.0, %v2993
      %v2995 = vpop.f32.mrb[0].mxu0
      %2996 = vdwg.mxu0
      %v2997 = vadd.f32 %v2639, %v2871
      %v2998 = vadd.f32 %v2640, %v2874
      %v2999 = vadd.f32 %v2641, %v2879
      %v3000 = vadd.f32 %v2642, %v2882
      %v3001 = vadd.f32 %v2643, %v2887
      %v3002 = vadd.f32 %v2644, %v2890
      %v3003 = vadd.f32 %v2645, %v2895
      %v3004 = vadd.f32 %v2646, %v2898
      %v3005 = vadd.f32 %v2647, %v2903
      %v3006 = vadd.f32 %v2648, %v2906
      %v3007 = vadd.f32 %v2649, %v2911
      %v3008 = vadd.f32 %v2650, %v2914
      %v3009 = vadd.f32 %v2651, %v2919
      %v3010 = vadd.f32 %v2652, %v2922
      %v3011 = vadd.f32 %v2653, %v2927
      %v3012 = vadd.f32 %v2654, %v2930
      %v3013 = vadd.f32 %v2655, %v2935
      %v3014 = vadd.f32 %v2656, %v2938
      %v3015 = vadd.f32 %v2657, %v2943
      %v3016 = vadd.f32 %v2658, %v2946
      %v3017 = vadd.f32 %v2659, %v2951
      %v3018 = vadd.f32 %v2660, %v2954
      %v3019 = vadd.f32 %v2661, %v2959
      %v3020 = vadd.f32 %v2662, %v2962
      %v3021 = vadd.f32 %v2663, %v2967
      %v3022 = vadd.f32 %v2664, %v2970
      %v3023 = vadd.f32 %v2665, %v2975
      %v3024 = vadd.f32 %v2666, %v2978
      %v3025 = vadd.f32 %v2667, %v2983
      %v3026 = vadd.f32 %v2668, %v2986
      %v3027 = vadd.f32 %v2669, %v2991
      %v3028 = vadd.f32 %v2670, %v2994
      %v3029 = vld [vmem:[%s1105] sm:$0xf]
      %v3030 = vld [vmem:[%s1105 + $0x4] sm:$0xf]
      %v3031 = vld [vmem:[%s1105 + $0x8] sm:$0x1]
      %v3032 = vld [vmem:[%s1105 + $0xc] sm:$0xf]
      %v3033 = vld [vmem:[%s1105 + $0x10] sm:$0xf]
      %v3034 = vld [vmem:[%s1105 + $0x14] sm:$0x1]
      %v3035 = vld [vmem:[%s1105 + $0x18] sm:$0xf]
      %v3036 = vld [vmem:[%s1105 + $0x1c] sm:$0xf]
      %v3037 = vld [vmem:[%s1105 + $0x20] sm:$0x1]
      %v3038 = vld [vmem:[%s1105 + $0x24] sm:$0xf]
      %v3039 = vld [vmem:[%s1105 + $0x28] sm:$0xf]
      %v3040 = vld [vmem:[%s1105 + $0x2c] sm:$0x1]
      %v3041 = vld [vmem:[%s1105 + $0x30] sm:$0xf]
      %v3042 = vld [vmem:[%s1105 + $0x34] sm:$0xf]
      %v3043 = vld [vmem:[%s1105 + $0x38] sm:$0x1]
      %v3044 = vld [vmem:[%s1105 + $0x3c] sm:$0xf]
      %v3045 = vld [vmem:[%s1105 + $0x40] sm:$0xf]
      %v3046 = vld [vmem:[%s1105 + $0x44] sm:$0x1]
      %v3047 = vld [vmem:[%s1105 + $0x48] sm:$0xf]
      %v3048 = vld [vmem:[%s1105 + $0x4c] sm:$0xf]
      %v3049 = vld [vmem:[%s1105 + $0x50] sm:$0x1]
      %v3050 = vld [vmem:[%s1105 + $0x54] sm:$0xf]
      %v3051 = vld [vmem:[%s1105 + $0x58] sm:$0xf]
      %v3052 = vld [vmem:[%s1105 + $0x5c] sm:$0x1]
      %v3053 = vld [vmem:[%s1105 + $0x60] sm:$0xf]
      %v3054 = vld [vmem:[%s1105 + $0x64] sm:$0xf]
      %v3055 = vld [vmem:[%s1105 + $0x68] sm:$0x1]
      %v3056 = vld [vmem:[%s1105 + $0x6c] sm:$0xf]
      %v3057 = vld [vmem:[%s1105 + $0x70] sm:$0xf]
      %v3058 = vld [vmem:[%s1105 + $0x74] sm:$0x1]
      %v3059 = vld [vmem:[%s1105 + $0x78] sm:$0xf]
      %v3060 = vld [vmem:[%s1105 + $0x7c] sm:$0xf]
      %v3061 = vld [vmem:[%s1105 + $0x80] sm:$0x1]
      %v3062 = vld [vmem:[%s1105 + $0x84] sm:$0xf]
      %v3063 = vld [vmem:[%s1105 + $0x88] sm:$0xf]
      %v3064 = vld [vmem:[%s1105 + $0x8c] sm:$0x1]
      %v3065 = vld [vmem:[%s1105 + $0x90] sm:$0xf]
      %v3066 = vld [vmem:[%s1105 + $0x94] sm:$0xf]
      %v3067 = vld [vmem:[%s1105 + $0x98] sm:$0x1]
      %v3068 = vld [vmem:[%s1105 + $0x9c] sm:$0xf]
      %v3069 = vld [vmem:[%s1105 + $0xa0] sm:$0xf]
      %v3070 = vld [vmem:[%s1105 + $0xa4] sm:$0x1]
      %v3071 = vld [vmem:[%s1105 + $0xa8] sm:$0xf]
      %v3072 = vld [vmem:[%s1105 + $0xac] sm:$0xf]
      %v3073 = vld [vmem:[%s1105 + $0xb0] sm:$0x1]
      %v3074 = vld [vmem:[%s1105 + $0xb4] sm:$0xf]
      %v3075 = vld [vmem:[%s1105 + $0xb8] sm:$0xf]
      %v3076 = vld [vmem:[%s1105 + $0xbc] sm:$0x1]
      %v3078 = vshrl.u32 %v3029, 16
      %v3080 = vrot.slane %v3078, 4
      %v3081 = vshll.u32 %v3029, 16
      %v3083 = vrot.slane %v3081, 5
      %v3084 = vor.u32 %v3080, %v3083
      %v3085 = vrot.slane %v3084, 4
      %v3087 = vshll.u32 %v3030, 16
      %v3089 = vrot.slane %v3087, 5
      %v3090 = vsel %vm1274, %v3085, %v3089
      %v3091 = vshrl.u32 %v3030, 16
      %v3093 = vrot.slane %v3091, 4
      %v3094 = vor.u32 %v3093, %v3089
      %v3095 = vrot.slane %v3094, 4
      %v3097 = vshll.u32 %v3031, 16
      %v3099 = vrot.slane %v3097, 5
      %v3100 = vsel %vm1274, %v3095, %v3099
      %v3102 = vshrl.u32 %v3032, 16
      %v3104 = vrot.slane %v3102, 4
      %v3105 = vshll.u32 %v3032, 16
      %v3107 = vrot.slane %v3105, 5
      %v3108 = vor.u32 %v3104, %v3107
      %v3109 = vrot.slane %v3108, 4
      %v3111 = vshll.u32 %v3033, 16
      %v3113 = vrot.slane %v3111, 5
      %v3114 = vsel %vm1274, %v3109, %v3113
      %v3115 = vshrl.u32 %v3033, 16
      %v3117 = vrot.slane %v3115, 4
      %v3118 = vor.u32 %v3117, %v3113
      %v3119 = vrot.slane %v3118, 4
      %v3121 = vshll.u32 %v3034, 16
      %v3123 = vrot.slane %v3121, 5
      %v3124 = vsel %vm1274, %v3119, %v3123
      %v3126 = vshrl.u32 %v3035, 16
      %v3128 = vrot.slane %v3126, 4
      %v3129 = vshll.u32 %v3035, 16
      %v3131 = vrot.slane %v3129, 5
      %v3132 = vor.u32 %v3128, %v3131
      %v3133 = vrot.slane %v3132, 4
      %v3135 = vshll.u32 %v3036, 16
      %v3137 = vrot.slane %v3135, 5
      %v3138 = vsel %vm1274, %v3133, %v3137
      %v3139 = vshrl.u32 %v3036, 16
      %v3141 = vrot.slane %v3139, 4
      %v3142 = vor.u32 %v3141, %v3137
      %v3143 = vrot.slane %v3142, 4
      %v3145 = vshll.u32 %v3037, 16
      %v3147 = vrot.slane %v3145, 5
      %v3148 = vsel %vm1274, %v3143, %v3147
      %v3150 = vshrl.u32 %v3038, 16
      %v3152 = vrot.slane %v3150, 4
      %v3153 = vshll.u32 %v3038, 16
      %v3155 = vrot.slane %v3153, 5
      %v3156 = vor.u32 %v3152, %v3155
      %v3157 = vrot.slane %v3156, 4
      %v3159 = vshll.u32 %v3039, 16
      %v3161 = vrot.slane %v3159, 5
      %v3162 = vsel %vm1274, %v3157, %v3161
      %v3163 = vshrl.u32 %v3039, 16
      %v3165 = vrot.slane %v3163, 4
      %v3166 = vor.u32 %v3165, %v3161
      %v3167 = vrot.slane %v3166, 4
      %v3169 = vshll.u32 %v3040, 16
      %v3171 = vrot.slane %v3169, 5
      %v3172 = vsel %vm1274, %v3167, %v3171
      %v3174 = vshrl.u32 %v3041, 16
      %v3176 = vrot.slane %v3174, 4
      %v3177 = vshll.u32 %v3041, 16
      %v3179 = vrot.slane %v3177, 5
      %v3180 = vor.u32 %v3176, %v3179
      %v3181 = vrot.slane %v3180, 4
      %v3183 = vshll.u32 %v3042, 16
      %v3185 = vrot.slane %v3183, 5
      %v3186 = vsel %vm1274, %v3181, %v3185
      %v3187 = vshrl.u32 %v3042, 16
      %v3189 = vrot.slane %v3187, 4
      %v3190 = vor.u32 %v3189, %v3185
      %v3191 = vrot.slane %v3190, 4
      %v3193 = vshll.u32 %v3043, 16
      %v3195 = vrot.slane %v3193, 5
      %v3196 = vsel %vm1274, %v3191, %v3195
      %v3198 = vshrl.u32 %v3044, 16
      %v3200 = vrot.slane %v3198, 4
      %v3201 = vshll.u32 %v3044, 16
      %v3203 = vrot.slane %v3201, 5
      %v3204 = vor.u32 %v3200, %v3203
      %v3205 = vrot.slane %v3204, 4
      %v3207 = vshll.u32 %v3045, 16
      %v3209 = vrot.slane %v3207, 5
      %v3210 = vsel %vm1274, %v3205, %v3209
      %v3211 = vshrl.u32 %v3045, 16
      %v3213 = vrot.slane %v3211, 4
      %v3214 = vor.u32 %v3213, %v3209
      %v3215 = vrot.slane %v3214, 4
      %v3217 = vshll.u32 %v3046, 16
      %v3219 = vrot.slane %v3217, 5
      %v3220 = vsel %vm1274, %v3215, %v3219
      %v3222 = vshrl.u32 %v3047, 16
      %v3224 = vrot.slane %v3222, 4
      %v3225 = vshll.u32 %v3047, 16
      %v3227 = vrot.slane %v3225, 5
      %v3228 = vor.u32 %v3224, %v3227
      %v3229 = vrot.slane %v3228, 4
      %v3231 = vshll.u32 %v3048, 16
      %v3233 = vrot.slane %v3231, 5
      %v3234 = vsel %vm1274, %v3229, %v3233
      %v3235 = vshrl.u32 %v3048, 16
      %v3237 = vrot.slane %v3235, 4
      %v3238 = vor.u32 %v3237, %v3233
      %v3239 = vrot.slane %v3238, 4
      %v3241 = vshll.u32 %v3049, 16
      %v3243 = vrot.slane %v3241, 5
      %v3244 = vsel %vm1274, %v3239, %v3243
      %v3246 = vshrl.u32 %v3050, 16
      %v3248 = vrot.slane %v3246, 4
      %v3249 = vshll.u32 %v3050, 16
      %v3251 = vrot.slane %v3249, 5
      %v3252 = vor.u32 %v3248, %v3251
      %v3253 = vrot.slane %v3252, 4
      %v3255 = vshll.u32 %v3051, 16
      %v3257 = vrot.slane %v3255, 5
      %v3258 = vsel %vm1274, %v3253, %v3257
      %v3259 = vshrl.u32 %v3051, 16
      %v3261 = vrot.slane %v3259, 4
      %v3262 = vor.u32 %v3261, %v3257
      %v3263 = vrot.slane %v3262, 4
      %v3265 = vshll.u32 %v3052, 16
      %v3267 = vrot.slane %v3265, 5
      %v3268 = vsel %vm1274, %v3263, %v3267
      %v3270 = vshrl.u32 %v3053, 16
      %v3272 = vrot.slane %v3270, 4
      %v3273 = vshll.u32 %v3053, 16
      %v3275 = vrot.slane %v3273, 5
      %v3276 = vor.u32 %v3272, %v3275
      %v3277 = vrot.slane %v3276, 4
      %v3279 = vshll.u32 %v3054, 16
      %v3281 = vrot.slane %v3279, 5
      %v3282 = vsel %vm1274, %v3277, %v3281
      %v3283 = vshrl.u32 %v3054, 16
      %v3285 = vrot.slane %v3283, 4
      %v3286 = vor.u32 %v3285, %v3281
      %v3287 = vrot.slane %v3286, 4
      %v3289 = vshll.u32 %v3055, 16
      %v3291 = vrot.slane %v3289, 5
      %v3292 = vsel %vm1274, %v3287, %v3291
      %v3294 = vshrl.u32 %v3056, 16
      %v3296 = vrot.slane %v3294, 4
      %v3297 = vshll.u32 %v3056, 16
      %v3299 = vrot.slane %v3297, 5
      %v3300 = vor.u32 %v3296, %v3299
      %v3301 = vrot.slane %v3300, 4
      %v3303 = vshll.u32 %v3057, 16
      %v3305 = vrot.slane %v3303, 5
      %v3306 = vsel %vm1274, %v3301, %v3305
      %v3307 = vshrl.u32 %v3057, 16
      %v3309 = vrot.slane %v3307, 4
      %v3310 = vor.u32 %v3309, %v3305
      %v3311 = vrot.slane %v3310, 4
      %v3313 = vshll.u32 %v3058, 16
      %v3315 = vrot.slane %v3313, 5
      %v3316 = vsel %vm1274, %v3311, %v3315
      %v3318 = vshrl.u32 %v3059, 16
      %v3320 = vrot.slane %v3318, 4
      %v3321 = vshll.u32 %v3059, 16
      %v3323 = vrot.slane %v3321, 5
      %v3324 = vor.u32 %v3320, %v3323
      %v3325 = vrot.slane %v3324, 4
      %v3327 = vshll.u32 %v3060, 16
      %v3329 = vrot.slane %v3327, 5
      %v3330 = vsel %vm1274, %v3325, %v3329
      %v3331 = vshrl.u32 %v3060, 16
      %v3333 = vrot.slane %v3331, 4
      %v3334 = vor.u32 %v3333, %v3329
      %v3335 = vrot.slane %v3334, 4
      %v3337 = vshll.u32 %v3061, 16
      %v3339 = vrot.slane %v3337, 5
      %v3340 = vsel %vm1274, %v3335, %v3339
      %v3342 = vshrl.u32 %v3062, 16
      %v3344 = vrot.slane %v3342, 4
      %v3345 = vshll.u32 %v3062, 16
      %v3347 = vrot.slane %v3345, 5
      %v3348 = vor.u32 %v3344, %v3347
      %v3349 = vrot.slane %v3348, 4
      %v3351 = vshll.u32 %v3063, 16
      %v3353 = vrot.slane %v3351, 5
      %v3354 = vsel %vm1274, %v3349, %v3353
      %v3355 = vshrl.u32 %v3063, 16
      %v3357 = vrot.slane %v3355, 4
      %v3358 = vor.u32 %v3357, %v3353
      %v3359 = vrot.slane %v3358, 4
      %v3361 = vshll.u32 %v3064, 16
      %v3363 = vrot.slane %v3361, 5
      %v3364 = vsel %vm1274, %v3359, %v3363
      %v3366 = vshrl.u32 %v3065, 16
      %v3368 = vrot.slane %v3366, 4
      %v3369 = vshll.u32 %v3065, 16
      %v3371 = vrot.slane %v3369, 5
      %v3372 = vor.u32 %v3368, %v3371
      %v3373 = vrot.slane %v3372, 4
      %v3375 = vshll.u32 %v3066, 16
      %v3377 = vrot.slane %v3375, 5
      %v3378 = vsel %vm1274, %v3373, %v3377
      %v3379 = vshrl.u32 %v3066, 16
      %v3381 = vrot.slane %v3379, 4
      %v3382 = vor.u32 %v3381, %v3377
      %v3383 = vrot.slane %v3382, 4
      %v3385 = vshll.u32 %v3067, 16
      %v3387 = vrot.slane %v3385, 5
      %v3388 = vsel %vm1274, %v3383, %v3387
      %v3390 = vshrl.u32 %v3068, 16
      %v3392 = vrot.slane %v3390, 4
      %v3393 = vshll.u32 %v3068, 16
      %v3395 = vrot.slane %v3393, 5
      %v3396 = vor.u32 %v3392, %v3395
      %v3397 = vrot.slane %v3396, 4
      %v3399 = vshll.u32 %v3069, 16
      %v3401 = vrot.slane %v3399, 5
      %v3402 = vsel %vm1274, %v3397, %v3401
      %v3403 = vshrl.u32 %v3069, 16
      %v3405 = vrot.slane %v3403, 4
      %v3406 = vor.u32 %v3405, %v3401
      %v3407 = vrot.slane %v3406, 4
      %v3409 = vshll.u32 %v3070, 16
      %v3411 = vrot.slane %v3409, 5
      %v3412 = vsel %vm1274, %v3407, %v3411
      %v3414 = vshrl.u32 %v3071, 16
      %v3416 = vrot.slane %v3414, 4
      %v3417 = vshll.u32 %v3071, 16
      %v3419 = vrot.slane %v3417, 5
      %v3420 = vor.u32 %v3416, %v3419
      %v3421 = vrot.slane %v3420, 4
      %v3423 = vshll.u32 %v3072, 16
      %v3425 = vrot.slane %v3423, 5
      %v3426 = vsel %vm1274, %v3421, %v3425
      %v3427 = vshrl.u32 %v3072, 16
      %v3429 = vrot.slane %v3427, 4
      %v3430 = vor.u32 %v3429, %v3425
      %v3431 = vrot.slane %v3430, 4
      %v3433 = vshll.u32 %v3073, 16
      %v3435 = vrot.slane %v3433, 5
      %v3436 = vsel %vm1274, %v3431, %v3435
      %v3438 = vshrl.u32 %v3074, 16
      %v3440 = vrot.slane %v3438, 4
      %v3441 = vshll.u32 %v3074, 16
      %v3443 = vrot.slane %v3441, 5
      %v3444 = vor.u32 %v3440, %v3443
      %v3445 = vrot.slane %v3444, 4
      %v3447 = vshll.u32 %v3075, 16
      %v3449 = vrot.slane %v3447, 5
      %v3450 = vsel %vm1274, %v3445, %v3449
      %v3451 = vshrl.u32 %v3075, 16
      %v3453 = vrot.slane %v3451, 4
      %v3454 = vor.u32 %v3453, %v3449
      %v3455 = vrot.slane %v3454, 4
      %v3457 = vshll.u32 %v3076, 16
      %v3459 = vrot.slane %v3457, 5
      %v3460 = vsel %vm1274, %v3455, %v3459
      %s3461 = scalar_lea.vmem %s1, 8
      %v3462 = vld [vmem:[%s3461] sm:$0x3]
      %v3463 = vunpack.c.l.b16 %v3090
      %v3464 = vunpack.c.l.b16 %v3100
      %v3465 = vunpack.c.l.b16 %v3114
      %v3466 = vunpack.c.l.b16 %v3124
      %v3467 = vunpack.c.l.b16 %v3138
      %v3468 = vunpack.c.l.b16 %v3148
      %v3469 = vunpack.c.l.b16 %v3162
      %v3470 = vunpack.c.l.b16 %v3172
      %v3471 = vunpack.c.l.b16 %v3186
      %v3472 = vunpack.c.l.b16 %v3196
      %v3473 = vunpack.c.l.b16 %v3210
      %v3474 = vunpack.c.l.b16 %v3220
      %v3475 = vunpack.c.l.b16 %v3234
      %v3476 = vunpack.c.l.b16 %v3244
      %v3477 = vunpack.c.l.b16 %v3258
      %v3478 = vunpack.c.l.b16 %v3268
      %v3479 = vunpack.c.l.b16 %v3282
      %v3480 = vunpack.c.l.b16 %v3292
      %v3481 = vunpack.c.l.b16 %v3306
      %v3482 = vunpack.c.l.b16 %v3316
      %v3483 = vunpack.c.l.b16 %v3330
      %v3484 = vunpack.c.l.b16 %v3340
      %v3485 = vunpack.c.l.b16 %v3354
      %v3486 = vunpack.c.l.b16 %v3364
      %v3487 = vunpack.c.l.b16 %v3378
      %v3488 = vunpack.c.l.b16 %v3388
      %v3489 = vunpack.c.l.b16 %v3402
      %v3490 = vunpack.c.l.b16 %v3412
      %v3491 = vunpack.c.l.b16 %v3426
      %v3492 = vunpack.c.l.b16 %v3436
      %v3493 = vunpack.c.l.b16 %v3450
      %v3494 = vunpack.c.l.b16 %v3460
      %v3495 = vpack.c.b16 %v3464, %v3463
      %v3496 = vpack.c.b16 %v3466, %v3465
      %v3497 = vpack.c.b16 %v3468, %v3467
      %v3498 = vpack.c.b16 %v3470, %v3469
      %v3499 = vpack.c.b16 %v3472, %v3471
      %v3500 = vpack.c.b16 %v3474, %v3473
      %v3501 = vpack.c.b16 %v3476, %v3475
      %v3502 = vpack.c.b16 %v3478, %v3477
      %v3503 = vpack.c.b16 %v3480, %v3479
      %v3504 = vpack.c.b16 %v3482, %v3481
      %v3505 = vpack.c.b16 %v3484, %v3483
      %v3506 = vpack.c.b16 %v3486, %v3485
      %v3507 = vpack.c.b16 %v3488, %v3487
      %v3508 = vpack.c.b16 %v3490, %v3489
      %v3509 = vpack.c.b16 %v3492, %v3491
      %v3510 = vpack.c.b16 %v3494, %v3493
      %v3512 = vsel %vm384, %v3495, 0
      %v3515 = vsel %vm384, %v3496, 0
      %v3518 = vsel %vm384, %v3497, 0
      %v3521 = vsel %vm384, %v3498, 0
      %v3524 = vsel %vm384, %v3499, 0
      %v3527 = vsel %vm384, %v3500, 0
      %v3530 = vsel %vm384, %v3501, 0
      %v3533 = vsel %vm384, %v3502, 0
      %v3536 = vsel %vm384, %v3503, 0
      %v3539 = vsel %vm384, %v3504, 0
      %v3542 = vsel %vm384, %v3505, 0
      %v3545 = vsel %vm384, %v3506, 0
      %v3548 = vsel %vm384, %v3507, 0
      %v3551 = vsel %vm384, %v3508, 0
      %v3554 = vsel %vm384, %v3509, 0
      %v3557 = vsel %vm384, %v3510, 0
      %v3560 = vsel %vm1757, %v3462, 0
      %3562 = vmatprep.subr.bf16.mxu0 0
      %3563 = vmatpush1.bf16.msra.mxu0 %v3560
      %3564 = vmatprep.subr.bf16.mxu0 0
      %3565 = vmatpush1.bf16.msra.mxu0 0
      %3566 = vmatprep.subr.bf16.mxu0 0
      %3567 = vmatpush1.bf16.msra.mxu0 0
      %3568 = vmatprep.subr.bf16.mxu0 0
      %3569 = vmatpush1.bf16.msra.mxu0 0
      %3570 = vmatprep.subr.bf16.mxu0 0
      %3571 = vmatpush1.bf16.msra.mxu0 0
      %3572 = vmatprep.subr.bf16.mxu0 0
      %3573 = vmatpush1.bf16.msra.mxu0 0
      %3574 = vmatprep.subr.bf16.mxu0 0
      %3575 = vmatpush1.bf16.msra.mxu0 0
      %3576 = vmatprep.subr.bf16.mxu0 0
      %3577 = vmatpush1.bf16.msra.mxu0 0
      %3578 = vmatprep.subr.bf16.mxu0 0
      %3579 = vmatpush1.bf16.msra.mxu0 0
      %3580 = vmatprep.subr.bf16.mxu0 0
      %3581 = vmatpush1.bf16.msra.mxu0 0
      %3582 = vmatprep.subr.bf16.mxu0 0
      %3583 = vmatpush1.bf16.msra.mxu0 0
      %3584 = vmatprep.subr.bf16.mxu0 0
      %3585 = vmatpush1.bf16.msra.mxu0 0
      %3586 = vmatprep.subr.bf16.mxu0 0
      %3587 = vmatpush1.bf16.msra.mxu0 0
      %3588 = vmatprep.subr.bf16.mxu0 0
      %3589 = vmatpush1.bf16.msra.mxu0 0
      %3590 = vmatprep.subr.bf16.mxu0 0
      %3591 = vmatpush1.bf16.msra.mxu0 0
      %3592 = vmatprep.subr.bf16.mxu0 0
      %3593 = vmatpush1.bf16.msra.mxu0 0
      %3594 = vmatprep.mubr.bf16.mxu0 0
      %3595 = vmatmul.mubr.bf16.gmra.mrb[0].mxu0 %v3512
      %v3596 = vpop.f32.mrb[0].mxu0
      %v3597 = vadd.f32 0.0, %v3596
      %v3598 = vpop.f32.mrb[0].mxu0
      %v3599 = vpop.f32.mrb[0].mxu0
      %v3600 = vadd.f32 0.0, %v3599
      %v3601 = vpop.f32.mrb[0].mxu0
      %3602 = vmatprep.mubr.bf16.mxu0 0
      %3603 = vmatmul.mubr.bf16.gmra.mrb[0].mxu0 %v3515
      %v3604 = vpop.f32.mrb[0].mxu0
      %v3605 = vadd.f32 0.0, %v3604
      %v3606 = vpop.f32.mrb[0].mxu0
      %v3607 = vpop.f32.mrb[0].mxu0
      %v3608 = vadd.f32 0.0, %v3607
      %v3609 = vpop.f32.mrb[0].mxu0
      %3610 = vmatprep.mubr.bf16.mxu0 0
      %3611 = vmatmul.mubr.bf16.gmra.mrb[0].mxu0 %v3518
      %v3612 = vpop.f32.mrb[0].mxu0
      %v3613 = vadd.f32 0.0, %v3612
      %v3614 = vpop.f32.mrb[0].mxu0
      %v3615 = vpop.f32.mrb[0].mxu0
      %v3616 = vadd.f32 0.0, %v3615
      %v3617 = vpop.f32.mrb[0].mxu0
      %3618 = vmatprep.mubr.bf16.mxu0 0
      %3619 = vmatmul.mubr.bf16.gmra.mrb[0].mxu0 %v3521
      %v3620 = vpop.f32.mrb[0].mxu0
      %v3621 = vadd.f32 0.0, %v3620
      %v3622 = vpop.f32.mrb[0].mxu0
      %v3623 = vpop.f32.mrb[0].mxu0
      %v3624 = vadd.f32 0.0, %v3623
      %v3625 = vpop.f32.mrb[0].mxu0
      %3626 = vmatprep.mubr.bf16.mxu0 0
      %3627 = vmatmul.mubr.bf16.gmra.mrb[0].mxu0 %v3524
      %v3628 = vpop.f32.mrb[0].mxu0
      %v3629 = vadd.f32 0.0, %v3628
      %v3630 = vpop.f32.mrb[0].mxu0
      %v3631 = vpop.f32.mrb[0].mxu0
      %v3632 = vadd.f32 0.0, %v3631
      %v3633 = vpop.f32.mrb[0].mxu0
      %3634 = vmatprep.mubr.bf16.mxu0 0
      %3635 = vmatmul.mubr.bf16.gmra.mrb[0].mxu0 %v3527
      %v3636 = vpop.f32.mrb[0].mxu0
      %v3637 = vadd.f32 0.0, %v3636
      %v3638 = vpop.f32.mrb[0].mxu0
      %v3639 = vpop.f32.mrb[0].mxu0
      %v3640 = vadd.f32 0.0, %v3639
      %v3641 = vpop.f32.mrb[0].mxu0
      %3642 = vmatprep.mubr.bf16.mxu0 0
      %3643 = vmatmul.mubr.bf16.gmra.mrb[0].mxu0 %v3530
      %v3644 = vpop.f32.mrb[0].mxu0
      %v3645 = vadd.f32 0.0, %v3644
      %v3646 = vpop.f32.mrb[0].mxu0
      %v3647 = vpop.f32.mrb[0].mxu0
      %v3648 = vadd.f32 0.0, %v3647
      %v3649 = vpop.f32.mrb[0].mxu0
      %3650 = vmatprep.mubr.bf16.mxu0 0
      %3651 = vmatmul.mubr.bf16.gmra.mrb[0].mxu0 %v3533
      %v3652 = vpop.f32.mrb[0].mxu0
      %v3653 = vadd.f32 0.0, %v3652
      %v3654 = vpop.f32.mrb[0].mxu0
      %v3655 = vpop.f32.mrb[0].mxu0
      %v3656 = vadd.f32 0.0, %v3655
      %v3657 = vpop.f32.mrb[0].mxu0
      %3658 = vmatprep.mubr.bf16.mxu0 0
      %3659 = vmatmul.mubr.bf16.gmra.mrb[0].mxu0 %v3536
      %v3660 = vpop.f32.mrb[0].mxu0
      %v3661 = vadd.f32 0.0, %v3660
      %v3662 = vpop.f32.mrb[0].mxu0
      %v3663 = vpop.f32.mrb[0].mxu0
      %v3664 = vadd.f32 0.0, %v3663
      %v3665 = vpop.f32.mrb[0].mxu0
      %3666 = vmatprep.mubr.bf16.mxu0 0
      %3667 = vmatmul.mubr.bf16.gmra.mrb[0].mxu0 %v3539
      %v3668 = vpop.f32.mrb[0].mxu0
      %v3669 = vadd.f32 0.0, %v3668
      %v3670 = vpop.f32.mrb[0].mxu0
      %v3671 = vpop.f32.mrb[0].mxu0
      %v3672 = vadd.f32 0.0, %v3671
      %v3673 = vpop.f32.mrb[0].mxu0
      %3674 = vmatprep.mubr.bf16.mxu0 0
      %3675 = vmatmul.mubr.bf16.gmra.mrb[0].mxu0 %v3542
      %v3676 = vpop.f32.mrb[0].mxu0
      %v3677 = vadd.f32 0.0, %v3676
      %v3678 = vpop.f32.mrb[0].mxu0
      %v3679 = vpop.f32.mrb[0].mxu0
      %v3680 = vadd.f32 0.0, %v3679
      %v3681 = vpop.f32.mrb[0].mxu0
      %3682 = vmatprep.mubr.bf16.mxu0 0
      %3683 = vmatmul.mubr.bf16.gmra.mrb[0].mxu0 %v3545
      %v3684 = vpop.f32.mrb[0].mxu0
      %v3685 = vadd.f32 0.0, %v3684
      %v3686 = vpop.f32.mrb[0].mxu0
      %v3687 = vpop.f32.mrb[0].mxu0
      %v3688 = vadd.f32 0.0, %v3687
      %v3689 = vpop.f32.mrb[0].mxu0
      %3690 = vmatprep.mubr.bf16.mxu0 0
      %3691 = vmatmul.mubr.bf16.gmra.mrb[0].mxu0 %v3548
      %v3692 = vpop.f32.mrb[0].mxu0
      %v3693 = vadd.f32 0.0, %v3692
      %v3694 = vpop.f32.mrb[0].mxu0
      %v3695 = vpop.f32.mrb[0].mxu0
      %v3696 = vadd.f32 0.0, %v3695
      %v3697 = vpop.f32.mrb[0].mxu0
      %3698 = vmatprep.mubr.bf16.mxu0 0
      %3699 = vmatmul.mubr.bf16.gmra.mrb[0].mxu0 %v3551
      %v3700 = vpop.f32.mrb[0].mxu0
      %v3701 = vadd.f32 0.0, %v3700
      %v3702 = vpop.f32.mrb[0].mxu0
      %v3703 = vpop.f32.mrb[0].mxu0
      %v3704 = vadd.f32 0.0, %v3703
      %v3705 = vpop.f32.mrb[0].mxu0
      %3706 = vmatprep.mubr.bf16.mxu0 0
      %3707 = vmatmul.mubr.bf16.gmra.mrb[0].mxu0 %v3554
      %v3708 = vpop.f32.mrb[0].mxu0
      %v3709 = vadd.f32 0.0, %v3708
      %v3710 = vpop.f32.mrb[0].mxu0
      %v3711 = vpop.f32.mrb[0].mxu0
      %v3712 = vadd.f32 0.0, %v3711
      %v3713 = vpop.f32.mrb[0].mxu0
      %3714 = vmatprep.mubr.bf16.mxu0 0
      %3715 = vmatmul.mubr.bf16.gmra.mrb[0].mxu0 %v3557
      %v3716 = vpop.f32.mrb[0].mxu0
      %v3717 = vadd.f32 0.0, %v3716
      %v3718 = vpop.f32.mrb[0].mxu0
      %v3719 = vpop.f32.mrb[0].mxu0
      %v3720 = vadd.f32 0.0, %v3719
      %v3721 = vpop.f32.mrb[0].mxu0
      %3722 = vdwg.mxu0
      %v3723 = vadd.f32 %v2997, %v3597
      %v3724 = vadd.f32 %v2998, %v3600
      %v3725 = vadd.f32 %v2999, %v3605
      %v3726 = vadd.f32 %v3000, %v3608
      %v3727 = vadd.f32 %v3001, %v3613
      %v3728 = vadd.f32 %v3002, %v3616
      %v3729 = vadd.f32 %v3003, %v3621
      %v3730 = vadd.f32 %v3004, %v3624
      %v3731 = vadd.f32 %v3005, %v3629
      %v3732 = vadd.f32 %v3006, %v3632
      %v3733 = vadd.f32 %v3007, %v3637
      %v3734 = vadd.f32 %v3008, %v3640
      %v3735 = vadd.f32 %v3009, %v3645
      %v3736 = vadd.f32 %v3010, %v3648
      %v3737 = vadd.f32 %v3011, %v3653
      %v3738 = vadd.f32 %v3012, %v3656
      %v3739 = vadd.f32 %v3013, %v3661
      %v3740 = vadd.f32 %v3014, %v3664
      %v3741 = vadd.f32 %v3015, %v3669
      %v3742 = vadd.f32 %v3016, %v3672
      %v3743 = vadd.f32 %v3017, %v3677
      %v3744 = vadd.f32 %v3018, %v3680
      %v3745 = vadd.f32 %v3019, %v3685
      %v3746 = vadd.f32 %v3020, %v3688
      %v3747 = vadd.f32 %v3021, %v3693
      %v3748 = vadd.f32 %v3022, %v3696
      %v3749 = vadd.f32 %v3023, %v3701
      %v3750 = vadd.f32 %v3024, %v3704
      %v3751 = vadd.f32 %v3025, %v3709
      %v3752 = vadd.f32 %v3026, %v3712
      %v3753 = vadd.f32 %v3027, %v3717
      %v3754 = vadd.f32 %v3028, %v3720
      %v3755 = vld [vmem:[%s1105] sm:$0xe]
      %v3756 = vld [vmem:[%s1105 + $0xc] sm:$0xe]
      %v3757 = vld [vmem:[%s1105 + $0x18] sm:$0xe]
      %v3758 = vld [vmem:[%s1105 + $0x24] sm:$0xe]
      %v3759 = vld [vmem:[%s1105 + $0x30] sm:$0xe]
      %v3760 = vld [vmem:[%s1105 + $0x3c] sm:$0xe]
      %v3761 = vld [vmem:[%s1105 + $0x48] sm:$0xe]
      %v3762 = vld [vmem:[%s1105 + $0x54] sm:$0xe]
      %v3763 = vld [vmem:[%s1105 + $0x60] sm:$0xe]
      %v3764 = vld [vmem:[%s1105 + $0x6c] sm:$0xe]
      %v3765 = vld [vmem:[%s1105 + $0x78] sm:$0xe]
      %v3766 = vld [vmem:[%s1105 + $0x84] sm:$0xe]
      %v3767 = vld [vmem:[%s1105 + $0x90] sm:$0xe]
      %v3768 = vld [vmem:[%s1105 + $0x9c] sm:$0xe]
      %v3769 = vld [vmem:[%s1105 + $0xa8] sm:$0xe]
      %v3770 = vld [vmem:[%s1105 + $0xb4] sm:$0xe]
      %v3819 = vrot.slane %v3755, 5
      %v3820 = vrot.slane %v3819, 4
      %v3821 = vrot.slane %v3030, 5
      %v3822 = vsel %vm2264, %v3820, %v3821
      %v3823 = vrot.slane %v3821, 4
      %v3824 = vrot.slane %v3031, 5
      %v3825 = vsel %vm2264, %v3823, %v3824
      %v3826 = vrot.slane %v3756, 5
      %v3827 = vrot.slane %v3826, 4
      %v3828 = vrot.slane %v3033, 5
      %v3829 = vsel %vm2264, %v3827, %v3828
      %v3830 = vrot.slane %v3828, 4
      %v3831 = vrot.slane %v3034, 5
      %v3832 = vsel %vm2264, %v3830, %v3831
      %v3833 = vrot.slane %v3757, 5
      %v3834 = vrot.slane %v3833, 4
      %v3835 = vrot.slane %v3036, 5
      %v3836 = vsel %vm2264, %v3834, %v3835
      %v3837 = vrot.slane %v3835, 4
      %v3838 = vrot.slane %v3037, 5
      %v3839 = vsel %vm2264, %v3837, %v3838
      %v3840 = vrot.slane %v3758, 5
      %v3841 = vrot.slane %v3840, 4
      %v3842 = vrot.slane %v3039, 5
      %v3843 = vsel %vm2264, %v3841, %v3842
      %v3844 = vrot.slane %v3842, 4
      %v3845 = vrot.slane %v3040, 5
      %v3846 = vsel %vm2264, %v3844, %v3845
      %v3847 = vrot.slane %v3759, 5
      %v3848 = vrot.slane %v3847, 4
      %v3849 = vrot.slane %v3042, 5
      %v3850 = vsel %vm2264, %v3848, %v3849
      %v3851 = vrot.slane %v3849, 4
      %v3852 = vrot.slane %v3043, 5
      %v3853 = vsel %vm2264, %v3851, %v3852
      %v3854 = vrot.slane %v3760, 5
      %v3855 = vrot.slane %v3854, 4
      %v3856 = vrot.slane %v3045, 5
      %v3857 = vsel %vm2264, %v3855, %v3856
      %v3858 = vrot.slane %v3856, 4
      %v3859 = vrot.slane %v3046, 5
      %v3860 = vsel %vm2264, %v3858, %v3859
      %v3861 = vrot.slane %v3761, 5
      %v3862 = vrot.slane %v3861, 4
      %v3863 = vrot.slane %v3048, 5
      %v3864 = vsel %vm2264, %v3862, %v3863
      %v3865 = vrot.slane %v3863, 4
      %v3866 = vrot.slane %v3049, 5
      %v3867 = vsel %vm2264, %v3865, %v3866
      %v3868 = vrot.slane %v3762, 5
      %v3869 = vrot.slane %v3868, 4
      %v3870 = vrot.slane %v3051, 5
      %v3871 = vsel %vm2264, %v3869, %v3870
      %v3872 = vrot.slane %v3870, 4
      %v3873 = vrot.slane %v3052, 5
      %v3874 = vsel %vm2264, %v3872, %v3873
      %v3875 = vrot.slane %v3763, 5
      %v3876 = vrot.slane %v3875, 4
      %v3877 = vrot.slane %v3054, 5
      %v3878 = vsel %vm2264, %v3876, %v3877
      %v3879 = vrot.slane %v3877, 4
      %v3880 = vrot.slane %v3055, 5
      %v3881 = vsel %vm2264, %v3879, %v3880
      %v3882 = vrot.slane %v3764, 5
      %v3883 = vrot.slane %v3882, 4
      %v3884 = vrot.slane %v3057, 5
      %v3885 = vsel %vm2264, %v3883, %v3884
      %v3886 = vrot.slane %v3884, 4
      %v3887 = vrot.slane %v3058, 5
      %v3888 = vsel %vm2264, %v3886, %v3887
      %v3889 = vrot.slane %v3765, 5
      %v3890 = vrot.slane %v3889, 4
      %v3891 = vrot.slane %v3060, 5
      %v3892 = vsel %vm2264, %v3890, %v3891
      %v3893 = vrot.slane %v3891, 4
      %v3894 = vrot.slane %v3061, 5
      %v3895 = vsel %vm2264, %v3893, %v3894
      %v3896 = vrot.slane %v3766, 5
      %v3897 = vrot.slane %v3896, 4
      %v3898 = vrot.slane %v3063, 5
      %v3899 = vsel %vm2264, %v3897, %v3898
      %v3900 = vrot.slane %v3898, 4
      %v3901 = vrot.slane %v3064, 5
      %v3902 = vsel %vm2264, %v3900, %v3901
      %v3903 = vrot.slane %v3767, 5
      %v3904 = vrot.slane %v3903, 4
      %v3905 = vrot.slane %v3066, 5
      %v3906 = vsel %vm2264, %v3904, %v3905
      %v3907 = vrot.slane %v3905, 4
      %v3908 = vrot.slane %v3067, 5
      %v3909 = vsel %vm2264, %v3907, %v3908
      %v3910 = vrot.slane %v3768, 5
      %v3911 = vrot.slane %v3910, 4
      %v3912 = vrot.slane %v3069, 5
      %v3913 = vsel %vm2264, %v3911, %v3912
      %v3914 = vrot.slane %v3912, 4
      %v3915 = vrot.slane %v3070, 5
      %v3916 = vsel %vm2264, %v3914, %v3915
      %v3917 = vrot.slane %v3769, 5
      %v3918 = vrot.slane %v3917, 4
      %v3919 = vrot.slane %v3072, 5
      %v3920 = vsel %vm2264, %v3918, %v3919
      %v3921 = vrot.slane %v3919, 4
      %v3922 = vrot.slane %v3073, 5
      %v3923 = vsel %vm2264, %v3921, %v3922
      %v3924 = vrot.slane %v3770, 5
      %v3925 = vrot.slane %v3924, 4
      %v3926 = vrot.slane %v3075, 5
      %v3927 = vsel %vm2264, %v3925, %v3926
      %v3928 = vrot.slane %v3926, 4
      %v3929 = vrot.slane %v3076, 5
      %v3930 = vsel %vm2264, %v3928, %v3929
      %s3931 = scalar_lea.vmem %s1, 10
      %v3932 = vld [vmem:[%s3931] sm:$0x3]
      %v3933 = vunpack.c.l.b16 %v3822
      %v3934 = vunpack.c.l.b16 %v3825
      %v3935 = vunpack.c.l.b16 %v3829
      %v3936 = vunpack.c.l.b16 %v3832
      %v3937 = vunpack.c.l.b16 %v3836
      %v3938 = vunpack.c.l.b16 %v3839
      %v3939 = vunpack.c.l.b16 %v3843
      %v3940 = vunpack.c.l.b16 %v3846
      %v3941 = vunpack.c.l.b16 %v3850
      %v3942 = vunpack.c.l.b16 %v3853
      %v3943 = vunpack.c.l.b16 %v3857
      %v3944 = vunpack.c.l.b16 %v3860
      %v3945 = vunpack.c.l.b16 %v3864
      %v3946 = vunpack.c.l.b16 %v3867
      %v3947 = vunpack.c.l.b16 %v3871
      %v3948 = vunpack.c.l.b16 %v3874
      %v3949 = vunpack.c.l.b16 %v3878
      %v3950 = vunpack.c.l.b16 %v3881
      %v3951 = vunpack.c.l.b16 %v3885
      %v3952 = vunpack.c.l.b16 %v3888
      %v3953 = vunpack.c.l.b16 %v3892
      %v3954 = vunpack.c.l.b16 %v3895
      %v3955 = vunpack.c.l.b16 %v3899
      %v3956 = vunpack.c.l.b16 %v3902
      %v3957 = vunpack.c.l.b16 %v3906
      %v3958 = vunpack.c.l.b16 %v3909
      %v3959 = vunpack.c.l.b16 %v3913
      %v3960 = vunpack.c.l.b16 %v3916
      %v3961 = vunpack.c.l.b16 %v3920
      %v3962 = vunpack.c.l.b16 %v3923
      %v3963 = vunpack.c.l.b16 %v3927
      %v3964 = vunpack.c.l.b16 %v3930
      %v3965 = vpack.c.b16 %v3934, %v3933
      %v3966 = vpack.c.b16 %v3936, %v3935
      %v3967 = vpack.c.b16 %v3938, %v3937
      %v3968 = vpack.c.b16 %v3940, %v3939
      %v3969 = vpack.c.b16 %v3942, %v3941
      %v3970 = vpack.c.b16 %v3944, %v3943
      %v3971 = vpack.c.b16 %v3946, %v3945
      %v3972 = vpack.c.b16 %v3948, %v3947
      %v3973 = vpack.c.b16 %v3950, %v3949
      %v3974 = vpack.c.b16 %v3952, %v3951
      %v3975 = vpack.c.b16 %v3954, %v3953
      %v3976 = vpack.c.b16 %v3956, %v3955
      %v3977 = vpack.c.b16 %v3958, %v3957
      %v3978 = vpack.c.b16 %v3960, %v3959
      %v3979 = vpack.c.b16 %v3962, %v3961
      %v3980 = vpack.c.b16 %v3964, %v3963
      %v3982 = vsel %vm384, %v3965, 0
      %v3985 = vsel %vm384, %v3966, 0
      %v3988 = vsel %vm384, %v3967, 0
      %v3991 = vsel %vm384, %v3968, 0
      %v3994 = vsel %vm384, %v3969, 0
      %v3997 = vsel %vm384, %v3970, 0
      %v4000 = vsel %vm384, %v3971, 0
      %v4003 = vsel %vm384, %v3972, 0
      %v4006 = vsel %vm384, %v3973, 0
      %v4009 = vsel %vm384, %v3974, 0
      %v4012 = vsel %vm384, %v3975, 0
      %v4015 = vsel %vm384, %v3976, 0
      %v4018 = vsel %vm384, %v3977, 0
      %v4021 = vsel %vm384, %v3978, 0
      %v4024 = vsel %vm384, %v3979, 0
      %v4027 = vsel %vm384, %v3980, 0
      %v4030 = vsel %vm1757, %v3932, 0
      %4032 = vmatprep.subr.bf16.mxu0 0
      %4033 = vmatpush1.bf16.msra.mxu0 %v4030
      %4034 = vmatprep.subr.bf16.mxu0 0
      %4035 = vmatpush1.bf16.msra.mxu0 0
      %4036 = vmatprep.subr.bf16.mxu0 0
      %4037 = vmatpush1.bf16.msra.mxu0 0
      %4038 = vmatprep.subr.bf16.mxu0 0
      %4039 = vmatpush1.bf16.msra.mxu0 0
      %4040 = vmatprep.subr.bf16.mxu0 0
      %4041 = vmatpush1.bf16.msra.mxu0 0
      %4042 = vmatprep.subr.bf16.mxu0 0
      %4043 = vmatpush1.bf16.msra.mxu0 0
      %4044 = vmatprep.subr.bf16.mxu0 0
      %4045 = vmatpush1.bf16.msra.mxu0 0
      %4046 = vmatprep.subr.bf16.mxu0 0
      %4047 = vmatpush1.bf16.msra.mxu0 0
      %4048 = vmatprep.subr.bf16.mxu0 0
      %4049 = vmatpush1.bf16.msra.mxu0 0
      %4050 = vmatprep.subr.bf16.mxu0 0
      %4051 = vmatpush1.bf16.msra.mxu0 0
      %4052 = vmatprep.subr.bf16.mxu0 0
      %4053 = vmatpush1.bf16.msra.mxu0 0
      %4054 = vmatprep.subr.bf16.mxu0 0
      %4055 = vmatpush1.bf16.msra.mxu0 0
      %4056 = vmatprep.subr.bf16.mxu0 0
      %4057 = vmatpush1.bf16.msra.mxu0 0
      %4058 = vmatprep.subr.bf16.mxu0 0
      %4059 = vmatpush1.bf16.msra.mxu0 0
      %4060 = vmatprep.subr.bf16.mxu0 0
      %4061 = vmatpush1.bf16.msra.mxu0 0
      %4062 = vmatprep.subr.bf16.mxu0 0
      %4063 = vmatpush1.bf16.msra.mxu0 0
      %4064 = vmatprep.mubr.bf16.mxu0 0
      %4065 = vmatmul.mubr.bf16.gmra.mrb[0].mxu0 %v3982
      %v4066 = vpop.f32.mrb[0].mxu0
      %v4067 = vadd.f32 0.0, %v4066
      %v4068 = vpop.f32.mrb[0].mxu0
      %v4069 = vpop.f32.mrb[0].mxu0
      %v4070 = vadd.f32 0.0, %v4069
      %v4071 = vpop.f32.mrb[0].mxu0
      %4072 = vmatprep.mubr.bf16.mxu0 0
      %4073 = vmatmul.mubr.bf16.gmra.mrb[0].mxu0 %v3985
      %v4074 = vpop.f32.mrb[0].mxu0
      %v4075 = vadd.f32 0.0, %v4074
      %v4076 = vpop.f32.mrb[0].mxu0
      %v4077 = vpop.f32.mrb[0].mxu0
      %v4078 = vadd.f32 0.0, %v4077
      %v4079 = vpop.f32.mrb[0].mxu0
      %4080 = vmatprep.mubr.bf16.mxu0 0
      %4081 = vmatmul.mubr.bf16.gmra.mrb[0].mxu0 %v3988
      %v4082 = vpop.f32.mrb[0].mxu0
      %v4083 = vadd.f32 0.0, %v4082
      %v4084 = vpop.f32.mrb[0].mxu0
      %v4085 = vpop.f32.mrb[0].mxu0
      %v4086 = vadd.f32 0.0, %v4085
      %v4087 = vpop.f32.mrb[0].mxu0
      %4088 = vmatprep.mubr.bf16.mxu0 0
      %4089 = vmatmul.mubr.bf16.gmra.mrb[0].mxu0 %v3991
      %v4090 = vpop.f32.mrb[0].mxu0
      %v4091 = vadd.f32 0.0, %v4090
      %v4092 = vpop.f32.mrb[0].mxu0
      %v4093 = vpop.f32.mrb[0].mxu0
      %v4094 = vadd.f32 0.0, %v4093
      %v4095 = vpop.f32.mrb[0].mxu0
      %4096 = vmatprep.mubr.bf16.mxu0 0
      %4097 = vmatmul.mubr.bf16.gmra.mrb[0].mxu0 %v3994
      %v4098 = vpop.f32.mrb[0].mxu0
      %v4099 = vadd.f32 0.0, %v4098
      %v4100 = vpop.f32.mrb[0].mxu0
      %v4101 = vpop.f32.mrb[0].mxu0
      %v4102 = vadd.f32 0.0, %v4101
      %v4103 = vpop.f32.mrb[0].mxu0
      %4104 = vmatprep.mubr.bf16.mxu0 0
      %4105 = vmatmul.mubr.bf16.gmra.mrb[0].mxu0 %v3997
      %v4106 = vpop.f32.mrb[0].mxu0
      %v4107 = vadd.f32 0.0, %v4106
      %v4108 = vpop.f32.mrb[0].mxu0
      %v4109 = vpop.f32.mrb[0].mxu0
      %v4110 = vadd.f32 0.0, %v4109
      %v4111 = vpop.f32.mrb[0].mxu0
      %4112 = vmatprep.mubr.bf16.mxu0 0
      %4113 = vmatmul.mubr.bf16.gmra.mrb[0].mxu0 %v4000
      %v4114 = vpop.f32.mrb[0].mxu0
      %v4115 = vadd.f32 0.0, %v4114
      %v4116 = vpop.f32.mrb[0].mxu0
      %v4117 = vpop.f32.mrb[0].mxu0
      %v4118 = vadd.f32 0.0, %v4117
      %v4119 = vpop.f32.mrb[0].mxu0
      %4120 = vmatprep.mubr.bf16.mxu0 0
      %4121 = vmatmul.mubr.bf16.gmra.mrb[0].mxu0 %v4003
      %v4122 = vpop.f32.mrb[0].mxu0
      %v4123 = vadd.f32 0.0, %v4122
      %v4124 = vpop.f32.mrb[0].mxu0
      %v4125 = vpop.f32.mrb[0].mxu0
      %v4126 = vadd.f32 0.0, %v4125
      %v4127 = vpop.f32.mrb[0].mxu0
      %4128 = vmatprep.mubr.bf16.mxu0 0
      %4129 = vmatmul.mubr.bf16.gmra.mrb[0].mxu0 %v4006
      %v4130 = vpop.f32.mrb[0].mxu0
      %v4131 = vadd.f32 0.0, %v4130
      %v4132 = vpop.f32.mrb[0].mxu0
      %v4133 = vpop.f32.mrb[0].mxu0
      %v4134 = vadd.f32 0.0, %v4133
      %v4135 = vpop.f32.mrb[0].mxu0
      %4136 = vmatprep.mubr.bf16.mxu0 0
      %4137 = vmatmul.mubr.bf16.gmra.mrb[0].mxu0 %v4009
      %v4138 = vpop.f32.mrb[0].mxu0
      %v4139 = vadd.f32 0.0, %v4138
      %v4140 = vpop.f32.mrb[0].mxu0
      %v4141 = vpop.f32.mrb[0].mxu0
      %v4142 = vadd.f32 0.0, %v4141
      %v4143 = vpop.f32.mrb[0].mxu0
      %4144 = vmatprep.mubr.bf16.mxu0 0
      %4145 = vmatmul.mubr.bf16.gmra.mrb[0].mxu0 %v4012
      %v4146 = vpop.f32.mrb[0].mxu0
      %v4147 = vadd.f32 0.0, %v4146
      %v4148 = vpop.f32.mrb[0].mxu0
      %v4149 = vpop.f32.mrb[0].mxu0
      %v4150 = vadd.f32 0.0, %v4149
      %v4151 = vpop.f32.mrb[0].mxu0
      %4152 = vmatprep.mubr.bf16.mxu0 0
      %4153 = vmatmul.mubr.bf16.gmra.mrb[0].mxu0 %v4015
      %v4154 = vpop.f32.mrb[0].mxu0
      %v4155 = vadd.f32 0.0, %v4154
      %v4156 = vpop.f32.mrb[0].mxu0
      %v4157 = vpop.f32.mrb[0].mxu0
      %v4158 = vadd.f32 0.0, %v4157
      %v4159 = vpop.f32.mrb[0].mxu0
      %4160 = vmatprep.mubr.bf16.mxu0 0
      %4161 = vmatmul.mubr.bf16.gmra.mrb[0].mxu0 %v4018
      %v4162 = vpop.f32.mrb[0].mxu0
      %v4163 = vadd.f32 0.0, %v4162
      %v4164 = vpop.f32.mrb[0].mxu0
      %v4165 = vpop.f32.mrb[0].mxu0
      %v4166 = vadd.f32 0.0, %v4165
      %v4167 = vpop.f32.mrb[0].mxu0
      %4168 = vmatprep.mubr.bf16.mxu0 0
      %4169 = vmatmul.mubr.bf16.gmra.mrb[0].mxu0 %v4021
      %v4170 = vpop.f32.mrb[0].mxu0
      %v4171 = vadd.f32 0.0, %v4170
      %v4172 = vpop.f32.mrb[0].mxu0
      %v4173 = vpop.f32.mrb[0].mxu0
      %v4174 = vadd.f32 0.0, %v4173
      %v4175 = vpop.f32.mrb[0].mxu0
      %4176 = vmatprep.mubr.bf16.mxu0 0
      %4177 = vmatmul.mubr.bf16.gmra.mrb[0].mxu0 %v4024
      %v4178 = vpop.f32.mrb[0].mxu0
      %v4179 = vadd.f32 0.0, %v4178
      %v4180 = vpop.f32.mrb[0].mxu0
      %v4181 = vpop.f32.mrb[0].mxu0
      %v4182 = vadd.f32 0.0, %v4181
      %v4183 = vpop.f32.mrb[0].mxu0
      %4184 = vmatprep.mubr.bf16.mxu0 0
      %4185 = vmatmul.mubr.bf16.gmra.mrb[0].mxu0 %v4027
      %v4186 = vpop.f32.mrb[0].mxu0
      %v4187 = vadd.f32 0.0, %v4186
      %v4188 = vpop.f32.mrb[0].mxu0
      %v4189 = vpop.f32.mrb[0].mxu0
      %v4190 = vadd.f32 0.0, %v4189
      %v4191 = vpop.f32.mrb[0].mxu0
      %4192 = vdwg.mxu0
      %v4193 = vadd.f32 %v3723, %v4067
      %v4194 = vadd.f32 %v3724, %v4070
      %v4195 = vadd.f32 %v3725, %v4075
      %v4196 = vadd.f32 %v3726, %v4078
      %v4197 = vadd.f32 %v3727, %v4083
      %v4198 = vadd.f32 %v3728, %v4086
      %v4199 = vadd.f32 %v3729, %v4091
      %v4200 = vadd.f32 %v3730, %v4094
      %v4201 = vadd.f32 %v3731, %v4099
      %v4202 = vadd.f32 %v3732, %v4102
      %v4203 = vadd.f32 %v3733, %v4107
      %v4204 = vadd.f32 %v3734, %v4110
      %v4205 = vadd.f32 %v3735, %v4115
      %v4206 = vadd.f32 %v3736, %v4118
      %v4207 = vadd.f32 %v3737, %v4123
      %v4208 = vadd.f32 %v3738, %v4126
      %v4209 = vadd.f32 %v3739, %v4131
      %v4210 = vadd.f32 %v3740, %v4134
      %v4211 = vadd.f32 %v3741, %v4139
      %v4212 = vadd.f32 %v3742, %v4142
      %v4213 = vadd.f32 %v3743, %v4147
      %v4214 = vadd.f32 %v3744, %v4150
      %v4215 = vadd.f32 %v3745, %v4155
      %v4216 = vadd.f32 %v3746, %v4158
      %v4217 = vadd.f32 %v3747, %v4163
      %v4218 = vadd.f32 %v3748, %v4166
      %v4219 = vadd.f32 %v3749, %v4171
      %v4220 = vadd.f32 %v3750, %v4174
      %v4221 = vadd.f32 %v3751, %v4179
      %v4222 = vadd.f32 %v3752, %v4182
      %v4223 = vadd.f32 %v3753, %v4187
      %v4224 = vadd.f32 %v3754, %v4190
      %s4225 = scalar_lea.vmem [#allocation2], 24
      %v4226 = vld [vmem:[%s4225] sm:$0xf]
      %v4227 = vld [vmem:[%s4225 + $0x4] sm:$0xf]
      %v4228 = vld [vmem:[%s4225 + $0xc] sm:$0xf]
      %v4229 = vld [vmem:[%s4225 + $0x10] sm:$0xf]
      %v4230 = vld [vmem:[%s4225 + $0x18] sm:$0xf]
      %v4231 = vld [vmem:[%s4225 + $0x1c] sm:$0xf]
      %v4232 = vld [vmem:[%s4225 + $0x24] sm:$0xf]
      %v4233 = vld [vmem:[%s4225 + $0x28] sm:$0xf]
      %v4234 = vld [vmem:[%s4225 + $0x30] sm:$0xf]
      %v4235 = vld [vmem:[%s4225 + $0x34] sm:$0xf]
      %v4236 = vld [vmem:[%s4225 + $0x3c] sm:$0xf]
      %v4237 = vld [vmem:[%s4225 + $0x40] sm:$0xf]
      %v4238 = vld [vmem:[%s4225 + $0x48] sm:$0xf]
      %v4239 = vld [vmem:[%s4225 + $0x4c] sm:$0xf]
      %v4240 = vld [vmem:[%s4225 + $0x54] sm:$0xf]
      %v4241 = vld [vmem:[%s4225 + $0x58] sm:$0xf]
      %v4242 = vld [vmem:[%s4225 + $0x60] sm:$0xf]
      %v4243 = vld [vmem:[%s4225 + $0x64] sm:$0xf]
      %v4244 = vld [vmem:[%s4225 + $0x6c] sm:$0xf]
      %v4245 = vld [vmem:[%s4225 + $0x70] sm:$0xf]
      %v4246 = vld [vmem:[%s4225 + $0x78] sm:$0xf]
      %v4247 = vld [vmem:[%s4225 + $0x7c] sm:$0xf]
      %v4248 = vld [vmem:[%s4225 + $0x84] sm:$0xf]
      %v4249 = vld [vmem:[%s4225 + $0x88] sm:$0xf]
      %v4250 = vld [vmem:[%s4225 + $0x90] sm:$0xf]
      %v4251 = vld [vmem:[%s4225 + $0x94] sm:$0xf]
      %v4252 = vld [vmem:[%s4225 + $0x9c] sm:$0xf]
      %v4253 = vld [vmem:[%s4225 + $0xa0] sm:$0xf]
      %v4254 = vld [vmem:[%s4225 + $0xa8] sm:$0xf]
      %v4255 = vld [vmem:[%s4225 + $0xac] sm:$0xf]
      %v4256 = vld [vmem:[%s4225 + $0xb4] sm:$0xf]
      %v4257 = vld [vmem:[%s4225 + $0xb8] sm:$0xf]
      %s4258 = scalar_lea.vmem %s1, 12
      %v4259 = vld [vmem:[%s4258] sm:$0x3]
      %v4292 = vunpack.c.l.b16 %v4226
      %v4293 = vunpack.c.l.b16 %v4227
      %v4294 = vunpack.c.l.b16 %v4228
      %v4295 = vunpack.c.l.b16 %v4229
      %v4296 = vunpack.c.l.b16 %v4230
      %v4297 = vunpack.c.l.b16 %v4231
      %v4298 = vunpack.c.l.b16 %v4232
      %v4299 = vunpack.c.l.b16 %v4233
      %v4300 = vunpack.c.l.b16 %v4234
      %v4301 = vunpack.c.l.b16 %v4235
      %v4302 = vunpack.c.l.b16 %v4236
      %v4303 = vunpack.c.l.b16 %v4237
      %v4304 = vunpack.c.l.b16 %v4238
      %v4305 = vunpack.c.l.b16 %v4239
      %v4306 = vunpack.c.l.b16 %v4240
      %v4307 = vunpack.c.l.b16 %v4241
      %v4308 = vunpack.c.l.b16 %v4242
      %v4309 = vunpack.c.l.b16 %v4243
      %v4310 = vunpack.c.l.b16 %v4244
      %v4311 = vunpack.c.l.b16 %v4245
      %v4312 = vunpack.c.l.b16 %v4246
      %v4313 = vunpack.c.l.b16 %v4247
      %v4314 = vunpack.c.l.b16 %v4248
      %v4315 = vunpack.c.l.b16 %v4249
      %v4316 = vunpack.c.l.b16 %v4250
      %v4317 = vunpack.c.l.b16 %v4251
      %v4318 = vunpack.c.l.b16 %v4252
      %v4319 = vunpack.c.l.b16 %v4253
      %v4320 = vunpack.c.l.b16 %v4254
      %v4321 = vunpack.c.l.b16 %v4255
      %v4322 = vunpack.c.l.b16 %v4256
      %v4323 = vunpack.c.l.b16 %v4257
      %v4324 = vpack.c.b16 %v4293, %v4292
      %v4325 = vpack.c.b16 %v4295, %v4294
      %v4326 = vpack.c.b16 %v4297, %v4296
      %v4327 = vpack.c.b16 %v4299, %v4298
      %v4328 = vpack.c.b16 %v4301, %v4300
      %v4329 = vpack.c.b16 %v4303, %v4302
      %v4330 = vpack.c.b16 %v4305, %v4304
      %v4331 = vpack.c.b16 %v4307, %v4306
      %v4332 = vpack.c.b16 %v4309, %v4308
      %v4333 = vpack.c.b16 %v4311, %v4310
      %v4334 = vpack.c.b16 %v4313, %v4312
      %v4335 = vpack.c.b16 %v4315, %v4314
      %v4336 = vpack.c.b16 %v4317, %v4316
      %v4337 = vpack.c.b16 %v4319, %v4318
      %v4338 = vpack.c.b16 %v4321, %v4320
      %v4339 = vpack.c.b16 %v4323, %v4322
      %v4341 = vsel %vm384, %v4324, 0
      %v4344 = vsel %vm384, %v4325, 0
      %v4347 = vsel %vm384, %v4326, 0
      %v4350 = vsel %vm384, %v4327, 0
      %v4353 = vsel %vm384, %v4328, 0
      %v4356 = vsel %vm384, %v4329, 0
      %v4359 = vsel %vm384, %v4330, 0
      %v4362 = vsel %vm384, %v4331, 0
      %v4365 = vsel %vm384, %v4332, 0
      %v4368 = vsel %vm384, %v4333, 0
      %v4371 = vsel %vm384, %v4334, 0
      %v4374 = vsel %vm384, %v4335, 0
      %v4377 = vsel %vm384, %v4336, 0
      %v4380 = vsel %vm384, %v4337, 0
      %v4383 = vsel %vm384, %v4338, 0
      %v4386 = vsel %vm384, %v4339, 0
      %v4389 = vsel %vm1757, %v4259, 0
      %4391 = vmatprep.subr.bf16.mxu0 0
      %4392 = vmatpush1.bf16.msra.mxu0 %v4389
      %4393 = vmatprep.subr.bf16.mxu0 0
      %4394 = vmatpush1.bf16.msra.mxu0 0
      %4395 = vmatprep.subr.bf16.mxu0 0
      %4396 = vmatpush1.bf16.msra.mxu0 0
      %4397 = vmatprep.subr.bf16.mxu0 0
      %4398 = vmatpush1.bf16.msra.mxu0 0
      %4399 = vmatprep.subr.bf16.mxu0 0
      %4400 = vmatpush1.bf16.msra.mxu0 0
      %4401 = vmatprep.subr.bf16.mxu0 0
      %4402 = vmatpush1.bf16.msra.mxu0 0
      %4403 = vmatprep.subr.bf16.mxu0 0
      %4404 = vmatpush1.bf16.msra.mxu0 0
      %4405 = vmatprep.subr.bf16.mxu0 0
      %4406 = vmatpush1.bf16.msra.mxu0 0
      %4407 = vmatprep.subr.bf16.mxu0 0
      %4408 = vmatpush1.bf16.msra.mxu0 0
      %4409 = vmatprep.subr.bf16.mxu0 0
      %4410 = vmatpush1.bf16.msra.mxu0 0
      %4411 = vmatprep.subr.bf16.mxu0 0
      %4412 = vmatpush1.bf16.msra.mxu0 0
      %4413 = vmatprep.subr.bf16.mxu0 0
      %4414 = vmatpush1.bf16.msra.mxu0 0
      %4415 = vmatprep.subr.bf16.mxu0 0
      %4416 = vmatpush1.bf16.msra.mxu0 0
      %4417 = vmatprep.subr.bf16.mxu0 0
      %4418 = vmatpush1.bf16.msra.mxu0 0
      %4419 = vmatprep.subr.bf16.mxu0 0
      %4420 = vmatpush1.bf16.msra.mxu0 0
      %4421 = vmatprep.subr.bf16.mxu0 0
      %4422 = vmatpush1.bf16.msra.mxu0 0
      %4423 = vmatprep.mubr.bf16.mxu0 0
      %4424 = vmatmul.mubr.bf16.gmra.mrb[0].mxu0 %v4341
      %v4425 = vpop.f32.mrb[0].mxu0
      %v4426 = vadd.f32 0.0, %v4425
      %v4427 = vpop.f32.mrb[0].mxu0
      %v4428 = vpop.f32.mrb[0].mxu0
      %v4429 = vadd.f32 0.0, %v4428
      %v4430 = vpop.f32.mrb[0].mxu0
      %4431 = vmatprep.mubr.bf16.mxu0 0
      %4432 = vmatmul.mubr.bf16.gmra.mrb[0].mxu0 %v4344
      %v4433 = vpop.f32.mrb[0].mxu0
      %v4434 = vadd.f32 0.0, %v4433
      %v4435 = vpop.f32.mrb[0].mxu0
      %v4436 = vpop.f32.mrb[0].mxu0
      %v4437 = vadd.f32 0.0, %v4436
      %v4438 = vpop.f32.mrb[0].mxu0
      %4439 = vmatprep.mubr.bf16.mxu0 0
      %4440 = vmatmul.mubr.bf16.gmra.mrb[0].mxu0 %v4347
      %v4441 = vpop.f32.mrb[0].mxu0
      %v4442 = vadd.f32 0.0, %v4441
      %v4443 = vpop.f32.mrb[0].mxu0
      %v4444 = vpop.f32.mrb[0].mxu0
      %v4445 = vadd.f32 0.0, %v4444
      %v4446 = vpop.f32.mrb[0].mxu0
      %4447 = vmatprep.mubr.bf16.mxu0 0
      %4448 = vmatmul.mubr.bf16.gmra.mrb[0].mxu0 %v4350
      %v4449 = vpop.f32.mrb[0].mxu0
      %v4450 = vadd.f32 0.0, %v4449
      %v4451 = vpop.f32.mrb[0].mxu0
      %v4452 = vpop.f32.mrb[0].mxu0
      %v4453 = vadd.f32 0.0, %v4452
      %v4454 = vpop.f32.mrb[0].mxu0
      %4455 = vmatprep.mubr.bf16.mxu0 0
      %4456 = vmatmul.mubr.bf16.gmra.mrb[0].mxu0 %v4353
      %v4457 = vpop.f32.mrb[0].mxu0
      %v4458 = vadd.f32 0.0, %v4457
      %v4459 = vpop.f32.mrb[0].mxu0
      %v4460 = vpop.f32.mrb[0].mxu0
      %v4461 = vadd.f32 0.0, %v4460
      %v4462 = vpop.f32.mrb[0].mxu0
      %4463 = vmatprep.mubr.bf16.mxu0 0
      %4464 = vmatmul.mubr.bf16.gmra.mrb[0].mxu0 %v4356
      %v4465 = vpop.f32.mrb[0].mxu0
      %v4466 = vadd.f32 0.0, %v4465
      %v4467 = vpop.f32.mrb[0].mxu0
      %v4468 = vpop.f32.mrb[0].mxu0
      %v4469 = vadd.f32 0.0, %v4468
      %v4470 = vpop.f32.mrb[0].mxu0
      %4471 = vmatprep.mubr.bf16.mxu0 0
      %4472 = vmatmul.mubr.bf16.gmra.mrb[0].mxu0 %v4359
      %v4473 = vpop.f32.mrb[0].mxu0
      %v4474 = vadd.f32 0.0, %v4473
      %v4475 = vpop.f32.mrb[0].mxu0
      %v4476 = vpop.f32.mrb[0].mxu0
      %v4477 = vadd.f32 0.0, %v4476
      %v4478 = vpop.f32.mrb[0].mxu0
      %4479 = vmatprep.mubr.bf16.mxu0 0
      %4480 = vmatmul.mubr.bf16.gmra.mrb[0].mxu0 %v4362
      %v4481 = vpop.f32.mrb[0].mxu0
      %v4482 = vadd.f32 0.0, %v4481
      %v4483 = vpop.f32.mrb[0].mxu0
      %v4484 = vpop.f32.mrb[0].mxu0
      %v4485 = vadd.f32 0.0, %v4484
      %v4486 = vpop.f32.mrb[0].mxu0
      %4487 = vmatprep.mubr.bf16.mxu0 0
      %4488 = vmatmul.mubr.bf16.gmra.mrb[0].mxu0 %v4365
      %v4489 = vpop.f32.mrb[0].mxu0
      %v4490 = vadd.f32 0.0, %v4489
      %v4491 = vpop.f32.mrb[0].mxu0
      %v4492 = vpop.f32.mrb[0].mxu0
      %v4493 = vadd.f32 0.0, %v4492
      %v4494 = vpop.f32.mrb[0].mxu0
      %4495 = vmatprep.mubr.bf16.mxu0 0
      %4496 = vmatmul.mubr.bf16.gmra.mrb[0].mxu0 %v4368
      %v4497 = vpop.f32.mrb[0].mxu0
      %v4498 = vadd.f32 0.0, %v4497
      %v4499 = vpop.f32.mrb[0].mxu0
      %v4500 = vpop.f32.mrb[0].mxu0
      %v4501 = vadd.f32 0.0, %v4500
      %v4502 = vpop.f32.mrb[0].mxu0
      %4503 = vmatprep.mubr.bf16.mxu0 0
      %4504 = vmatmul.mubr.bf16.gmra.mrb[0].mxu0 %v4371
      %v4505 = vpop.f32.mrb[0].mxu0
      %v4506 = vadd.f32 0.0, %v4505
      %v4507 = vpop.f32.mrb[0].mxu0
      %v4508 = vpop.f32.mrb[0].mxu0
      %v4509 = vadd.f32 0.0, %v4508
      %v4510 = vpop.f32.mrb[0].mxu0
      %4511 = vmatprep.mubr.bf16.mxu0 0
      %4512 = vmatmul.mubr.bf16.gmra.mrb[0].mxu0 %v4374
      %v4513 = vpop.f32.mrb[0].mxu0
      %v4514 = vadd.f32 0.0, %v4513
      %v4515 = vpop.f32.mrb[0].mxu0
      %v4516 = vpop.f32.mrb[0].mxu0
      %v4517 = vadd.f32 0.0, %v4516
      %v4518 = vpop.f32.mrb[0].mxu0
      %4519 = vmatprep.mubr.bf16.mxu0 0
      %4520 = vmatmul.mubr.bf16.gmra.mrb[0].mxu0 %v4377
      %v4521 = vpop.f32.mrb[0].mxu0
      %v4522 = vadd.f32 0.0, %v4521
      %v4523 = vpop.f32.mrb[0].mxu0
      %v4524 = vpop.f32.mrb[0].mxu0
      %v4525 = vadd.f32 0.0, %v4524
      %v4526 = vpop.f32.mrb[0].mxu0
      %4527 = vmatprep.mubr.bf16.mxu0 0
      %4528 = vmatmul.mubr.bf16.gmra.mrb[0].mxu0 %v4380
      %v4529 = vpop.f32.mrb[0].mxu0
      %v4530 = vadd.f32 0.0, %v4529
      %v4531 = vpop.f32.mrb[0].mxu0
      %v4532 = vpop.f32.mrb[0].mxu0
      %v4533 = vadd.f32 0.0, %v4532
      %v4534 = vpop.f32.mrb[0].mxu0
      %4535 = vmatprep.mubr.bf16.mxu0 0
      %4536 = vmatmul.mubr.bf16.gmra.mrb[0].mxu0 %v4383
      %v4537 = vpop.f32.mrb[0].mxu0
      %v4538 = vadd.f32 0.0, %v4537
      %v4539 = vpop.f32.mrb[0].mxu0
      %v4540 = vpop.f32.mrb[0].mxu0
      %v4541 = vadd.f32 0.0, %v4540
      %v4542 = vpop.f32.mrb[0].mxu0
      %4543 = vmatprep.mubr.bf16.mxu0 0
      %4544 = vmatmul.mubr.bf16.gmra.mrb[0].mxu0 %v4386
      %v4545 = vpop.f32.mrb[0].mxu0
      %v4546 = vadd.f32 0.0, %v4545
      %v4547 = vpop.f32.mrb[0].mxu0
      %v4548 = vpop.f32.mrb[0].mxu0
      %v4549 = vadd.f32 0.0, %v4548
      %v4550 = vpop.f32.mrb[0].mxu0
      %4551 = vdwg.mxu0
      %v4552 = vadd.f32 %v4193, %v4426
      %v4553 = vadd.f32 %v4194, %v4429
      %v4554 = vadd.f32 %v4195, %v4434
      %v4555 = vadd.f32 %v4196, %v4437
      %v4556 = vadd.f32 %v4197, %v4442
      %v4557 = vadd.f32 %v4198, %v4445
      %v4558 = vadd.f32 %v4199, %v4450
      %v4559 = vadd.f32 %v4200, %v4453
      %v4560 = vadd.f32 %v4201, %v4458
      %v4561 = vadd.f32 %v4202, %v4461
      %v4562 = vadd.f32 %v4203, %v4466
      %v4563 = vadd.f32 %v4204, %v4469
      %v4564 = vadd.f32 %v4205, %v4474
      %v4565 = vadd.f32 %v4206, %v4477
      %v4566 = vadd.f32 %v4207, %v4482
      %v4567 = vadd.f32 %v4208, %v4485
      %v4568 = vadd.f32 %v4209, %v4490
      %v4569 = vadd.f32 %v4210, %v4493
      %v4570 = vadd.f32 %v4211, %v4498
      %v4571 = vadd.f32 %v4212, %v4501
      %v4572 = vadd.f32 %v4213, %v4506
      %v4573 = vadd.f32 %v4214, %v4509
      %v4574 = vadd.f32 %v4215, %v4514
      %v4575 = vadd.f32 %v4216, %v4517
      %v4576 = vadd.f32 %v4217, %v4522
      %v4577 = vadd.f32 %v4218, %v4525
      %v4578 = vadd.f32 %v4219, %v4530
      %v4579 = vadd.f32 %v4220, %v4533
      %v4580 = vadd.f32 %v4221, %v4538
      %v4581 = vadd.f32 %v4222, %v4541
      %v4582 = vadd.f32 %v4223, %v4546
      %v4583 = vadd.f32 %v4224, %v4549
      %v4584 = vld [vmem:[%s4225] sm:$0xf]
      %v4585 = vld [vmem:[%s4225 + $0x4] sm:$0xf]
      %v4586 = vld [vmem:[%s4225 + $0x8] sm:$0x1]
      %v4587 = vld [vmem:[%s4225 + $0xc] sm:$0xf]
      %v4588 = vld [vmem:[%s4225 + $0x10] sm:$0xf]
      %v4589 = vld [vmem:[%s4225 + $0x14] sm:$0x1]
      %v4590 = vld [vmem:[%s4225 + $0x18] sm:$0xf]
      %v4591 = vld [vmem:[%s4225 + $0x1c] sm:$0xf]
      %v4592 = vld [vmem:[%s4225 + $0x20] sm:$0x1]
      %v4593 = vld [vmem:[%s4225 + $0x24] sm:$0xf]
      %v4594 = vld [vmem:[%s4225 + $0x28] sm:$0xf]
      %v4595 = vld [vmem:[%s4225 + $0x2c] sm:$0x1]
      %v4596 = vld [vmem:[%s4225 + $0x30] sm:$0xf]
      %v4597 = vld [vmem:[%s4225 + $0x34] sm:$0xf]
      %v4598 = vld [vmem:[%s4225 + $0x38] sm:$0x1]
      %v4599 = vld [vmem:[%s4225 + $0x3c] sm:$0xf]
      %v4600 = vld [vmem:[%s4225 + $0x40] sm:$0xf]
      %v4601 = vld [vmem:[%s4225 + $0x44] sm:$0x1]
      %v4602 = vld [vmem:[%s4225 + $0x48] sm:$0xf]
      %v4603 = vld [vmem:[%s4225 + $0x4c] sm:$0xf]
      %v4604 = vld [vmem:[%s4225 + $0x50] sm:$0x1]
      %v4605 = vld [vmem:[%s4225 + $0x54] sm:$0xf]
      %v4606 = vld [vmem:[%s4225 + $0x58] sm:$0xf]
      %v4607 = vld [vmem:[%s4225 + $0x5c] sm:$0x1]
      %v4608 = vld [vmem:[%s4225 + $0x60] sm:$0xf]
      %v4609 = vld [vmem:[%s4225 + $0x64] sm:$0xf]
      %v4610 = vld [vmem:[%s4225 + $0x68] sm:$0x1]
      %v4611 = vld [vmem:[%s4225 + $0x6c] sm:$0xf]
      %v4612 = vld [vmem:[%s4225 + $0x70] sm:$0xf]
      %v4613 = vld [vmem:[%s4225 + $0x74] sm:$0x1]
      %v4614 = vld [vmem:[%s4225 + $0x78] sm:$0xf]
      %v4615 = vld [vmem:[%s4225 + $0x7c] sm:$0xf]
      %v4616 = vld [vmem:[%s4225 + $0x80] sm:$0x1]
      %v4617 = vld [vmem:[%s4225 + $0x84] sm:$0xf]
      %v4618 = vld [vmem:[%s4225 + $0x88] sm:$0xf]
      %v4619 = vld [vmem:[%s4225 + $0x8c] sm:$0x1]
      %v4620 = vld [vmem:[%s4225 + $0x90] sm:$0xf]
      %v4621 = vld [vmem:[%s4225 + $0x94] sm:$0xf]
      %v4622 = vld [vmem:[%s4225 + $0x98] sm:$0x1]
      %v4623 = vld [vmem:[%s4225 + $0x9c] sm:$0xf]
      %v4624 = vld [vmem:[%s4225 + $0xa0] sm:$0xf]
      %v4625 = vld [vmem:[%s4225 + $0xa4] sm:$0x1]
      %v4626 = vld [vmem:[%s4225 + $0xa8] sm:$0xf]
      %v4627 = vld [vmem:[%s4225 + $0xac] sm:$0xf]
      %v4628 = vld [vmem:[%s4225 + $0xb0] sm:$0x1]
      %v4629 = vld [vmem:[%s4225 + $0xb4] sm:$0xf]
      %v4630 = vld [vmem:[%s4225 + $0xb8] sm:$0xf]
      %v4631 = vld [vmem:[%s4225 + $0xbc] sm:$0x1]
      %v4633 = vshrl.u32 %v4584, 16
      %v4635 = vrot.slane %v4633, 4
      %v4636 = vshll.u32 %v4584, 16
      %v4638 = vrot.slane %v4636, 5
      %v4639 = vor.u32 %v4635, %v4638
      %v4640 = vrot.slane %v4639, 4
      %v4642 = vshll.u32 %v4585, 16
      %v4644 = vrot.slane %v4642, 5
      %v4645 = vsel %vm1274, %v4640, %v4644
      %v4646 = vshrl.u32 %v4585, 16
      %v4648 = vrot.slane %v4646, 4
      %v4649 = vor.u32 %v4648, %v4644
      %v4650 = vrot.slane %v4649, 4
      %v4652 = vshll.u32 %v4586, 16
      %v4654 = vrot.slane %v4652, 5
      %v4655 = vsel %vm1274, %v4650, %v4654
      %v4657 = vshrl.u32 %v4587, 16
      %v4659 = vrot.slane %v4657, 4
      %v4660 = vshll.u32 %v4587, 16
      %v4662 = vrot.slane %v4660, 5
      %v4663 = vor.u32 %v4659, %v4662
      %v4664 = vrot.slane %v4663, 4
      %v4666 = vshll.u32 %v4588, 16
      %v4668 = vrot.slane %v4666, 5
      %v4669 = vsel %vm1274, %v4664, %v4668
      %v4670 = vshrl.u32 %v4588, 16
      %v4672 = vrot.slane %v4670, 4
      %v4673 = vor.u32 %v4672, %v4668
      %v4674 = vrot.slane %v4673, 4
      %v4676 = vshll.u32 %v4589, 16
      %v4678 = vrot.slane %v4676, 5
      %v4679 = vsel %vm1274, %v4674, %v4678
      %v4681 = vshrl.u32 %v4590, 16
      %v4683 = vrot.slane %v4681, 4
      %v4684 = vshll.u32 %v4590, 16
      %v4686 = vrot.slane %v4684, 5
      %v4687 = vor.u32 %v4683, %v4686
      %v4688 = vrot.slane %v4687, 4
      %v4690 = vshll.u32 %v4591, 16
      %v4692 = vrot.slane %v4690, 5
      %v4693 = vsel %vm1274, %v4688, %v4692
      %v4694 = vshrl.u32 %v4591, 16
      %v4696 = vrot.slane %v4694, 4
      %v4697 = vor.u32 %v4696, %v4692
      %v4698 = vrot.slane %v4697, 4
      %v4700 = vshll.u32 %v4592, 16
      %v4702 = vrot.slane %v4700, 5
      %v4703 = vsel %vm1274, %v4698, %v4702
      %v4705 = vshrl.u32 %v4593, 16
      %v4707 = vrot.slane %v4705, 4
      %v4708 = vshll.u32 %v4593, 16
      %v4710 = vrot.slane %v4708, 5
      %v4711 = vor.u32 %v4707, %v4710
      %v4712 = vrot.slane %v4711, 4
      %v4714 = vshll.u32 %v4594, 16
      %v4716 = vrot.slane %v4714, 5
      %v4717 = vsel %vm1274, %v4712, %v4716
      %v4718 = vshrl.u32 %v4594, 16
      %v4720 = vrot.slane %v4718, 4
      %v4721 = vor.u32 %v4720, %v4716
      %v4722 = vrot.slane %v4721, 4
      %v4724 = vshll.u32 %v4595, 16
      %v4726 = vrot.slane %v4724, 5
      %v4727 = vsel %vm1274, %v4722, %v4726
      %v4729 = vshrl.u32 %v4596, 16
      %v4731 = vrot.slane %v4729, 4
      %v4732 = vshll.u32 %v4596, 16
      %v4734 = vrot.slane %v4732, 5
      %v4735 = vor.u32 %v4731, %v4734
      %v4736 = vrot.slane %v4735, 4
      %v4738 = vshll.u32 %v4597, 16
      %v4740 = vrot.slane %v4738, 5
      %v4741 = vsel %vm1274, %v4736, %v4740
      %v4742 = vshrl.u32 %v4597, 16
      %v4744 = vrot.slane %v4742, 4
      %v4745 = vor.u32 %v4744, %v4740
      %v4746 = vrot.slane %v4745, 4
      %v4748 = vshll.u32 %v4598, 16
      %v4750 = vrot.slane %v4748, 5
      %v4751 = vsel %vm1274, %v4746, %v4750
      %v4753 = vshrl.u32 %v4599, 16
      %v4755 = vrot.slane %v4753, 4
      %v4756 = vshll.u32 %v4599, 16
      %v4758 = vrot.slane %v4756, 5
      %v4759 = vor.u32 %v4755, %v4758
      %v4760 = vrot.slane %v4759, 4
      %v4762 = vshll.u32 %v4600, 16
      %v4764 = vrot.slane %v4762, 5
      %v4765 = vsel %vm1274, %v4760, %v4764
      %v4766 = vshrl.u32 %v4600, 16
      %v4768 = vrot.slane %v4766, 4
      %v4769 = vor.u32 %v4768, %v4764
      %v4770 = vrot.slane %v4769, 4
      %v4772 = vshll.u32 %v4601, 16
      %v4774 = vrot.slane %v4772, 5
      %v4775 = vsel %vm1274, %v4770, %v4774
      %v4777 = vshrl.u32 %v4602, 16
      %v4779 = vrot.slane %v4777, 4
      %v4780 = vshll.u32 %v4602, 16
      %v4782 = vrot.slane %v4780, 5
      %v4783 = vor.u32 %v4779, %v4782
      %v4784 = vrot.slane %v4783, 4
      %v4786 = vshll.u32 %v4603, 16
      %v4788 = vrot.slane %v4786, 5
      %v4789 = vsel %vm1274, %v4784, %v4788
      %v4790 = vshrl.u32 %v4603, 16
      %v4792 = vrot.slane %v4790, 4
      %v4793 = vor.u32 %v4792, %v4788
      %v4794 = vrot.slane %v4793, 4
      %v4796 = vshll.u32 %v4604, 16
      %v4798 = vrot.slane %v4796, 5
      %v4799 = vsel %vm1274, %v4794, %v4798
      %v4801 = vshrl.u32 %v4605, 16
      %v4803 = vrot.slane %v4801, 4
      %v4804 = vshll.u32 %v4605, 16
      %v4806 = vrot.slane %v4804, 5
      %v4807 = vor.u32 %v4803, %v4806
      %v4808 = vrot.slane %v4807, 4
      %v4810 = vshll.u32 %v4606, 16
      %v4812 = vrot.slane %v4810, 5
      %v4813 = vsel %vm1274, %v4808, %v4812
      %v4814 = vshrl.u32 %v4606, 16
      %v4816 = vrot.slane %v4814, 4
      %v4817 = vor.u32 %v4816, %v4812
      %v4818 = vrot.slane %v4817, 4
      %v4820 = vshll.u32 %v4607, 16
      %v4822 = vrot.slane %v4820, 5
      %v4823 = vsel %vm1274, %v4818, %v4822
      %v4825 = vshrl.u32 %v4608, 16
      %v4827 = vrot.slane %v4825, 4
      %v4828 = vshll.u32 %v4608, 16
      %v4830 = vrot.slane %v4828, 5
      %v4831 = vor.u32 %v4827, %v4830
      %v4832 = vrot.slane %v4831, 4
      %v4834 = vshll.u32 %v4609, 16
      %v4836 = vrot.slane %v4834, 5
      %v4837 = vsel %vm1274, %v4832, %v4836
      %v4838 = vshrl.u32 %v4609, 16
      %v4840 = vrot.slane %v4838, 4
      %v4841 = vor.u32 %v4840, %v4836
      %v4842 = vrot.slane %v4841, 4
      %v4844 = vshll.u32 %v4610, 16
      %v4846 = vrot.slane %v4844, 5
      %v4847 = vsel %vm1274, %v4842, %v4846
      %v4849 = vshrl.u32 %v4611, 16
      %v4851 = vrot.slane %v4849, 4
      %v4852 = vshll.u32 %v4611, 16
      %v4854 = vrot.slane %v4852, 5
      %v4855 = vor.u32 %v4851, %v4854
      %v4856 = vrot.slane %v4855, 4
      %v4858 = vshll.u32 %v4612, 16
      %v4860 = vrot.slane %v4858, 5
      %v4861 = vsel %vm1274, %v4856, %v4860
      %v4862 = vshrl.u32 %v4612, 16
      %v4864 = vrot.slane %v4862, 4
      %v4865 = vor.u32 %v4864, %v4860
      %v4866 = vrot.slane %v4865, 4
      %v4868 = vshll.u32 %v4613, 16
      %v4870 = vrot.slane %v4868, 5
      %v4871 = vsel %vm1274, %v4866, %v4870
      %v4873 = vshrl.u32 %v4614, 16
      %v4875 = vrot.slane %v4873, 4
      %v4876 = vshll.u32 %v4614, 16
      %v4878 = vrot.slane %v4876, 5
      %v4879 = vor.u32 %v4875, %v4878
      %v4880 = vrot.slane %v4879, 4
      %v4882 = vshll.u32 %v4615, 16
      %v4884 = vrot.slane %v4882, 5
      %v4885 = vsel %vm1274, %v4880, %v4884
      %v4886 = vshrl.u32 %v4615, 16
      %v4888 = vrot.slane %v4886, 4
      %v4889 = vor.u32 %v4888, %v4884
      %v4890 = vrot.slane %v4889, 4
      %v4892 = vshll.u32 %v4616, 16
      %v4894 = vrot.slane %v4892, 5
      %v4895 = vsel %vm1274, %v4890, %v4894
      %v4897 = vshrl.u32 %v4617, 16
      %v4899 = vrot.slane %v4897, 4
      %v4900 = vshll.u32 %v4617, 16
      %v4902 = vrot.slane %v4900, 5
      %v4903 = vor.u32 %v4899, %v4902
      %v4904 = vrot.slane %v4903, 4
      %v4906 = vshll.u32 %v4618, 16
      %v4908 = vrot.slane %v4906, 5
      %v4909 = vsel %vm1274, %v4904, %v4908
      %v4910 = vshrl.u32 %v4618, 16
      %v4912 = vrot.slane %v4910, 4
      %v4913 = vor.u32 %v4912, %v4908
      %v4914 = vrot.slane %v4913, 4
      %v4916 = vshll.u32 %v4619, 16
      %v4918 = vrot.slane %v4916, 5
      %v4919 = vsel %vm1274, %v4914, %v4918
      %v4921 = vshrl.u32 %v4620, 16
      %v4923 = vrot.slane %v4921, 4
      %v4924 = vshll.u32 %v4620, 16
      %v4926 = vrot.slane %v4924, 5
      %v4927 = vor.u32 %v4923, %v4926
      %v4928 = vrot.slane %v4927, 4
      %v4930 = vshll.u32 %v4621, 16
      %v4932 = vrot.slane %v4930, 5
      %v4933 = vsel %vm1274, %v4928, %v4932
      %v4934 = vshrl.u32 %v4621, 16
      %v4936 = vrot.slane %v4934, 4
      %v4937 = vor.u32 %v4936, %v4932
      %v4938 = vrot.slane %v4937, 4
      %v4940 = vshll.u32 %v4622, 16
      %v4942 = vrot.slane %v4940, 5
      %v4943 = vsel %vm1274, %v4938, %v4942
      %v4945 = vshrl.u32 %v4623, 16
      %v4947 = vrot.slane %v4945, 4
      %v4948 = vshll.u32 %v4623, 16
      %v4950 = vrot.slane %v4948, 5
      %v4951 = vor.u32 %v4947, %v4950
      %v4952 = vrot.slane %v4951, 4
      %v4954 = vshll.u32 %v4624, 16
      %v4956 = vrot.slane %v4954, 5
      %v4957 = vsel %vm1274, %v4952, %v4956
      %v4958 = vshrl.u32 %v4624, 16
      %v4960 = vrot.slane %v4958, 4
      %v4961 = vor.u32 %v4960, %v4956
      %v4962 = vrot.slane %v4961, 4
      %v4964 = vshll.u32 %v4625, 16
      %v4966 = vrot.slane %v4964, 5
      %v4967 = vsel %vm1274, %v4962, %v4966
      %v4969 = vshrl.u32 %v4626, 16
      %v4971 = vrot.slane %v4969, 4
      %v4972 = vshll.u32 %v4626, 16
      %v4974 = vrot.slane %v4972, 5
      %v4975 = vor.u32 %v4971, %v4974
      %v4976 = vrot.slane %v4975, 4
      %v4978 = vshll.u32 %v4627, 16
      %v4980 = vrot.slane %v4978, 5
      %v4981 = vsel %vm1274, %v4976, %v4980
      %v4982 = vshrl.u32 %v4627, 16
      %v4984 = vrot.slane %v4982, 4
      %v4985 = vor.u32 %v4984, %v4980
      %v4986 = vrot.slane %v4985, 4
      %v4988 = vshll.u32 %v4628, 16
      %v4990 = vrot.slane %v4988, 5
      %v4991 = vsel %vm1274, %v4986, %v4990
      %v4993 = vshrl.u32 %v4629, 16
      %v4995 = vrot.slane %v4993, 4
      %v4996 = vshll.u32 %v4629, 16
      %v4998 = vrot.slane %v4996, 5
      %v4999 = vor.u32 %v4995, %v4998
      %v5000 = vrot.slane %v4999, 4
      %v5002 = vshll.u32 %v4630, 16
      %v5004 = vrot.slane %v5002, 5
      %v5005 = vsel %vm1274, %v5000, %v5004
      %v5006 = vshrl.u32 %v4630, 16
      %v5008 = vrot.slane %v5006, 4
      %v5009 = vor.u32 %v5008, %v5004
      %v5010 = vrot.slane %v5009, 4
      %v5012 = vshll.u32 %v4631, 16
      %v5014 = vrot.slane %v5012, 5
      %v5015 = vsel %vm1274, %v5010, %v5014
      %s5016 = scalar_lea.vmem %s1, 14
      %v5017 = vld [vmem:[%s5016] sm:$0x3]
      %v5018 = vunpack.c.l.b16 %v4645
      %v5019 = vunpack.c.l.b16 %v4655
      %v5020 = vunpack.c.l.b16 %v4669
      %v5021 = vunpack.c.l.b16 %v4679
      %v5022 = vunpack.c.l.b16 %v4693
      %v5023 = vunpack.c.l.b16 %v4703
      %v5024 = vunpack.c.l.b16 %v4717
      %v5025 = vunpack.c.l.b16 %v4727
      %v5026 = vunpack.c.l.b16 %v4741
      %v5027 = vunpack.c.l.b16 %v4751
      %v5028 = vunpack.c.l.b16 %v4765
      %v5029 = vunpack.c.l.b16 %v4775
      %v5030 = vunpack.c.l.b16 %v4789
      %v5031 = vunpack.c.l.b16 %v4799
      %v5032 = vunpack.c.l.b16 %v4813
      %v5033 = vunpack.c.l.b16 %v4823
      %v5034 = vunpack.c.l.b16 %v4837
      %v5035 = vunpack.c.l.b16 %v4847
      %v5036 = vunpack.c.l.b16 %v4861
      %v5037 = vunpack.c.l.b16 %v4871
      %v5038 = vunpack.c.l.b16 %v4885
      %v5039 = vunpack.c.l.b16 %v4895
      %v5040 = vunpack.c.l.b16 %v4909
      %v5041 = vunpack.c.l.b16 %v4919
      %v5042 = vunpack.c.l.b16 %v4933
      %v5043 = vunpack.c.l.b16 %v4943
      %v5044 = vunpack.c.l.b16 %v4957
      %v5045 = vunpack.c.l.b16 %v4967
      %v5046 = vunpack.c.l.b16 %v4981
      %v5047 = vunpack.c.l.b16 %v4991
      %v5048 = vunpack.c.l.b16 %v5005
      %v5049 = vunpack.c.l.b16 %v5015
      %v5050 = vpack.c.b16 %v5019, %v5018
      %v5051 = vpack.c.b16 %v5021, %v5020
      %v5052 = vpack.c.b16 %v5023, %v5022
      %v5053 = vpack.c.b16 %v5025, %v5024
      %v5054 = vpack.c.b16 %v5027, %v5026
      %v5055 = vpack.c.b16 %v5029, %v5028
      %v5056 = vpack.c.b16 %v5031, %v5030
      %v5057 = vpack.c.b16 %v5033, %v5032
      %v5058 = vpack.c.b16 %v5035, %v5034
      %v5059 = vpack.c.b16 %v5037, %v5036
      %v5060 = vpack.c.b16 %v5039, %v5038
      %v5061 = vpack.c.b16 %v5041, %v5040
      %v5062 = vpack.c.b16 %v5043, %v5042
      %v5063 = vpack.c.b16 %v5045, %v5044
      %v5064 = vpack.c.b16 %v5047, %v5046
      %v5065 = vpack.c.b16 %v5049, %v5048
      %v5067 = vsel %vm384, %v5050, 0
      %v5070 = vsel %vm384, %v5051, 0
      %v5073 = vsel %vm384, %v5052, 0
      %v5076 = vsel %vm384, %v5053, 0
      %v5079 = vsel %vm384, %v5054, 0
      %v5082 = vsel %vm384, %v5055, 0
      %v5085 = vsel %vm384, %v5056, 0
      %v5088 = vsel %vm384, %v5057, 0
      %v5091 = vsel %vm384, %v5058, 0
      %v5094 = vsel %vm384, %v5059, 0
      %v5097 = vsel %vm384, %v5060, 0
      %v5100 = vsel %vm384, %v5061, 0
      %v5103 = vsel %vm384, %v5062, 0
      %v5106 = vsel %vm384, %v5063, 0
      %v5109 = vsel %vm384, %v5064, 0
      %v5112 = vsel %vm384, %v5065, 0
      %v5115 = vsel %vm1757, %v5017, 0
      %5117 = vmatprep.subr.bf16.mxu0 0
      %5118 = vmatpush1.bf16.msra.mxu0 %v5115
      %5119 = vmatprep.subr.bf16.mxu0 0
      %5120 = vmatpush1.bf16.msra.mxu0 0
      %5121 = vmatprep.subr.bf16.mxu0 0
      %5122 = vmatpush1.bf16.msra.mxu0 0
      %5123 = vmatprep.subr.bf16.mxu0 0
      %5124 = vmatpush1.bf16.msra.mxu0 0
      %5125 = vmatprep.subr.bf16.mxu0 0
      %5126 = vmatpush1.bf16.msra.mxu0 0
      %5127 = vmatprep.subr.bf16.mxu0 0
      %5128 = vmatpush1.bf16.msra.mxu0 0
      %5129 = vmatprep.subr.bf16.mxu0 0
      %5130 = vmatpush1.bf16.msra.mxu0 0
      %5131 = vmatprep.subr.bf16.mxu0 0
      %5132 = vmatpush1.bf16.msra.mxu0 0
      %5133 = vmatprep.subr.bf16.mxu0 0
      %5134 = vmatpush1.bf16.msra.mxu0 0
      %5135 = vmatprep.subr.bf16.mxu0 0
      %5136 = vmatpush1.bf16.msra.mxu0 0
      %5137 = vmatprep.subr.bf16.mxu0 0
      %5138 = vmatpush1.bf16.msra.mxu0 0
      %5139 = vmatprep.subr.bf16.mxu0 0
      %5140 = vmatpush1.bf16.msra.mxu0 0
      %5141 = vmatprep.subr.bf16.mxu0 0
      %5142 = vmatpush1.bf16.msra.mxu0 0
      %5143 = vmatprep.subr.bf16.mxu0 0
      %5144 = vmatpush1.bf16.msra.mxu0 0
      %5145 = vmatprep.subr.bf16.mxu0 0
      %5146 = vmatpush1.bf16.msra.mxu0 0
      %5147 = vmatprep.subr.bf16.mxu0 0
      %5148 = vmatpush1.bf16.msra.mxu0 0
      %5149 = vmatprep.mubr.bf16.mxu0 0
      %5150 = vmatmul.mubr.bf16.gmra.mrb[0].mxu0 %v5067
      %v5151 = vpop.f32.mrb[0].mxu0
      %v5152 = vadd.f32 0.0, %v5151
      %v5153 = vpop.f32.mrb[0].mxu0
      %v5154 = vpop.f32.mrb[0].mxu0
      %v5155 = vadd.f32 0.0, %v5154
      %v5156 = vpop.f32.mrb[0].mxu0
      %5157 = vmatprep.mubr.bf16.mxu0 0
      %5158 = vmatmul.mubr.bf16.gmra.mrb[0].mxu0 %v5070
      %v5159 = vpop.f32.mrb[0].mxu0
      %v5160 = vadd.f32 0.0, %v5159
      %v5161 = vpop.f32.mrb[0].mxu0
      %v5162 = vpop.f32.mrb[0].mxu0
      %v5163 = vadd.f32 0.0, %v5162
      %v5164 = vpop.f32.mrb[0].mxu0
      %5165 = vmatprep.mubr.bf16.mxu0 0
      %5166 = vmatmul.mubr.bf16.gmra.mrb[0].mxu0 %v5073
      %v5167 = vpop.f32.mrb[0].mxu0
      %v5168 = vadd.f32 0.0, %v5167
      %v5169 = vpop.f32.mrb[0].mxu0
      %v5170 = vpop.f32.mrb[0].mxu0
      %v5171 = vadd.f32 0.0, %v5170
      %v5172 = vpop.f32.mrb[0].mxu0
      %5173 = vmatprep.mubr.bf16.mxu0 0
      %5174 = vmatmul.mubr.bf16.gmra.mrb[0].mxu0 %v5076
      %v5175 = vpop.f32.mrb[0].mxu0
      %v5176 = vadd.f32 0.0, %v5175
      %v5177 = vpop.f32.mrb[0].mxu0
      %v5178 = vpop.f32.mrb[0].mxu0
      %v5179 = vadd.f32 0.0, %v5178
      %v5180 = vpop.f32.mrb[0].mxu0
      %5181 = vmatprep.mubr.bf16.mxu0 0
      %5182 = vmatmul.mubr.bf16.gmra.mrb[0].mxu0 %v5079
      %v5183 = vpop.f32.mrb[0].mxu0
      %v5184 = vadd.f32 0.0, %v5183
      %v5185 = vpop.f32.mrb[0].mxu0
      %v5186 = vpop.f32.mrb[0].mxu0
      %v5187 = vadd.f32 0.0, %v5186
      %v5188 = vpop.f32.mrb[0].mxu0
      %5189 = vmatprep.mubr.bf16.mxu0 0
      %5190 = vmatmul.mubr.bf16.gmra.mrb[0].mxu0 %v5082
      %v5191 = vpop.f32.mrb[0].mxu0
      %v5192 = vadd.f32 0.0, %v5191
      %v5193 = vpop.f32.mrb[0].mxu0
      %v5194 = vpop.f32.mrb[0].mxu0
      %v5195 = vadd.f32 0.0, %v5194
      %v5196 = vpop.f32.mrb[0].mxu0
      %5197 = vmatprep.mubr.bf16.mxu0 0
      %5198 = vmatmul.mubr.bf16.gmra.mrb[0].mxu0 %v5085
      %v5199 = vpop.f32.mrb[0].mxu0
      %v5200 = vadd.f32 0.0, %v5199
      %v5201 = vpop.f32.mrb[0].mxu0
      %v5202 = vpop.f32.mrb[0].mxu0
      %v5203 = vadd.f32 0.0, %v5202
      %v5204 = vpop.f32.mrb[0].mxu0
      %5205 = vmatprep.mubr.bf16.mxu0 0
      %5206 = vmatmul.mubr.bf16.gmra.mrb[0].mxu0 %v5088
      %v5207 = vpop.f32.mrb[0].mxu0
      %v5208 = vadd.f32 0.0, %v5207
      %v5209 = vpop.f32.mrb[0].mxu0
      %v5210 = vpop.f32.mrb[0].mxu0
      %v5211 = vadd.f32 0.0, %v5210
      %v5212 = vpop.f32.mrb[0].mxu0
      %5213 = vmatprep.mubr.bf16.mxu0 0
      %5214 = vmatmul.mubr.bf16.gmra.mrb[0].mxu0 %v5091
      %v5215 = vpop.f32.mrb[0].mxu0
      %v5216 = vadd.f32 0.0, %v5215
      %v5217 = vpop.f32.mrb[0].mxu0
      %v5218 = vpop.f32.mrb[0].mxu0
      %v5219 = vadd.f32 0.0, %v5218
      %v5220 = vpop.f32.mrb[0].mxu0
      %5221 = vmatprep.mubr.bf16.mxu0 0
      %5222 = vmatmul.mubr.bf16.gmra.mrb[0].mxu0 %v5094
      %v5223 = vpop.f32.mrb[0].mxu0
      %v5224 = vadd.f32 0.0, %v5223
      %v5225 = vpop.f32.mrb[0].mxu0
      %v5226 = vpop.f32.mrb[0].mxu0
      %v5227 = vadd.f32 0.0, %v5226
      %v5228 = vpop.f32.mrb[0].mxu0
      %5229 = vmatprep.mubr.bf16.mxu0 0
      %5230 = vmatmul.mubr.bf16.gmra.mrb[0].mxu0 %v5097
      %v5231 = vpop.f32.mrb[0].mxu0
      %v5232 = vadd.f32 0.0, %v5231
      %v5233 = vpop.f32.mrb[0].mxu0
      %v5234 = vpop.f32.mrb[0].mxu0
      %v5235 = vadd.f32 0.0, %v5234
      %v5236 = vpop.f32.mrb[0].mxu0
      %5237 = vmatprep.mubr.bf16.mxu0 0
      %5238 = vmatmul.mubr.bf16.gmra.mrb[0].mxu0 %v5100
      %v5239 = vpop.f32.mrb[0].mxu0
      %v5240 = vadd.f32 0.0, %v5239
      %v5241 = vpop.f32.mrb[0].mxu0
      %v5242 = vpop.f32.mrb[0].mxu0
      %v5243 = vadd.f32 0.0, %v5242
      %v5244 = vpop.f32.mrb[0].mxu0
      %5245 = vmatprep.mubr.bf16.mxu0 0
      %5246 = vmatmul.mubr.bf16.gmra.mrb[0].mxu0 %v5103
      %v5247 = vpop.f32.mrb[0].mxu0
      %v5248 = vadd.f32 0.0, %v5247
      %v5249 = vpop.f32.mrb[0].mxu0
      %v5250 = vpop.f32.mrb[0].mxu0
      %v5251 = vadd.f32 0.0, %v5250
      %v5252 = vpop.f32.mrb[0].mxu0
      %5253 = vmatprep.mubr.bf16.mxu0 0
      %5254 = vmatmul.mubr.bf16.gmra.mrb[0].mxu0 %v5106
      %v5255 = vpop.f32.mrb[0].mxu0
      %v5256 = vadd.f32 0.0, %v5255
      %v5257 = vpop.f32.mrb[0].mxu0
      %v5258 = vpop.f32.mrb[0].mxu0
      %v5259 = vadd.f32 0.0, %v5258
      %v5260 = vpop.f32.mrb[0].mxu0
      %5261 = vmatprep.mubr.bf16.mxu0 0
      %5262 = vmatmul.mubr.bf16.gmra.mrb[0].mxu0 %v5109
      %v5263 = vpop.f32.mrb[0].mxu0
      %v5264 = vadd.f32 0.0, %v5263
      %v5265 = vpop.f32.mrb[0].mxu0
      %v5266 = vpop.f32.mrb[0].mxu0
      %v5267 = vadd.f32 0.0, %v5266
      %v5268 = vpop.f32.mrb[0].mxu0
      %5269 = vmatprep.mubr.bf16.mxu0 0
      %5270 = vmatmul.mubr.bf16.gmra.mrb[0].mxu0 %v5112
      %v5271 = vpop.f32.mrb[0].mxu0
      %v5272 = vadd.f32 0.0, %v5271
      %v5273 = vpop.f32.mrb[0].mxu0
      %v5274 = vpop.f32.mrb[0].mxu0
      %v5275 = vadd.f32 0.0, %v5274
      %v5276 = vpop.f32.mrb[0].mxu0
      %5277 = vdwg.mxu0
      %v5278 = vadd.f32 %v4552, %v5152
      %v5279 = vadd.f32 %v4553, %v5155
      %v5280 = vadd.f32 %v4554, %v5160
      %v5281 = vadd.f32 %v4555, %v5163
      %v5282 = vadd.f32 %v4556, %v5168
      %v5283 = vadd.f32 %v4557, %v5171
      %v5284 = vadd.f32 %v4558, %v5176
      %v5285 = vadd.f32 %v4559, %v5179
      %v5286 = vadd.f32 %v4560, %v5184
      %v5287 = vadd.f32 %v4561, %v5187
      %v5288 = vadd.f32 %v4562, %v5192
      %v5289 = vadd.f32 %v4563, %v5195
      %v5290 = vadd.f32 %v4564, %v5200
      %v5291 = vadd.f32 %v4565, %v5203
      %v5292 = vadd.f32 %v4566, %v5208
      %v5293 = vadd.f32 %v4567, %v5211
      %v5294 = vadd.f32 %v4568, %v5216
      %v5295 = vadd.f32 %v4569, %v5219
      %v5296 = vadd.f32 %v4570, %v5224
      %v5297 = vadd.f32 %v4571, %v5227
      %v5298 = vadd.f32 %v4572, %v5232
      %v5299 = vadd.f32 %v4573, %v5235
      %v5300 = vadd.f32 %v4574, %v5240
      %v5301 = vadd.f32 %v4575, %v5243
      %v5302 = vadd.f32 %v4576, %v5248
      %v5303 = vadd.f32 %v4577, %v5251
      %v5304 = vadd.f32 %v4578, %v5256
      %v5305 = vadd.f32 %v4579, %v5259
      %v5306 = vadd.f32 %v4580, %v5264
      %v5307 = vadd.f32 %v4581, %v5267
      %v5308 = vadd.f32 %v4582, %v5272
      %v5309 = vadd.f32 %v4583, %v5275
      %v5310 = vld [vmem:[%s4225] sm:$0xe]
      %v5311 = vld [vmem:[%s4225 + $0xc] sm:$0xe]
      %v5312 = vld [vmem:[%s4225 + $0x18] sm:$0xe]
      %v5313 = vld [vmem:[%s4225 + $0x24] sm:$0xe]
      %v5314 = vld [vmem:[%s4225 + $0x30] sm:$0xe]
      %v5315 = vld [vmem:[%s4225 + $0x3c] sm:$0xe]
      %v5316 = vld [vmem:[%s4225 + $0x48] sm:$0xe]
      %v5317 = vld [vmem:[%s4225 + $0x54] sm:$0xe]
      %v5318 = vld [vmem:[%s4225 + $0x60] sm:$0xe]
      %v5319 = vld [vmem:[%s4225 + $0x6c] sm:$0xe]
      %v5320 = vld [vmem:[%s4225 + $0x78] sm:$0xe]
      %v5321 = vld [vmem:[%s4225 + $0x84] sm:$0xe]
      %v5322 = vld [vmem:[%s4225 + $0x90] sm:$0xe]
      %v5323 = vld [vmem:[%s4225 + $0x9c] sm:$0xe]
      %v5324 = vld [vmem:[%s4225 + $0xa8] sm:$0xe]
      %v5325 = vld [vmem:[%s4225 + $0xb4] sm:$0xe]
      %v5374 = vrot.slane %v5310, 5
      %v5375 = vrot.slane %v5374, 4
      %v5376 = vrot.slane %v4585, 5
      %v5377 = vsel %vm2264, %v5375, %v5376
      %v5378 = vrot.slane %v5376, 4
      %v5379 = vrot.slane %v4586, 5
      %v5380 = vsel %vm2264, %v5378, %v5379
      %v5381 = vrot.slane %v5311, 5
      %v5382 = vrot.slane %v5381, 4
      %v5383 = vrot.slane %v4588, 5
      %v5384 = vsel %vm2264, %v5382, %v5383
      %v5385 = vrot.slane %v5383, 4
      %v5386 = vrot.slane %v4589, 5
      %v5387 = vsel %vm2264, %v5385, %v5386
      %v5388 = vrot.slane %v5312, 5
      %v5389 = vrot.slane %v5388, 4
      %v5390 = vrot.slane %v4591, 5
      %v5391 = vsel %vm2264, %v5389, %v5390
      %v5392 = vrot.slane %v5390, 4
      %v5393 = vrot.slane %v4592, 5
      %v5394 = vsel %vm2264, %v5392, %v5393
      %v5395 = vrot.slane %v5313, 5
      %v5396 = vrot.slane %v5395, 4
      %v5397 = vrot.slane %v4594, 5
      %v5398 = vsel %vm2264, %v5396, %v5397
      %v5399 = vrot.slane %v5397, 4
      %v5400 = vrot.slane %v4595, 5
      %v5401 = vsel %vm2264, %v5399, %v5400
      %v5402 = vrot.slane %v5314, 5
      %v5403 = vrot.slane %v5402, 4
      %v5404 = vrot.slane %v4597, 5
      %v5405 = vsel %vm2264, %v5403, %v5404
      %v5406 = vrot.slane %v5404, 4
      %v5407 = vrot.slane %v4598, 5
      %v5408 = vsel %vm2264, %v5406, %v5407
      %v5409 = vrot.slane %v5315, 5
      %v5410 = vrot.slane %v5409, 4
      %v5411 = vrot.slane %v4600, 5
      %v5412 = vsel %vm2264, %v5410, %v5411
      %v5413 = vrot.slane %v5411, 4
      %v5414 = vrot.slane %v4601, 5
      %v5415 = vsel %vm2264, %v5413, %v5414
      %v5416 = vrot.slane %v5316, 5
      %v5417 = vrot.slane %v5416, 4
      %v5418 = vrot.slane %v4603, 5
      %v5419 = vsel %vm2264, %v5417, %v5418
      %v5420 = vrot.slane %v5418, 4
      %v5421 = vrot.slane %v4604, 5
      %v5422 = vsel %vm2264, %v5420, %v5421
      %v5423 = vrot.slane %v5317, 5
      %v5424 = vrot.slane %v5423, 4
      %v5425 = vrot.slane %v4606, 5
      %v5426 = vsel %vm2264, %v5424, %v5425
      %v5427 = vrot.slane %v5425, 4
      %v5428 = vrot.slane %v4607, 5
      %v5429 = vsel %vm2264, %v5427, %v5428
      %v5430 = vrot.slane %v5318, 5
      %v5431 = vrot.slane %v5430, 4
      %v5432 = vrot.slane %v4609, 5
      %v5433 = vsel %vm2264, %v5431, %v5432
      %v5434 = vrot.slane %v5432, 4
      %v5435 = vrot.slane %v4610, 5
      %v5436 = vsel %vm2264, %v5434, %v5435
      %v5437 = vrot.slane %v5319, 5
      %v5438 = vrot.slane %v5437, 4
      %v5439 = vrot.slane %v4612, 5
      %v5440 = vsel %vm2264, %v5438, %v5439
      %v5441 = vrot.slane %v5439, 4
      %v5442 = vrot.slane %v4613, 5
      %v5443 = vsel %vm2264, %v5441, %v5442
      %v5444 = vrot.slane %v5320, 5
      %v5445 = vrot.slane %v5444, 4
      %v5446 = vrot.slane %v4615, 5
      %v5447 = vsel %vm2264, %v5445, %v5446
      %v5448 = vrot.slane %v5446, 4
      %v5449 = vrot.slane %v4616, 5
      %v5450 = vsel %vm2264, %v5448, %v5449
      %v5451 = vrot.slane %v5321, 5
      %v5452 = vrot.slane %v5451, 4
      %v5453 = vrot.slane %v4618, 5
      %v5454 = vsel %vm2264, %v5452, %v5453
      %v5455 = vrot.slane %v5453, 4
      %v5456 = vrot.slane %v4619, 5
      %v5457 = vsel %vm2264, %v5455, %v5456
      %v5458 = vrot.slane %v5322, 5
      %v5459 = vrot.slane %v5458, 4
      %v5460 = vrot.slane %v4621, 5
      %v5461 = vsel %vm2264, %v5459, %v5460
      %v5462 = vrot.slane %v5460, 4
      %v5463 = vrot.slane %v4622, 5
      %v5464 = vsel %vm2264, %v5462, %v5463
      %v5465 = vrot.slane %v5323, 5
      %v5466 = vrot.slane %v5465, 4
      %v5467 = vrot.slane %v4624, 5
      %v5468 = vsel %vm2264, %v5466, %v5467
      %v5469 = vrot.slane %v5467, 4
      %v5470 = vrot.slane %v4625, 5
      %v5471 = vsel %vm2264, %v5469, %v5470
      %v5472 = vrot.slane %v5324, 5
      %v5473 = vrot.slane %v5472, 4
      %v5474 = vrot.slane %v4627, 5
      %v5475 = vsel %vm2264, %v5473, %v5474
      %v5476 = vrot.slane %v5474, 4
      %v5477 = vrot.slane %v4628, 5
      %v5478 = vsel %vm2264, %v5476, %v5477
      %v5479 = vrot.slane %v5325, 5
      %v5480 = vrot.slane %v5479, 4
      %v5481 = vrot.slane %v4630, 5
      %v5482 = vsel %vm2264, %v5480, %v5481
      %v5483 = vrot.slane %v5481, 4
      %v5484 = vrot.slane %v4631, 5
      %v5485 = vsel %vm2264, %v5483, %v5484
      %s5486 = scalar_lea.vmem %s1, 16
      %v5487 = vld [vmem:[%s5486] sm:$0x3]
      %v5488 = vunpack.c.l.b16 %v5377
      %v5489 = vunpack.c.l.b16 %v5380
      %v5490 = vunpack.c.l.b16 %v5384
      %v5491 = vunpack.c.l.b16 %v5387
      %v5492 = vunpack.c.l.b16 %v5391
      %v5493 = vunpack.c.l.b16 %v5394
      %v5494 = vunpack.c.l.b16 %v5398
      %v5495 = vunpack.c.l.b16 %v5401
      %v5496 = vunpack.c.l.b16 %v5405
      %v5497 = vunpack.c.l.b16 %v5408
      %v5498 = vunpack.c.l.b16 %v5412
      %v5499 = vunpack.c.l.b16 %v5415
      %v5500 = vunpack.c.l.b16 %v5419
      %v5501 = vunpack.c.l.b16 %v5422
      %v5502 = vunpack.c.l.b16 %v5426
      %v5503 = vunpack.c.l.b16 %v5429
      %v5504 = vunpack.c.l.b16 %v5433
      %v5505 = vunpack.c.l.b16 %v5436
      %v5506 = vunpack.c.l.b16 %v5440
      %v5507 = vunpack.c.l.b16 %v5443
      %v5508 = vunpack.c.l.b16 %v5447
      %v5509 = vunpack.c.l.b16 %v5450
      %v5510 = vunpack.c.l.b16 %v5454
      %v5511 = vunpack.c.l.b16 %v5457
      %v5512 = vunpack.c.l.b16 %v5461
      %v5513 = vunpack.c.l.b16 %v5464
      %v5514 = vunpack.c.l.b16 %v5468
      %v5515 = vunpack.c.l.b16 %v5471
      %v5516 = vunpack.c.l.b16 %v5475
      %v5517 = vunpack.c.l.b16 %v5478
      %v5518 = vunpack.c.l.b16 %v5482
      %v5519 = vunpack.c.l.b16 %v5485
      %v5520 = vpack.c.b16 %v5489, %v5488
      %v5521 = vpack.c.b16 %v5491, %v5490
      %v5522 = vpack.c.b16 %v5493, %v5492
      %v5523 = vpack.c.b16 %v5495, %v5494
      %v5524 = vpack.c.b16 %v5497, %v5496
      %v5525 = vpack.c.b16 %v5499, %v5498
      %v5526 = vpack.c.b16 %v5501, %v5500
      %v5527 = vpack.c.b16 %v5503, %v5502
      %v5528 = vpack.c.b16 %v5505, %v5504
      %v5529 = vpack.c.b16 %v5507, %v5506
      %v5530 = vpack.c.b16 %v5509, %v5508
      %v5531 = vpack.c.b16 %v5511, %v5510
      %v5532 = vpack.c.b16 %v5513, %v5512
      %v5533 = vpack.c.b16 %v5515, %v5514
      %v5534 = vpack.c.b16 %v5517, %v5516
      %v5535 = vpack.c.b16 %v5519, %v5518
      %v5537 = vsel %vm384, %v5520, 0
      %v5540 = vsel %vm384, %v5521, 0
      %v5543 = vsel %vm384, %v5522, 0
      %v5546 = vsel %vm384, %v5523, 0
      %v5549 = vsel %vm384, %v5524, 0
      %v5552 = vsel %vm384, %v5525, 0
      %v5555 = vsel %vm384, %v5526, 0
      %v5558 = vsel %vm384, %v5527, 0
      %v5561 = vsel %vm384, %v5528, 0
      %v5564 = vsel %vm384, %v5529, 0
      %v5567 = vsel %vm384, %v5530, 0
      %v5570 = vsel %vm384, %v5531, 0
      %v5573 = vsel %vm384, %v5532, 0
      %v5576 = vsel %vm384, %v5533, 0
      %v5579 = vsel %vm384, %v5534, 0
      %v5582 = vsel %vm384, %v5535, 0
      %v5585 = vsel %vm1757, %v5487, 0
      %5587 = vmatprep.subr.bf16.mxu0 0
      %5588 = vmatpush1.bf16.msra.mxu0 %v5585
      %5589 = vmatprep.subr.bf16.mxu0 0
      %5590 = vmatpush1.bf16.msra.mxu0 0
      %5591 = vmatprep.subr.bf16.mxu0 0
      %5592 = vmatpush1.bf16.msra.mxu0 0
      %5593 = vmatprep.subr.bf16.mxu0 0
      %5594 = vmatpush1.bf16.msra.mxu0 0
      %5595 = vmatprep.subr.bf16.mxu0 0
      %5596 = vmatpush1.bf16.msra.mxu0 0
      %5597 = vmatprep.subr.bf16.mxu0 0
      %5598 = vmatpush1.bf16.msra.mxu0 0
      %5599 = vmatprep.subr.bf16.mxu0 0
      %5600 = vmatpush1.bf16.msra.mxu0 0
      %5601 = vmatprep.subr.bf16.mxu0 0
      %5602 = vmatpush1.bf16.msra.mxu0 0
      %5603 = vmatprep.subr.bf16.mxu0 0
      %5604 = vmatpush1.bf16.msra.mxu0 0
      %5605 = vmatprep.subr.bf16.mxu0 0
      %5606 = vmatpush1.bf16.msra.mxu0 0
      %5607 = vmatprep.subr.bf16.mxu0 0
      %5608 = vmatpush1.bf16.msra.mxu0 0
      %5609 = vmatprep.subr.bf16.mxu0 0
      %5610 = vmatpush1.bf16.msra.mxu0 0
      %5611 = vmatprep.subr.bf16.mxu0 0
      %5612 = vmatpush1.bf16.msra.mxu0 0
      %5613 = vmatprep.subr.bf16.mxu0 0
      %5614 = vmatpush1.bf16.msra.mxu0 0
      %5615 = vmatprep.subr.bf16.mxu0 0
      %5616 = vmatpush1.bf16.msra.mxu0 0
      %5617 = vmatprep.subr.bf16.mxu0 0
      %5618 = vmatpush1.bf16.msra.mxu0 0
      %5619 = vmatprep.mubr.bf16.mxu0 0
      %5620 = vmatmul.mubr.bf16.gmra.mrb[0].mxu0 %v5537
      %v5621 = vpop.f32.mrb[0].mxu0
      %v5622 = vadd.f32 0.0, %v5621
      %v5623 = vpop.f32.mrb[0].mxu0
      %v5624 = vpop.f32.mrb[0].mxu0
      %v5625 = vadd.f32 0.0, %v5624
      %v5626 = vpop.f32.mrb[0].mxu0
      %5627 = vmatprep.mubr.bf16.mxu0 0
      %5628 = vmatmul.mubr.bf16.gmra.mrb[0].mxu0 %v5540
      %v5629 = vpop.f32.mrb[0].mxu0
      %v5630 = vadd.f32 0.0, %v5629
      %v5631 = vpop.f32.mrb[0].mxu0
      %v5632 = vpop.f32.mrb[0].mxu0
      %v5633 = vadd.f32 0.0, %v5632
      %v5634 = vpop.f32.mrb[0].mxu0
      %5635 = vmatprep.mubr.bf16.mxu0 0
      %5636 = vmatmul.mubr.bf16.gmra.mrb[0].mxu0 %v5543
      %v5637 = vpop.f32.mrb[0].mxu0
      %v5638 = vadd.f32 0.0, %v5637
      %v5639 = vpop.f32.mrb[0].mxu0
      %v5640 = vpop.f32.mrb[0].mxu0
      %v5641 = vadd.f32 0.0, %v5640
      %v5642 = vpop.f32.mrb[0].mxu0
      %5643 = vmatprep.mubr.bf16.mxu0 0
      %5644 = vmatmul.mubr.bf16.gmra.mrb[0].mxu0 %v5546
      %v5645 = vpop.f32.mrb[0].mxu0
      %v5646 = vadd.f32 0.0, %v5645
      %v5647 = vpop.f32.mrb[0].mxu0
      %v5648 = vpop.f32.mrb[0].mxu0
      %v5649 = vadd.f32 0.0, %v5648
      %v5650 = vpop.f32.mrb[0].mxu0
      %5651 = vmatprep.mubr.bf16.mxu0 0
      %5652 = vmatmul.mubr.bf16.gmra.mrb[0].mxu0 %v5549
      %v5653 = vpop.f32.mrb[0].mxu0
      %v5654 = vadd.f32 0.0, %v5653
      %v5655 = vpop.f32.mrb[0].mxu0
      %v5656 = vpop.f32.mrb[0].mxu0
      %v5657 = vadd.f32 0.0, %v5656
      %v5658 = vpop.f32.mrb[0].mxu0
      %5659 = vmatprep.mubr.bf16.mxu0 0
      %5660 = vmatmul.mubr.bf16.gmra.mrb[0].mxu0 %v5552
      %v5661 = vpop.f32.mrb[0].mxu0
      %v5662 = vadd.f32 0.0, %v5661
      %v5663 = vpop.f32.mrb[0].mxu0
      %v5664 = vpop.f32.mrb[0].mxu0
      %v5665 = vadd.f32 0.0, %v5664
      %v5666 = vpop.f32.mrb[0].mxu0
      %5667 = vmatprep.mubr.bf16.mxu0 0
      %5668 = vmatmul.mubr.bf16.gmra.mrb[0].mxu0 %v5555
      %v5669 = vpop.f32.mrb[0].mxu0
      %v5670 = vadd.f32 0.0, %v5669
      %v5671 = vpop.f32.mrb[0].mxu0
      %v5672 = vpop.f32.mrb[0].mxu0
      %v5673 = vadd.f32 0.0, %v5672
      %v5674 = vpop.f32.mrb[0].mxu0
      %5675 = vmatprep.mubr.bf16.mxu0 0
      %5676 = vmatmul.mubr.bf16.gmra.mrb[0].mxu0 %v5558
      %v5677 = vpop.f32.mrb[0].mxu0
      %v5678 = vadd.f32 0.0, %v5677
      %v5679 = vpop.f32.mrb[0].mxu0
      %v5680 = vpop.f32.mrb[0].mxu0
      %v5681 = vadd.f32 0.0, %v5680
      %v5682 = vpop.f32.mrb[0].mxu0
      %5683 = vmatprep.mubr.bf16.mxu0 0
      %5684 = vmatmul.mubr.bf16.gmra.mrb[0].mxu0 %v5561
      %v5685 = vpop.f32.mrb[0].mxu0
      %v5686 = vadd.f32 0.0, %v5685
      %v5687 = vpop.f32.mrb[0].mxu0
      %v5688 = vpop.f32.mrb[0].mxu0
      %v5689 = vadd.f32 0.0, %v5688
      %v5690 = vpop.f32.mrb[0].mxu0
      %5691 = vmatprep.mubr.bf16.mxu0 0
      %5692 = vmatmul.mubr.bf16.gmra.mrb[0].mxu0 %v5564
      %v5693 = vpop.f32.mrb[0].mxu0
      %v5694 = vadd.f32 0.0, %v5693
      %v5695 = vpop.f32.mrb[0].mxu0
      %v5696 = vpop.f32.mrb[0].mxu0
      %v5697 = vadd.f32 0.0, %v5696
      %v5698 = vpop.f32.mrb[0].mxu0
      %5699 = vmatprep.mubr.bf16.mxu0 0
      %5700 = vmatmul.mubr.bf16.gmra.mrb[0].mxu0 %v5567
      %v5701 = vpop.f32.mrb[0].mxu0
      %v5702 = vadd.f32 0.0, %v5701
      %v5703 = vpop.f32.mrb[0].mxu0
      %v5704 = vpop.f32.mrb[0].mxu0
      %v5705 = vadd.f32 0.0, %v5704
      %v5706 = vpop.f32.mrb[0].mxu0
      %5707 = vmatprep.mubr.bf16.mxu0 0
      %5708 = vmatmul.mubr.bf16.gmra.mrb[0].mxu0 %v5570
      %v5709 = vpop.f32.mrb[0].mxu0
      %v5710 = vadd.f32 0.0, %v5709
      %v5711 = vpop.f32.mrb[0].mxu0
      %v5712 = vpop.f32.mrb[0].mxu0
      %v5713 = vadd.f32 0.0, %v5712
      %v5714 = vpop.f32.mrb[0].mxu0
      %5715 = vmatprep.mubr.bf16.mxu0 0
      %5716 = vmatmul.mubr.bf16.gmra.mrb[0].mxu0 %v5573
      %v5717 = vpop.f32.mrb[0].mxu0
      %v5718 = vadd.f32 0.0, %v5717
      %v5719 = vpop.f32.mrb[0].mxu0
      %v5720 = vpop.f32.mrb[0].mxu0
      %v5721 = vadd.f32 0.0, %v5720
      %v5722 = vpop.f32.mrb[0].mxu0
      %5723 = vmatprep.mubr.bf16.mxu0 0
      %5724 = vmatmul.mubr.bf16.gmra.mrb[0].mxu0 %v5576
      %v5725 = vpop.f32.mrb[0].mxu0
      %v5726 = vadd.f32 0.0, %v5725
      %v5727 = vpop.f32.mrb[0].mxu0
      %v5728 = vpop.f32.mrb[0].mxu0
      %v5729 = vadd.f32 0.0, %v5728
      %v5730 = vpop.f32.mrb[0].mxu0
      %5731 = vmatprep.mubr.bf16.mxu0 0
      %5732 = vmatmul.mubr.bf16.gmra.mrb[0].mxu0 %v5579
      %v5733 = vpop.f32.mrb[0].mxu0
      %v5734 = vadd.f32 0.0, %v5733
      %v5735 = vpop.f32.mrb[0].mxu0
      %v5736 = vpop.f32.mrb[0].mxu0
      %v5737 = vadd.f32 0.0, %v5736
      %v5738 = vpop.f32.mrb[0].mxu0
      %5739 = vmatprep.mubr.bf16.mxu0 0
      %5740 = vmatmul.mubr.bf16.gmra.mrb[0].mxu0 %v5582
      %v5741 = vpop.f32.mrb[0].mxu0
      %v5742 = vadd.f32 0.0, %v5741
      %v5743 = vpop.f32.mrb[0].mxu0
      %v5744 = vpop.f32.mrb[0].mxu0
      %v5745 = vadd.f32 0.0, %v5744
      %v5746 = vpop.f32.mrb[0].mxu0
      %5747 = vdwg.mxu0
      %v5748 = vadd.f32 %v5278, %v5622
      %v5749 = vadd.f32 %v5279, %v5625
      %v5750 = vadd.f32 %v5280, %v5630
      %v5751 = vadd.f32 %v5281, %v5633
      %v5752 = vadd.f32 %v5282, %v5638
      %v5753 = vadd.f32 %v5283, %v5641
      %v5754 = vadd.f32 %v5284, %v5646
      %v5755 = vadd.f32 %v5285, %v5649
      %v5756 = vadd.f32 %v5286, %v5654
      %v5757 = vadd.f32 %v5287, %v5657
      %v5758 = vadd.f32 %v5288, %v5662
      %v5759 = vadd.f32 %v5289, %v5665
      %v5760 = vadd.f32 %v5290, %v5670
      %v5761 = vadd.f32 %v5291, %v5673
      %v5762 = vadd.f32 %v5292, %v5678
      %v5763 = vadd.f32 %v5293, %v5681
      %v5764 = vadd.f32 %v5294, %v5686
      %v5765 = vadd.f32 %v5295, %v5689
      %v5766 = vadd.f32 %v5296, %v5694
      %v5767 = vadd.f32 %v5297, %v5697
      %v5768 = vadd.f32 %v5298, %v5702
      %v5769 = vadd.f32 %v5299, %v5705
      %v5770 = vadd.f32 %v5300, %v5710
      %v5771 = vadd.f32 %v5301, %v5713
      %v5772 = vadd.f32 %v5302, %v5718
      %v5773 = vadd.f32 %v5303, %v5721
      %v5774 = vadd.f32 %v5304, %v5726
      %v5775 = vadd.f32 %v5305, %v5729
      %v5776 = vadd.f32 %v5306, %v5734
      %v5777 = vadd.f32 %v5307, %v5737
      %v5778 = vadd.f32 %v5308, %v5742
      %v5779 = vadd.f32 %v5309, %v5745
      %vm5780 = vcmask 64512
      %v5781 = vsel %vm5780, %v5748, 0.0
      %v5782 = vsel %vm5780, %v5749, 0.0
      %v5783 = vadd.f32 %v5781, %v5782
      %v5784 = vsel %vm5780, %v5750, 0.0
      %v5785 = vadd.f32 %v5783, %v5784
      %v5786 = vsel %vm5780, %v5751, 0.0
      %v5787 = vadd.f32 %v5785, %v5786
      %v5788 = vsel %vm5780, %v5752, 0.0
      %v5789 = vadd.f32 %v5787, %v5788
      %v5790 = vsel %vm5780, %v5753, 0.0
      %v5791 = vadd.f32 %v5789, %v5790
      %v5792 = vsel %vm5780, %v5754, 0.0
      %v5793 = vadd.f32 %v5791, %v5792
      %v5794 = vsel %vm5780, %v5755, 0.0
      %v5795 = vadd.f32 %v5793, %v5794
      %v5796 = vsel %vm5780, %v5756, 0.0
      %v5797 = vadd.f32 %v5795, %v5796
      %v5798 = vsel %vm5780, %v5757, 0.0
      %v5799 = vadd.f32 %v5797, %v5798
      %v5800 = vsel %vm5780, %v5758, 0.0
      %v5801 = vadd.f32 %v5799, %v5800
      %v5802 = vsel %vm5780, %v5759, 0.0
      %v5803 = vadd.f32 %v5801, %v5802
      %v5804 = vsel %vm5780, %v5760, 0.0
      %v5805 = vadd.f32 %v5803, %v5804
      %v5806 = vsel %vm5780, %v5761, 0.0
      %v5807 = vadd.f32 %v5805, %v5806
      %v5808 = vsel %vm5780, %v5762, 0.0
      %v5809 = vadd.f32 %v5807, %v5808
      %v5810 = vsel %vm5780, %v5763, 0.0
      %v5811 = vadd.f32 %v5809, %v5810
      %v5812 = vsel %vm5780, %v5764, 0.0
      %v5813 = vadd.f32 %v5811, %v5812
      %v5814 = vsel %vm5780, %v5765, 0.0
      %v5815 = vadd.f32 %v5813, %v5814
      %v5816 = vsel %vm5780, %v5766, 0.0
      %v5817 = vadd.f32 %v5815, %v5816
      %v5818 = vsel %vm5780, %v5767, 0.0
      %v5819 = vadd.f32 %v5817, %v5818
      %v5820 = vsel %vm5780, %v5768, 0.0
      %v5821 = vadd.f32 %v5819, %v5820
      %v5822 = vsel %vm5780, %v5769, 0.0
      %v5823 = vadd.f32 %v5821, %v5822
      %v5824 = vsel %vm5780, %v5770, 0.0
      %v5825 = vadd.f32 %v5823, %v5824
      %v5826 = vsel %vm5780, %v5771, 0.0
      %v5827 = vadd.f32 %v5825, %v5826
      %v5828 = vsel %vm5780, %v5772, 0.0
      %v5829 = vadd.f32 %v5827, %v5828
      %v5830 = vsel %vm5780, %v5773, 0.0
      %v5831 = vadd.f32 %v5829, %v5830
      %v5832 = vsel %vm5780, %v5774, 0.0
      %v5833 = vadd.f32 %v5831, %v5832
      %v5834 = vsel %vm5780, %v5775, 0.0
      %v5835 = vadd.f32 %v5833, %v5834
      %v5836 = vsel %vm5780, %v5776, 0.0
      %v5837 = vadd.f32 %v5835, %v5836
      %v5838 = vsel %vm5780, %v5777, 0.0
      %v5839 = vadd.f32 %v5837, %v5838
      %v5840 = vsel %vm5780, %v5778, 0.0
      %v5841 = vadd.f32 %v5839, %v5840
      %v5842 = vsel %vm5780, %v5779, 0.0
      %v5843 = vadd.f32 %v5841, %v5842
      %v5844 = vrot.slane %v5843, 4
      %v5845 = vadd.f32 %v5843, %v5844
      %v5846 = vrot.slane %v5845, 2
      %v5847 = vadd.f32 %v5845, %v5846
      %v5848 = vrot.slane %v5847, 1
      %v5849 = vadd.f32 %v5847, %v5848
      %v5850 = vmul.f32 %v5849, 0.00390625
      %v5851 = vsub.f32 %v5748, %v5850
      %v5852 = vsub.f32 %v5749, %v5850
      %v5853 = vsub.f32 %v5750, %v5850
      %v5854 = vsub.f32 %v5751, %v5850
      %v5855 = vsub.f32 %v5752, %v5850
      %v5856 = vsub.f32 %v5753, %v5850
      %v5857 = vsub.f32 %v5754, %v5850
      %v5858 = vsub.f32 %v5755, %v5850
      %v5859 = vsub.f32 %v5756, %v5850
      %v5860 = vsub.f32 %v5757, %v5850
      %v5861 = vsub.f32 %v5758, %v5850
      %v5862 = vsub.f32 %v5759, %v5850
      %v5863 = vsub.f32 %v5760, %v5850
      %v5864 = vsub.f32 %v5761, %v5850
      %v5865 = vsub.f32 %v5762, %v5850
      %v5866 = vsub.f32 %v5763, %v5850
      %v5867 = vsub.f32 %v5764, %v5850
      %v5868 = vsub.f32 %v5765, %v5850
      %v5869 = vsub.f32 %v5766, %v5850
      %v5870 = vsub.f32 %v5767, %v5850
      %v5871 = vsub.f32 %v5768, %v5850
      %v5872 = vsub.f32 %v5769, %v5850
      %v5873 = vsub.f32 %v5770, %v5850
      %v5874 = vsub.f32 %v5771, %v5850
      %v5875 = vsub.f32 %v5772, %v5850
      %v5876 = vsub.f32 %v5773, %v5850
      %v5877 = vsub.f32 %v5774, %v5850
      %v5878 = vsub.f32 %v5775, %v5850
      %v5879 = vsub.f32 %v5776, %v5850
      %v5880 = vsub.f32 %v5777, %v5850
      %v5881 = vsub.f32 %v5778, %v5850
      %v5882 = vsub.f32 %v5779, %v5850
      %v5883 = vmul.f32 %v5851, %v5851
      %v5884 = vmul.f32 %v5852, %v5852
      %v5885 = vmul.f32 %v5853, %v5853
      %v5886 = vmul.f32 %v5854, %v5854
      %v5887 = vmul.f32 %v5855, %v5855
      %v5888 = vmul.f32 %v5856, %v5856
      %v5889 = vmul.f32 %v5857, %v5857
      %v5890 = vmul.f32 %v5858, %v5858
      %v5891 = vmul.f32 %v5859, %v5859
      %v5892 = vmul.f32 %v5860, %v5860
      %v5893 = vmul.f32 %v5861, %v5861
      %v5894 = vmul.f32 %v5862, %v5862
      %v5895 = vmul.f32 %v5863, %v5863
      %v5896 = vmul.f32 %v5864, %v5864
      %v5897 = vmul.f32 %v5865, %v5865
      %v5898 = vmul.f32 %v5866, %v5866
      %v5899 = vmul.f32 %v5867, %v5867
      %v5900 = vmul.f32 %v5868, %v5868
      %v5901 = vmul.f32 %v5869, %v5869
      %v5902 = vmul.f32 %v5870, %v5870
      %v5903 = vmul.f32 %v5871, %v5871
      %v5904 = vmul.f32 %v5872, %v5872
      %v5905 = vmul.f32 %v5873, %v5873
      %v5906 = vmul.f32 %v5874, %v5874
      %v5907 = vmul.f32 %v5875, %v5875
      %v5908 = vmul.f32 %v5876, %v5876
      %v5909 = vmul.f32 %v5877, %v5877
      %v5910 = vmul.f32 %v5878, %v5878
      %v5911 = vmul.f32 %v5879, %v5879
      %v5912 = vmul.f32 %v5880, %v5880
      %v5913 = vmul.f32 %v5881, %v5881
      %v5914 = vmul.f32 %v5882, %v5882
      %v5915 = vsel %vm5780, %v5883, 0.0
      %v5916 = vsel %vm5780, %v5884, 0.0
      %v5917 = vadd.f32 %v5915, %v5916
      %v5918 = vsel %vm5780, %v5885, 0.0
      %v5919 = vadd.f32 %v5917, %v5918
      %v5920 = vsel %vm5780, %v5886, 0.0
      %v5921 = vadd.f32 %v5919, %v5920
      %v5922 = vsel %vm5780, %v5887, 0.0
      %v5923 = vadd.f32 %v5921, %v5922
      %v5924 = vsel %vm5780, %v5888, 0.0
      %v5925 = vadd.f32 %v5923, %v5924
      %v5926 = vsel %vm5780, %v5889, 0.0
      %v5927 = vadd.f32 %v5925, %v5926
      %v5928 = vsel %vm5780, %v5890, 0.0
      %v5929 = vadd.f32 %v5927, %v5928
      %v5930 = vsel %vm5780, %v5891, 0.0
      %v5931 = vadd.f32 %v5929, %v5930
      %v5932 = vsel %vm5780, %v5892, 0.0
      %v5933 = vadd.f32 %v5931, %v5932
      %v5934 = vsel %vm5780, %v5893, 0.0
      %v5935 = vadd.f32 %v5933, %v5934
      %v5936 = vsel %vm5780, %v5894, 0.0
      %v5937 = vadd.f32 %v5935, %v5936
      %v5938 = vsel %vm5780, %v5895, 0.0
      %v5939 = vadd.f32 %v5937, %v5938
      %v5940 = vsel %vm5780, %v5896, 0.0
      %v5941 = vadd.f32 %v5939, %v5940
      %v5942 = vsel %vm5780, %v5897, 0.0
      %v5943 = vadd.f32 %v5941, %v5942
      %v5944 = vsel %vm5780, %v5898, 0.0
      %v5945 = vadd.f32 %v5943, %v5944
      %v5946 = vsel %vm5780, %v5899, 0.0
      %v5947 = vadd.f32 %v5945, %v5946
      %v5948 = vsel %vm5780, %v5900, 0.0
      %v5949 = vadd.f32 %v5947, %v5948
      %v5950 = vsel %vm5780, %v5901, 0.0
      %v5951 = vadd.f32 %v5949, %v5950
      %v5952 = vsel %vm5780, %v5902, 0.0
      %v5953 = vadd.f32 %v5951, %v5952
      %v5954 = vsel %vm5780, %v5903, 0.0
      %v5955 = vadd.f32 %v5953, %v5954
      %v5956 = vsel %vm5780, %v5904, 0.0
      %v5957 = vadd.f32 %v5955, %v5956
      %v5958 = vsel %vm5780, %v5905, 0.0
      %v5959 = vadd.f32 %v5957, %v5958
      %v5960 = vsel %vm5780, %v5906, 0.0
      %v5961 = vadd.f32 %v5959, %v5960
      %v5962 = vsel %vm5780, %v5907, 0.0
      %v5963 = vadd.f32 %v5961, %v5962
      %v5964 = vsel %vm5780, %v5908, 0.0
      %v5965 = vadd.f32 %v5963, %v5964
      %v5966 = vsel %vm5780, %v5909, 0.0
      %v5967 = vadd.f32 %v5965, %v5966
      %v5968 = vsel %vm5780, %v5910, 0.0
      %v5969 = vadd.f32 %v5967, %v5968
      %v5970 = vsel %vm5780, %v5911, 0.0
      %v5971 = vadd.f32 %v5969, %v5970
      %v5972 = vsel %vm5780, %v5912, 0.0
      %v5973 = vadd.f32 %v5971, %v5972
      %v5974 = vsel %vm5780, %v5913, 0.0
      %v5975 = vadd.f32 %v5973, %v5974
      %v5976 = vsel %vm5780, %v5914, 0.0
      %v5977 = vadd.f32 %v5975, %v5976
      %v5978 = vrot.slane %v5977, 4
      %v5979 = vadd.f32 %v5977, %v5978
      %v5980 = vrot.slane %v5979, 2
      %v5981 = vadd.f32 %v5979, %v5980
      %v5982 = vrot.slane %v5981, 1
      %v5983 = vadd.f32 %v5981, %v5982
      %v5984 = vmul.f32 %v5983, 0.00390625
      %v5985 = vadd.f32 %v5984, 1e-05
      %v5986 = vrsqrt.pop %v5985
      %v5987 = vmul.f32 %v5851, %v5986
      %v5988 = vmul.f32 %v5852, %v5986
      %v5989 = vmul.f32 %v5853, %v5986
      %v5990 = vmul.f32 %v5854, %v5986
      %v5991 = vmul.f32 %v5855, %v5986
      %v5992 = vmul.f32 %v5856, %v5986
      %v5993 = vmul.f32 %v5857, %v5986
      %v5994 = vmul.f32 %v5858, %v5986
      %v5995 = vmul.f32 %v5859, %v5986
      %v5996 = vmul.f32 %v5860, %v5986
      %v5997 = vmul.f32 %v5861, %v5986
      %v5998 = vmul.f32 %v5862, %v5986
      %v5999 = vmul.f32 %v5863, %v5986
      %v6000 = vmul.f32 %v5864, %v5986
      %v6001 = vmul.f32 %v5865, %v5986
      %v6002 = vmul.f32 %v5866, %v5986
      %v6003 = vmul.f32 %v5867, %v5986
      %v6004 = vmul.f32 %v5868, %v5986
      %v6005 = vmul.f32 %v5869, %v5986
      %v6006 = vmul.f32 %v5870, %v5986
      %v6007 = vmul.f32 %v5871, %v5986
      %v6008 = vmul.f32 %v5872, %v5986
      %v6009 = vmul.f32 %v5873, %v5986
      %v6010 = vmul.f32 %v5874, %v5986
      %v6011 = vmul.f32 %v5875, %v5986
      %v6012 = vmul.f32 %v5876, %v5986
      %v6013 = vmul.f32 %v5877, %v5986
      %v6014 = vmul.f32 %v5878, %v5986
      %v6015 = vmul.f32 %v5879, %v5986
      %v6016 = vmul.f32 %v5880, %v5986
      %v6017 = vmul.f32 %v5881, %v5986
      %v6018 = vmul.f32 %v5882, %v5986
      %v6019 = vmul.f32 %v5987, 0.01
      %v6020 = vmul.f32 %v5988, 0.01
      %v6021 = vmul.f32 %v5989, 0.01
      %v6022 = vmul.f32 %v5990, 0.01
      %v6023 = vmul.f32 %v5991, 0.01
      %v6024 = vmul.f32 %v5992, 0.01
      %v6025 = vmul.f32 %v5993, 0.01
      %v6026 = vmul.f32 %v5994, 0.01
      %v6027 = vmul.f32 %v5995, 0.01
      %v6028 = vmul.f32 %v5996, 0.01
      %v6029 = vmul.f32 %v5997, 0.01
      %v6030 = vmul.f32 %v5998, 0.01
      %v6031 = vmul.f32 %v5999, 0.01
      %v6032 = vmul.f32 %v6000, 0.01
      %v6033 = vmul.f32 %v6001, 0.01
      %v6034 = vmul.f32 %v6002, 0.01
      %v6035 = vmul.f32 %v6003, 0.01
      %v6036 = vmul.f32 %v6004, 0.01
      %v6037 = vmul.f32 %v6005, 0.01
      %v6038 = vmul.f32 %v6006, 0.01
      %v6039 = vmul.f32 %v6007, 0.01
      %v6040 = vmul.f32 %v6008, 0.01
      %v6041 = vmul.f32 %v6009, 0.01
      %v6042 = vmul.f32 %v6010, 0.01
      %v6043 = vmul.f32 %v6011, 0.01
      %v6044 = vmul.f32 %v6012, 0.01
      %v6045 = vmul.f32 %v6013, 0.01
      %v6046 = vmul.f32 %v6014, 0.01
      %v6047 = vmul.f32 %v6015, 0.01
      %v6048 = vmul.f32 %v6016, 0.01
      %v6049 = vmul.f32 %v6017, 0.01
      %v6050 = vmul.f32 %v6018, 0.01
      %v6051 = vmax.f32 %v5987, %v6019
      %v6052 = vmax.f32 %v5988, %v6020
      %v6053 = vmax.f32 %v5989, %v6021
      %v6054 = vmax.f32 %v5990, %v6022
      %v6055 = vmax.f32 %v5991, %v6023
      %v6056 = vmax.f32 %v5992, %v6024
      %v6057 = vmax.f32 %v5993, %v6025
      %v6058 = vmax.f32 %v5994, %v6026
      %v6059 = vmax.f32 %v5995, %v6027
      %v6060 = vmax.f32 %v5996, %v6028
      %v6061 = vmax.f32 %v5997, %v6029
      %v6062 = vmax.f32 %v5998, %v6030
      %v6063 = vmax.f32 %v5999, %v6031
      %v6064 = vmax.f32 %v6000, %v6032
      %v6065 = vmax.f32 %v6001, %v6033
      %v6066 = vmax.f32 %v6002, %v6034
      %v6067 = vmax.f32 %v6003, %v6035
      %v6068 = vmax.f32 %v6004, %v6036
      %v6069 = vmax.f32 %v6005, %v6037
      %v6070 = vmax.f32 %v6006, %v6038
      %v6071 = vmax.f32 %v6007, %v6039
      %v6072 = vmax.f32 %v6008, %v6040
      %v6073 = vmax.f32 %v6009, %v6041
      %v6074 = vmax.f32 %v6010, %v6042
      %v6075 = vmax.f32 %v6011, %v6043
      %v6076 = vmax.f32 %v6012, %v6044
      %v6077 = vmax.f32 %v6013, %v6045
      %v6078 = vmax.f32 %v6014, %v6046
      %v6079 = vmax.f32 %v6015, %v6047
      %v6080 = vmax.f32 %v6016, %v6048
      %v6081 = vmax.f32 %v6017, %v6049
      %v6082 = vmax.f32 %v6018, %v6050
      %v6083 = vpack.c.bf16 %v6052, %v6051
      %v6084 = vpack.c.bf16 %v6054, %v6053
      %v6085 = vpack.c.bf16 %v6056, %v6055
      %v6086 = vpack.c.bf16 %v6058, %v6057
      %v6087 = vpack.c.bf16 %v6060, %v6059
      %v6088 = vpack.c.bf16 %v6062, %v6061
      %v6089 = vpack.c.bf16 %v6064, %v6063
      %v6090 = vpack.c.bf16 %v6066, %v6065
      %v6091 = vpack.c.bf16 %v6068, %v6067
      %v6092 = vpack.c.bf16 %v6070, %v6069
      %v6093 = vpack.c.bf16 %v6072, %v6071
      %v6094 = vpack.c.bf16 %v6074, %v6073
      %v6095 = vpack.c.bf16 %v6076, %v6075
      %v6096 = vpack.c.bf16 %v6078, %v6077
      %v6097 = vpack.c.bf16 %v6080, %v6079
      %v6098 = vpack.c.bf16 %v6082, %v6081
      %v6115 = vunpack.c.l.b16 %v6083
      %v6116 = vunpack.c.h.b16 %v6083
      %v6117 = vunpack.c.l.b16 %v6084
      %v6118 = vunpack.c.h.b16 %v6084
      %v6119 = vunpack.c.l.b16 %v6085
      %v6120 = vunpack.c.h.b16 %v6085
      %v6121 = vunpack.c.l.b16 %v6086
      %v6122 = vunpack.c.h.b16 %v6086
      %v6123 = vunpack.c.l.b16 %v6087
      %v6124 = vunpack.c.h.b16 %v6087
      %v6125 = vunpack.c.l.b16 %v6088
      %v6126 = vunpack.c.h.b16 %v6088
      %v6127 = vunpack.c.l.b16 %v6089
      %v6128 = vunpack.c.h.b16 %v6089
      %v6129 = vunpack.c.l.b16 %v6090
      %v6130 = vunpack.c.h.b16 %v6090
      %v6131 = vunpack.c.l.b16 %v6091
      %v6132 = vunpack.c.h.b16 %v6091
      %v6133 = vunpack.c.l.b16 %v6092
      %v6134 = vunpack.c.h.b16 %v6092
      %v6135 = vunpack.c.l.b16 %v6093
      %v6136 = vunpack.c.h.b16 %v6093
      %v6137 = vunpack.c.l.b16 %v6094
      %v6138 = vunpack.c.h.b16 %v6094
      %v6139 = vunpack.c.l.b16 %v6095
      %v6140 = vunpack.c.h.b16 %v6095
      %v6141 = vunpack.c.l.b16 %v6096
      %v6142 = vunpack.c.h.b16 %v6096
      %v6143 = vunpack.c.l.b16 %v6097
      %v6144 = vunpack.c.h.b16 %v6097
      %v6145 = vunpack.c.l.b16 %v6098
      %v6146 = vunpack.c.h.b16 %v6098
      %v6147 = vpack.c.b16 %v6115, %v6115
      %v6148 = vpack.c.b16 %v6116, %v6116
      %v6149 = vpack.c.b16 %v6117, %v6117
      %v6150 = vpack.c.b16 %v6118, %v6118
      %v6151 = vpack.c.b16 %v6119, %v6119
      %v6152 = vpack.c.b16 %v6120, %v6120
      %v6153 = vpack.c.b16 %v6121, %v6121
      %v6154 = vpack.c.b16 %v6122, %v6122
      %v6155 = vpack.c.b16 %v6123, %v6123
      %v6156 = vpack.c.b16 %v6124, %v6124
      %v6157 = vpack.c.b16 %v6125, %v6125
      %v6158 = vpack.c.b16 %v6126, %v6126
      %v6159 = vpack.c.b16 %v6127, %v6127
      %v6160 = vpack.c.b16 %v6128, %v6128
      %v6161 = vpack.c.b16 %v6129, %v6129
      %v6162 = vpack.c.b16 %v6130, %v6130
      %v6163 = vpack.c.b16 %v6131, %v6131
      %v6164 = vpack.c.b16 %v6132, %v6132
      %v6165 = vpack.c.b16 %v6133, %v6133
      %v6166 = vpack.c.b16 %v6134, %v6134
      %v6167 = vpack.c.b16 %v6135, %v6135
      %v6168 = vpack.c.b16 %v6136, %v6136
      %v6169 = vpack.c.b16 %v6137, %v6137
      %v6170 = vpack.c.b16 %v6138, %v6138
      %v6171 = vpack.c.b16 %v6139, %v6139
      %v6172 = vpack.c.b16 %v6140, %v6140
      %v6173 = vpack.c.b16 %v6141, %v6141
      %v6174 = vpack.c.b16 %v6142, %v6142
      %v6175 = vpack.c.b16 %v6143, %v6143
      %v6176 = vpack.c.b16 %v6144, %v6144
      %v6177 = vpack.c.b16 %v6145, %v6145
      %v6178 = vpack.c.b16 %v6146, %v6146
      %v6180 = vshrl.u32 %v6147, 16
      %v6182 = vrot.slane %v6180, 7
      %v6183 = vshll.u32 %v6147, 16
      %v6185 = vor.u32 %v6182, %v6183
      %v6186 = vrot.slane %v6182, 4
      %v6188 = vshrl.u32 %v6148, 16
      %v6190 = vrot.slane %v6188, 7
      %v6191 = vshll.u32 %v6148, 16
      %v6193 = vor.u32 %v6190, %v6191
      %v6194 = vsel %vm784, %v6186, %v6193
      %v6195 = vrot.slane %v6190, 4
      %v6197 = vshrl.u32 %v6149, 16
      %v6199 = vrot.slane %v6197, 7
      %v6200 = vshll.u32 %v6149, 16
      %v6202 = vor.u32 %v6199, %v6200
      %v6203 = vrot.slane %v6199, 4
      %v6205 = vshrl.u32 %v6150, 16
      %v6207 = vrot.slane %v6205, 7
      %v6208 = vshll.u32 %v6150, 16
      %v6210 = vor.u32 %v6207, %v6208
      %v6211 = vsel %vm784, %v6203, %v6210
      %v6212 = vrot.slane %v6207, 4
      %v6214 = vshrl.u32 %v6151, 16
      %v6216 = vrot.slane %v6214, 7
      %v6217 = vshll.u32 %v6151, 16
      %v6219 = vor.u32 %v6216, %v6217
      %v6220 = vrot.slane %v6216, 4
      %v6222 = vshrl.u32 %v6152, 16
      %v6224 = vrot.slane %v6222, 7
      %v6225 = vshll.u32 %v6152, 16
      %v6227 = vor.u32 %v6224, %v6225
      %v6228 = vsel %vm784, %v6220, %v6227
      %v6229 = vrot.slane %v6224, 4
      %v6231 = vshrl.u32 %v6153, 16
      %v6233 = vrot.slane %v6231, 7
      %v6234 = vshll.u32 %v6153, 16
      %v6236 = vor.u32 %v6233, %v6234
      %v6237 = vrot.slane %v6233, 4
      %v6239 = vshrl.u32 %v6154, 16
      %v6241 = vrot.slane %v6239, 7
      %v6242 = vshll.u32 %v6154, 16
      %v6244 = vor.u32 %v6241, %v6242
      %v6245 = vsel %vm784, %v6237, %v6244
      %v6246 = vrot.slane %v6241, 4
      %v6248 = vshrl.u32 %v6155, 16
      %v6250 = vrot.slane %v6248, 7
      %v6251 = vshll.u32 %v6155, 16
      %v6253 = vor.u32 %v6250, %v6251
      %v6254 = vrot.slane %v6250, 4
      %v6256 = vshrl.u32 %v6156, 16
      %v6258 = vrot.slane %v6256, 7
      %v6259 = vshll.u32 %v6156, 16
      %v6261 = vor.u32 %v6258, %v6259
      %v6262 = vsel %vm784, %v6254, %v6261
      %v6263 = vrot.slane %v6258, 4
      %v6265 = vshrl.u32 %v6157, 16
      %v6267 = vrot.slane %v6265, 7
      %v6268 = vshll.u32 %v6157, 16
      %v6270 = vor.u32 %v6267, %v6268
      %v6271 = vrot.slane %v6267, 4
      %v6273 = vshrl.u32 %v6158, 16
      %v6275 = vrot.slane %v6273, 7
      %v6276 = vshll.u32 %v6158, 16
      %v6278 = vor.u32 %v6275, %v6276
      %v6279 = vsel %vm784, %v6271, %v6278
      %v6280 = vrot.slane %v6275, 4
      %v6282 = vshrl.u32 %v6159, 16
      %v6284 = vrot.slane %v6282, 7
      %v6285 = vshll.u32 %v6159, 16
      %v6287 = vor.u32 %v6284, %v6285
      %v6288 = vrot.slane %v6284, 4
      %v6290 = vshrl.u32 %v6160, 16
      %v6292 = vrot.slane %v6290, 7
      %v6293 = vshll.u32 %v6160, 16
      %v6295 = vor.u32 %v6292, %v6293
      %v6296 = vsel %vm784, %v6288, %v6295
      %v6297 = vrot.slane %v6292, 4
      %v6299 = vshrl.u32 %v6161, 16
      %v6301 = vrot.slane %v6299, 7
      %v6302 = vshll.u32 %v6161, 16
      %v6304 = vor.u32 %v6301, %v6302
      %v6305 = vrot.slane %v6301, 4
      %v6307 = vshrl.u32 %v6162, 16
      %v6309 = vrot.slane %v6307, 7
      %v6310 = vshll.u32 %v6162, 16
      %v6312 = vor.u32 %v6309, %v6310
      %v6313 = vsel %vm784, %v6305, %v6312
      %v6314 = vrot.slane %v6309, 4
      %v6316 = vshrl.u32 %v6163, 16
      %v6318 = vrot.slane %v6316, 7
      %v6319 = vshll.u32 %v6163, 16
      %v6321 = vor.u32 %v6318, %v6319
      %v6322 = vrot.slane %v6318, 4
      %v6324 = vshrl.u32 %v6164, 16
      %v6326 = vrot.slane %v6324, 7
      %v6327 = vshll.u32 %v6164, 16
      %v6329 = vor.u32 %v6326, %v6327
      %v6330 = vsel %vm784, %v6322, %v6329
      %v6331 = vrot.slane %v6326, 4
      %v6333 = vshrl.u32 %v6165, 16
      %v6335 = vrot.slane %v6333, 7
      %v6336 = vshll.u32 %v6165, 16
      %v6338 = vor.u32 %v6335, %v6336
      %v6339 = vrot.slane %v6335, 4
      %v6341 = vshrl.u32 %v6166, 16
      %v6343 = vrot.slane %v6341, 7
      %v6344 = vshll.u32 %v6166, 16
      %v6346 = vor.u32 %v6343, %v6344
      %v6347 = vsel %vm784, %v6339, %v6346
      %v6348 = vrot.slane %v6343, 4
      %v6350 = vshrl.u32 %v6167, 16
      %v6352 = vrot.slane %v6350, 7
      %v6353 = vshll.u32 %v6167, 16
      %v6355 = vor.u32 %v6352, %v6353
      %v6356 = vrot.slane %v6352, 4
      %v6358 = vshrl.u32 %v6168, 16
      %v6360 = vrot.slane %v6358, 7
      %v6361 = vshll.u32 %v6168, 16
      %v6363 = vor.u32 %v6360, %v6361
      %v6364 = vsel %vm784, %v6356, %v6363
      %v6365 = vrot.slane %v6360, 4
      %v6367 = vshrl.u32 %v6169, 16
      %v6369 = vrot.slane %v6367, 7
      %v6370 = vshll.u32 %v6169, 16
      %v6372 = vor.u32 %v6369, %v6370
      %v6373 = vrot.slane %v6369, 4
      %v6375 = vshrl.u32 %v6170, 16
      %v6377 = vrot.slane %v6375, 7
      %v6378 = vshll.u32 %v6170, 16
      %v6380 = vor.u32 %v6377, %v6378
      %v6381 = vsel %vm784, %v6373, %v6380
      %v6382 = vrot.slane %v6377, 4
      %v6384 = vshrl.u32 %v6171, 16
      %v6386 = vrot.slane %v6384, 7
      %v6387 = vshll.u32 %v6171, 16
      %v6389 = vor.u32 %v6386, %v6387
      %v6390 = vrot.slane %v6386, 4
      %v6392 = vshrl.u32 %v6172, 16
      %v6394 = vrot.slane %v6392, 7
      %v6395 = vshll.u32 %v6172, 16
      %v6397 = vor.u32 %v6394, %v6395
      %v6398 = vsel %vm784, %v6390, %v6397
      %v6399 = vrot.slane %v6394, 4
      %v6401 = vshrl.u32 %v6173, 16
      %v6403 = vrot.slane %v6401, 7
      %v6404 = vshll.u32 %v6173, 16
      %v6406 = vor.u32 %v6403, %v6404
      %v6407 = vrot.slane %v6403, 4
      %v6409 = vshrl.u32 %v6174, 16
      %v6411 = vrot.slane %v6409, 7
      %v6412 = vshll.u32 %v6174, 16
      %v6414 = vor.u32 %v6411, %v6412
      %v6415 = vsel %vm784, %v6407, %v6414
      %v6416 = vrot.slane %v6411, 4
      %v6418 = vshrl.u32 %v6175, 16
      %v6420 = vrot.slane %v6418, 7
      %v6421 = vshll.u32 %v6175, 16
      %v6423 = vor.u32 %v6420, %v6421
      %v6424 = vrot.slane %v6420, 4
      %v6426 = vshrl.u32 %v6176, 16
      %v6428 = vrot.slane %v6426, 7
      %v6429 = vshll.u32 %v6176, 16
      %v6431 = vor.u32 %v6428, %v6429
      %v6432 = vsel %vm784, %v6424, %v6431
      %v6433 = vrot.slane %v6428, 4
      %v6435 = vshrl.u32 %v6177, 16
      %v6437 = vrot.slane %v6435, 7
      %v6438 = vshll.u32 %v6177, 16
      %v6440 = vor.u32 %v6437, %v6438
      %v6441 = vrot.slane %v6437, 4
      %v6443 = vshrl.u32 %v6178, 16
      %v6445 = vrot.slane %v6443, 7
      %v6446 = vshll.u32 %v6178, 16
      %v6448 = vor.u32 %v6445, %v6446
      %v6449 = vsel %vm784, %v6441, %v6448
      %v6450 = vrot.slane %v6445, 4
      %vm6499 = vcmask 60416
      %vm6500 = vmand %vm6499, %vm264
      %v6501 = vsel %vm6500, %v6185, %v3029
      %6502 = vst [vmem:[%s1105] sm:$0xf] %v6501
      %6503 = vst.msk [vmem:[%s1105 + $0x4] sm:$0xf] %vm199, %v6194
      %v6504 = vld [vmem:[%s1105 + $0x8] sm:$0x1]
      %v6505 = vsel %vm209, %v6195, %v6504
      %6506 = vst [vmem:[%s1105 + $0x8] sm:$0x1] %v6505
      %v6507 = vld [vmem:[%s1105 + $0xc] sm:$0xf]
      %v6508 = vsel %vm6500, %v6202, %v6507
      %6509 = vst [vmem:[%s1105 + $0xc] sm:$0xf] %v6508
      %6510 = vst.msk [vmem:[%s1105 + $0x10] sm:$0xf] %vm199, %v6211
      %v6511 = vld [vmem:[%s1105 + $0x14] sm:$0x1]
      %v6512 = vsel %vm209, %v6212, %v6511
      %6513 = vst [vmem:[%s1105 + $0x14] sm:$0x1] %v6512
      %v6514 = vld [vmem:[%s1105 + $0x18] sm:$0xf]
      %v6515 = vsel %vm6500, %v6219, %v6514
      %6516 = vst [vmem:[%s1105 + $0x18] sm:$0xf] %v6515
      %6517 = vst.msk [vmem:[%s1105 + $0x1c] sm:$0xf] %vm199, %v6228
      %v6518 = vld [vmem:[%s1105 + $0x20] sm:$0x1]
      %v6519 = vsel %vm209, %v6229, %v6518
      %6520 = vst [vmem:[%s1105 + $0x20] sm:$0x1] %v6519
      %v6521 = vld [vmem:[%s1105 + $0x24] sm:$0xf]
      %v6522 = vsel %vm6500, %v6236, %v6521
      %6523 = vst [vmem:[%s1105 + $0x24] sm:$0xf] %v6522
      %6524 = vst.msk [vmem:[%s1105 + $0x28] sm:$0xf] %vm199, %v6245
      %v6525 = vld [vmem:[%s1105 + $0x2c] sm:$0x1]
      %v6526 = vsel %vm209, %v6246, %v6525
      %6527 = vst [vmem:[%s1105 + $0x2c] sm:$0x1] %v6526
      %v6528 = vld [vmem:[%s1105 + $0x30] sm:$0xf]
      %v6529 = vsel %vm6500, %v6253, %v6528
      %6530 = vst [vmem:[%s1105 + $0x30] sm:$0xf] %v6529
      %6531 = vst.msk [vmem:[%s1105 + $0x34] sm:$0xf] %vm199, %v6262
      %v6532 = vld [vmem:[%s1105 + $0x38] sm:$0x1]
      %v6533 = vsel %vm209, %v6263, %v6532
      %6534 = vst [vmem:[%s1105 + $0x38] sm:$0x1] %v6533
      %v6535 = vld [vmem:[%s1105 + $0x3c] sm:$0xf]
      %v6536 = vsel %vm6500, %v6270, %v6535
      %6537 = vst [vmem:[%s1105 + $0x3c] sm:$0xf] %v6536
      %6538 = vst.msk [vmem:[%s1105 + $0x40] sm:$0xf] %vm199, %v6279
      %v6539 = vld [vmem:[%s1105 + $0x44] sm:$0x1]
      %v6540 = vsel %vm209, %v6280, %v6539
      %6541 = vst [vmem:[%s1105 + $0x44] sm:$0x1] %v6540
      %v6542 = vld [vmem:[%s1105 + $0x48] sm:$0xf]
      %v6543 = vsel %vm6500, %v6287, %v6542
      %6544 = vst [vmem:[%s1105 + $0x48] sm:$0xf] %v6543
      %6545 = vst.msk [vmem:[%s1105 + $0x4c] sm:$0xf] %vm199, %v6296
      %v6546 = vld [vmem:[%s1105 + $0x50] sm:$0x1]
      %v6547 = vsel %vm209, %v6297, %v6546
      %6548 = vst [vmem:[%s1105 + $0x50] sm:$0x1] %v6547
      %v6549 = vld [vmem:[%s1105 + $0x54] sm:$0xf]
      %v6550 = vsel %vm6500, %v6304, %v6549
      %6551 = vst [vmem:[%s1105 + $0x54] sm:$0xf] %v6550
      %6552 = vst.msk [vmem:[%s1105 + $0x58] sm:$0xf] %vm199, %v6313
      %v6553 = vld [vmem:[%s1105 + $0x5c] sm:$0x1]
      %v6554 = vsel %vm209, %v6314, %v6553
      %6555 = vst [vmem:[%s1105 + $0x5c] sm:$0x1] %v6554
      %v6556 = vld [vmem:[%s1105 + $0x60] sm:$0xf]
      %v6557 = vsel %vm6500, %v6321, %v6556
      %6558 = vst [vmem:[%s1105 + $0x60] sm:$0xf] %v6557
      %6559 = vst.msk [vmem:[%s1105 + $0x64] sm:$0xf] %vm199, %v6330
      %v6560 = vld [vmem:[%s1105 + $0x68] sm:$0x1]
      %v6561 = vsel %vm209, %v6331, %v6560
      %6562 = vst [vmem:[%s1105 + $0x68] sm:$0x1] %v6561
      %v6563 = vld [vmem:[%s1105 + $0x6c] sm:$0xf]
      %v6564 = vsel %vm6500, %v6338, %v6563
      %6565 = vst [vmem:[%s1105 + $0x6c] sm:$0xf] %v6564
      %6566 = vst.msk [vmem:[%s1105 + $0x70] sm:$0xf] %vm199, %v6347
      %v6567 = vld [vmem:[%s1105 + $0x74] sm:$0x1]
      %v6568 = vsel %vm209, %v6348, %v6567
      %6569 = vst [vmem:[%s1105 + $0x74] sm:$0x1] %v6568
      %v6570 = vld [vmem:[%s1105 + $0x78] sm:$0xf]
      %v6571 = vsel %vm6500, %v6355, %v6570
      %6572 = vst [vmem:[%s1105 + $0x78] sm:$0xf] %v6571
      %6573 = vst.msk [vmem:[%s1105 + $0x7c] sm:$0xf] %vm199, %v6364
      %v6574 = vld [vmem:[%s1105 + $0x80] sm:$0x1]
      %v6575 = vsel %vm209, %v6365, %v6574
      %6576 = vst [vmem:[%s1105 + $0x80] sm:$0x1] %v6575
      %v6577 = vld [vmem:[%s1105 + $0x84] sm:$0xf]
      %v6578 = vsel %vm6500, %v6372, %v6577
      %6579 = vst [vmem:[%s1105 + $0x84] sm:$0xf] %v6578
      %6580 = vst.msk [vmem:[%s1105 + $0x88] sm:$0xf] %vm199, %v6381
      %v6581 = vld [vmem:[%s1105 + $0x8c] sm:$0x1]
      %v6582 = vsel %vm209, %v6382, %v6581
      %6583 = vst [vmem:[%s1105 + $0x8c] sm:$0x1] %v6582
      %v6584 = vld [vmem:[%s1105 + $0x90] sm:$0xf]
      %v6585 = vsel %vm6500, %v6389, %v6584
      %6586 = vst [vmem:[%s1105 + $0x90] sm:$0xf] %v6585
      %6587 = vst.msk [vmem:[%s1105 + $0x94] sm:$0xf] %vm199, %v6398
      %v6588 = vld [vmem:[%s1105 + $0x98] sm:$0x1]
      %v6589 = vsel %vm209, %v6399, %v6588
      %6590 = vst [vmem:[%s1105 + $0x98] sm:$0x1] %v6589
      %v6591 = vld [vmem:[%s1105 + $0x9c] sm:$0xf]
      %v6592 = vsel %vm6500, %v6406, %v6591
      %6593 = vst [vmem:[%s1105 + $0x9c] sm:$0xf] %v6592
      %6594 = vst.msk [vmem:[%s1105 + $0xa0] sm:$0xf] %vm199, %v6415
      %v6595 = vld [vmem:[%s1105 + $0xa4] sm:$0x1]
      %v6596 = vsel %vm209, %v6416, %v6595
      %6597 = vst [vmem:[%s1105 + $0xa4] sm:$0x1] %v6596
      %v6598 = vld [vmem:[%s1105 + $0xa8] sm:$0xf]
      %v6599 = vsel %vm6500, %v6423, %v6598
      %6600 = vst [vmem:[%s1105 + $0xa8] sm:$0xf] %v6599
      %6601 = vst.msk [vmem:[%s1105 + $0xac] sm:$0xf] %vm199, %v6432
      %v6602 = vld [vmem:[%s1105 + $0xb0] sm:$0x1]
      %v6603 = vsel %vm209, %v6433, %v6602
      %6604 = vst [vmem:[%s1105 + $0xb0] sm:$0x1] %v6603
      %v6605 = vld [vmem:[%s1105 + $0xb4] sm:$0xf]
      %v6606 = vsel %vm6500, %v6440, %v6605
      %6607 = vst [vmem:[%s1105 + $0xb4] sm:$0xf] %v6606
      %6608 = vst.msk [vmem:[%s1105 + $0xb8] sm:$0xf] %vm199, %v6449
      %v6609 = vld [vmem:[%s1105 + $0xbc] sm:$0x1]
      %v6610 = vsel %vm209, %v6450, %v6609
      %6611 = vst [vmem:[%s1105 + $0xbc] sm:$0x1] %v6610
      %v6612 = vld [vmem:[#allocation2] sm:$0xf]
      %v6613 = vld [vmem:[#allocation2 + $0x4] sm:$0xf]
      %v6614 = vld [vmem:[#allocation2 + $0xc] sm:$0xf]
      %v6615 = vld [vmem:[#allocation2 + $0x10] sm:$0xf]
      %v6616 = vld [vmem:[#allocation2 + $0x18] sm:$0xf]
      %v6617 = vld [vmem:[#allocation2 + $0x1c] sm:$0xf]
      %v6618 = vld [vmem:[#allocation2 + $0x24] sm:$0xf]
      %v6619 = vld [vmem:[#allocation2 + $0x28] sm:$0xf]
      %v6620 = vld [vmem:[#allocation2 + $0x30] sm:$0xf]
      %v6621 = vld [vmem:[#allocation2 + $0x34] sm:$0xf]
      %v6622 = vld [vmem:[#allocation2 + $0x3c] sm:$0xf]
      %v6623 = vld [vmem:[#allocation2 + $0x40] sm:$0xf]
      %v6624 = vld [vmem:[#allocation2 + $0x48] sm:$0xf]
      %v6625 = vld [vmem:[#allocation2 + $0x4c] sm:$0xf]
      %v6626 = vld [vmem:[#allocation2 + $0x54] sm:$0xf]
      %v6627 = vld [vmem:[#allocation2 + $0x58] sm:$0xf]
      %v6628 = vld [vmem:[#allocation2 + $0x60] sm:$0xf]
      %v6629 = vld [vmem:[#allocation2 + $0x64] sm:$0xf]
      %v6630 = vld [vmem:[#allocation2 + $0x6c] sm:$0xf]
      %v6631 = vld [vmem:[#allocation2 + $0x70] sm:$0xf]
      %v6632 = vld [vmem:[#allocation2 + $0x78] sm:$0xf]
      %v6633 = vld [vmem:[#allocation2 + $0x7c] sm:$0xf]
      %v6634 = vld [vmem:[#allocation2 + $0x84] sm:$0xf]
      %v6635 = vld [vmem:[#allocation2 + $0x88] sm:$0xf]
      %v6636 = vld [vmem:[#allocation2 + $0x90] sm:$0xf]
      %v6637 = vld [vmem:[#allocation2 + $0x94] sm:$0xf]
      %v6638 = vld [vmem:[#allocation2 + $0x9c] sm:$0xf]
      %v6639 = vld [vmem:[#allocation2 + $0xa0] sm:$0xf]
      %v6640 = vld [vmem:[#allocation2 + $0xa8] sm:$0xf]
      %v6641 = vld [vmem:[#allocation2 + $0xac] sm:$0xf]
      %v6642 = vld [vmem:[#allocation2 + $0xb4] sm:$0xf]
      %v6643 = vld [vmem:[#allocation2 + $0xb8] sm:$0xf]
      %v6644 = vld [vmem:[%s2] sm:$0xf]
      %v6645 = vld [vmem:[#allocation2 + $0x8] sm:$0x1]
      %v6646 = vld [vmem:[#allocation2 + $0x14] sm:$0x1]
      %v6647 = vld [vmem:[#allocation2 + $0x20] sm:$0x1]
      %v6648 = vld [vmem:[#allocation2 + $0x2c] sm:$0x1]
      %v6649 = vld [vmem:[#allocation2 + $0x38] sm:$0x1]
      %v6650 = vld [vmem:[#allocation2 + $0x44] sm:$0x1]
      %v6651 = vld [vmem:[#allocation2 + $0x50] sm:$0x1]
      %v6652 = vld [vmem:[#allocation2 + $0x5c] sm:$0x1]
      %v6653 = vld [vmem:[#allocation2 + $0x68] sm:$0x1]
      %v6654 = vld [vmem:[#allocation2 + $0x74] sm:$0x1]
      %v6655 = vld [vmem:[#allocation2 + $0x80] sm:$0x1]
      %v6656 = vld [vmem:[#allocation2 + $0x8c] sm:$0x1]
      %v6657 = vld [vmem:[#allocation2 + $0x98] sm:$0x1]
      %v6658 = vld [vmem:[#allocation2 + $0xa4] sm:$0x1]
      %v6659 = vld [vmem:[#allocation2 + $0xb0] sm:$0x1]
      %v6660 = vld [vmem:[#allocation2 + $0xbc] sm:$0x1]
      %v6662 = vshrl.u32 %v6612, 16
      %v6664 = vrot.slane %v6662, 4
      %v6665 = vshll.u32 %v6612, 16
      %v6667 = vrot.slane %v6665, 5
      %v6668 = vor.u32 %v6664, %v6667
      %v6669 = vrot.slane %v6668, 4
      %v6671 = vshll.u32 %v6613, 16
      %v6673 = vrot.slane %v6671, 5
      %v6674 = vsel %vm1274, %v6669, %v6673
      %v6675 = vshrl.u32 %v6613, 16
      %v6677 = vrot.slane %v6675, 4
      %v6678 = vor.u32 %v6677, %v6673
      %v6679 = vrot.slane %v6678, 4
      %v6681 = vshll.u32 %v6645, 16
      %v6683 = vrot.slane %v6681, 5
      %v6684 = vsel %vm1274, %v6679, %v6683
      %v6686 = vshrl.u32 %v6614, 16
      %v6688 = vrot.slane %v6686, 4
      %v6689 = vshll.u32 %v6614, 16
      %v6691 = vrot.slane %v6689, 5
      %v6692 = vor.u32 %v6688, %v6691
      %v6693 = vrot.slane %v6692, 4
      %v6695 = vshll.u32 %v6615, 16
      %v6697 = vrot.slane %v6695, 5
      %v6698 = vsel %vm1274, %v6693, %v6697
      %v6699 = vshrl.u32 %v6615, 16
      %v6701 = vrot.slane %v6699, 4
      %v6702 = vor.u32 %v6701, %v6697
      %v6703 = vrot.slane %v6702, 4
      %v6705 = vshll.u32 %v6646, 16
      %v6707 = vrot.slane %v6705, 5
      %v6708 = vsel %vm1274, %v6703, %v6707
      %v6710 = vshrl.u32 %v6616, 16
      %v6712 = vrot.slane %v6710, 4
      %v6713 = vshll.u32 %v6616, 16
      %v6715 = vrot.slane %v6713, 5
      %v6716 = vor.u32 %v6712, %v6715
      %v6717 = vrot.slane %v6716, 4
      %v6719 = vshll.u32 %v6617, 16
      %v6721 = vrot.slane %v6719, 5
      %v6722 = vsel %vm1274, %v6717, %v6721
      %v6723 = vshrl.u32 %v6617, 16
      %v6725 = vrot.slane %v6723, 4
      %v6726 = vor.u32 %v6725, %v6721
      %v6727 = vrot.slane %v6726, 4
      %v6729 = vshll.u32 %v6647, 16
      %v6731 = vrot.slane %v6729, 5
      %v6732 = vsel %vm1274, %v6727, %v6731
      %v6734 = vshrl.u32 %v6618, 16
      %v6736 = vrot.slane %v6734, 4
      %v6737 = vshll.u32 %v6618, 16
      %v6739 = vrot.slane %v6737, 5
      %v6740 = vor.u32 %v6736, %v6739
      %v6741 = vrot.slane %v6740, 4
      %v6743 = vshll.u32 %v6619, 16
      %v6745 = vrot.slane %v6743, 5
      %v6746 = vsel %vm1274, %v6741, %v6745
      %v6747 = vshrl.u32 %v6619, 16
      %v6749 = vrot.slane %v6747, 4
      %v6750 = vor.u32 %v6749, %v6745
      %v6751 = vrot.slane %v6750, 4
      %v6753 = vshll.u32 %v6648, 16
      %v6755 = vrot.slane %v6753, 5
      %v6756 = vsel %vm1274, %v6751, %v6755
      %v6758 = vshrl.u32 %v6620, 16
      %v6760 = vrot.slane %v6758, 4
      %v6761 = vshll.u32 %v6620, 16
      %v6763 = vrot.slane %v6761, 5
      %v6764 = vor.u32 %v6760, %v6763
      %v6765 = vrot.slane %v6764, 4
      %v6767 = vshll.u32 %v6621, 16
      %v6769 = vrot.slane %v6767, 5
      %v6770 = vsel %vm1274, %v6765, %v6769
      %v6771 = vshrl.u32 %v6621, 16
      %v6773 = vrot.slane %v6771, 4
      %v6774 = vor.u32 %v6773, %v6769
      %v6775 = vrot.slane %v6774, 4
      %v6777 = vshll.u32 %v6649, 16
      %v6779 = vrot.slane %v6777, 5
      %v6780 = vsel %vm1274, %v6775, %v6779
      %v6782 = vshrl.u32 %v6622, 16
      %v6784 = vrot.slane %v6782, 4
      %v6785 = vshll.u32 %v6622, 16
      %v6787 = vrot.slane %v6785, 5
      %v6788 = vor.u32 %v6784, %v6787
      %v6789 = vrot.slane %v6788, 4
      %v6791 = vshll.u32 %v6623, 16
      %v6793 = vrot.slane %v6791, 5
      %v6794 = vsel %vm1274, %v6789, %v6793
      %v6795 = vshrl.u32 %v6623, 16
      %v6797 = vrot.slane %v6795, 4
      %v6798 = vor.u32 %v6797, %v6793
      %v6799 = vrot.slane %v6798, 4
      %v6801 = vshll.u32 %v6650, 16
      %v6803 = vrot.slane %v6801, 5
      %v6804 = vsel %vm1274, %v6799, %v6803
      %v6806 = vshrl.u32 %v6624, 16
      %v6808 = vrot.slane %v6806, 4
      %v6809 = vshll.u32 %v6624, 16
      %v6811 = vrot.slane %v6809, 5
      %v6812 = vor.u32 %v6808, %v6811
      %v6813 = vrot.slane %v6812, 4
      %v6815 = vshll.u32 %v6625, 16
      %v6817 = vrot.slane %v6815, 5
      %v6818 = vsel %vm1274, %v6813, %v6817
      %v6819 = vshrl.u32 %v6625, 16
      %v6821 = vrot.slane %v6819, 4
      %v6822 = vor.u32 %v6821, %v6817
      %v6823 = vrot.slane %v6822, 4
      %v6825 = vshll.u32 %v6651, 16
      %v6827 = vrot.slane %v6825, 5
      %v6828 = vsel %vm1274, %v6823, %v6827
      %v6830 = vshrl.u32 %v6626, 16
      %v6832 = vrot.slane %v6830, 4
      %v6833 = vshll.u32 %v6626, 16
      %v6835 = vrot.slane %v6833, 5
      %v6836 = vor.u32 %v6832, %v6835
      %v6837 = vrot.slane %v6836, 4
      %v6839 = vshll.u32 %v6627, 16
      %v6841 = vrot.slane %v6839, 5
      %v6842 = vsel %vm1274, %v6837, %v6841
      %v6843 = vshrl.u32 %v6627, 16
      %v6845 = vrot.slane %v6843, 4
      %v6846 = vor.u32 %v6845, %v6841
      %v6847 = vrot.slane %v6846, 4
      %v6849 = vshll.u32 %v6652, 16
      %v6851 = vrot.slane %v6849, 5
      %v6852 = vsel %vm1274, %v6847, %v6851
      %v6854 = vshrl.u32 %v6628, 16
      %v6856 = vrot.slane %v6854, 4
      %v6857 = vshll.u32 %v6628, 16
      %v6859 = vrot.slane %v6857, 5
      %v6860 = vor.u32 %v6856, %v6859
      %v6861 = vrot.slane %v6860, 4
      %v6863 = vshll.u32 %v6629, 16
      %v6865 = vrot.slane %v6863, 5
      %v6866 = vsel %vm1274, %v6861, %v6865
      %v6867 = vshrl.u32 %v6629, 16
      %v6869 = vrot.slane %v6867, 4
      %v6870 = vor.u32 %v6869, %v6865
      %v6871 = vrot.slane %v6870, 4
      %v6873 = vshll.u32 %v6653, 16
      %v6875 = vrot.slane %v6873, 5
      %v6876 = vsel %vm1274, %v6871, %v6875
      %v6878 = vshrl.u32 %v6630, 16
      %v6880 = vrot.slane %v6878, 4
      %v6881 = vshll.u32 %v6630, 16
      %v6883 = vrot.slane %v6881, 5
      %v6884 = vor.u32 %v6880, %v6883
      %v6885 = vrot.slane %v6884, 4
      %v6887 = vshll.u32 %v6631, 16
      %v6889 = vrot.slane %v6887, 5
      %v6890 = vsel %vm1274, %v6885, %v6889
      %v6891 = vshrl.u32 %v6631, 16
      %v6893 = vrot.slane %v6891, 4
      %v6894 = vor.u32 %v6893, %v6889
      %v6895 = vrot.slane %v6894, 4
      %v6897 = vshll.u32 %v6654, 16
      %v6899 = vrot.slane %v6897, 5
      %v6900 = vsel %vm1274, %v6895, %v6899
      %v6902 = vshrl.u32 %v6632, 16
      %v6904 = vrot.slane %v6902, 4
      %v6905 = vshll.u32 %v6632, 16
      %v6907 = vrot.slane %v6905, 5
      %v6908 = vor.u32 %v6904, %v6907
      %v6909 = vrot.slane %v6908, 4
      %v6911 = vshll.u32 %v6633, 16
      %v6913 = vrot.slane %v6911, 5
      %v6914 = vsel %vm1274, %v6909, %v6913
      %v6915 = vshrl.u32 %v6633, 16
      %v6917 = vrot.slane %v6915, 4
      %v6918 = vor.u32 %v6917, %v6913
      %v6919 = vrot.slane %v6918, 4
      %v6921 = vshll.u32 %v6655, 16
      %v6923 = vrot.slane %v6921, 5
      %v6924 = vsel %vm1274, %v6919, %v6923
      %v6926 = vshrl.u32 %v6634, 16
      %v6928 = vrot.slane %v6926, 4
      %v6929 = vshll.u32 %v6634, 16
      %v6931 = vrot.slane %v6929, 5
      %v6932 = vor.u32 %v6928, %v6931
      %v6933 = vrot.slane %v6932, 4
      %v6935 = vshll.u32 %v6635, 16
      %v6937 = vrot.slane %v6935, 5
      %v6938 = vsel %vm1274, %v6933, %v6937
      %v6939 = vshrl.u32 %v6635, 16
      %v6941 = vrot.slane %v6939, 4
      %v6942 = vor.u32 %v6941, %v6937
      %v6943 = vrot.slane %v6942, 4
      %v6945 = vshll.u32 %v6656, 16
      %v6947 = vrot.slane %v6945, 5
      %v6948 = vsel %vm1274, %v6943, %v6947
      %v6950 = vshrl.u32 %v6636, 16
      %v6952 = vrot.slane %v6950, 4
      %v6953 = vshll.u32 %v6636, 16
      %v6955 = vrot.slane %v6953, 5
      %v6956 = vor.u32 %v6952, %v6955
      %v6957 = vrot.slane %v6956, 4
      %v6959 = vshll.u32 %v6637, 16
      %v6961 = vrot.slane %v6959, 5
      %v6962 = vsel %vm1274, %v6957, %v6961
      %v6963 = vshrl.u32 %v6637, 16
      %v6965 = vrot.slane %v6963, 4
      %v6966 = vor.u32 %v6965, %v6961
      %v6967 = vrot.slane %v6966, 4
      %v6969 = vshll.u32 %v6657, 16
      %v6971 = vrot.slane %v6969, 5
      %v6972 = vsel %vm1274, %v6967, %v6971
      %v6974 = vshrl.u32 %v6638, 16
      %v6976 = vrot.slane %v6974, 4
      %v6977 = vshll.u32 %v6638, 16
      %v6979 = vrot.slane %v6977, 5
      %v6980 = vor.u32 %v6976, %v6979
      %v6981 = vrot.slane %v6980, 4
      %v6983 = vshll.u32 %v6639, 16
      %v6985 = vrot.slane %v6983, 5
      %v6986 = vsel %vm1274, %v6981, %v6985
      %v6987 = vshrl.u32 %v6639, 16
      %v6989 = vrot.slane %v6987, 4
      %v6990 = vor.u32 %v6989, %v6985
      %v6991 = vrot.slane %v6990, 4
      %v6993 = vshll.u32 %v6658, 16
      %v6995 = vrot.slane %v6993, 5
      %v6996 = vsel %vm1274, %v6991, %v6995
      %v6998 = vshrl.u32 %v6640, 16
      %v7000 = vrot.slane %v6998, 4
      %v7001 = vshll.u32 %v6640, 16
      %v7003 = vrot.slane %v7001, 5
      %v7004 = vor.u32 %v7000, %v7003
      %v7005 = vrot.slane %v7004, 4
      %v7007 = vshll.u32 %v6641, 16
      %v7009 = vrot.slane %v7007, 5
      %v7010 = vsel %vm1274, %v7005, %v7009
      %v7011 = vshrl.u32 %v6641, 16
      %v7013 = vrot.slane %v7011, 4
      %v7014 = vor.u32 %v7013, %v7009
      %v7015 = vrot.slane %v7014, 4
      %v7017 = vshll.u32 %v6659, 16
      %v7019 = vrot.slane %v7017, 5
      %v7020 = vsel %vm1274, %v7015, %v7019
      %v7022 = vshrl.u32 %v6642, 16
      %v7024 = vrot.slane %v7022, 4
      %v7025 = vshll.u32 %v6642, 16
      %v7027 = vrot.slane %v7025, 5
      %v7028 = vor.u32 %v7024, %v7027
      %v7029 = vrot.slane %v7028, 4
      %v7031 = vshll.u32 %v6643, 16
      %v7033 = vrot.slane %v7031, 5
      %v7034 = vsel %vm1274, %v7029, %v7033
      %v7035 = vshrl.u32 %v6643, 16
      %v7037 = vrot.slane %v7035, 4
      %v7038 = vor.u32 %v7037, %v7033
      %v7039 = vrot.slane %v7038, 4
      %v7041 = vshll.u32 %v6660, 16
      %v7043 = vrot.slane %v7041, 5
      %v7044 = vsel %vm1274, %v7039, %v7043
      %s7045 = scalar_lea.vmem %s2, 4
      %v7046 = vld [vmem:[%s7045] sm:$0xf]
      %v7047 = vunpack.c.l.b16 %v6674
      %v7048 = vunpack.c.l.b16 %v6684
      %v7049 = vunpack.c.l.b16 %v6698
      %v7050 = vunpack.c.l.b16 %v6708
      %v7051 = vunpack.c.l.b16 %v6722
      %v7052 = vunpack.c.l.b16 %v6732
      %v7053 = vunpack.c.l.b16 %v6746
      %v7054 = vunpack.c.l.b16 %v6756
      %v7055 = vunpack.c.l.b16 %v6770
      %v7056 = vunpack.c.l.b16 %v6780
      %v7057 = vunpack.c.l.b16 %v6794
      %v7058 = vunpack.c.l.b16 %v6804
      %v7059 = vunpack.c.l.b16 %v6818
      %v7060 = vunpack.c.l.b16 %v6828
      %v7061 = vunpack.c.l.b16 %v6842
      %v7062 = vunpack.c.l.b16 %v6852
      %v7063 = vunpack.c.l.b16 %v6866
      %v7064 = vunpack.c.l.b16 %v6876
      %v7065 = vunpack.c.l.b16 %v6890
      %v7066 = vunpack.c.l.b16 %v6900
      %v7067 = vunpack.c.l.b16 %v6914
      %v7068 = vunpack.c.l.b16 %v6924
      %v7069 = vunpack.c.l.b16 %v6938
      %v7070 = vunpack.c.l.b16 %v6948
      %v7071 = vunpack.c.l.b16 %v6962
      %v7072 = vunpack.c.l.b16 %v6972
      %v7073 = vunpack.c.l.b16 %v6986
      %v7074 = vunpack.c.l.b16 %v6996
      %v7075 = vunpack.c.l.b16 %v7010
      %v7076 = vunpack.c.l.b16 %v7020
      %v7077 = vunpack.c.l.b16 %v7034
      %v7078 = vunpack.c.l.b16 %v7044
      %v7079 = vpack.c.b16 %v7048, %v7047
      %v7080 = vpack.c.b16 %v7050, %v7049
      %v7081 = vpack.c.b16 %v7052, %v7051
      %v7082 = vpack.c.b16 %v7054, %v7053
      %v7083 = vpack.c.b16 %v7056, %v7055
      %v7084 = vpack.c.b16 %v7058, %v7057
      %v7085 = vpack.c.b16 %v7060, %v7059
      %v7086 = vpack.c.b16 %v7062, %v7061
      %v7087 = vpack.c.b16 %v7064, %v7063
      %v7088 = vpack.c.b16 %v7066, %v7065
      %v7089 = vpack.c.b16 %v7068, %v7067
      %v7090 = vpack.c.b16 %v7070, %v7069
      %v7091 = vpack.c.b16 %v7072, %v7071
      %v7092 = vpack.c.b16 %v7074, %v7073
      %v7093 = vpack.c.b16 %v7076, %v7075
      %v7094 = vpack.c.b16 %v7078, %v7077
      %v7096 = vsel %vm5780, %v7079, 0
      %v7099 = vsel %vm5780, %v7080, 0
      %v7102 = vsel %vm5780, %v7081, 0
      %v7105 = vsel %vm5780, %v7082, 0
      %v7108 = vsel %vm5780, %v7083, 0
      %v7111 = vsel %vm5780, %v7084, 0
      %v7114 = vsel %vm5780, %v7085, 0
      %v7117 = vsel %vm5780, %v7086, 0
      %v7120 = vsel %vm5780, %v7087, 0
      %v7123 = vsel %vm5780, %v7088, 0
      %v7126 = vsel %vm5780, %v7089, 0
      %v7129 = vsel %vm5780, %v7090, 0
      %v7132 = vsel %vm5780, %v7091, 0
      %v7135 = vsel %vm5780, %v7092, 0
      %v7138 = vsel %vm5780, %v7093, 0
      %v7141 = vsel %vm5780, %v7094, 0
      %vm7143 = vcmask 1043456
      %v7145 = vsel %vm7143, %v7046, 0
      %7147 = vmatprep.subr.bf16.mxu0 0
      %7148 = vmatpush1.bf16.msra.mxu0 %v7145
      %7149 = vmatprep.subr.bf16.mxu0 0
      %7150 = vmatpush1.bf16.msra.mxu0 0
      %7151 = vmatprep.subr.bf16.mxu0 0
      %7152 = vmatpush1.bf16.msra.mxu0 0
      %7153 = vmatprep.subr.bf16.mxu0 0
      %7154 = vmatpush1.bf16.msra.mxu0 0
      %7155 = vmatprep.subr.bf16.mxu0 0
      %7156 = vmatpush1.bf16.msra.mxu0 0
      %7157 = vmatprep.subr.bf16.mxu0 0
      %7158 = vmatpush1.bf16.msra.mxu0 0
      %7159 = vmatprep.subr.bf16.mxu0 0
      %7160 = vmatpush1.bf16.msra.mxu0 0
      %7161 = vmatprep.subr.bf16.mxu0 0
      %7162 = vmatpush1.bf16.msra.mxu0 0
      %7163 = vmatprep.subr.bf16.mxu0 0
      %7164 = vmatpush1.bf16.msra.mxu0 0
      %7165 = vmatprep.subr.bf16.mxu0 0
      %7166 = vmatpush1.bf16.msra.mxu0 0
      %7167 = vmatprep.subr.bf16.mxu0 0
      %7168 = vmatpush1.bf16.msra.mxu0 0
      %7169 = vmatprep.subr.bf16.mxu0 0
      %7170 = vmatpush1.bf16.msra.mxu0 0
      %7171 = vmatprep.subr.bf16.mxu0 0
      %7172 = vmatpush1.bf16.msra.mxu0 0
      %7173 = vmatprep.subr.bf16.mxu0 0
      %7174 = vmatpush1.bf16.msra.mxu0 0
      %7175 = vmatprep.subr.bf16.mxu0 0
      %7176 = vmatpush1.bf16.msra.mxu0 0
      %7177 = vmatprep.subr.bf16.mxu0 0
      %7178 = vmatpush1.bf16.msra.mxu0 0
      %7179 = vmatprep.mubr.bf16.mxu0 0
      %7180 = vmatmul.mubr.bf16.gmra.mrb[0].mxu0 %v7096
      %v7181 = vpop.f32.mrb[0].mxu0
      %v7182 = vadd.f32 0.0, %v7181
      %v7183 = vpop.f32.mrb[0].mxu0
      %v7184 = vpop.f32.mrb[0].mxu0
      %v7185 = vadd.f32 0.0, %v7184
      %v7186 = vpop.f32.mrb[0].mxu0
      %7187 = vmatprep.mubr.bf16.mxu0 0
      %7188 = vmatmul.mubr.bf16.gmra.mrb[0].mxu0 %v7099
      %v7189 = vpop.f32.mrb[0].mxu0
      %v7190 = vadd.f32 0.0, %v7189
      %v7191 = vpop.f32.mrb[0].mxu0
      %v7192 = vpop.f32.mrb[0].mxu0
      %v7193 = vadd.f32 0.0, %v7192
      %v7194 = vpop.f32.mrb[0].mxu0
      %7195 = vmatprep.mubr.bf16.mxu0 0
      %7196 = vmatmul.mubr.bf16.gmra.mrb[0].mxu0 %v7102
      %v7197 = vpop.f32.mrb[0].mxu0
      %v7198 = vadd.f32 0.0, %v7197
      %v7199 = vpop.f32.mrb[0].mxu0
      %v7200 = vpop.f32.mrb[0].mxu0
      %v7201 = vadd.f32 0.0, %v7200
      %v7202 = vpop.f32.mrb[0].mxu0
      %7203 = vmatprep.mubr.bf16.mxu0 0
      %7204 = vmatmul.mubr.bf16.gmra.mrb[0].mxu0 %v7105
      %v7205 = vpop.f32.mrb[0].mxu0
      %v7206 = vadd.f32 0.0, %v7205
      %v7207 = vpop.f32.mrb[0].mxu0
      %v7208 = vpop.f32.mrb[0].mxu0
      %v7209 = vadd.f32 0.0, %v7208
      %v7210 = vpop.f32.mrb[0].mxu0
      %7211 = vmatprep.mubr.bf16.mxu0 0
      %7212 = vmatmul.mubr.bf16.gmra.mrb[0].mxu0 %v7108
      %v7213 = vpop.f32.mrb[0].mxu0
      %v7214 = vadd.f32 0.0, %v7213
      %v7215 = vpop.f32.mrb[0].mxu0
      %v7216 = vpop.f32.mrb[0].mxu0
      %v7217 = vadd.f32 0.0, %v7216
      %v7218 = vpop.f32.mrb[0].mxu0
      %7219 = vmatprep.mubr.bf16.mxu0 0
      %7220 = vmatmul.mubr.bf16.gmra.mrb[0].mxu0 %v7111
      %v7221 = vpop.f32.mrb[0].mxu0
      %v7222 = vadd.f32 0.0, %v7221
      %v7223 = vpop.f32.mrb[0].mxu0
      %v7224 = vpop.f32.mrb[0].mxu0
      %v7225 = vadd.f32 0.0, %v7224
      %v7226 = vpop.f32.mrb[0].mxu0
      %7227 = vmatprep.mubr.bf16.mxu0 0
      %7228 = vmatmul.mubr.bf16.gmra.mrb[0].mxu0 %v7114
      %v7229 = vpop.f32.mrb[0].mxu0
      %v7230 = vadd.f32 0.0, %v7229
      %v7231 = vpop.f32.mrb[0].mxu0
      %v7232 = vpop.f32.mrb[0].mxu0
      %v7233 = vadd.f32 0.0, %v7232
      %v7234 = vpop.f32.mrb[0].mxu0
      %7235 = vmatprep.mubr.bf16.mxu0 0
      %7236 = vmatmul.mubr.bf16.gmra.mrb[0].mxu0 %v7117
      %v7237 = vpop.f32.mrb[0].mxu0
      %v7238 = vadd.f32 0.0, %v7237
      %v7239 = vpop.f32.mrb[0].mxu0
      %v7240 = vpop.f32.mrb[0].mxu0
      %v7241 = vadd.f32 0.0, %v7240
      %v7242 = vpop.f32.mrb[0].mxu0
      %7243 = vmatprep.mubr.bf16.mxu0 0
      %7244 = vmatmul.mubr.bf16.gmra.mrb[0].mxu0 %v7120
      %v7245 = vpop.f32.mrb[0].mxu0
      %v7246 = vadd.f32 0.0, %v7245
      %v7247 = vpop.f32.mrb[0].mxu0
      %v7248 = vpop.f32.mrb[0].mxu0
      %v7249 = vadd.f32 0.0, %v7248
      %v7250 = vpop.f32.mrb[0].mxu0
      %7251 = vmatprep.mubr.bf16.mxu0 0
      %7252 = vmatmul.mubr.bf16.gmra.mrb[0].mxu0 %v7123
      %v7253 = vpop.f32.mrb[0].mxu0
      %v7254 = vadd.f32 0.0, %v7253
      %v7255 = vpop.f32.mrb[0].mxu0
      %v7256 = vpop.f32.mrb[0].mxu0
      %v7257 = vadd.f32 0.0, %v7256
      %v7258 = vpop.f32.mrb[0].mxu0
      %7259 = vmatprep.mubr.bf16.mxu0 0
      %7260 = vmatmul.mubr.bf16.gmra.mrb[0].mxu0 %v7126
      %v7261 = vpop.f32.mrb[0].mxu0
      %v7262 = vadd.f32 0.0, %v7261
      %v7263 = vpop.f32.mrb[0].mxu0
      %v7264 = vpop.f32.mrb[0].mxu0
      %v7265 = vadd.f32 0.0, %v7264
      %v7266 = vpop.f32.mrb[0].mxu0
      %7267 = vmatprep.mubr.bf16.mxu0 0
      %7268 = vmatmul.mubr.bf16.gmra.mrb[0].mxu0 %v7129
      %v7269 = vpop.f32.mrb[0].mxu0
      %v7270 = vadd.f32 0.0, %v7269
      %v7271 = vpop.f32.mrb[0].mxu0
      %v7272 = vpop.f32.mrb[0].mxu0
      %v7273 = vadd.f32 0.0, %v7272
      %v7274 = vpop.f32.mrb[0].mxu0
      %7275 = vmatprep.mubr.bf16.mxu0 0
      %7276 = vmatmul.mubr.bf16.gmra.mrb[0].mxu0 %v7132
      %v7277 = vpop.f32.mrb[0].mxu0
      %v7278 = vadd.f32 0.0, %v7277
      %v7279 = vpop.f32.mrb[0].mxu0
      %v7280 = vpop.f32.mrb[0].mxu0
      %v7281 = vadd.f32 0.0, %v7280
      %v7282 = vpop.f32.mrb[0].mxu0
      %7283 = vmatprep.mubr.bf16.mxu0 0
      %7284 = vmatmul.mubr.bf16.gmra.mrb[0].mxu0 %v7135
      %v7285 = vpop.f32.mrb[0].mxu0
      %v7286 = vadd.f32 0.0, %v7285
      %v7287 = vpop.f32.mrb[0].mxu0
      %v7288 = vpop.f32.mrb[0].mxu0
      %v7289 = vadd.f32 0.0, %v7288
      %v7290 = vpop.f32.mrb[0].mxu0
      %7291 = vmatprep.mubr.bf16.mxu0 0
      %7292 = vmatmul.mubr.bf16.gmra.mrb[0].mxu0 %v7138
      %v7293 = vpop.f32.mrb[0].mxu0
      %v7294 = vadd.f32 0.0, %v7293
      %v7295 = vpop.f32.mrb[0].mxu0
      %v7296 = vpop.f32.mrb[0].mxu0
      %v7297 = vadd.f32 0.0, %v7296
      %v7298 = vpop.f32.mrb[0].mxu0
      %7299 = vmatprep.mubr.bf16.mxu0 0
      %7300 = vmatmul.mubr.bf16.gmra.mrb[0].mxu0 %v7141
      %v7301 = vpop.f32.mrb[0].mxu0
      %v7302 = vadd.f32 0.0, %v7301
      %v7303 = vpop.f32.mrb[0].mxu0
      %v7304 = vpop.f32.mrb[0].mxu0
      %v7305 = vadd.f32 0.0, %v7304
      %v7306 = vpop.f32.mrb[0].mxu0
      %7307 = vdwg.mxu0
      %v7340 = vunpack.c.l.b16 %v6612
      %v7341 = vunpack.c.l.b16 %v6613
      %v7342 = vunpack.c.l.b16 %v6614
      %v7343 = vunpack.c.l.b16 %v6615
      %v7344 = vunpack.c.l.b16 %v6616
      %v7345 = vunpack.c.l.b16 %v6617
      %v7346 = vunpack.c.l.b16 %v6618
      %v7347 = vunpack.c.l.b16 %v6619
      %v7348 = vunpack.c.l.b16 %v6620
      %v7349 = vunpack.c.l.b16 %v6621
      %v7350 = vunpack.c.l.b16 %v6622
      %v7351 = vunpack.c.l.b16 %v6623
      %v7352 = vunpack.c.l.b16 %v6624
      %v7353 = vunpack.c.l.b16 %v6625
      %v7354 = vunpack.c.l.b16 %v6626
      %v7355 = vunpack.c.l.b16 %v6627
      %v7356 = vunpack.c.l.b16 %v6628
      %v7357 = vunpack.c.l.b16 %v6629
      %v7358 = vunpack.c.l.b16 %v6630
      %v7359 = vunpack.c.l.b16 %v6631
      %v7360 = vunpack.c.l.b16 %v6632
      %v7361 = vunpack.c.l.b16 %v6633
      %v7362 = vunpack.c.l.b16 %v6634
      %v7363 = vunpack.c.l.b16 %v6635
      %v7364 = vunpack.c.l.b16 %v6636
      %v7365 = vunpack.c.l.b16 %v6637
      %v7366 = vunpack.c.l.b16 %v6638
      %v7367 = vunpack.c.l.b16 %v6639
      %v7368 = vunpack.c.l.b16 %v6640
      %v7369 = vunpack.c.l.b16 %v6641
      %v7370 = vunpack.c.l.b16 %v6642
      %v7371 = vunpack.c.l.b16 %v6643
      %v7372 = vpack.c.b16 %v7341, %v7340
      %v7373 = vpack.c.b16 %v7343, %v7342
      %v7374 = vpack.c.b16 %v7345, %v7344
      %v7375 = vpack.c.b16 %v7347, %v7346
      %v7376 = vpack.c.b16 %v7349, %v7348
      %v7377 = vpack.c.b16 %v7351, %v7350
      %v7378 = vpack.c.b16 %v7353, %v7352
      %v7379 = vpack.c.b16 %v7355, %v7354
      %v7380 = vpack.c.b16 %v7357, %v7356
      %v7381 = vpack.c.b16 %v7359, %v7358
      %v7382 = vpack.c.b16 %v7361, %v7360
      %v7383 = vpack.c.b16 %v7363, %v7362
      %v7384 = vpack.c.b16 %v7365, %v7364
      %v7385 = vpack.c.b16 %v7367, %v7366
      %v7386 = vpack.c.b16 %v7369, %v7368
      %v7387 = vpack.c.b16 %v7371, %v7370
      %v7389 = vsel %vm5780, %v7372, 0
      %v7392 = vsel %vm5780, %v7373, 0
      %v7395 = vsel %vm5780, %v7374, 0
      %v7398 = vsel %vm5780, %v7375, 0
      %v7401 = vsel %vm5780, %v7376, 0
      %v7404 = vsel %vm5780, %v7377, 0
      %v7407 = vsel %vm5780, %v7378, 0
      %v7410 = vsel %vm5780, %v7379, 0
      %v7413 = vsel %vm5780, %v7380, 0
      %v7416 = vsel %vm5780, %v7381, 0
      %v7419 = vsel %vm5780, %v7382, 0
      %v7422 = vsel %vm5780, %v7383, 0
      %v7425 = vsel %vm5780, %v7384, 0
      %v7428 = vsel %vm5780, %v7385, 0
      %v7431 = vsel %vm5780, %v7386, 0
      %v7434 = vsel %vm5780, %v7387, 0
      %v7437 = vsel %vm7143, %v6644, 0
      %7439 = vmatprep.subr.bf16.mxu0 0
      %7440 = vmatpush1.bf16.msra.mxu0 %v7437
      %7441 = vmatprep.subr.bf16.mxu0 0
      %7442 = vmatpush1.bf16.msra.mxu0 0
      %7443 = vmatprep.subr.bf16.mxu0 0
      %7444 = vmatpush1.bf16.msra.mxu0 0
      %7445 = vmatprep.subr.bf16.mxu0 0
      %7446 = vmatpush1.bf16.msra.mxu0 0
      %7447 = vmatprep.subr.bf16.mxu0 0
      %7448 = vmatpush1.bf16.msra.mxu0 0
      %7449 = vmatprep.subr.bf16.mxu0 0
      %7450 = vmatpush1.bf16.msra.mxu0 0
      %7451 = vmatprep.subr.bf16.mxu0 0
      %7452 = vmatpush1.bf16.msra.mxu0 0
      %7453 = vmatprep.subr.bf16.mxu0 0
      %7454 = vmatpush1.bf16.msra.mxu0 0
      %7455 = vmatprep.subr.bf16.mxu0 0
      %7456 = vmatpush1.bf16.msra.mxu0 0
      %7457 = vmatprep.subr.bf16.mxu0 0
      %7458 = vmatpush1.bf16.msra.mxu0 0
      %7459 = vmatprep.subr.bf16.mxu0 0
      %7460 = vmatpush1.bf16.msra.mxu0 0
      %7461 = vmatprep.subr.bf16.mxu0 0
      %7462 = vmatpush1.bf16.msra.mxu0 0
      %7463 = vmatprep.subr.bf16.mxu0 0
      %7464 = vmatpush1.bf16.msra.mxu0 0
      %7465 = vmatprep.subr.bf16.mxu0 0
      %7466 = vmatpush1.bf16.msra.mxu0 0
      %7467 = vmatprep.subr.bf16.mxu0 0
      %7468 = vmatpush1.bf16.msra.mxu0 0
      %7469 = vmatprep.subr.bf16.mxu0 0
      %7470 = vmatpush1.bf16.msra.mxu0 0
      %7471 = vmatprep.mubr.bf16.mxu0 0
      %7472 = vmatmul.mubr.bf16.gmra.mrb[0].mxu0 %v7389
      %v7473 = vpop.f32.mrb[0].mxu0
      %v7474 = vadd.f32 %v7182, %v7473
      %v7475 = vpop.f32.mrb[0].mxu0
      %v7476 = vpop.f32.mrb[0].mxu0
      %v7477 = vadd.f32 %v7185, %v7476
      %v7478 = vpop.f32.mrb[0].mxu0
      %7479 = vmatprep.mubr.bf16.mxu0 0
      %7480 = vmatmul.mubr.bf16.gmra.mrb[0].mxu0 %v7392
      %v7481 = vpop.f32.mrb[0].mxu0
      %v7482 = vadd.f32 %v7190, %v7481
      %v7483 = vpop.f32.mrb[0].mxu0
      %v7484 = vpop.f32.mrb[0].mxu0
      %v7485 = vadd.f32 %v7193, %v7484
      %v7486 = vpop.f32.mrb[0].mxu0
      %7487 = vmatprep.mubr.bf16.mxu0 0
      %7488 = vmatmul.mubr.bf16.gmra.mrb[0].mxu0 %v7395
      %v7489 = vpop.f32.mrb[0].mxu0
      %v7490 = vadd.f32 %v7198, %v7489
      %v7491 = vpop.f32.mrb[0].mxu0
      %v7492 = vpop.f32.mrb[0].mxu0
      %v7493 = vadd.f32 %v7201, %v7492
      %v7494 = vpop.f32.mrb[0].mxu0
      %7495 = vmatprep.mubr.bf16.mxu0 0
      %7496 = vmatmul.mubr.bf16.gmra.mrb[0].mxu0 %v7398
      %v7497 = vpop.f32.mrb[0].mxu0
      %v7498 = vadd.f32 %v7206, %v7497
      %v7499 = vpop.f32.mrb[0].mxu0
      %v7500 = vpop.f32.mrb[0].mxu0
      %v7501 = vadd.f32 %v7209, %v7500
      %v7502 = vpop.f32.mrb[0].mxu0
      %7503 = vmatprep.mubr.bf16.mxu0 0
      %7504 = vmatmul.mubr.bf16.gmra.mrb[0].mxu0 %v7401
      %v7505 = vpop.f32.mrb[0].mxu0
      %v7506 = vadd.f32 %v7214, %v7505
      %v7507 = vpop.f32.mrb[0].mxu0
      %v7508 = vpop.f32.mrb[0].mxu0
      %v7509 = vadd.f32 %v7217, %v7508
      %v7510 = vpop.f32.mrb[0].mxu0
      %7511 = vmatprep.mubr.bf16.mxu0 0
      %7512 = vmatmul.mubr.bf16.gmra.mrb[0].mxu0 %v7404
      %v7513 = vpop.f32.mrb[0].mxu0
      %v7514 = vadd.f32 %v7222, %v7513
      %v7515 = vpop.f32.mrb[0].mxu0
      %v7516 = vpop.f32.mrb[0].mxu0
      %v7517 = vadd.f32 %v7225, %v7516
      %v7518 = vpop.f32.mrb[0].mxu0
      %7519 = vmatprep.mubr.bf16.mxu0 0
      %7520 = vmatmul.mubr.bf16.gmra.mrb[0].mxu0 %v7407
      %v7521 = vpop.f32.mrb[0].mxu0
      %v7522 = vadd.f32 %v7230, %v7521
      %v7523 = vpop.f32.mrb[0].mxu0
      %v7524 = vpop.f32.mrb[0].mxu0
      %v7525 = vadd.f32 %v7233, %v7524
      %v7526 = vpop.f32.mrb[0].mxu0
      %7527 = vmatprep.mubr.bf16.mxu0 0
      %7528 = vmatmul.mubr.bf16.gmra.mrb[0].mxu0 %v7410
      %v7529 = vpop.f32.mrb[0].mxu0
      %v7530 = vadd.f32 %v7238, %v7529
      %v7531 = vpop.f32.mrb[0].mxu0
      %v7532 = vpop.f32.mrb[0].mxu0
      %v7533 = vadd.f32 %v7241, %v7532
      %v7534 = vpop.f32.mrb[0].mxu0
      %7535 = vmatprep.mubr.bf16.mxu0 0
      %7536 = vmatmul.mubr.bf16.gmra.mrb[0].mxu0 %v7413
      %v7537 = vpop.f32.mrb[0].mxu0
      %v7538 = vadd.f32 %v7246, %v7537
      %v7539 = vpop.f32.mrb[0].mxu0
      %v7540 = vpop.f32.mrb[0].mxu0
      %v7541 = vadd.f32 %v7249, %v7540
      %v7542 = vpop.f32.mrb[0].mxu0
      %7543 = vmatprep.mubr.bf16.mxu0 0
      %7544 = vmatmul.mubr.bf16.gmra.mrb[0].mxu0 %v7416
      %v7545 = vpop.f32.mrb[0].mxu0
      %v7546 = vadd.f32 %v7254, %v7545
      %v7547 = vpop.f32.mrb[0].mxu0
      %v7548 = vpop.f32.mrb[0].mxu0
      %v7549 = vadd.f32 %v7257, %v7548
      %v7550 = vpop.f32.mrb[0].mxu0
      %7551 = vmatprep.mubr.bf16.mxu0 0
      %7552 = vmatmul.mubr.bf16.gmra.mrb[0].mxu0 %v7419
      %v7553 = vpop.f32.mrb[0].mxu0
      %v7554 = vadd.f32 %v7262, %v7553
      %v7555 = vpop.f32.mrb[0].mxu0
      %v7556 = vpop.f32.mrb[0].mxu0
      %v7557 = vadd.f32 %v7265, %v7556
      %v7558 = vpop.f32.mrb[0].mxu0
      %7559 = vmatprep.mubr.bf16.mxu0 0
      %7560 = vmatmul.mubr.bf16.gmra.mrb[0].mxu0 %v7422
      %v7561 = vpop.f32.mrb[0].mxu0
      %v7562 = vadd.f32 %v7270, %v7561
      %v7563 = vpop.f32.mrb[0].mxu0
      %v7564 = vpop.f32.mrb[0].mxu0
      %v7565 = vadd.f32 %v7273, %v7564
      %v7566 = vpop.f32.mrb[0].mxu0
      %7567 = vmatprep.mubr.bf16.mxu0 0
      %7568 = vmatmul.mubr.bf16.gmra.mrb[0].mxu0 %v7425
      %v7569 = vpop.f32.mrb[0].mxu0
      %v7570 = vadd.f32 %v7278, %v7569
      %v7571 = vpop.f32.mrb[0].mxu0
      %v7572 = vpop.f32.mrb[0].mxu0
      %v7573 = vadd.f32 %v7281, %v7572
      %v7574 = vpop.f32.mrb[0].mxu0
      %7575 = vmatprep.mubr.bf16.mxu0 0
      %7576 = vmatmul.mubr.bf16.gmra.mrb[0].mxu0 %v7428
      %v7577 = vpop.f32.mrb[0].mxu0
      %v7578 = vadd.f32 %v7286, %v7577
      %v7579 = vpop.f32.mrb[0].mxu0
      %v7580 = vpop.f32.mrb[0].mxu0
      %v7581 = vadd.f32 %v7289, %v7580
      %v7582 = vpop.f32.mrb[0].mxu0
      %7583 = vmatprep.mubr.bf16.mxu0 0
      %7584 = vmatmul.mubr.bf16.gmra.mrb[0].mxu0 %v7431
      %v7585 = vpop.f32.mrb[0].mxu0
      %v7586 = vadd.f32 %v7294, %v7585
      %v7587 = vpop.f32.mrb[0].mxu0
      %v7588 = vpop.f32.mrb[0].mxu0
      %v7589 = vadd.f32 %v7297, %v7588
      %v7590 = vpop.f32.mrb[0].mxu0
      %7591 = vmatprep.mubr.bf16.mxu0 0
      %7592 = vmatmul.mubr.bf16.gmra.mrb[0].mxu0 %v7434
      %v7593 = vpop.f32.mrb[0].mxu0
      %v7594 = vadd.f32 %v7302, %v7593
      %v7595 = vpop.f32.mrb[0].mxu0
      %v7596 = vpop.f32.mrb[0].mxu0
      %v7597 = vadd.f32 %v7305, %v7596
      %v7598 = vpop.f32.mrb[0].mxu0
      %7599 = vdwg.mxu0
      %v7600 = vld [vmem:[#allocation2] sm:$0xe]
      %v7601 = vld [vmem:[#allocation2 + $0xc] sm:$0xe]
      %v7602 = vld [vmem:[#allocation2 + $0x18] sm:$0xe]
      %v7603 = vld [vmem:[#allocation2 + $0x24] sm:$0xe]
      %v7604 = vld [vmem:[#allocation2 + $0x30] sm:$0xe]
      %v7605 = vld [vmem:[#allocation2 + $0x3c] sm:$0xe]
      %v7606 = vld [vmem:[#allocation2 + $0x48] sm:$0xe]
      %v7607 = vld [vmem:[#allocation2 + $0x54] sm:$0xe]
      %v7608 = vld [vmem:[#allocation2 + $0x60] sm:$0xe]
      %v7609 = vld [vmem:[#allocation2 + $0x6c] sm:$0xe]
      %v7610 = vld [vmem:[#allocation2 + $0x78] sm:$0xe]
      %v7611 = vld [vmem:[#allocation2 + $0x84] sm:$0xe]
      %v7612 = vld [vmem:[#allocation2 + $0x90] sm:$0xe]
      %v7613 = vld [vmem:[#allocation2 + $0x9c] sm:$0xe]
      %v7614 = vld [vmem:[#allocation2 + $0xa8] sm:$0xe]
      %v7615 = vld [vmem:[#allocation2 + $0xb4] sm:$0xe]
      %v7648 = vrot.slane %v7600, 5
      %v7649 = vrot.slane %v7648, 4
      %v7650 = vrot.slane %v6613, 5
      %v7651 = vsel %vm2264, %v7649, %v7650
      %v7652 = vrot.slane %v7650, 4
      %v7653 = vrot.slane %v6645, 5
      %v7654 = vsel %vm2264, %v7652, %v7653
      %v7655 = vrot.slane %v7601, 5
      %v7656 = vrot.slane %v7655, 4
      %v7657 = vrot.slane %v6615, 5
      %v7658 = vsel %vm2264, %v7656, %v7657
      %v7659 = vrot.slane %v7657, 4
      %v7660 = vrot.slane %v6646, 5
      %v7661 = vsel %vm2264, %v7659, %v7660
      %v7662 = vrot.slane %v7602, 5
      %v7663 = vrot.slane %v7662, 4
      %v7664 = vrot.slane %v6617, 5
      %v7665 = vsel %vm2264, %v7663, %v7664
      %v7666 = vrot.slane %v7664, 4
      %v7667 = vrot.slane %v6647, 5
      %v7668 = vsel %vm2264, %v7666, %v7667
      %v7669 = vrot.slane %v7603, 5
      %v7670 = vrot.slane %v7669, 4
      %v7671 = vrot.slane %v6619, 5
      %v7672 = vsel %vm2264, %v7670, %v7671
      %v7673 = vrot.slane %v7671, 4
      %v7674 = vrot.slane %v6648, 5
      %v7675 = vsel %vm2264, %v7673, %v7674
      %v7676 = vrot.slane %v7604, 5
      %v7677 = vrot.slane %v7676, 4
      %v7678 = vrot.slane %v6621, 5
      %v7679 = vsel %vm2264, %v7677, %v7678
      %v7680 = vrot.slane %v7678, 4
      %v7681 = vrot.slane %v6649, 5
      %v7682 = vsel %vm2264, %v7680, %v7681
      %v7683 = vrot.slane %v7605, 5
      %v7684 = vrot.slane %v7683, 4
      %v7685 = vrot.slane %v6623, 5
      %v7686 = vsel %vm2264, %v7684, %v7685
      %v7687 = vrot.slane %v7685, 4
      %v7688 = vrot.slane %v6650, 5
      %v7689 = vsel %vm2264, %v7687, %v7688
      %v7690 = vrot.slane %v7606, 5
      %v7691 = vrot.slane %v7690, 4
      %v7692 = vrot.slane %v6625, 5
      %v7693 = vsel %vm2264, %v7691, %v7692
      %v7694 = vrot.slane %v7692, 4
      %v7695 = vrot.slane %v6651, 5
      %v7696 = vsel %vm2264, %v7694, %v7695
      %v7697 = vrot.slane %v7607, 5
      %v7698 = vrot.slane %v7697, 4
      %v7699 = vrot.slane %v6627, 5
      %v7700 = vsel %vm2264, %v7698, %v7699
      %v7701 = vrot.slane %v7699, 4
      %v7702 = vrot.slane %v6652, 5
      %v7703 = vsel %vm2264, %v7701, %v7702
      %v7704 = vrot.slane %v7608, 5
      %v7705 = vrot.slane %v7704, 4
      %v7706 = vrot.slane %v6629, 5
      %v7707 = vsel %vm2264, %v7705, %v7706
      %v7708 = vrot.slane %v7706, 4
      %v7709 = vrot.slane %v6653, 5
      %v7710 = vsel %vm2264, %v7708, %v7709
      %v7711 = vrot.slane %v7609, 5
      %v7712 = vrot.slane %v7711, 4
      %v7713 = vrot.slane %v6631, 5
      %v7714 = vsel %vm2264, %v7712, %v7713
      %v7715 = vrot.slane %v7713, 4
      %v7716 = vrot.slane %v6654, 5
      %v7717 = vsel %vm2264, %v7715, %v7716
      %v7718 = vrot.slane %v7610, 5
      %v7719 = vrot.slane %v7718, 4
      %v7720 = vrot.slane %v6633, 5
      %v7721 = vsel %vm2264, %v7719, %v7720
      %v7722 = vrot.slane %v7720, 4
      %v7723 = vrot.slane %v6655, 5
      %v7724 = vsel %vm2264, %v7722, %v7723
      %v7725 = vrot.slane %v7611, 5
      %v7726 = vrot.slane %v7725, 4
      %v7727 = vrot.slane %v6635, 5
      %v7728 = vsel %vm2264, %v7726, %v7727
      %v7729 = vrot.slane %v7727, 4
      %v7730 = vrot.slane %v6656, 5
      %v7731 = vsel %vm2264, %v7729, %v7730
      %v7732 = vrot.slane %v7612, 5
      %v7733 = vrot.slane %v7732, 4
      %v7734 = vrot.slane %v6637, 5
      %v7735 = vsel %vm2264, %v7733, %v7734
      %v7736 = vrot.slane %v7734, 4
      %v7737 = vrot.slane %v6657, 5
      %v7738 = vsel %vm2264, %v7736, %v7737
      %v7739 = vrot.slane %v7613, 5
      %v7740 = vrot.slane %v7739, 4
      %v7741 = vrot.slane %v6639, 5
      %v7742 = vsel %vm2264, %v7740, %v7741
      %v7743 = vrot.slane %v7741, 4
      %v7744 = vrot.slane %v6658, 5
      %v7745 = vsel %vm2264, %v7743, %v7744
      %v7746 = vrot.slane %v7614, 5
      %v7747 = vrot.slane %v7746, 4
      %v7748 = vrot.slane %v6641, 5
      %v7749 = vsel %vm2264, %v7747, %v7748
      %v7750 = vrot.slane %v7748, 4
      %v7751 = vrot.slane %v6659, 5
      %v7752 = vsel %vm2264, %v7750, %v7751
      %v7753 = vrot.slane %v7615, 5
      %v7754 = vrot.slane %v7753, 4
      %v7755 = vrot.slane %v6643, 5
      %v7756 = vsel %vm2264, %v7754, %v7755
      %v7757 = vrot.slane %v7755, 4
      %v7758 = vrot.slane %v6660, 5
      %v7759 = vsel %vm2264, %v7757, %v7758
      %s7760 = scalar_lea.vmem %s2, 8
      %v7761 = vld [vmem:[%s7760] sm:$0xf]
      %v7762 = vunpack.c.l.b16 %v7651
      %v7763 = vunpack.c.l.b16 %v7654
      %v7764 = vunpack.c.l.b16 %v7658
      %v7765 = vunpack.c.l.b16 %v7661
      %v7766 = vunpack.c.l.b16 %v7665
      %v7767 = vunpack.c.l.b16 %v7668
      %v7768 = vunpack.c.l.b16 %v7672
      %v7769 = vunpack.c.l.b16 %v7675
      %v7770 = vunpack.c.l.b16 %v7679
      %v7771 = vunpack.c.l.b16 %v7682
      %v7772 = vunpack.c.l.b16 %v7686
      %v7773 = vunpack.c.l.b16 %v7689
      %v7774 = vunpack.c.l.b16 %v7693
      %v7775 = vunpack.c.l.b16 %v7696
      %v7776 = vunpack.c.l.b16 %v7700
      %v7777 = vunpack.c.l.b16 %v7703
      %v7778 = vunpack.c.l.b16 %v7707
      %v7779 = vunpack.c.l.b16 %v7710
      %v7780 = vunpack.c.l.b16 %v7714
      %v7781 = vunpack.c.l.b16 %v7717
      %v7782 = vunpack.c.l.b16 %v7721
      %v7783 = vunpack.c.l.b16 %v7724
      %v7784 = vunpack.c.l.b16 %v7728
      %v7785 = vunpack.c.l.b16 %v7731
      %v7786 = vunpack.c.l.b16 %v7735
      %v7787 = vunpack.c.l.b16 %v7738
      %v7788 = vunpack.c.l.b16 %v7742
      %v7789 = vunpack.c.l.b16 %v7745
      %v7790 = vunpack.c.l.b16 %v7749
      %v7791 = vunpack.c.l.b16 %v7752
      %v7792 = vunpack.c.l.b16 %v7756
      %v7793 = vunpack.c.l.b16 %v7759
      %v7794 = vpack.c.b16 %v7763, %v7762
      %v7795 = vpack.c.b16 %v7765, %v7764
      %v7796 = vpack.c.b16 %v7767, %v7766
      %v7797 = vpack.c.b16 %v7769, %v7768
      %v7798 = vpack.c.b16 %v7771, %v7770
      %v7799 = vpack.c.b16 %v7773, %v7772
      %v7800 = vpack.c.b16 %v7775, %v7774
      %v7801 = vpack.c.b16 %v7777, %v7776
      %v7802 = vpack.c.b16 %v7779, %v7778
      %v7803 = vpack.c.b16 %v7781, %v7780
      %v7804 = vpack.c.b16 %v7783, %v7782
      %v7805 = vpack.c.b16 %v7785, %v7784
      %v7806 = vpack.c.b16 %v7787, %v7786
      %v7807 = vpack.c.b16 %v7789, %v7788
      %v7808 = vpack.c.b16 %v7791, %v7790
      %v7809 = vpack.c.b16 %v7793, %v7792
      %v7811 = vsel %vm5780, %v7794, 0
      %v7814 = vsel %vm5780, %v7795, 0
      %v7817 = vsel %vm5780, %v7796, 0
      %v7820 = vsel %vm5780, %v7797, 0
      %v7823 = vsel %vm5780, %v7798, 0
      %v7826 = vsel %vm5780, %v7799, 0
      %v7829 = vsel %vm5780, %v7800, 0
      %v7832 = vsel %vm5780, %v7801, 0
      %v7835 = vsel %vm5780, %v7802, 0
      %v7838 = vsel %vm5780, %v7803, 0
      %v7841 = vsel %vm5780, %v7804, 0
      %v7844 = vsel %vm5780, %v7805, 0
      %v7847 = vsel %vm5780, %v7806, 0
      %v7850 = vsel %vm5780, %v7807, 0
      %v7853 = vsel %vm5780, %v7808, 0
      %v7856 = vsel %vm5780, %v7809, 0
      %v7859 = vsel %vm7143, %v7761, 0
      %7861 = vmatprep.subr.bf16.mxu0 0
      %7862 = vmatpush1.bf16.msra.mxu0 %v7859
      %7863 = vmatprep.subr.bf16.mxu0 0
      %7864 = vmatpush1.bf16.msra.mxu0 0
      %7865 = vmatprep.subr.bf16.mxu0 0
      %7866 = vmatpush1.bf16.msra.mxu0 0
      %7867 = vmatprep.subr.bf16.mxu0 0
      %7868 = vmatpush1.bf16.msra.mxu0 0
      %7869 = vmatprep.subr.bf16.mxu0 0
      %7870 = vmatpush1.bf16.msra.mxu0 0
      %7871 = vmatprep.subr.bf16.mxu0 0
      %7872 = vmatpush1.bf16.msra.mxu0 0
      %7873 = vmatprep.subr.bf16.mxu0 0
      %7874 = vmatpush1.bf16.msra.mxu0 0
      %7875 = vmatprep.subr.bf16.mxu0 0
      %7876 = vmatpush1.bf16.msra.mxu0 0
      %7877 = vmatprep.subr.bf16.mxu0 0
      %7878 = vmatpush1.bf16.msra.mxu0 0
      %7879 = vmatprep.subr.bf16.mxu0 0
      %7880 = vmatpush1.bf16.msra.mxu0 0
      %7881 = vmatprep.subr.bf16.mxu0 0
      %7882 = vmatpush1.bf16.msra.mxu0 0
      %7883 = vmatprep.subr.bf16.mxu0 0
      %7884 = vmatpush1.bf16.msra.mxu0 0
      %7885 = vmatprep.subr.bf16.mxu0 0
      %7886 = vmatpush1.bf16.msra.mxu0 0
      %7887 = vmatprep.subr.bf16.mxu0 0
      %7888 = vmatpush1.bf16.msra.mxu0 0
      %7889 = vmatprep.subr.bf16.mxu0 0
      %7890 = vmatpush1.bf16.msra.mxu0 0
      %7891 = vmatprep.subr.bf16.mxu0 0
      %7892 = vmatpush1.bf16.msra.mxu0 0
      %7893 = vmatprep.mubr.bf16.mxu0 0
      %7894 = vmatmul.mubr.bf16.gmra.mrb[0].mxu0 %v7811
      %v7895 = vpop.f32.mrb[0].mxu0
      %v7896 = vadd.f32 0.0, %v7895
      %v7897 = vpop.f32.mrb[0].mxu0
      %v7898 = vpop.f32.mrb[0].mxu0
      %v7899 = vadd.f32 0.0, %v7898
      %v7900 = vpop.f32.mrb[0].mxu0
      %7901 = vmatprep.mubr.bf16.mxu0 0
      %7902 = vmatmul.mubr.bf16.gmra.mrb[0].mxu0 %v7814
      %v7903 = vpop.f32.mrb[0].mxu0
      %v7904 = vadd.f32 0.0, %v7903
      %v7905 = vpop.f32.mrb[0].mxu0
      %v7906 = vpop.f32.mrb[0].mxu0
      %v7907 = vadd.f32 0.0, %v7906
      %v7908 = vpop.f32.mrb[0].mxu0
      %7909 = vmatprep.mubr.bf16.mxu0 0
      %7910 = vmatmul.mubr.bf16.gmra.mrb[0].mxu0 %v7817
      %v7911 = vpop.f32.mrb[0].mxu0
      %v7912 = vadd.f32 0.0, %v7911
      %v7913 = vpop.f32.mrb[0].mxu0
      %v7914 = vpop.f32.mrb[0].mxu0
      %v7915 = vadd.f32 0.0, %v7914
      %v7916 = vpop.f32.mrb[0].mxu0
      %7917 = vmatprep.mubr.bf16.mxu0 0
      %7918 = vmatmul.mubr.bf16.gmra.mrb[0].mxu0 %v7820
      %v7919 = vpop.f32.mrb[0].mxu0
      %v7920 = vadd.f32 0.0, %v7919
      %v7921 = vpop.f32.mrb[0].mxu0
      %v7922 = vpop.f32.mrb[0].mxu0
      %v7923 = vadd.f32 0.0, %v7922
      %v7924 = vpop.f32.mrb[0].mxu0
      %7925 = vmatprep.mubr.bf16.mxu0 0
      %7926 = vmatmul.mubr.bf16.gmra.mrb[0].mxu0 %v7823
      %v7927 = vpop.f32.mrb[0].mxu0
      %v7928 = vadd.f32 0.0, %v7927
      %v7929 = vpop.f32.mrb[0].mxu0
      %v7930 = vpop.f32.mrb[0].mxu0
      %v7931 = vadd.f32 0.0, %v7930
      %v7932 = vpop.f32.mrb[0].mxu0
      %7933 = vmatprep.mubr.bf16.mxu0 0
      %7934 = vmatmul.mubr.bf16.gmra.mrb[0].mxu0 %v7826
      %v7935 = vpop.f32.mrb[0].mxu0
      %v7936 = vadd.f32 0.0, %v7935
      %v7937 = vpop.f32.mrb[0].mxu0
      %v7938 = vpop.f32.mrb[0].mxu0
      %v7939 = vadd.f32 0.0, %v7938
      %v7940 = vpop.f32.mrb[0].mxu0
      %7941 = vmatprep.mubr.bf16.mxu0 0
      %7942 = vmatmul.mubr.bf16.gmra.mrb[0].mxu0 %v7829
      %v7943 = vpop.f32.mrb[0].mxu0
      %v7944 = vadd.f32 0.0, %v7943
      %v7945 = vpop.f32.mrb[0].mxu0
      %v7946 = vpop.f32.mrb[0].mxu0
      %v7947 = vadd.f32 0.0, %v7946
      %v7948 = vpop.f32.mrb[0].mxu0
      %7949 = vmatprep.mubr.bf16.mxu0 0
      %7950 = vmatmul.mubr.bf16.gmra.mrb[0].mxu0 %v7832
      %v7951 = vpop.f32.mrb[0].mxu0
      %v7952 = vadd.f32 0.0, %v7951
      %v7953 = vpop.f32.mrb[0].mxu0
      %v7954 = vpop.f32.mrb[0].mxu0
      %v7955 = vadd.f32 0.0, %v7954
      %v7956 = vpop.f32.mrb[0].mxu0
      %7957 = vmatprep.mubr.bf16.mxu0 0
      %7958 = vmatmul.mubr.bf16.gmra.mrb[0].mxu0 %v7835
      %v7959 = vpop.f32.mrb[0].mxu0
      %v7960 = vadd.f32 0.0, %v7959
      %v7961 = vpop.f32.mrb[0].mxu0
      %v7962 = vpop.f32.mrb[0].mxu0
      %v7963 = vadd.f32 0.0, %v7962
      %v7964 = vpop.f32.mrb[0].mxu0
      %7965 = vmatprep.mubr.bf16.mxu0 0
      %7966 = vmatmul.mubr.bf16.gmra.mrb[0].mxu0 %v7838
      %v7967 = vpop.f32.mrb[0].mxu0
      %v7968 = vadd.f32 0.0, %v7967
      %v7969 = vpop.f32.mrb[0].mxu0
      %v7970 = vpop.f32.mrb[0].mxu0
      %v7971 = vadd.f32 0.0, %v7970
      %v7972 = vpop.f32.mrb[0].mxu0
      %7973 = vmatprep.mubr.bf16.mxu0 0
      %7974 = vmatmul.mubr.bf16.gmra.mrb[0].mxu0 %v7841
      %v7975 = vpop.f32.mrb[0].mxu0
      %v7976 = vadd.f32 0.0, %v7975
      %v7977 = vpop.f32.mrb[0].mxu0
      %v7978 = vpop.f32.mrb[0].mxu0
      %v7979 = vadd.f32 0.0, %v7978
      %v7980 = vpop.f32.mrb[0].mxu0
      %7981 = vmatprep.mubr.bf16.mxu0 0
      %7982 = vmatmul.mubr.bf16.gmra.mrb[0].mxu0 %v7844
      %v7983 = vpop.f32.mrb[0].mxu0
      %v7984 = vadd.f32 0.0, %v7983
      %v7985 = vpop.f32.mrb[0].mxu0
      %v7986 = vpop.f32.mrb[0].mxu0
      %v7987 = vadd.f32 0.0, %v7986
      %v7988 = vpop.f32.mrb[0].mxu0
      %7989 = vmatprep.mubr.bf16.mxu0 0
      %7990 = vmatmul.mubr.bf16.gmra.mrb[0].mxu0 %v7847
      %v7991 = vpop.f32.mrb[0].mxu0
      %v7992 = vadd.f32 0.0, %v7991
      %v7993 = vpop.f32.mrb[0].mxu0
      %v7994 = vpop.f32.mrb[0].mxu0
      %v7995 = vadd.f32 0.0, %v7994
      %v7996 = vpop.f32.mrb[0].mxu0
      %7997 = vmatprep.mubr.bf16.mxu0 0
      %7998 = vmatmul.mubr.bf16.gmra.mrb[0].mxu0 %v7850
      %v7999 = vpop.f32.mrb[0].mxu0
      %v8000 = vadd.f32 0.0, %v7999
      %v8001 = vpop.f32.mrb[0].mxu0
      %v8002 = vpop.f32.mrb[0].mxu0
      %v8003 = vadd.f32 0.0, %v8002
      %v8004 = vpop.f32.mrb[0].mxu0
      %8005 = vmatprep.mubr.bf16.mxu0 0
      %8006 = vmatmul.mubr.bf16.gmra.mrb[0].mxu0 %v7853
      %v8007 = vpop.f32.mrb[0].mxu0
      %v8008 = vadd.f32 0.0, %v8007
      %v8009 = vpop.f32.mrb[0].mxu0
      %v8010 = vpop.f32.mrb[0].mxu0
      %v8011 = vadd.f32 0.0, %v8010
      %v8012 = vpop.f32.mrb[0].mxu0
      %8013 = vmatprep.mubr.bf16.mxu0 0
      %8014 = vmatmul.mubr.bf16.gmra.mrb[0].mxu0 %v7856
      %v8015 = vpop.f32.mrb[0].mxu0
      %v8016 = vadd.f32 0.0, %v8015
      %v8017 = vpop.f32.mrb[0].mxu0
      %v8018 = vpop.f32.mrb[0].mxu0
      %v8019 = vadd.f32 0.0, %v8018
      %v8020 = vpop.f32.mrb[0].mxu0
      %8021 = vdwg.mxu0
      %v8022 = vadd.f32 %v7474, %v7896
      %v8023 = vadd.f32 %v7477, %v7899
      %v8024 = vadd.f32 %v7482, %v7904
      %v8025 = vadd.f32 %v7485, %v7907
      %v8026 = vadd.f32 %v7490, %v7912
      %v8027 = vadd.f32 %v7493, %v7915
      %v8028 = vadd.f32 %v7498, %v7920
      %v8029 = vadd.f32 %v7501, %v7923
      %v8030 = vadd.f32 %v7506, %v7928
      %v8031 = vadd.f32 %v7509, %v7931
      %v8032 = vadd.f32 %v7514, %v7936
      %v8033 = vadd.f32 %v7517, %v7939
      %v8034 = vadd.f32 %v7522, %v7944
      %v8035 = vadd.f32 %v7525, %v7947
      %v8036 = vadd.f32 %v7530, %v7952
      %v8037 = vadd.f32 %v7533, %v7955
      %v8038 = vadd.f32 %v7538, %v7960
      %v8039 = vadd.f32 %v7541, %v7963
      %v8040 = vadd.f32 %v7546, %v7968
      %v8041 = vadd.f32 %v7549, %v7971
      %v8042 = vadd.f32 %v7554, %v7976
      %v8043 = vadd.f32 %v7557, %v7979
      %v8044 = vadd.f32 %v7562, %v7984
      %v8045 = vadd.f32 %v7565, %v7987
      %v8046 = vadd.f32 %v7570, %v7992
      %v8047 = vadd.f32 %v7573, %v7995
      %v8048 = vadd.f32 %v7578, %v8000
      %v8049 = vadd.f32 %v7581, %v8003
      %v8050 = vadd.f32 %v7586, %v8008
      %v8051 = vadd.f32 %v7589, %v8011
      %v8052 = vadd.f32 %v7594, %v8016
      %v8053 = vadd.f32 %v7597, %v8019
      %v8054 = vld [vmem:[%s1105] sm:$0xf]
      %v8055 = vld [vmem:[%s1105 + $0x4] sm:$0xf]
      %v8056 = vld [vmem:[%s1105 + $0xc] sm:$0xf]
      %v8057 = vld [vmem:[%s1105 + $0x10] sm:$0xf]
      %v8058 = vld [vmem:[%s1105 + $0x18] sm:$0xf]
      %v8059 = vld [vmem:[%s1105 + $0x1c] sm:$0xf]
      %v8060 = vld [vmem:[%s1105 + $0x24] sm:$0xf]
      %v8061 = vld [vmem:[%s1105 + $0x28] sm:$0xf]
      %v8062 = vld [vmem:[%s1105 + $0x30] sm:$0xf]
      %v8063 = vld [vmem:[%s1105 + $0x34] sm:$0xf]
      %v8064 = vld [vmem:[%s1105 + $0x3c] sm:$0xf]
      %v8065 = vld [vmem:[%s1105 + $0x40] sm:$0xf]
      %v8066 = vld [vmem:[%s1105 + $0x48] sm:$0xf]
      %v8067 = vld [vmem:[%s1105 + $0x4c] sm:$0xf]
      %v8068 = vld [vmem:[%s1105 + $0x54] sm:$0xf]
      %v8069 = vld [vmem:[%s1105 + $0x58] sm:$0xf]
      %v8070 = vld [vmem:[%s1105 + $0x60] sm:$0xf]
      %v8071 = vld [vmem:[%s1105 + $0x64] sm:$0xf]
      %v8072 = vld [vmem:[%s1105 + $0x6c] sm:$0xf]
      %v8073 = vld [vmem:[%s1105 + $0x70] sm:$0xf]
      %v8074 = vld [vmem:[%s1105 + $0x78] sm:$0xf]
      %v8075 = vld [vmem:[%s1105 + $0x7c] sm:$0xf]
      %v8076 = vld [vmem:[%s1105 + $0x84] sm:$0xf]
      %v8077 = vld [vmem:[%s1105 + $0x88] sm:$0xf]
      %v8078 = vld [vmem:[%s1105 + $0x90] sm:$0xf]
      %v8079 = vld [vmem:[%s1105 + $0x94] sm:$0xf]
      %v8080 = vld [vmem:[%s1105 + $0x9c] sm:$0xf]
      %v8081 = vld [vmem:[%s1105 + $0xa0] sm:$0xf]
      %v8082 = vld [vmem:[%s1105 + $0xa8] sm:$0xf]
      %v8083 = vld [vmem:[%s1105 + $0xac] sm:$0xf]
      %v8084 = vld [vmem:[%s1105 + $0xb4] sm:$0xf]
      %v8085 = vld [vmem:[%s1105 + $0xb8] sm:$0xf]
      %s8086 = scalar_lea.vmem %s2, 12
      %v8087 = vld [vmem:[%s8086] sm:$0xf]
      %v8120 = vunpack.c.l.b16 %v8054
      %v8121 = vunpack.c.l.b16 %v8055
      %v8122 = vunpack.c.l.b16 %v8056
      %v8123 = vunpack.c.l.b16 %v8057
      %v8124 = vunpack.c.l.b16 %v8058
      %v8125 = vunpack.c.l.b16 %v8059
      %v8126 = vunpack.c.l.b16 %v8060
      %v8127 = vunpack.c.l.b16 %v8061
      %v8128 = vunpack.c.l.b16 %v8062
      %v8129 = vunpack.c.l.b16 %v8063
      %v8130 = vunpack.c.l.b16 %v8064
      %v8131 = vunpack.c.l.b16 %v8065
      %v8132 = vunpack.c.l.b16 %v8066
      %v8133 = vunpack.c.l.b16 %v8067
      %v8134 = vunpack.c.l.b16 %v8068
      %v8135 = vunpack.c.l.b16 %v8069
      %v8136 = vunpack.c.l.b16 %v8070
      %v8137 = vunpack.c.l.b16 %v8071
      %v8138 = vunpack.c.l.b16 %v8072
      %v8139 = vunpack.c.l.b16 %v8073
      %v8140 = vunpack.c.l.b16 %v8074
      %v8141 = vunpack.c.l.b16 %v8075
      %v8142 = vunpack.c.l.b16 %v8076
      %v8143 = vunpack.c.l.b16 %v8077
      %v8144 = vunpack.c.l.b16 %v8078
      %v8145 = vunpack.c.l.b16 %v8079
      %v8146 = vunpack.c.l.b16 %v8080
      %v8147 = vunpack.c.l.b16 %v8081
      %v8148 = vunpack.c.l.b16 %v8082
      %v8149 = vunpack.c.l.b16 %v8083
      %v8150 = vunpack.c.l.b16 %v8084
      %v8151 = vunpack.c.l.b16 %v8085
      %v8152 = vpack.c.b16 %v8121, %v8120
      %v8153 = vpack.c.b16 %v8123, %v8122
      %v8154 = vpack.c.b16 %v8125, %v8124
      %v8155 = vpack.c.b16 %v8127, %v8126
      %v8156 = vpack.c.b16 %v8129, %v8128
      %v8157 = vpack.c.b16 %v8131, %v8130
      %v8158 = vpack.c.b16 %v8133, %v8132
      %v8159 = vpack.c.b16 %v8135, %v8134
      %v8160 = vpack.c.b16 %v8137, %v8136
      %v8161 = vpack.c.b16 %v8139, %v8138
      %v8162 = vpack.c.b16 %v8141, %v8140
      %v8163 = vpack.c.b16 %v8143, %v8142
      %v8164 = vpack.c.b16 %v8145, %v8144
      %v8165 = vpack.c.b16 %v8147, %v8146
      %v8166 = vpack.c.b16 %v8149, %v8148
      %v8167 = vpack.c.b16 %v8151, %v8150
      %v8169 = vsel %vm5780, %v8152, 0
      %v8172 = vsel %vm5780, %v8153, 0
      %v8175 = vsel %vm5780, %v8154, 0
      %v8178 = vsel %vm5780, %v8155, 0
      %v8181 = vsel %vm5780, %v8156, 0
      %v8184 = vsel %vm5780, %v8157, 0
      %v8187 = vsel %vm5780, %v8158, 0
      %v8190 = vsel %vm5780, %v8159, 0
      %v8193 = vsel %vm5780, %v8160, 0
      %v8196 = vsel %vm5780, %v8161, 0
      %v8199 = vsel %vm5780, %v8162, 0
      %v8202 = vsel %vm5780, %v8163, 0
      %v8205 = vsel %vm5780, %v8164, 0
      %v8208 = vsel %vm5780, %v8165, 0
      %v8211 = vsel %vm5780, %v8166, 0
      %v8214 = vsel %vm5780, %v8167, 0
      %v8217 = vsel %vm7143, %v8087, 0
      %8219 = vmatprep.subr.bf16.mxu0 0
      %8220 = vmatpush1.bf16.msra.mxu0 %v8217
      %8221 = vmatprep.subr.bf16.mxu0 0
      %8222 = vmatpush1.bf16.msra.mxu0 0
      %8223 = vmatprep.subr.bf16.mxu0 0
      %8224 = vmatpush1.bf16.msra.mxu0 0
      %8225 = vmatprep.subr.bf16.mxu0 0
      %8226 = vmatpush1.bf16.msra.mxu0 0
      %8227 = vmatprep.subr.bf16.mxu0 0
      %8228 = vmatpush1.bf16.msra.mxu0 0
      %8229 = vmatprep.subr.bf16.mxu0 0
      %8230 = vmatpush1.bf16.msra.mxu0 0
      %8231 = vmatprep.subr.bf16.mxu0 0
      %8232 = vmatpush1.bf16.msra.mxu0 0
      %8233 = vmatprep.subr.bf16.mxu0 0
      %8234 = vmatpush1.bf16.msra.mxu0 0
      %8235 = vmatprep.subr.bf16.mxu0 0
      %8236 = vmatpush1.bf16.msra.mxu0 0
      %8237 = vmatprep.subr.bf16.mxu0 0
      %8238 = vmatpush1.bf16.msra.mxu0 0
      %8239 = vmatprep.subr.bf16.mxu0 0
      %8240 = vmatpush1.bf16.msra.mxu0 0
      %8241 = vmatprep.subr.bf16.mxu0 0
      %8242 = vmatpush1.bf16.msra.mxu0 0
      %8243 = vmatprep.subr.bf16.mxu0 0
      %8244 = vmatpush1.bf16.msra.mxu0 0
      %8245 = vmatprep.subr.bf16.mxu0 0
      %8246 = vmatpush1.bf16.msra.mxu0 0
      %8247 = vmatprep.subr.bf16.mxu0 0
      %8248 = vmatpush1.bf16.msra.mxu0 0
      %8249 = vmatprep.subr.bf16.mxu0 0
      %8250 = vmatpush1.bf16.msra.mxu0 0
      %8251 = vmatprep.mubr.bf16.mxu0 0
      %8252 = vmatmul.mubr.bf16.gmra.mrb[0].mxu0 %v8169
      %v8253 = vpop.f32.mrb[0].mxu0
      %v8254 = vadd.f32 0.0, %v8253
      %v8255 = vpop.f32.mrb[0].mxu0
      %v8256 = vpop.f32.mrb[0].mxu0
      %v8257 = vadd.f32 0.0, %v8256
      %v8258 = vpop.f32.mrb[0].mxu0
      %8259 = vmatprep.mubr.bf16.mxu0 0
      %8260 = vmatmul.mubr.bf16.gmra.mrb[0].mxu0 %v8172
      %v8261 = vpop.f32.mrb[0].mxu0
      %v8262 = vadd.f32 0.0, %v8261
      %v8263 = vpop.f32.mrb[0].mxu0
      %v8264 = vpop.f32.mrb[0].mxu0
      %v8265 = vadd.f32 0.0, %v8264
      %v8266 = vpop.f32.mrb[0].mxu0
      %8267 = vmatprep.mubr.bf16.mxu0 0
      %8268 = vmatmul.mubr.bf16.gmra.mrb[0].mxu0 %v8175
      %v8269 = vpop.f32.mrb[0].mxu0
      %v8270 = vadd.f32 0.0, %v8269
      %v8271 = vpop.f32.mrb[0].mxu0
      %v8272 = vpop.f32.mrb[0].mxu0
      %v8273 = vadd.f32 0.0, %v8272
      %v8274 = vpop.f32.mrb[0].mxu0
      %8275 = vmatprep.mubr.bf16.mxu0 0
      %8276 = vmatmul.mubr.bf16.gmra.mrb[0].mxu0 %v8178
      %v8277 = vpop.f32.mrb[0].mxu0
      %v8278 = vadd.f32 0.0, %v8277
      %v8279 = vpop.f32.mrb[0].mxu0
      %v8280 = vpop.f32.mrb[0].mxu0
      %v8281 = vadd.f32 0.0, %v8280
      %v8282 = vpop.f32.mrb[0].mxu0
      %8283 = vmatprep.mubr.bf16.mxu0 0
      %8284 = vmatmul.mubr.bf16.gmra.mrb[0].mxu0 %v8181
      %v8285 = vpop.f32.mrb[0].mxu0
      %v8286 = vadd.f32 0.0, %v8285
      %v8287 = vpop.f32.mrb[0].mxu0
      %v8288 = vpop.f32.mrb[0].mxu0
      %v8289 = vadd.f32 0.0, %v8288
      %v8290 = vpop.f32.mrb[0].mxu0
      %8291 = vmatprep.mubr.bf16.mxu0 0
      %8292 = vmatmul.mubr.bf16.gmra.mrb[0].mxu0 %v8184
      %v8293 = vpop.f32.mrb[0].mxu0
      %v8294 = vadd.f32 0.0, %v8293
      %v8295 = vpop.f32.mrb[0].mxu0
      %v8296 = vpop.f32.mrb[0].mxu0
      %v8297 = vadd.f32 0.0, %v8296
      %v8298 = vpop.f32.mrb[0].mxu0
      %8299 = vmatprep.mubr.bf16.mxu0 0
      %8300 = vmatmul.mubr.bf16.gmra.mrb[0].mxu0 %v8187
      %v8301 = vpop.f32.mrb[0].mxu0
      %v8302 = vadd.f32 0.0, %v8301
      %v8303 = vpop.f32.mrb[0].mxu0
      %v8304 = vpop.f32.mrb[0].mxu0
      %v8305 = vadd.f32 0.0, %v8304
      %v8306 = vpop.f32.mrb[0].mxu0
      %8307 = vmatprep.mubr.bf16.mxu0 0
      %8308 = vmatmul.mubr.bf16.gmra.mrb[0].mxu0 %v8190
      %v8309 = vpop.f32.mrb[0].mxu0
      %v8310 = vadd.f32 0.0, %v8309
      %v8311 = vpop.f32.mrb[0].mxu0
      %v8312 = vpop.f32.mrb[0].mxu0
      %v8313 = vadd.f32 0.0, %v8312
      %v8314 = vpop.f32.mrb[0].mxu0
      %8315 = vmatprep.mubr.bf16.mxu0 0
      %8316 = vmatmul.mubr.bf16.gmra.mrb[0].mxu0 %v8193
      %v8317 = vpop.f32.mrb[0].mxu0
      %v8318 = vadd.f32 0.0, %v8317
      %v8319 = vpop.f32.mrb[0].mxu0
      %v8320 = vpop.f32.mrb[0].mxu0
      %v8321 = vadd.f32 0.0, %v8320
      %v8322 = vpop.f32.mrb[0].mxu0
      %8323 = vmatprep.mubr.bf16.mxu0 0
      %8324 = vmatmul.mubr.bf16.gmra.mrb[0].mxu0 %v8196
      %v8325 = vpop.f32.mrb[0].mxu0
      %v8326 = vadd.f32 0.0, %v8325
      %v8327 = vpop.f32.mrb[0].mxu0
      %v8328 = vpop.f32.mrb[0].mxu0
      %v8329 = vadd.f32 0.0, %v8328
      %v8330 = vpop.f32.mrb[0].mxu0
      %8331 = vmatprep.mubr.bf16.mxu0 0
      %8332 = vmatmul.mubr.bf16.gmra.mrb[0].mxu0 %v8199
      %v8333 = vpop.f32.mrb[0].mxu0
      %v8334 = vadd.f32 0.0, %v8333
      %v8335 = vpop.f32.mrb[0].mxu0
      %v8336 = vpop.f32.mrb[0].mxu0
      %v8337 = vadd.f32 0.0, %v8336
      %v8338 = vpop.f32.mrb[0].mxu0
      %8339 = vmatprep.mubr.bf16.mxu0 0
      %8340 = vmatmul.mubr.bf16.gmra.mrb[0].mxu0 %v8202
      %v8341 = vpop.f32.mrb[0].mxu0
      %v8342 = vadd.f32 0.0, %v8341
      %v8343 = vpop.f32.mrb[0].mxu0
      %v8344 = vpop.f32.mrb[0].mxu0
      %v8345 = vadd.f32 0.0, %v8344
      %v8346 = vpop.f32.mrb[0].mxu0
      %8347 = vmatprep.mubr.bf16.mxu0 0
      %8348 = vmatmul.mubr.bf16.gmra.mrb[0].mxu0 %v8205
      %v8349 = vpop.f32.mrb[0].mxu0
      %v8350 = vadd.f32 0.0, %v8349
      %v8351 = vpop.f32.mrb[0].mxu0
      %v8352 = vpop.f32.mrb[0].mxu0
      %v8353 = vadd.f32 0.0, %v8352
      %v8354 = vpop.f32.mrb[0].mxu0
      %8355 = vmatprep.mubr.bf16.mxu0 0
      %8356 = vmatmul.mubr.bf16.gmra.mrb[0].mxu0 %v8208
      %v8357 = vpop.f32.mrb[0].mxu0
      %v8358 = vadd.f32 0.0, %v8357
      %v8359 = vpop.f32.mrb[0].mxu0
      %v8360 = vpop.f32.mrb[0].mxu0
      %v8361 = vadd.f32 0.0, %v8360
      %v8362 = vpop.f32.mrb[0].mxu0
      %8363 = vmatprep.mubr.bf16.mxu0 0
      %8364 = vmatmul.mubr.bf16.gmra.mrb[0].mxu0 %v8211
      %v8365 = vpop.f32.mrb[0].mxu0
      %v8366 = vadd.f32 0.0, %v8365
      %v8367 = vpop.f32.mrb[0].mxu0
      %v8368 = vpop.f32.mrb[0].mxu0
      %v8369 = vadd.f32 0.0, %v8368
      %v8370 = vpop.f32.mrb[0].mxu0
      %8371 = vmatprep.mubr.bf16.mxu0 0
      %8372 = vmatmul.mubr.bf16.gmra.mrb[0].mxu0 %v8214
      %v8373 = vpop.f32.mrb[0].mxu0
      %v8374 = vadd.f32 0.0, %v8373
      %v8375 = vpop.f32.mrb[0].mxu0
      %v8376 = vpop.f32.mrb[0].mxu0
      %v8377 = vadd.f32 0.0, %v8376
      %v8378 = vpop.f32.mrb[0].mxu0
      %8379 = vdwg.mxu0
      %v8380 = vadd.f32 %v8022, %v8254
      %v8381 = vadd.f32 %v8023, %v8257
      %v8382 = vadd.f32 %v8024, %v8262
      %v8383 = vadd.f32 %v8025, %v8265
      %v8384 = vadd.f32 %v8026, %v8270
      %v8385 = vadd.f32 %v8027, %v8273
      %v8386 = vadd.f32 %v8028, %v8278
      %v8387 = vadd.f32 %v8029, %v8281
      %v8388 = vadd.f32 %v8030, %v8286
      %v8389 = vadd.f32 %v8031, %v8289
      %v8390 = vadd.f32 %v8032, %v8294
      %v8391 = vadd.f32 %v8033, %v8297
      %v8392 = vadd.f32 %v8034, %v8302
      %v8393 = vadd.f32 %v8035, %v8305
      %v8394 = vadd.f32 %v8036, %v8310
      %v8395 = vadd.f32 %v8037, %v8313
      %v8396 = vadd.f32 %v8038, %v8318
      %v8397 = vadd.f32 %v8039, %v8321
      %v8398 = vadd.f32 %v8040, %v8326
      %v8399 = vadd.f32 %v8041, %v8329
      %v8400 = vadd.f32 %v8042, %v8334
      %v8401 = vadd.f32 %v8043, %v8337
      %v8402 = vadd.f32 %v8044, %v8342
      %v8403 = vadd.f32 %v8045, %v8345
      %v8404 = vadd.f32 %v8046, %v8350
      %v8405 = vadd.f32 %v8047, %v8353
      %v8406 = vadd.f32 %v8048, %v8358
      %v8407 = vadd.f32 %v8049, %v8361
      %v8408 = vadd.f32 %v8050, %v8366
      %v8409 = vadd.f32 %v8051, %v8369
      %v8410 = vadd.f32 %v8052, %v8374
      %v8411 = vadd.f32 %v8053, %v8377
      %v8412 = vld [vmem:[%s1105] sm:$0xf]
      %v8413 = vld [vmem:[%s1105 + $0x4] sm:$0xf]
      %v8414 = vld [vmem:[%s1105 + $0x8] sm:$0x1]
      %v8415 = vld [vmem:[%s1105 + $0xc] sm:$0xf]
      %v8416 = vld [vmem:[%s1105 + $0x10] sm:$0xf]
      %v8417 = vld [vmem:[%s1105 + $0x14] sm:$0x1]
      %v8418 = vld [vmem:[%s1105 + $0x18] sm:$0xf]
      %v8419 = vld [vmem:[%s1105 + $0x1c] sm:$0xf]
      %v8420 = vld [vmem:[%s1105 + $0x20] sm:$0x1]
      %v8421 = vld [vmem:[%s1105 + $0x24] sm:$0xf]
      %v8422 = vld [vmem:[%s1105 + $0x28] sm:$0xf]
      %v8423 = vld [vmem:[%s1105 + $0x2c] sm:$0x1]
      %v8424 = vld [vmem:[%s1105 + $0x30] sm:$0xf]
      %v8425 = vld [vmem:[%s1105 + $0x34] sm:$0xf]
      %v8426 = vld [vmem:[%s1105 + $0x38] sm:$0x1]
      %v8427 = vld [vmem:[%s1105 + $0x3c] sm:$0xf]
      %v8428 = vld [vmem:[%s1105 + $0x40] sm:$0xf]
      %v8429 = vld [vmem:[%s1105 + $0x44] sm:$0x1]
      %v8430 = vld [vmem:[%s1105 + $0x48] sm:$0xf]
      %v8431 = vld [vmem:[%s1105 + $0x4c] sm:$0xf]
      %v8432 = vld [vmem:[%s1105 + $0x50] sm:$0x1]
      %v8433 = vld [vmem:[%s1105 + $0x54] sm:$0xf]
      %v8434 = vld [vmem:[%s1105 + $0x58] sm:$0xf]
      %v8435 = vld [vmem:[%s1105 + $0x5c] sm:$0x1]
      %v8436 = vld [vmem:[%s1105 + $0x60] sm:$0xf]
      %v8437 = vld [vmem:[%s1105 + $0x64] sm:$0xf]
      %v8438 = vld [vmem:[%s1105 + $0x68] sm:$0x1]
      %v8439 = vld [vmem:[%s1105 + $0x6c] sm:$0xf]
      %v8440 = vld [vmem:[%s1105 + $0x70] sm:$0xf]
      %v8441 = vld [vmem:[%s1105 + $0x74] sm:$0x1]
      %v8442 = vld [vmem:[%s1105 + $0x78] sm:$0xf]
      %v8443 = vld [vmem:[%s1105 + $0x7c] sm:$0xf]
      %v8444 = vld [vmem:[%s1105 + $0x80] sm:$0x1]
      %v8445 = vld [vmem:[%s1105 + $0x84] sm:$0xf]
      %v8446 = vld [vmem:[%s1105 + $0x88] sm:$0xf]
      %v8447 = vld [vmem:[%s1105 + $0x8c] sm:$0x1]
      %v8448 = vld [vmem:[%s1105 + $0x90] sm:$0xf]
      %v8449 = vld [vmem:[%s1105 + $0x94] sm:$0xf]
      %v8450 = vld [vmem:[%s1105 + $0x98] sm:$0x1]
      %v8451 = vld [vmem:[%s1105 + $0x9c] sm:$0xf]
      %v8452 = vld [vmem:[%s1105 + $0xa0] sm:$0xf]
      %v8453 = vld [vmem:[%s1105 + $0xa4] sm:$0x1]
      %v8454 = vld [vmem:[%s1105 + $0xa8] sm:$0xf]
      %v8455 = vld [vmem:[%s1105 + $0xac] sm:$0xf]
      %v8456 = vld [vmem:[%s1105 + $0xb0] sm:$0x1]
      %v8457 = vld [vmem:[%s1105 + $0xb4] sm:$0xf]
      %v8458 = vld [vmem:[%s1105 + $0xb8] sm:$0xf]
      %v8459 = vld [vmem:[%s1105 + $0xbc] sm:$0x1]
      %v8461 = vshrl.u32 %v8412, 16
      %v8463 = vrot.slane %v8461, 4
      %v8464 = vshll.u32 %v8412, 16
      %v8466 = vrot.slane %v8464, 5
      %v8467 = vor.u32 %v8463, %v8466
      %v8468 = vrot.slane %v8467, 4
      %v8470 = vshll.u32 %v8413, 16
      %v8472 = vrot.slane %v8470, 5
      %v8473 = vsel %vm1274, %v8468, %v8472
      %v8474 = vshrl.u32 %v8413, 16
      %v8476 = vrot.slane %v8474, 4
      %v8477 = vor.u32 %v8476, %v8472
      %v8478 = vrot.slane %v8477, 4
      %v8480 = vshll.u32 %v8414, 16
      %v8482 = vrot.slane %v8480, 5
      %v8483 = vsel %vm1274, %v8478, %v8482
      %v8485 = vshrl.u32 %v8415, 16
      %v8487 = vrot.slane %v8485, 4
      %v8488 = vshll.u32 %v8415, 16
      %v8490 = vrot.slane %v8488, 5
      %v8491 = vor.u32 %v8487, %v8490
      %v8492 = vrot.slane %v8491, 4
      %v8494 = vshll.u32 %v8416, 16
      %v8496 = vrot.slane %v8494, 5
      %v8497 = vsel %vm1274, %v8492, %v8496
      %v8498 = vshrl.u32 %v8416, 16
      %v8500 = vrot.slane %v8498, 4
      %v8501 = vor.u32 %v8500, %v8496
      %v8502 = vrot.slane %v8501, 4
      %v8504 = vshll.u32 %v8417, 16
      %v8506 = vrot.slane %v8504, 5
      %v8507 = vsel %vm1274, %v8502, %v8506
      %v8509 = vshrl.u32 %v8418, 16
      %v8511 = vrot.slane %v8509, 4
      %v8512 = vshll.u32 %v8418, 16
      %v8514 = vrot.slane %v8512, 5
      %v8515 = vor.u32 %v8511, %v8514
      %v8516 = vrot.slane %v8515, 4
      %v8518 = vshll.u32 %v8419, 16
      %v8520 = vrot.slane %v8518, 5
      %v8521 = vsel %vm1274, %v8516, %v8520
      %v8522 = vshrl.u32 %v8419, 16
      %v8524 = vrot.slane %v8522, 4
      %v8525 = vor.u32 %v8524, %v8520
      %v8526 = vrot.slane %v8525, 4
      %v8528 = vshll.u32 %v8420, 16
      %v8530 = vrot.slane %v8528, 5
      %v8531 = vsel %vm1274, %v8526, %v8530
      %v8533 = vshrl.u32 %v8421, 16
      %v8535 = vrot.slane %v8533, 4
      %v8536 = vshll.u32 %v8421, 16
      %v8538 = vrot.slane %v8536, 5
      %v8539 = vor.u32 %v8535, %v8538
      %v8540 = vrot.slane %v8539, 4
      %v8542 = vshll.u32 %v8422, 16
      %v8544 = vrot.slane %v8542, 5
      %v8545 = vsel %vm1274, %v8540, %v8544
      %v8546 = vshrl.u32 %v8422, 16
      %v8548 = vrot.slane %v8546, 4
      %v8549 = vor.u32 %v8548, %v8544
      %v8550 = vrot.slane %v8549, 4
      %v8552 = vshll.u32 %v8423, 16
      %v8554 = vrot.slane %v8552, 5
      %v8555 = vsel %vm1274, %v8550, %v8554
      %v8557 = vshrl.u32 %v8424, 16
      %v8559 = vrot.slane %v8557, 4
      %v8560 = vshll.u32 %v8424, 16
      %v8562 = vrot.slane %v8560, 5
      %v8563 = vor.u32 %v8559, %v8562
      %v8564 = vrot.slane %v8563, 4
      %v8566 = vshll.u32 %v8425, 16
      %v8568 = vrot.slane %v8566, 5
      %v8569 = vsel %vm1274, %v8564, %v8568
      %v8570 = vshrl.u32 %v8425, 16
      %v8572 = vrot.slane %v8570, 4
      %v8573 = vor.u32 %v8572, %v8568
      %v8574 = vrot.slane %v8573, 4
      %v8576 = vshll.u32 %v8426, 16
      %v8578 = vrot.slane %v8576, 5
      %v8579 = vsel %vm1274, %v8574, %v8578
      %v8581 = vshrl.u32 %v8427, 16
      %v8583 = vrot.slane %v8581, 4
      %v8584 = vshll.u32 %v8427, 16
      %v8586 = vrot.slane %v8584, 5
      %v8587 = vor.u32 %v8583, %v8586
      %v8588 = vrot.slane %v8587, 4
      %v8590 = vshll.u32 %v8428, 16
      %v8592 = vrot.slane %v8590, 5
      %v8593 = vsel %vm1274, %v8588, %v8592
      %v8594 = vshrl.u32 %v8428, 16
      %v8596 = vrot.slane %v8594, 4
      %v8597 = vor.u32 %v8596, %v8592
      %v8598 = vrot.slane %v8597, 4
      %v8600 = vshll.u32 %v8429, 16
      %v8602 = vrot.slane %v8600, 5
      %v8603 = vsel %vm1274, %v8598, %v8602
      %v8605 = vshrl.u32 %v8430, 16
      %v8607 = vrot.slane %v8605, 4
      %v8608 = vshll.u32 %v8430, 16
      %v8610 = vrot.slane %v8608, 5
      %v8611 = vor.u32 %v8607, %v8610
      %v8612 = vrot.slane %v8611, 4
      %v8614 = vshll.u32 %v8431, 16
      %v8616 = vrot.slane %v8614, 5
      %v8617 = vsel %vm1274, %v8612, %v8616
      %v8618 = vshrl.u32 %v8431, 16
      %v8620 = vrot.slane %v8618, 4
      %v8621 = vor.u32 %v8620, %v8616
      %v8622 = vrot.slane %v8621, 4
      %v8624 = vshll.u32 %v8432, 16
      %v8626 = vrot.slane %v8624, 5
      %v8627 = vsel %vm1274, %v8622, %v8626
      %v8629 = vshrl.u32 %v8433, 16
      %v8631 = vrot.slane %v8629, 4
      %v8632 = vshll.u32 %v8433, 16
      %v8634 = vrot.slane %v8632, 5
      %v8635 = vor.u32 %v8631, %v8634
      %v8636 = vrot.slane %v8635, 4
      %v8638 = vshll.u32 %v8434, 16
      %v8640 = vrot.slane %v8638, 5
      %v8641 = vsel %vm1274, %v8636, %v8640
      %v8642 = vshrl.u32 %v8434, 16
      %v8644 = vrot.slane %v8642, 4
      %v8645 = vor.u32 %v8644, %v8640
      %v8646 = vrot.slane %v8645, 4
      %v8648 = vshll.u32 %v8435, 16
      %v8650 = vrot.slane %v8648, 5
      %v8651 = vsel %vm1274, %v8646, %v8650
      %v8653 = vshrl.u32 %v8436, 16
      %v8655 = vrot.slane %v8653, 4
      %v8656 = vshll.u32 %v8436, 16
      %v8658 = vrot.slane %v8656, 5
      %v8659 = vor.u32 %v8655, %v8658
      %v8660 = vrot.slane %v8659, 4
      %v8662 = vshll.u32 %v8437, 16
      %v8664 = vrot.slane %v8662, 5
      %v8665 = vsel %vm1274, %v8660, %v8664
      %v8666 = vshrl.u32 %v8437, 16
      %v8668 = vrot.slane %v8666, 4
      %v8669 = vor.u32 %v8668, %v8664
      %v8670 = vrot.slane %v8669, 4
      %v8672 = vshll.u32 %v8438, 16
      %v8674 = vrot.slane %v8672, 5
      %v8675 = vsel %vm1274, %v8670, %v8674
      %v8677 = vshrl.u32 %v8439, 16
      %v8679 = vrot.slane %v8677, 4
      %v8680 = vshll.u32 %v8439, 16
      %v8682 = vrot.slane %v8680, 5
      %v8683 = vor.u32 %v8679, %v8682
      %v8684 = vrot.slane %v8683, 4
      %v8686 = vshll.u32 %v8440, 16
      %v8688 = vrot.slane %v8686, 5
      %v8689 = vsel %vm1274, %v8684, %v8688
      %v8690 = vshrl.u32 %v8440, 16
      %v8692 = vrot.slane %v8690, 4
      %v8693 = vor.u32 %v8692, %v8688
      %v8694 = vrot.slane %v8693, 4
      %v8696 = vshll.u32 %v8441, 16
      %v8698 = vrot.slane %v8696, 5
      %v8699 = vsel %vm1274, %v8694, %v8698
      %v8701 = vshrl.u32 %v8442, 16
      %v8703 = vrot.slane %v8701, 4
      %v8704 = vshll.u32 %v8442, 16
      %v8706 = vrot.slane %v8704, 5
      %v8707 = vor.u32 %v8703, %v8706
      %v8708 = vrot.slane %v8707, 4
      %v8710 = vshll.u32 %v8443, 16
      %v8712 = vrot.slane %v8710, 5
      %v8713 = vsel %vm1274, %v8708, %v8712
      %v8714 = vshrl.u32 %v8443, 16
      %v8716 = vrot.slane %v8714, 4
      %v8717 = vor.u32 %v8716, %v8712
      %v8718 = vrot.slane %v8717, 4
      %v8720 = vshll.u32 %v8444, 16
      %v8722 = vrot.slane %v8720, 5
      %v8723 = vsel %vm1274, %v8718, %v8722
      %v8725 = vshrl.u32 %v8445, 16
      %v8727 = vrot.slane %v8725, 4
      %v8728 = vshll.u32 %v8445, 16
      %v8730 = vrot.slane %v8728, 5
      %v8731 = vor.u32 %v8727, %v8730
      %v8732 = vrot.slane %v8731, 4
      %v8734 = vshll.u32 %v8446, 16
      %v8736 = vrot.slane %v8734, 5
      %v8737 = vsel %vm1274, %v8732, %v8736
      %v8738 = vshrl.u32 %v8446, 16
      %v8740 = vrot.slane %v8738, 4
      %v8741 = vor.u32 %v8740, %v8736
      %v8742 = vrot.slane %v8741, 4
      %v8744 = vshll.u32 %v8447, 16
      %v8746 = vrot.slane %v8744, 5
      %v8747 = vsel %vm1274, %v8742, %v8746
      %v8749 = vshrl.u32 %v8448, 16
      %v8751 = vrot.slane %v8749, 4
      %v8752 = vshll.u32 %v8448, 16
      %v8754 = vrot.slane %v8752, 5
      %v8755 = vor.u32 %v8751, %v8754
      %v8756 = vrot.slane %v8755, 4
      %v8758 = vshll.u32 %v8449, 16
      %v8760 = vrot.slane %v8758, 5
      %v8761 = vsel %vm1274, %v8756, %v8760
      %v8762 = vshrl.u32 %v8449, 16
      %v8764 = vrot.slane %v8762, 4
      %v8765 = vor.u32 %v8764, %v8760
      %v8766 = vrot.slane %v8765, 4
      %v8768 = vshll.u32 %v8450, 16
      %v8770 = vrot.slane %v8768, 5
      %v8771 = vsel %vm1274, %v8766, %v8770
      %v8773 = vshrl.u32 %v8451, 16
      %v8775 = vrot.slane %v8773, 4
      %v8776 = vshll.u32 %v8451, 16
      %v8778 = vrot.slane %v8776, 5
      %v8779 = vor.u32 %v8775, %v8778
      %v8780 = vrot.slane %v8779, 4
      %v8782 = vshll.u32 %v8452, 16
      %v8784 = vrot.slane %v8782, 5
      %v8785 = vsel %vm1274, %v8780, %v8784
      %v8786 = vshrl.u32 %v8452, 16
      %v8788 = vrot.slane %v8786, 4
      %v8789 = vor.u32 %v8788, %v8784
      %v8790 = vrot.slane %v8789, 4
      %v8792 = vshll.u32 %v8453, 16
      %v8794 = vrot.slane %v8792, 5
      %v8795 = vsel %vm1274, %v8790, %v8794
      %v8797 = vshrl.u32 %v8454, 16
      %v8799 = vrot.slane %v8797, 4
      %v8800 = vshll.u32 %v8454, 16
      %v8802 = vrot.slane %v8800, 5
      %v8803 = vor.u32 %v8799, %v8802
      %v8804 = vrot.slane %v8803, 4
      %v8806 = vshll.u32 %v8455, 16
      %v8808 = vrot.slane %v8806, 5
      %v8809 = vsel %vm1274, %v8804, %v8808
      %v8810 = vshrl.u32 %v8455, 16
      %v8812 = vrot.slane %v8810, 4
      %v8813 = vor.u32 %v8812, %v8808
      %v8814 = vrot.slane %v8813, 4
      %v8816 = vshll.u32 %v8456, 16
      %v8818 = vrot.slane %v8816, 5
      %v8819 = vsel %vm1274, %v8814, %v8818
      %v8821 = vshrl.u32 %v8457, 16
      %v8823 = vrot.slane %v8821, 4
      %v8824 = vshll.u32 %v8457, 16
      %v8826 = vrot.slane %v8824, 5
      %v8827 = vor.u32 %v8823, %v8826
      %v8828 = vrot.slane %v8827, 4
      %v8830 = vshll.u32 %v8458, 16
      %v8832 = vrot.slane %v8830, 5
      %v8833 = vsel %vm1274, %v8828, %v8832
      %v8834 = vshrl.u32 %v8458, 16
      %v8836 = vrot.slane %v8834, 4
      %v8837 = vor.u32 %v8836, %v8832
      %v8838 = vrot.slane %v8837, 4
      %v8840 = vshll.u32 %v8459, 16
      %v8842 = vrot.slane %v8840, 5
      %v8843 = vsel %vm1274, %v8838, %v8842
      %s8844 = scalar_lea.vmem %s2, 16
      %v8845 = vld [vmem:[%s8844] sm:$0xf]
      %v8846 = vunpack.c.l.b16 %v8473
      %v8847 = vunpack.c.l.b16 %v8483
      %v8848 = vunpack.c.l.b16 %v8497
      %v8849 = vunpack.c.l.b16 %v8507
      %v8850 = vunpack.c.l.b16 %v8521
      %v8851 = vunpack.c.l.b16 %v8531
      %v8852 = vunpack.c.l.b16 %v8545
      %v8853 = vunpack.c.l.b16 %v8555
      %v8854 = vunpack.c.l.b16 %v8569
      %v8855 = vunpack.c.l.b16 %v8579
      %v8856 = vunpack.c.l.b16 %v8593
      %v8857 = vunpack.c.l.b16 %v8603
      %v8858 = vunpack.c.l.b16 %v8617
      %v8859 = vunpack.c.l.b16 %v8627
      %v8860 = vunpack.c.l.b16 %v8641
      %v8861 = vunpack.c.l.b16 %v8651
      %v8862 = vunpack.c.l.b16 %v8665
      %v8863 = vunpack.c.l.b16 %v8675
      %v8864 = vunpack.c.l.b16 %v8689
      %v8865 = vunpack.c.l.b16 %v8699
      %v8866 = vunpack.c.l.b16 %v8713
      %v8867 = vunpack.c.l.b16 %v8723
      %v8868 = vunpack.c.l.b16 %v8737
      %v8869 = vunpack.c.l.b16 %v8747
      %v8870 = vunpack.c.l.b16 %v8761
      %v8871 = vunpack.c.l.b16 %v8771
      %v8872 = vunpack.c.l.b16 %v8785
      %v8873 = vunpack.c.l.b16 %v8795
      %v8874 = vunpack.c.l.b16 %v8809
      %v8875 = vunpack.c.l.b16 %v8819
      %v8876 = vunpack.c.l.b16 %v8833
      %v8877 = vunpack.c.l.b16 %v8843
      %v8878 = vpack.c.b16 %v8847, %v8846
      %v8879 = vpack.c.b16 %v8849, %v8848
      %v8880 = vpack.c.b16 %v8851, %v8850
      %v8881 = vpack.c.b16 %v8853, %v8852
      %v8882 = vpack.c.b16 %v8855, %v8854
      %v8883 = vpack.c.b16 %v8857, %v8856
      %v8884 = vpack.c.b16 %v8859, %v8858
      %v8885 = vpack.c.b16 %v8861, %v8860
      %v8886 = vpack.c.b16 %v8863, %v8862
      %v8887 = vpack.c.b16 %v8865, %v8864
      %v8888 = vpack.c.b16 %v8867, %v8866
      %v8889 = vpack.c.b16 %v8869, %v8868
      %v8890 = vpack.c.b16 %v8871, %v8870
      %v8891 = vpack.c.b16 %v8873, %v8872
      %v8892 = vpack.c.b16 %v8875, %v8874
      %v8893 = vpack.c.b16 %v8877, %v8876
      %v8895 = vsel %vm5780, %v8878, 0
      %v8898 = vsel %vm5780, %v8879, 0
      %v8901 = vsel %vm5780, %v8880, 0
      %v8904 = vsel %vm5780, %v8881, 0
      %v8907 = vsel %vm5780, %v8882, 0
      %v8910 = vsel %vm5780, %v8883, 0
      %v8913 = vsel %vm5780, %v8884, 0
      %v8916 = vsel %vm5780, %v8885, 0
      %v8919 = vsel %vm5780, %v8886, 0
      %v8922 = vsel %vm5780, %v8887, 0
      %v8925 = vsel %vm5780, %v8888, 0
      %v8928 = vsel %vm5780, %v8889, 0
      %v8931 = vsel %vm5780, %v8890, 0
      %v8934 = vsel %vm5780, %v8891, 0
      %v8937 = vsel %vm5780, %v8892, 0
      %v8940 = vsel %vm5780, %v8893, 0
      %v8943 = vsel %vm7143, %v8845, 0
      %8945 = vmatprep.subr.bf16.mxu0 0
      %8946 = vmatpush1.bf16.msra.mxu0 %v8943
      %8947 = vmatprep.subr.bf16.mxu0 0
      %8948 = vmatpush1.bf16.msra.mxu0 0
      %8949 = vmatprep.subr.bf16.mxu0 0
      %8950 = vmatpush1.bf16.msra.mxu0 0
      %8951 = vmatprep.subr.bf16.mxu0 0
      %8952 = vmatpush1.bf16.msra.mxu0 0
      %8953 = vmatprep.subr.bf16.mxu0 0
      %8954 = vmatpush1.bf16.msra.mxu0 0
      %8955 = vmatprep.subr.bf16.mxu0 0
      %8956 = vmatpush1.bf16.msra.mxu0 0
      %8957 = vmatprep.subr.bf16.mxu0 0
      %8958 = vmatpush1.bf16.msra.mxu0 0
      %8959 = vmatprep.subr.bf16.mxu0 0
      %8960 = vmatpush1.bf16.msra.mxu0 0
      %8961 = vmatprep.subr.bf16.mxu0 0
      %8962 = vmatpush1.bf16.msra.mxu0 0
      %8963 = vmatprep.subr.bf16.mxu0 0
      %8964 = vmatpush1.bf16.msra.mxu0 0
      %8965 = vmatprep.subr.bf16.mxu0 0
      %8966 = vmatpush1.bf16.msra.mxu0 0
      %8967 = vmatprep.subr.bf16.mxu0 0
      %8968 = vmatpush1.bf16.msra.mxu0 0
      %8969 = vmatprep.subr.bf16.mxu0 0
      %8970 = vmatpush1.bf16.msra.mxu0 0
      %8971 = vmatprep.subr.bf16.mxu0 0
      %8972 = vmatpush1.bf16.msra.mxu0 0
      %8973 = vmatprep.subr.bf16.mxu0 0
      %8974 = vmatpush1.bf16.msra.mxu0 0
      %8975 = vmatprep.subr.bf16.mxu0 0
      %8976 = vmatpush1.bf16.msra.mxu0 0
      %8977 = vmatprep.mubr.bf16.mxu0 0
      %8978 = vmatmul.mubr.bf16.gmra.mrb[0].mxu0 %v8895
      %v8979 = vpop.f32.mrb[0].mxu0
      %v8980 = vadd.f32 0.0, %v8979
      %v8981 = vpop.f32.mrb[0].mxu0
      %v8982 = vpop.f32.mrb[0].mxu0
      %v8983 = vadd.f32 0.0, %v8982
      %v8984 = vpop.f32.mrb[0].mxu0
      %8985 = vmatprep.mubr.bf16.mxu0 0
      %8986 = vmatmul.mubr.bf16.gmra.mrb[0].mxu0 %v8898
      %v8987 = vpop.f32.mrb[0].mxu0
      %v8988 = vadd.f32 0.0, %v8987
      %v8989 = vpop.f32.mrb[0].mxu0
      %v8990 = vpop.f32.mrb[0].mxu0
      %v8991 = vadd.f32 0.0, %v8990
      %v8992 = vpop.f32.mrb[0].mxu0
      %8993 = vmatprep.mubr.bf16.mxu0 0
      %8994 = vmatmul.mubr.bf16.gmra.mrb[0].mxu0 %v8901
      %v8995 = vpop.f32.mrb[0].mxu0
      %v8996 = vadd.f32 0.0, %v8995
      %v8997 = vpop.f32.mrb[0].mxu0
      %v8998 = vpop.f32.mrb[0].mxu0
      %v8999 = vadd.f32 0.0, %v8998
      %v9000 = vpop.f32.mrb[0].mxu0
      %9001 = vmatprep.mubr.bf16.mxu0 0
      %9002 = vmatmul.mubr.bf16.gmra.mrb[0].mxu0 %v8904
      %v9003 = vpop.f32.mrb[0].mxu0
      %v9004 = vadd.f32 0.0, %v9003
      %v9005 = vpop.f32.mrb[0].mxu0
      %v9006 = vpop.f32.mrb[0].mxu0
      %v9007 = vadd.f32 0.0, %v9006
      %v9008 = vpop.f32.mrb[0].mxu0
      %9009 = vmatprep.mubr.bf16.mxu0 0
      %9010 = vmatmul.mubr.bf16.gmra.mrb[0].mxu0 %v8907
      %v9011 = vpop.f32.mrb[0].mxu0
      %v9012 = vadd.f32 0.0, %v9011
      %v9013 = vpop.f32.mrb[0].mxu0
      %v9014 = vpop.f32.mrb[0].mxu0
      %v9015 = vadd.f32 0.0, %v9014
      %v9016 = vpop.f32.mrb[0].mxu0
      %9017 = vmatprep.mubr.bf16.mxu0 0
      %9018 = vmatmul.mubr.bf16.gmra.mrb[0].mxu0 %v8910
      %v9019 = vpop.f32.mrb[0].mxu0
      %v9020 = vadd.f32 0.0, %v9019
      %v9021 = vpop.f32.mrb[0].mxu0
      %v9022 = vpop.f32.mrb[0].mxu0
      %v9023 = vadd.f32 0.0, %v9022
      %v9024 = vpop.f32.mrb[0].mxu0
      %9025 = vmatprep.mubr.bf16.mxu0 0
      %9026 = vmatmul.mubr.bf16.gmra.mrb[0].mxu0 %v8913
      %v9027 = vpop.f32.mrb[0].mxu0
      %v9028 = vadd.f32 0.0, %v9027
      %v9029 = vpop.f32.mrb[0].mxu0
      %v9030 = vpop.f32.mrb[0].mxu0
      %v9031 = vadd.f32 0.0, %v9030
      %v9032 = vpop.f32.mrb[0].mxu0
      %9033 = vmatprep.mubr.bf16.mxu0 0
      %9034 = vmatmul.mubr.bf16.gmra.mrb[0].mxu0 %v8916
      %v9035 = vpop.f32.mrb[0].mxu0
      %v9036 = vadd.f32 0.0, %v9035
      %v9037 = vpop.f32.mrb[0].mxu0
      %v9038 = vpop.f32.mrb[0].mxu0
      %v9039 = vadd.f32 0.0, %v9038
      %v9040 = vpop.f32.mrb[0].mxu0
      %9041 = vmatprep.mubr.bf16.mxu0 0
      %9042 = vmatmul.mubr.bf16.gmra.mrb[0].mxu0 %v8919
      %v9043 = vpop.f32.mrb[0].mxu0
      %v9044 = vadd.f32 0.0, %v9043
      %v9045 = vpop.f32.mrb[0].mxu0
      %v9046 = vpop.f32.mrb[0].mxu0
      %v9047 = vadd.f32 0.0, %v9046
      %v9048 = vpop.f32.mrb[0].mxu0
      %9049 = vmatprep.mubr.bf16.mxu0 0
      %9050 = vmatmul.mubr.bf16.gmra.mrb[0].mxu0 %v8922
      %v9051 = vpop.f32.mrb[0].mxu0
      %v9052 = vadd.f32 0.0, %v9051
      %v9053 = vpop.f32.mrb[0].mxu0
      %v9054 = vpop.f32.mrb[0].mxu0
      %v9055 = vadd.f32 0.0, %v9054
      %v9056 = vpop.f32.mrb[0].mxu0
      %9057 = vmatprep.mubr.bf16.mxu0 0
      %9058 = vmatmul.mubr.bf16.gmra.mrb[0].mxu0 %v8925
      %v9059 = vpop.f32.mrb[0].mxu0
      %v9060 = vadd.f32 0.0, %v9059
      %v9061 = vpop.f32.mrb[0].mxu0
      %v9062 = vpop.f32.mrb[0].mxu0
      %v9063 = vadd.f32 0.0, %v9062
      %v9064 = vpop.f32.mrb[0].mxu0
      %9065 = vmatprep.mubr.bf16.mxu0 0
      %9066 = vmatmul.mubr.bf16.gmra.mrb[0].mxu0 %v8928
      %v9067 = vpop.f32.mrb[0].mxu0
      %v9068 = vadd.f32 0.0, %v9067
      %v9069 = vpop.f32.mrb[0].mxu0
      %v9070 = vpop.f32.mrb[0].mxu0
      %v9071 = vadd.f32 0.0, %v9070
      %v9072 = vpop.f32.mrb[0].mxu0
      %9073 = vmatprep.mubr.bf16.mxu0 0
      %9074 = vmatmul.mubr.bf16.gmra.mrb[0].mxu0 %v8931
      %v9075 = vpop.f32.mrb[0].mxu0
      %v9076 = vadd.f32 0.0, %v9075
      %v9077 = vpop.f32.mrb[0].mxu0
      %v9078 = vpop.f32.mrb[0].mxu0
      %v9079 = vadd.f32 0.0, %v9078
      %v9080 = vpop.f32.mrb[0].mxu0
      %9081 = vmatprep.mubr.bf16.mxu0 0
      %9082 = vmatmul.mubr.bf16.gmra.mrb[0].mxu0 %v8934
      %v9083 = vpop.f32.mrb[0].mxu0
      %v9084 = vadd.f32 0.0, %v9083
      %v9085 = vpop.f32.mrb[0].mxu0
      %v9086 = vpop.f32.mrb[0].mxu0
      %v9087 = vadd.f32 0.0, %v9086
      %v9088 = vpop.f32.mrb[0].mxu0
      %9089 = vmatprep.mubr.bf16.mxu0 0
      %9090 = vmatmul.mubr.bf16.gmra.mrb[0].mxu0 %v8937
      %v9091 = vpop.f32.mrb[0].mxu0
      %v9092 = vadd.f32 0.0, %v9091
      %v9093 = vpop.f32.mrb[0].mxu0
      %v9094 = vpop.f32.mrb[0].mxu0
      %v9095 = vadd.f32 0.0, %v9094
      %v9096 = vpop.f32.mrb[0].mxu0
      %9097 = vmatprep.mubr.bf16.mxu0 0
      %9098 = vmatmul.mubr.bf16.gmra.mrb[0].mxu0 %v8940
      %v9099 = vpop.f32.mrb[0].mxu0
      %v9100 = vadd.f32 0.0, %v9099
      %v9101 = vpop.f32.mrb[0].mxu0
      %v9102 = vpop.f32.mrb[0].mxu0
      %v9103 = vadd.f32 0.0, %v9102
      %v9104 = vpop.f32.mrb[0].mxu0
      %9105 = vdwg.mxu0
      %v9106 = vadd.f32 %v8380, %v8980
      %v9107 = vadd.f32 %v8381, %v8983
      %v9108 = vadd.f32 %v8382, %v8988
      %v9109 = vadd.f32 %v8383, %v8991
      %v9110 = vadd.f32 %v8384, %v8996
      %v9111 = vadd.f32 %v8385, %v8999
      %v9112 = vadd.f32 %v8386, %v9004
      %v9113 = vadd.f32 %v8387, %v9007
      %v9114 = vadd.f32 %v8388, %v9012
      %v9115 = vadd.f32 %v8389, %v9015
      %v9116 = vadd.f32 %v8390, %v9020
      %v9117 = vadd.f32 %v8391, %v9023
      %v9118 = vadd.f32 %v8392, %v9028
      %v9119 = vadd.f32 %v8393, %v9031
      %v9120 = vadd.f32 %v8394, %v9036
      %v9121 = vadd.f32 %v8395, %v9039
      %v9122 = vadd.f32 %v8396, %v9044
      %v9123 = vadd.f32 %v8397, %v9047
      %v9124 = vadd.f32 %v8398, %v9052
      %v9125 = vadd.f32 %v8399, %v9055
      %v9126 = vadd.f32 %v8400, %v9060
      %v9127 = vadd.f32 %v8401, %v9063
      %v9128 = vadd.f32 %v8402, %v9068
      %v9129 = vadd.f32 %v8403, %v9071
      %v9130 = vadd.f32 %v8404, %v9076
      %v9131 = vadd.f32 %v8405, %v9079
      %v9132 = vadd.f32 %v8406, %v9084
      %v9133 = vadd.f32 %v8407, %v9087
      %v9134 = vadd.f32 %v8408, %v9092
      %v9135 = vadd.f32 %v8409, %v9095
      %v9136 = vadd.f32 %v8410, %v9100
      %v9137 = vadd.f32 %v8411, %v9103
      %v9138 = vld [vmem:[%s1105] sm:$0xe]
      %v9139 = vld [vmem:[%s1105 + $0xc] sm:$0xe]
      %v9140 = vld [vmem:[%s1105 + $0x18] sm:$0xe]
      %v9141 = vld [vmem:[%s1105 + $0x24] sm:$0xe]
      %v9142 = vld [vmem:[%s1105 + $0x30] sm:$0xe]
      %v9143 = vld [vmem:[%s1105 + $0x3c] sm:$0xe]
      %v9144 = vld [vmem:[%s1105 + $0x48] sm:$0xe]
      %v9145 = vld [vmem:[%s1105 + $0x54] sm:$0xe]
      %v9146 = vld [vmem:[%s1105 + $0x60] sm:$0xe]
      %v9147 = vld [vmem:[%s1105 + $0x6c] sm:$0xe]
      %v9148 = vld [vmem:[%s1105 + $0x78] sm:$0xe]
      %v9149 = vld [vmem:[%s1105 + $0x84] sm:$0xe]
      %v9150 = vld [vmem:[%s1105 + $0x90] sm:$0xe]
      %v9151 = vld [vmem:[%s1105 + $0x9c] sm:$0xe]
      %v9152 = vld [vmem:[%s1105 + $0xa8] sm:$0xe]
      %v9153 = vld [vmem:[%s1105 + $0xb4] sm:$0xe]
      %v9202 = vrot.slane %v9138, 5
      %v9203 = vrot.slane %v9202, 4
      %v9204 = vrot.slane %v8413, 5
      %v9205 = vsel %vm2264, %v9203, %v9204
      %v9206 = vrot.slane %v9204, 4
      %v9207 = vrot.slane %v8414, 5
      %v9208 = vsel %vm2264, %v9206, %v9207
      %v9209 = vrot.slane %v9139, 5
      %v9210 = vrot.slane %v9209, 4
      %v9211 = vrot.slane %v8416, 5
      %v9212 = vsel %vm2264, %v9210, %v9211
      %v9213 = vrot.slane %v9211, 4
      %v9214 = vrot.slane %v8417, 5
      %v9215 = vsel %vm2264, %v9213, %v9214
      %v9216 = vrot.slane %v9140, 5
      %v9217 = vrot.slane %v9216, 4
      %v9218 = vrot.slane %v8419, 5
      %v9219 = vsel %vm2264, %v9217, %v9218
      %v9220 = vrot.slane %v9218, 4
      %v9221 = vrot.slane %v8420, 5
      %v9222 = vsel %vm2264, %v9220, %v9221
      %v9223 = vrot.slane %v9141, 5
      %v9224 = vrot.slane %v9223, 4
      %v9225 = vrot.slane %v8422, 5
      %v9226 = vsel %vm2264, %v9224, %v9225
      %v9227 = vrot.slane %v9225, 4
      %v9228 = vrot.slane %v8423, 5
      %v9229 = vsel %vm2264, %v9227, %v9228
      %v9230 = vrot.slane %v9142, 5
      %v9231 = vrot.slane %v9230, 4
      %v9232 = vrot.slane %v8425, 5
      %v9233 = vsel %vm2264, %v9231, %v9232
      %v9234 = vrot.slane %v9232, 4
      %v9235 = vrot.slane %v8426, 5
      %v9236 = vsel %vm2264, %v9234, %v9235
      %v9237 = vrot.slane %v9143, 5
      %v9238 = vrot.slane %v9237, 4
      %v9239 = vrot.slane %v8428, 5
      %v9240 = vsel %vm2264, %v9238, %v9239
      %v9241 = vrot.slane %v9239, 4
      %v9242 = vrot.slane %v8429, 5
      %v9243 = vsel %vm2264, %v9241, %v9242
      %v9244 = vrot.slane %v9144, 5
      %v9245 = vrot.slane %v9244, 4
      %v9246 = vrot.slane %v8431, 5
      %v9247 = vsel %vm2264, %v9245, %v9246
      %v9248 = vrot.slane %v9246, 4
      %v9249 = vrot.slane %v8432, 5
      %v9250 = vsel %vm2264, %v9248, %v9249
      %v9251 = vrot.slane %v9145, 5
      %v9252 = vrot.slane %v9251, 4
      %v9253 = vrot.slane %v8434, 5
      %v9254 = vsel %vm2264, %v9252, %v9253
      %v9255 = vrot.slane %v9253, 4
      %v9256 = vrot.slane %v8435, 5
      %v9257 = vsel %vm2264, %v9255, %v9256
      %v9258 = vrot.slane %v9146, 5
      %v9259 = vrot.slane %v9258, 4
      %v9260 = vrot.slane %v8437, 5
      %v9261 = vsel %vm2264, %v9259, %v9260
      %v9262 = vrot.slane %v9260, 4
      %v9263 = vrot.slane %v8438, 5
      %v9264 = vsel %vm2264, %v9262, %v9263
      %v9265 = vrot.slane %v9147, 5
      %v9266 = vrot.slane %v9265, 4
      %v9267 = vrot.slane %v8440, 5
      %v9268 = vsel %vm2264, %v9266, %v9267
      %v9269 = vrot.slane %v9267, 4
      %v9270 = vrot.slane %v8441, 5
      %v9271 = vsel %vm2264, %v9269, %v9270
      %v9272 = vrot.slane %v9148, 5
      %v9273 = vrot.slane %v9272, 4
      %v9274 = vrot.slane %v8443, 5
      %v9275 = vsel %vm2264, %v9273, %v9274
      %v9276 = vrot.slane %v9274, 4
      %v9277 = vrot.slane %v8444, 5
      %v9278 = vsel %vm2264, %v9276, %v9277
      %v9279 = vrot.slane %v9149, 5
      %v9280 = vrot.slane %v9279, 4
      %v9281 = vrot.slane %v8446, 5
      %v9282 = vsel %vm2264, %v9280, %v9281
      %v9283 = vrot.slane %v9281, 4
      %v9284 = vrot.slane %v8447, 5
      %v9285 = vsel %vm2264, %v9283, %v9284
      %v9286 = vrot.slane %v9150, 5
      %v9287 = vrot.slane %v9286, 4
      %v9288 = vrot.slane %v8449, 5
      %v9289 = vsel %vm2264, %v9287, %v9288
      %v9290 = vrot.slane %v9288, 4
      %v9291 = vrot.slane %v8450, 5
      %v9292 = vsel %vm2264, %v9290, %v9291
      %v9293 = vrot.slane %v9151, 5
      %v9294 = vrot.slane %v9293, 4
      %v9295 = vrot.slane %v8452, 5
      %v9296 = vsel %vm2264, %v9294, %v9295
      %v9297 = vrot.slane %v9295, 4
      %v9298 = vrot.slane %v8453, 5
      %v9299 = vsel %vm2264, %v9297, %v9298
      %v9300 = vrot.slane %v9152, 5
      %v9301 = vrot.slane %v9300, 4
      %v9302 = vrot.slane %v8455, 5
      %v9303 = vsel %vm2264, %v9301, %v9302
      %v9304 = vrot.slane %v9302, 4
      %v9305 = vrot.slane %v8456, 5
      %v9306 = vsel %vm2264, %v9304, %v9305
      %v9307 = vrot.slane %v9153, 5
      %v9308 = vrot.slane %v9307, 4
      %v9309 = vrot.slane %v8458, 5
      %v9310 = vsel %vm2264, %v9308, %v9309
      %v9311 = vrot.slane %v9309, 4
      %v9312 = vrot.slane %v8459, 5
      %v9313 = vsel %vm2264, %v9311, %v9312
      %s9314 = scalar_lea.vmem %s2, 20
      %v9315 = vld [vmem:[%s9314] sm:$0xf]
      %v9316 = vunpack.c.l.b16 %v9205
      %v9317 = vunpack.c.l.b16 %v9208
      %v9318 = vunpack.c.l.b16 %v9212
      %v9319 = vunpack.c.l.b16 %v9215
      %v9320 = vunpack.c.l.b16 %v9219
      %v9321 = vunpack.c.l.b16 %v9222
      %v9322 = vunpack.c.l.b16 %v9226
      %v9323 = vunpack.c.l.b16 %v9229
      %v9324 = vunpack.c.l.b16 %v9233
      %v9325 = vunpack.c.l.b16 %v9236
      %v9326 = vunpack.c.l.b16 %v9240
      %v9327 = vunpack.c.l.b16 %v9243
      %v9328 = vunpack.c.l.b16 %v9247
      %v9329 = vunpack.c.l.b16 %v9250
      %v9330 = vunpack.c.l.b16 %v9254
      %v9331 = vunpack.c.l.b16 %v9257
      %v9332 = vunpack.c.l.b16 %v9261
      %v9333 = vunpack.c.l.b16 %v9264
      %v9334 = vunpack.c.l.b16 %v9268
      %v9335 = vunpack.c.l.b16 %v9271
      %v9336 = vunpack.c.l.b16 %v9275
      %v9337 = vunpack.c.l.b16 %v9278
      %v9338 = vunpack.c.l.b16 %v9282
      %v9339 = vunpack.c.l.b16 %v9285
      %v9340 = vunpack.c.l.b16 %v9289
      %v9341 = vunpack.c.l.b16 %v9292
      %v9342 = vunpack.c.l.b16 %v9296
      %v9343 = vunpack.c.l.b16 %v9299
      %v9344 = vunpack.c.l.b16 %v9303
      %v9345 = vunpack.c.l.b16 %v9306
      %v9346 = vunpack.c.l.b16 %v9310
      %v9347 = vunpack.c.l.b16 %v9313
      %v9348 = vpack.c.b16 %v9317, %v9316
      %v9349 = vpack.c.b16 %v9319, %v9318
      %v9350 = vpack.c.b16 %v9321, %v9320
      %v9351 = vpack.c.b16 %v9323, %v9322
      %v9352 = vpack.c.b16 %v9325, %v9324
      %v9353 = vpack.c.b16 %v9327, %v9326
      %v9354 = vpack.c.b16 %v9329, %v9328
      %v9355 = vpack.c.b16 %v9331, %v9330
      %v9356 = vpack.c.b16 %v9333, %v9332
      %v9357 = vpack.c.b16 %v9335, %v9334
      %v9358 = vpack.c.b16 %v9337, %v9336
      %v9359 = vpack.c.b16 %v9339, %v9338
      %v9360 = vpack.c.b16 %v9341, %v9340
      %v9361 = vpack.c.b16 %v9343, %v9342
      %v9362 = vpack.c.b16 %v9345, %v9344
      %v9363 = vpack.c.b16 %v9347, %v9346
      %v9365 = vsel %vm5780, %v9348, 0
      %v9368 = vsel %vm5780, %v9349, 0
      %v9371 = vsel %vm5780, %v9350, 0
      %v9374 = vsel %vm5780, %v9351, 0
      %v9377 = vsel %vm5780, %v9352, 0
      %v9380 = vsel %vm5780, %v9353, 0
      %v9383 = vsel %vm5780, %v9354, 0
      %v9386 = vsel %vm5780, %v9355, 0
      %v9389 = vsel %vm5780, %v9356, 0
      %v9392 = vsel %vm5780, %v9357, 0
      %v9395 = vsel %vm5780, %v9358, 0
      %v9398 = vsel %vm5780, %v9359, 0
      %v9401 = vsel %vm5780, %v9360, 0
      %v9404 = vsel %vm5780, %v9361, 0
      %v9407 = vsel %vm5780, %v9362, 0
      %v9410 = vsel %vm5780, %v9363, 0
      %v9413 = vsel %vm7143, %v9315, 0
      %9415 = vmatprep.subr.bf16.mxu0 0
      %9416 = vmatpush1.bf16.msra.mxu0 %v9413
      %9417 = vmatprep.subr.bf16.mxu0 0
      %9418 = vmatpush1.bf16.msra.mxu0 0
      %9419 = vmatprep.subr.bf16.mxu0 0
      %9420 = vmatpush1.bf16.msra.mxu0 0
      %9421 = vmatprep.subr.bf16.mxu0 0
      %9422 = vmatpush1.bf16.msra.mxu0 0
      %9423 = vmatprep.subr.bf16.mxu0 0
      %9424 = vmatpush1.bf16.msra.mxu0 0
      %9425 = vmatprep.subr.bf16.mxu0 0
      %9426 = vmatpush1.bf16.msra.mxu0 0
      %9427 = vmatprep.subr.bf16.mxu0 0
      %9428 = vmatpush1.bf16.msra.mxu0 0
      %9429 = vmatprep.subr.bf16.mxu0 0
      %9430 = vmatpush1.bf16.msra.mxu0 0
      %9431 = vmatprep.subr.bf16.mxu0 0
      %9432 = vmatpush1.bf16.msra.mxu0 0
      %9433 = vmatprep.subr.bf16.mxu0 0
      %9434 = vmatpush1.bf16.msra.mxu0 0
      %9435 = vmatprep.subr.bf16.mxu0 0
      %9436 = vmatpush1.bf16.msra.mxu0 0
      %9437 = vmatprep.subr.bf16.mxu0 0
      %9438 = vmatpush1.bf16.msra.mxu0 0
      %9439 = vmatprep.subr.bf16.mxu0 0
      %9440 = vmatpush1.bf16.msra.mxu0 0
      %9441 = vmatprep.subr.bf16.mxu0 0
      %9442 = vmatpush1.bf16.msra.mxu0 0
      %9443 = vmatprep.subr.bf16.mxu0 0
      %9444 = vmatpush1.bf16.msra.mxu0 0
      %9445 = vmatprep.subr.bf16.mxu0 0
      %9446 = vmatpush1.bf16.msra.mxu0 0
      %9447 = vmatprep.mubr.bf16.mxu0 0
      %9448 = vmatmul.mubr.bf16.gmra.mrb[0].mxu0 %v9365
      %v9449 = vpop.f32.mrb[0].mxu0
      %v9450 = vadd.f32 0.0, %v9449
      %v9451 = vpop.f32.mrb[0].mxu0
      %v9452 = vpop.f32.mrb[0].mxu0
      %v9453 = vadd.f32 0.0, %v9452
      %v9454 = vpop.f32.mrb[0].mxu0
      %9455 = vmatprep.mubr.bf16.mxu0 0
      %9456 = vmatmul.mubr.bf16.gmra.mrb[0].mxu0 %v9368
      %v9457 = vpop.f32.mrb[0].mxu0
      %v9458 = vadd.f32 0.0, %v9457
      %v9459 = vpop.f32.mrb[0].mxu0
      %v9460 = vpop.f32.mrb[0].mxu0
      %v9461 = vadd.f32 0.0, %v9460
      %v9462 = vpop.f32.mrb[0].mxu0
      %9463 = vmatprep.mubr.bf16.mxu0 0
      %9464 = vmatmul.mubr.bf16.gmra.mrb[0].mxu0 %v9371
      %v9465 = vpop.f32.mrb[0].mxu0
      %v9466 = vadd.f32 0.0, %v9465
      %v9467 = vpop.f32.mrb[0].mxu0
      %v9468 = vpop.f32.mrb[0].mxu0
      %v9469 = vadd.f32 0.0, %v9468
      %v9470 = vpop.f32.mrb[0].mxu0
      %9471 = vmatprep.mubr.bf16.mxu0 0
      %9472 = vmatmul.mubr.bf16.gmra.mrb[0].mxu0 %v9374
      %v9473 = vpop.f32.mrb[0].mxu0
      %v9474 = vadd.f32 0.0, %v9473
      %v9475 = vpop.f32.mrb[0].mxu0
      %v9476 = vpop.f32.mrb[0].mxu0
      %v9477 = vadd.f32 0.0, %v9476
      %v9478 = vpop.f32.mrb[0].mxu0
      %9479 = vmatprep.mubr.bf16.mxu0 0
      %9480 = vmatmul.mubr.bf16.gmra.mrb[0].mxu0 %v9377
      %v9481 = vpop.f32.mrb[0].mxu0
      %v9482 = vadd.f32 0.0, %v9481
      %v9483 = vpop.f32.mrb[0].mxu0
      %v9484 = vpop.f32.mrb[0].mxu0
      %v9485 = vadd.f32 0.0, %v9484
      %v9486 = vpop.f32.mrb[0].mxu0
      %9487 = vmatprep.mubr.bf16.mxu0 0
      %9488 = vmatmul.mubr.bf16.gmra.mrb[0].mxu0 %v9380
      %v9489 = vpop.f32.mrb[0].mxu0
      %v9490 = vadd.f32 0.0, %v9489
      %v9491 = vpop.f32.mrb[0].mxu0
      %v9492 = vpop.f32.mrb[0].mxu0
      %v9493 = vadd.f32 0.0, %v9492
      %v9494 = vpop.f32.mrb[0].mxu0
      %9495 = vmatprep.mubr.bf16.mxu0 0
      %9496 = vmatmul.mubr.bf16.gmra.mrb[0].mxu0 %v9383
      %v9497 = vpop.f32.mrb[0].mxu0
      %v9498 = vadd.f32 0.0, %v9497
      %v9499 = vpop.f32.mrb[0].mxu0
      %v9500 = vpop.f32.mrb[0].mxu0
      %v9501 = vadd.f32 0.0, %v9500
      %v9502 = vpop.f32.mrb[0].mxu0
      %9503 = vmatprep.mubr.bf16.mxu0 0
      %9504 = vmatmul.mubr.bf16.gmra.mrb[0].mxu0 %v9386
      %v9505 = vpop.f32.mrb[0].mxu0
      %v9506 = vadd.f32 0.0, %v9505
      %v9507 = vpop.f32.mrb[0].mxu0
      %v9508 = vpop.f32.mrb[0].mxu0
      %v9509 = vadd.f32 0.0, %v9508
      %v9510 = vpop.f32.mrb[0].mxu0
      %9511 = vmatprep.mubr.bf16.mxu0 0
      %9512 = vmatmul.mubr.bf16.gmra.mrb[0].mxu0 %v9389
      %v9513 = vpop.f32.mrb[0].mxu0
      %v9514 = vadd.f32 0.0, %v9513
      %v9515 = vpop.f32.mrb[0].mxu0
      %v9516 = vpop.f32.mrb[0].mxu0
      %v9517 = vadd.f32 0.0, %v9516
      %v9518 = vpop.f32.mrb[0].mxu0
      %9519 = vmatprep.mubr.bf16.mxu0 0
      %9520 = vmatmul.mubr.bf16.gmra.mrb[0].mxu0 %v9392
      %v9521 = vpop.f32.mrb[0].mxu0
      %v9522 = vadd.f32 0.0, %v9521
      %v9523 = vpop.f32.mrb[0].mxu0
      %v9524 = vpop.f32.mrb[0].mxu0
      %v9525 = vadd.f32 0.0, %v9524
      %v9526 = vpop.f32.mrb[0].mxu0
      %9527 = vmatprep.mubr.bf16.mxu0 0
      %9528 = vmatmul.mubr.bf16.gmra.mrb[0].mxu0 %v9395
      %v9529 = vpop.f32.mrb[0].mxu0
      %v9530 = vadd.f32 0.0, %v9529
      %v9531 = vpop.f32.mrb[0].mxu0
      %v9532 = vpop.f32.mrb[0].mxu0
      %v9533 = vadd.f32 0.0, %v9532
      %v9534 = vpop.f32.mrb[0].mxu0
      %9535 = vmatprep.mubr.bf16.mxu0 0
      %9536 = vmatmul.mubr.bf16.gmra.mrb[0].mxu0 %v9398
      %v9537 = vpop.f32.mrb[0].mxu0
      %v9538 = vadd.f32 0.0, %v9537
      %v9539 = vpop.f32.mrb[0].mxu0
      %v9540 = vpop.f32.mrb[0].mxu0
      %v9541 = vadd.f32 0.0, %v9540
      %v9542 = vpop.f32.mrb[0].mxu0
      %9543 = vmatprep.mubr.bf16.mxu0 0
      %9544 = vmatmul.mubr.bf16.gmra.mrb[0].mxu0 %v9401
      %v9545 = vpop.f32.mrb[0].mxu0
      %v9546 = vadd.f32 0.0, %v9545
      %v9547 = vpop.f32.mrb[0].mxu0
      %v9548 = vpop.f32.mrb[0].mxu0
      %v9549 = vadd.f32 0.0, %v9548
      %v9550 = vpop.f32.mrb[0].mxu0
      %9551 = vmatprep.mubr.bf16.mxu0 0
      %9552 = vmatmul.mubr.bf16.gmra.mrb[0].mxu0 %v9404
      %v9553 = vpop.f32.mrb[0].mxu0
      %v9554 = vadd.f32 0.0, %v9553
      %v9555 = vpop.f32.mrb[0].mxu0
      %v9556 = vpop.f32.mrb[0].mxu0
      %v9557 = vadd.f32 0.0, %v9556
      %v9558 = vpop.f32.mrb[0].mxu0
      %9559 = vmatprep.mubr.bf16.mxu0 0
      %9560 = vmatmul.mubr.bf16.gmra.mrb[0].mxu0 %v9407
      %v9561 = vpop.f32.mrb[0].mxu0
      %v9562 = vadd.f32 0.0, %v9561
      %v9563 = vpop.f32.mrb[0].mxu0
      %v9564 = vpop.f32.mrb[0].mxu0
      %v9565 = vadd.f32 0.0, %v9564
      %v9566 = vpop.f32.mrb[0].mxu0
      %9567 = vmatprep.mubr.bf16.mxu0 0
      %9568 = vmatmul.mubr.bf16.gmra.mrb[0].mxu0 %v9410
      %v9569 = vpop.f32.mrb[0].mxu0
      %v9570 = vadd.f32 0.0, %v9569
      %v9571 = vpop.f32.mrb[0].mxu0
      %v9572 = vpop.f32.mrb[0].mxu0
      %v9573 = vadd.f32 0.0, %v9572
      %v9574 = vpop.f32.mrb[0].mxu0
      %9575 = vdwg.mxu0
      %v9576 = vadd.f32 %v9106, %v9450
      %v9577 = vadd.f32 %v9107, %v9453
      %v9578 = vadd.f32 %v9108, %v9458
      %v9579 = vadd.f32 %v9109, %v9461
      %v9580 = vadd.f32 %v9110, %v9466
      %v9581 = vadd.f32 %v9111, %v9469
      %v9582 = vadd.f32 %v9112, %v9474
      %v9583 = vadd.f32 %v9113, %v9477
      %v9584 = vadd.f32 %v9114, %v9482
      %v9585 = vadd.f32 %v9115, %v9485
      %v9586 = vadd.f32 %v9116, %v9490
      %v9587 = vadd.f32 %v9117, %v9493
      %v9588 = vadd.f32 %v9118, %v9498
      %v9589 = vadd.f32 %v9119, %v9501
      %v9590 = vadd.f32 %v9120, %v9506
      %v9591 = vadd.f32 %v9121, %v9509
      %v9592 = vadd.f32 %v9122, %v9514
      %v9593 = vadd.f32 %v9123, %v9517
      %v9594 = vadd.f32 %v9124, %v9522
      %v9595 = vadd.f32 %v9125, %v9525
      %v9596 = vadd.f32 %v9126, %v9530
      %v9597 = vadd.f32 %v9127, %v9533
      %v9598 = vadd.f32 %v9128, %v9538
      %v9599 = vadd.f32 %v9129, %v9541
      %v9600 = vadd.f32 %v9130, %v9546
      %v9601 = vadd.f32 %v9131, %v9549
      %v9602 = vadd.f32 %v9132, %v9554
      %v9603 = vadd.f32 %v9133, %v9557
      %v9604 = vadd.f32 %v9134, %v9562
      %v9605 = vadd.f32 %v9135, %v9565
      %v9606 = vadd.f32 %v9136, %v9570
      %v9607 = vadd.f32 %v9137, %v9573
      %v9608 = vld [vmem:[%s4225] sm:$0xf]
      %v9609 = vld [vmem:[%s4225 + $0x4] sm:$0xf]
      %v9610 = vld [vmem:[%s4225 + $0xc] sm:$0xf]
      %v9611 = vld [vmem:[%s4225 + $0x10] sm:$0xf]
      %v9612 = vld [vmem:[%s4225 + $0x18] sm:$0xf]
      %v9613 = vld [vmem:[%s4225 + $0x1c] sm:$0xf]
      %v9614 = vld [vmem:[%s4225 + $0x24] sm:$0xf]
      %v9615 = vld [vmem:[%s4225 + $0x28] sm:$0xf]
      %v9616 = vld [vmem:[%s4225 + $0x30] sm:$0xf]
      %v9617 = vld [vmem:[%s4225 + $0x34] sm:$0xf]
      %v9618 = vld [vmem:[%s4225 + $0x3c] sm:$0xf]
      %v9619 = vld [vmem:[%s4225 + $0x40] sm:$0xf]
      %v9620 = vld [vmem:[%s4225 + $0x48] sm:$0xf]
      %v9621 = vld [vmem:[%s4225 + $0x4c] sm:$0xf]
      %v9622 = vld [vmem:[%s4225 + $0x54] sm:$0xf]
      %v9623 = vld [vmem:[%s4225 + $0x58] sm:$0xf]
      %v9624 = vld [vmem:[%s4225 + $0x60] sm:$0xf]
      %v9625 = vld [vmem:[%s4225 + $0x64] sm:$0xf]
      %v9626 = vld [vmem:[%s4225 + $0x6c] sm:$0xf]
      %v9627 = vld [vmem:[%s4225 + $0x70] sm:$0xf]
      %v9628 = vld [vmem:[%s4225 + $0x78] sm:$0xf]
      %v9629 = vld [vmem:[%s4225 + $0x7c] sm:$0xf]
      %v9630 = vld [vmem:[%s4225 + $0x84] sm:$0xf]
      %v9631 = vld [vmem:[%s4225 + $0x88] sm:$0xf]
      %v9632 = vld [vmem:[%s4225 + $0x90] sm:$0xf]
      %v9633 = vld [vmem:[%s4225 + $0x94] sm:$0xf]
      %v9634 = vld [vmem:[%s4225 + $0x9c] sm:$0xf]
      %v9635 = vld [vmem:[%s4225 + $0xa0] sm:$0xf]
      %v9636 = vld [vmem:[%s4225 + $0xa8] sm:$0xf]
      %v9637 = vld [vmem:[%s4225 + $0xac] sm:$0xf]
      %v9638 = vld [vmem:[%s4225 + $0xb4] sm:$0xf]
      %v9639 = vld [vmem:[%s4225 + $0xb8] sm:$0xf]
      %s9640 = scalar_lea.vmem %s2, 24
      %v9641 = vld [vmem:[%s9640] sm:$0xf]
      %v9674 = vunpack.c.l.b16 %v9608
      %v9675 = vunpack.c.l.b16 %v9609
      %v9676 = vunpack.c.l.b16 %v9610
      %v9677 = vunpack.c.l.b16 %v9611
      %v9678 = vunpack.c.l.b16 %v9612
      %v9679 = vunpack.c.l.b16 %v9613
      %v9680 = vunpack.c.l.b16 %v9614
      %v9681 = vunpack.c.l.b16 %v9615
      %v9682 = vunpack.c.l.b16 %v9616
      %v9683 = vunpack.c.l.b16 %v9617
      %v9684 = vunpack.c.l.b16 %v9618
      %v9685 = vunpack.c.l.b16 %v9619
      %v9686 = vunpack.c.l.b16 %v9620
      %v9687 = vunpack.c.l.b16 %v9621
      %v9688 = vunpack.c.l.b16 %v9622
      %v9689 = vunpack.c.l.b16 %v9623
      %v9690 = vunpack.c.l.b16 %v9624
      %v9691 = vunpack.c.l.b16 %v9625
      %v9692 = vunpack.c.l.b16 %v9626
      %v9693 = vunpack.c.l.b16 %v9627
      %v9694 = vunpack.c.l.b16 %v9628
      %v9695 = vunpack.c.l.b16 %v9629
      %v9696 = vunpack.c.l.b16 %v9630
      %v9697 = vunpack.c.l.b16 %v9631
      %v9698 = vunpack.c.l.b16 %v9632
      %v9699 = vunpack.c.l.b16 %v9633
      %v9700 = vunpack.c.l.b16 %v9634
      %v9701 = vunpack.c.l.b16 %v9635
      %v9702 = vunpack.c.l.b16 %v9636
      %v9703 = vunpack.c.l.b16 %v9637
      %v9704 = vunpack.c.l.b16 %v9638
      %v9705 = vunpack.c.l.b16 %v9639
      %v9706 = vpack.c.b16 %v9675, %v9674
      %v9707 = vpack.c.b16 %v9677, %v9676
      %v9708 = vpack.c.b16 %v9679, %v9678
      %v9709 = vpack.c.b16 %v9681, %v9680
      %v9710 = vpack.c.b16 %v9683, %v9682
      %v9711 = vpack.c.b16 %v9685, %v9684
      %v9712 = vpack.c.b16 %v9687, %v9686
      %v9713 = vpack.c.b16 %v9689, %v9688
      %v9714 = vpack.c.b16 %v9691, %v9690
      %v9715 = vpack.c.b16 %v9693, %v9692
      %v9716 = vpack.c.b16 %v9695, %v9694
      %v9717 = vpack.c.b16 %v9697, %v9696
      %v9718 = vpack.c.b16 %v9699, %v9698
      %v9719 = vpack.c.b16 %v9701, %v9700
      %v9720 = vpack.c.b16 %v9703, %v9702
      %v9721 = vpack.c.b16 %v9705, %v9704
      %v9723 = vsel %vm5780, %v9706, 0
      %v9726 = vsel %vm5780, %v9707, 0
      %v9729 = vsel %vm5780, %v9708, 0
      %v9732 = vsel %vm5780, %v9709, 0
      %v9735 = vsel %vm5780, %v9710, 0
      %v9738 = vsel %vm5780, %v9711, 0
      %v9741 = vsel %vm5780, %v9712, 0
      %v9744 = vsel %vm5780, %v9713, 0
      %v9747 = vsel %vm5780, %v9714, 0
      %v9750 = vsel %vm5780, %v9715, 0
      %v9753 = vsel %vm5780, %v9716, 0
      %v9756 = vsel %vm5780, %v9717, 0
      %v9759 = vsel %vm5780, %v9718, 0
      %v9762 = vsel %vm5780, %v9719, 0
      %v9765 = vsel %vm5780, %v9720, 0
      %v9768 = vsel %vm5780, %v9721, 0
      %v9771 = vsel %vm7143, %v9641, 0
      %9773 = vmatprep.subr.bf16.mxu0 0
      %9774 = vmatpush1.bf16.msra.mxu0 %v9771
      %9775 = vmatprep.subr.bf16.mxu0 0
      %9776 = vmatpush1.bf16.msra.mxu0 0
      %9777 = vmatprep.subr.bf16.mxu0 0
      %9778 = vmatpush1.bf16.msra.mxu0 0
      %9779 = vmatprep.subr.bf16.mxu0 0
      %9780 = vmatpush1.bf16.msra.mxu0 0
      %9781 = vmatprep.subr.bf16.mxu0 0
      %9782 = vmatpush1.bf16.msra.mxu0 0
      %9783 = vmatprep.subr.bf16.mxu0 0
      %9784 = vmatpush1.bf16.msra.mxu0 0
      %9785 = vmatprep.subr.bf16.mxu0 0
      %9786 = vmatpush1.bf16.msra.mxu0 0
      %9787 = vmatprep.subr.bf16.mxu0 0
      %9788 = vmatpush1.bf16.msra.mxu0 0
      %9789 = vmatprep.subr.bf16.mxu0 0
      %9790 = vmatpush1.bf16.msra.mxu0 0
      %9791 = vmatprep.subr.bf16.mxu0 0
      %9792 = vmatpush1.bf16.msra.mxu0 0
      %9793 = vmatprep.subr.bf16.mxu0 0
      %9794 = vmatpush1.bf16.msra.mxu0 0
      %9795 = vmatprep.subr.bf16.mxu0 0
      %9796 = vmatpush1.bf16.msra.mxu0 0
      %9797 = vmatprep.subr.bf16.mxu0 0
      %9798 = vmatpush1.bf16.msra.mxu0 0
      %9799 = vmatprep.subr.bf16.mxu0 0
      %9800 = vmatpush1.bf16.msra.mxu0 0
      %9801 = vmatprep.subr.bf16.mxu0 0
      %9802 = vmatpush1.bf16.msra.mxu0 0
      %9803 = vmatprep.subr.bf16.mxu0 0
      %9804 = vmatpush1.bf16.msra.mxu0 0
      %9805 = vmatprep.mubr.bf16.mxu0 0
      %9806 = vmatmul.mubr.bf16.gmra.mrb[0].mxu0 %v9723
      %v9807 = vpop.f32.mrb[0].mxu0
      %v9808 = vadd.f32 0.0, %v9807
      %v9809 = vpop.f32.mrb[0].mxu0
      %v9810 = vpop.f32.mrb[0].mxu0
      %v9811 = vadd.f32 0.0, %v9810
      %v9812 = vpop.f32.mrb[0].mxu0
      %9813 = vmatprep.mubr.bf16.mxu0 0
      %9814 = vmatmul.mubr.bf16.gmra.mrb[0].mxu0 %v9726
      %v9815 = vpop.f32.mrb[0].mxu0
      %v9816 = vadd.f32 0.0, %v9815
      %v9817 = vpop.f32.mrb[0].mxu0
      %v9818 = vpop.f32.mrb[0].mxu0
      %v9819 = vadd.f32 0.0, %v9818
      %v9820 = vpop.f32.mrb[0].mxu0
      %9821 = vmatprep.mubr.bf16.mxu0 0
      %9822 = vmatmul.mubr.bf16.gmra.mrb[0].mxu0 %v9729
      %v9823 = vpop.f32.mrb[0].mxu0
      %v9824 = vadd.f32 0.0, %v9823
      %v9825 = vpop.f32.mrb[0].mxu0
      %v9826 = vpop.f32.mrb[0].mxu0
      %v9827 = vadd.f32 0.0, %v9826
      %v9828 = vpop.f32.mrb[0].mxu0
      %9829 = vmatprep.mubr.bf16.mxu0 0
      %9830 = vmatmul.mubr.bf16.gmra.mrb[0].mxu0 %v9732
      %v9831 = vpop.f32.mrb[0].mxu0
      %v9832 = vadd.f32 0.0, %v9831
      %v9833 = vpop.f32.mrb[0].mxu0
      %v9834 = vpop.f32.mrb[0].mxu0
      %v9835 = vadd.f32 0.0, %v9834
      %v9836 = vpop.f32.mrb[0].mxu0
      %9837 = vmatprep.mubr.bf16.mxu0 0
      %9838 = vmatmul.mubr.bf16.gmra.mrb[0].mxu0 %v9735
      %v9839 = vpop.f32.mrb[0].mxu0
      %v9840 = vadd.f32 0.0, %v9839
      %v9841 = vpop.f32.mrb[0].mxu0
      %v9842 = vpop.f32.mrb[0].mxu0
      %v9843 = vadd.f32 0.0, %v9842
      %v9844 = vpop.f32.mrb[0].mxu0
      %9845 = vmatprep.mubr.bf16.mxu0 0
      %9846 = vmatmul.mubr.bf16.gmra.mrb[0].mxu0 %v9738
      %v9847 = vpop.f32.mrb[0].mxu0
      %v9848 = vadd.f32 0.0, %v9847
      %v9849 = vpop.f32.mrb[0].mxu0
      %v9850 = vpop.f32.mrb[0].mxu0
      %v9851 = vadd.f32 0.0, %v9850
      %v9852 = vpop.f32.mrb[0].mxu0
      %9853 = vmatprep.mubr.bf16.mxu0 0
      %9854 = vmatmul.mubr.bf16.gmra.mrb[0].mxu0 %v9741
      %v9855 = vpop.f32.mrb[0].mxu0
      %v9856 = vadd.f32 0.0, %v9855
      %v9857 = vpop.f32.mrb[0].mxu0
      %v9858 = vpop.f32.mrb[0].mxu0
      %v9859 = vadd.f32 0.0, %v9858
      %v9860 = vpop.f32.mrb[0].mxu0
      %9861 = vmatprep.mubr.bf16.mxu0 0
      %9862 = vmatmul.mubr.bf16.gmra.mrb[0].mxu0 %v9744
      %v9863 = vpop.f32.mrb[0].mxu0
      %v9864 = vadd.f32 0.0, %v9863
      %v9865 = vpop.f32.mrb[0].mxu0
      %v9866 = vpop.f32.mrb[0].mxu0
      %v9867 = vadd.f32 0.0, %v9866
      %v9868 = vpop.f32.mrb[0].mxu0
      %9869 = vmatprep.mubr.bf16.mxu0 0
      %9870 = vmatmul.mubr.bf16.gmra.mrb[0].mxu0 %v9747
      %v9871 = vpop.f32.mrb[0].mxu0
      %v9872 = vadd.f32 0.0, %v9871
      %v9873 = vpop.f32.mrb[0].mxu0
      %v9874 = vpop.f32.mrb[0].mxu0
      %v9875 = vadd.f32 0.0, %v9874
      %v9876 = vpop.f32.mrb[0].mxu0
      %9877 = vmatprep.mubr.bf16.mxu0 0
      %9878 = vmatmul.mubr.bf16.gmra.mrb[0].mxu0 %v9750
      %v9879 = vpop.f32.mrb[0].mxu0
      %v9880 = vadd.f32 0.0, %v9879
      %v9881 = vpop.f32.mrb[0].mxu0
      %v9882 = vpop.f32.mrb[0].mxu0
      %v9883 = vadd.f32 0.0, %v9882
      %v9884 = vpop.f32.mrb[0].mxu0
      %9885 = vmatprep.mubr.bf16.mxu0 0
      %9886 = vmatmul.mubr.bf16.gmra.mrb[0].mxu0 %v9753
      %v9887 = vpop.f32.mrb[0].mxu0
      %v9888 = vadd.f32 0.0, %v9887
      %v9889 = vpop.f32.mrb[0].mxu0
      %v9890 = vpop.f32.mrb[0].mxu0
      %v9891 = vadd.f32 0.0, %v9890
      %v9892 = vpop.f32.mrb[0].mxu0
      %9893 = vmatprep.mubr.bf16.mxu0 0
      %9894 = vmatmul.mubr.bf16.gmra.mrb[0].mxu0 %v9756
      %v9895 = vpop.f32.mrb[0].mxu0
      %v9896 = vadd.f32 0.0, %v9895
      %v9897 = vpop.f32.mrb[0].mxu0
      %v9898 = vpop.f32.mrb[0].mxu0
      %v9899 = vadd.f32 0.0, %v9898
      %v9900 = vpop.f32.mrb[0].mxu0
      %9901 = vmatprep.mubr.bf16.mxu0 0
      %9902 = vmatmul.mubr.bf16.gmra.mrb[0].mxu0 %v9759
      %v9903 = vpop.f32.mrb[0].mxu0
      %v9904 = vadd.f32 0.0, %v9903
      %v9905 = vpop.f32.mrb[0].mxu0
      %v9906 = vpop.f32.mrb[0].mxu0
      %v9907 = vadd.f32 0.0, %v9906
      %v9908 = vpop.f32.mrb[0].mxu0
      %9909 = vmatprep.mubr.bf16.mxu0 0
      %9910 = vmatmul.mubr.bf16.gmra.mrb[0].mxu0 %v9762
      %v9911 = vpop.f32.mrb[0].mxu0
      %v9912 = vadd.f32 0.0, %v9911
      %v9913 = vpop.f32.mrb[0].mxu0
      %v9914 = vpop.f32.mrb[0].mxu0
      %v9915 = vadd.f32 0.0, %v9914
      %v9916 = vpop.f32.mrb[0].mxu0
      %9917 = vmatprep.mubr.bf16.mxu0 0
      %9918 = vmatmul.mubr.bf16.gmra.mrb[0].mxu0 %v9765
      %v9919 = vpop.f32.mrb[0].mxu0
      %v9920 = vadd.f32 0.0, %v9919
      %v9921 = vpop.f32.mrb[0].mxu0
      %v9922 = vpop.f32.mrb[0].mxu0
      %v9923 = vadd.f32 0.0, %v9922
      %v9924 = vpop.f32.mrb[0].mxu0
      %9925 = vmatprep.mubr.bf16.mxu0 0
      %9926 = vmatmul.mubr.bf16.gmra.mrb[0].mxu0 %v9768
      %v9927 = vpop.f32.mrb[0].mxu0
      %v9928 = vadd.f32 0.0, %v9927
      %v9929 = vpop.f32.mrb[0].mxu0
      %v9930 = vpop.f32.mrb[0].mxu0
      %v9931 = vadd.f32 0.0, %v9930
      %v9932 = vpop.f32.mrb[0].mxu0
      %9933 = vdwg.mxu0
      %v9934 = vadd.f32 %v9576, %v9808
      %v9935 = vadd.f32 %v9577, %v9811
      %v9936 = vadd.f32 %v9578, %v9816
      %v9937 = vadd.f32 %v9579, %v9819
      %v9938 = vadd.f32 %v9580, %v9824
      %v9939 = vadd.f32 %v9581, %v9827
      %v9940 = vadd.f32 %v9582, %v9832
      %v9941 = vadd.f32 %v9583, %v9835
      %v9942 = vadd.f32 %v9584, %v9840
      %v9943 = vadd.f32 %v9585, %v9843
      %v9944 = vadd.f32 %v9586, %v9848
      %v9945 = vadd.f32 %v9587, %v9851
      %v9946 = vadd.f32 %v9588, %v9856
      %v9947 = vadd.f32 %v9589, %v9859
      %v9948 = vadd.f32 %v9590, %v9864
      %v9949 = vadd.f32 %v9591, %v9867
      %v9950 = vadd.f32 %v9592, %v9872
      %v9951 = vadd.f32 %v9593, %v9875
      %v9952 = vadd.f32 %v9594, %v9880
      %v9953 = vadd.f32 %v9595, %v9883
      %v9954 = vadd.f32 %v9596, %v9888
      %v9955 = vadd.f32 %v9597, %v9891
      %v9956 = vadd.f32 %v9598, %v9896
      %v9957 = vadd.f32 %v9599, %v9899
      %v9958 = vadd.f32 %v9600, %v9904
      %v9959 = vadd.f32 %v9601, %v9907
      %v9960 = vadd.f32 %v9602, %v9912
      %v9961 = vadd.f32 %v9603, %v9915
      %v9962 = vadd.f32 %v9604, %v9920
      %v9963 = vadd.f32 %v9605, %v9923
      %v9964 = vadd.f32 %v9606, %v9928
      %v9965 = vadd.f32 %v9607, %v9931
      %v9966 = vld [vmem:[%s4225] sm:$0xf]
      %v9967 = vld [vmem:[%s4225 + $0x4] sm:$0xf]
      %v9968 = vld [vmem:[%s4225 + $0x8] sm:$0x1]
      %v9969 = vld [vmem:[%s4225 + $0xc] sm:$0xf]
      %v9970 = vld [vmem:[%s4225 + $0x10] sm:$0xf]
      %v9971 = vld [vmem:[%s4225 + $0x14] sm:$0x1]
      %v9972 = vld [vmem:[%s4225 + $0x18] sm:$0xf]
      %v9973 = vld [vmem:[%s4225 + $0x1c] sm:$0xf]
      %v9974 = vld [vmem:[%s4225 + $0x20] sm:$0x1]
      %v9975 = vld [vmem:[%s4225 + $0x24] sm:$0xf]
      %v9976 = vld [vmem:[%s4225 + $0x28] sm:$0xf]
      %v9977 = vld [vmem:[%s4225 + $0x2c] sm:$0x1]
      %v9978 = vld [vmem:[%s4225 + $0x30] sm:$0xf]
      %v9979 = vld [vmem:[%s4225 + $0x34] sm:$0xf]
      %v9980 = vld [vmem:[%s4225 + $0x38] sm:$0x1]
      %v9981 = vld [vmem:[%s4225 + $0x3c] sm:$0xf]
      %v9982 = vld [vmem:[%s4225 + $0x40] sm:$0xf]
      %v9983 = vld [vmem:[%s4225 + $0x44] sm:$0x1]
      %v9984 = vld [vmem:[%s4225 + $0x48] sm:$0xf]
      %v9985 = vld [vmem:[%s4225 + $0x4c] sm:$0xf]
      %v9986 = vld [vmem:[%s4225 + $0x50] sm:$0x1]
      %v9987 = vld [vmem:[%s4225 + $0x54] sm:$0xf]
      %v9988 = vld [vmem:[%s4225 + $0x58] sm:$0xf]
      %v9989 = vld [vmem:[%s4225 + $0x5c] sm:$0x1]
      %v9990 = vld [vmem:[%s4225 + $0x60] sm:$0xf]
      %v9991 = vld [vmem:[%s4225 + $0x64] sm:$0xf]
      %v9992 = vld [vmem:[%s4225 + $0x68] sm:$0x1]
      %v9993 = vld [vmem:[%s4225 + $0x6c] sm:$0xf]
      %v9994 = vld [vmem:[%s4225 + $0x70] sm:$0xf]
      %v9995 = vld [vmem:[%s4225 + $0x74] sm:$0x1]
      %v9996 = vld [vmem:[%s4225 + $0x78] sm:$0xf]
      %v9997 = vld [vmem:[%s4225 + $0x7c] sm:$0xf]
      %v9998 = vld [vmem:[%s4225 + $0x80] sm:$0x1]
      %v9999 = vld [vmem:[%s4225 + $0x84] sm:$0xf]
      %v10000 = vld [vmem:[%s4225 + $0x88] sm:$0xf]
      %v10001 = vld [vmem:[%s4225 + $0x8c] sm:$0x1]
      %v10002 = vld [vmem:[%s4225 + $0x90] sm:$0xf]
      %v10003 = vld [vmem:[%s4225 + $0x94] sm:$0xf]
      %v10004 = vld [vmem:[%s4225 + $0x98] sm:$0x1]
      %v10005 = vld [vmem:[%s4225 + $0x9c] sm:$0xf]
      %v10006 = vld [vmem:[%s4225 + $0xa0] sm:$0xf]
      %v10007 = vld [vmem:[%s4225 + $0xa4] sm:$0x1]
      %v10008 = vld [vmem:[%s4225 + $0xa8] sm:$0xf]
      %v10009 = vld [vmem:[%s4225 + $0xac] sm:$0xf]
      %v10010 = vld [vmem:[%s4225 + $0xb0] sm:$0x1]
      %v10011 = vld [vmem:[%s4225 + $0xb4] sm:$0xf]
      %v10012 = vld [vmem:[%s4225 + $0xb8] sm:$0xf]
      %v10013 = vld [vmem:[%s4225 + $0xbc] sm:$0x1]
      %v10015 = vshrl.u32 %v9966, 16
      %v10017 = vrot.slane %v10015, 4
      %v10018 = vshll.u32 %v9966, 16
      %v10020 = vrot.slane %v10018, 5
      %v10021 = vor.u32 %v10017, %v10020
      %v10022 = vrot.slane %v10021, 4
      %v10024 = vshll.u32 %v9967, 16
      %v10026 = vrot.slane %v10024, 5
      %v10027 = vsel %vm1274, %v10022, %v10026
      %v10028 = vshrl.u32 %v9967, 16
      %v10030 = vrot.slane %v10028, 4
      %v10031 = vor.u32 %v10030, %v10026
      %v10032 = vrot.slane %v10031, 4
      %v10034 = vshll.u32 %v9968, 16
      %v10036 = vrot.slane %v10034, 5
      %v10037 = vsel %vm1274, %v10032, %v10036
      %v10039 = vshrl.u32 %v9969, 16
      %v10041 = vrot.slane %v10039, 4
      %v10042 = vshll.u32 %v9969, 16
      %v10044 = vrot.slane %v10042, 5
      %v10045 = vor.u32 %v10041, %v10044
      %v10046 = vrot.slane %v10045, 4
      %v10048 = vshll.u32 %v9970, 16
      %v10050 = vrot.slane %v10048, 5
      %v10051 = vsel %vm1274, %v10046, %v10050
      %v10052 = vshrl.u32 %v9970, 16
      %v10054 = vrot.slane %v10052, 4
      %v10055 = vor.u32 %v10054, %v10050
      %v10056 = vrot.slane %v10055, 4
      %v10058 = vshll.u32 %v9971, 16
      %v10060 = vrot.slane %v10058, 5
      %v10061 = vsel %vm1274, %v10056, %v10060
      %v10063 = vshrl.u32 %v9972, 16
      %v10065 = vrot.slane %v10063, 4
      %v10066 = vshll.u32 %v9972, 16
      %v10068 = vrot.slane %v10066, 5
      %v10069 = vor.u32 %v10065, %v10068
      %v10070 = vrot.slane %v10069, 4
      %v10072 = vshll.u32 %v9973, 16
      %v10074 = vrot.slane %v10072, 5
      %v10075 = vsel %vm1274, %v10070, %v10074
      %v10076 = vshrl.u32 %v9973, 16
      %v10078 = vrot.slane %v10076, 4
      %v10079 = vor.u32 %v10078, %v10074
      %v10080 = vrot.slane %v10079, 4
      %v10082 = vshll.u32 %v9974, 16
      %v10084 = vrot.slane %v10082, 5
      %v10085 = vsel %vm1274, %v10080, %v10084
      %v10087 = vshrl.u32 %v9975, 16
      %v10089 = vrot.slane %v10087, 4
      %v10090 = vshll.u32 %v9975, 16
      %v10092 = vrot.slane %v10090, 5
      %v10093 = vor.u32 %v10089, %v10092
      %v10094 = vrot.slane %v10093, 4
      %v10096 = vshll.u32 %v9976, 16
      %v10098 = vrot.slane %v10096, 5
      %v10099 = vsel %vm1274, %v10094, %v10098
      %v10100 = vshrl.u32 %v9976, 16
      %v10102 = vrot.slane %v10100, 4
      %v10103 = vor.u32 %v10102, %v10098
      %v10104 = vrot.slane %v10103, 4
      %v10106 = vshll.u32 %v9977, 16
      %v10108 = vrot.slane %v10106, 5
      %v10109 = vsel %vm1274, %v10104, %v10108
      %v10111 = vshrl.u32 %v9978, 16
      %v10113 = vrot.slane %v10111, 4
      %v10114 = vshll.u32 %v9978, 16
      %v10116 = vrot.slane %v10114, 5
      %v10117 = vor.u32 %v10113, %v10116
      %v10118 = vrot.slane %v10117, 4
      %v10120 = vshll.u32 %v9979, 16
      %v10122 = vrot.slane %v10120, 5
      %v10123 = vsel %vm1274, %v10118, %v10122
      %v10124 = vshrl.u32 %v9979, 16
      %v10126 = vrot.slane %v10124, 4
      %v10127 = vor.u32 %v10126, %v10122
      %v10128 = vrot.slane %v10127, 4
      %v10130 = vshll.u32 %v9980, 16
      %v10132 = vrot.slane %v10130, 5
      %v10133 = vsel %vm1274, %v10128, %v10132
      %v10135 = vshrl.u32 %v9981, 16
      %v10137 = vrot.slane %v10135, 4
      %v10138 = vshll.u32 %v9981, 16
      %v10140 = vrot.slane %v10138, 5
      %v10141 = vor.u32 %v10137, %v10140
      %v10142 = vrot.slane %v10141, 4
      %v10144 = vshll.u32 %v9982, 16
      %v10146 = vrot.slane %v10144, 5
      %v10147 = vsel %vm1274, %v10142, %v10146
      %v10148 = vshrl.u32 %v9982, 16
      %v10150 = vrot.slane %v10148, 4
      %v10151 = vor.u32 %v10150, %v10146
      %v10152 = vrot.slane %v10151, 4
      %v10154 = vshll.u32 %v9983, 16
      %v10156 = vrot.slane %v10154, 5
      %v10157 = vsel %vm1274, %v10152, %v10156
      %v10159 = vshrl.u32 %v9984, 16
      %v10161 = vrot.slane %v10159, 4
      %v10162 = vshll.u32 %v9984, 16
      %v10164 = vrot.slane %v10162, 5
      %v10165 = vor.u32 %v10161, %v10164
      %v10166 = vrot.slane %v10165, 4
      %v10168 = vshll.u32 %v9985, 16
      %v10170 = vrot.slane %v10168, 5
      %v10171 = vsel %vm1274, %v10166, %v10170
      %v10172 = vshrl.u32 %v9985, 16
      %v10174 = vrot.slane %v10172, 4
      %v10175 = vor.u32 %v10174, %v10170
      %v10176 = vrot.slane %v10175, 4
      %v10178 = vshll.u32 %v9986, 16
      %v10180 = vrot.slane %v10178, 5
      %v10181 = vsel %vm1274, %v10176, %v10180
      %v10183 = vshrl.u32 %v9987, 16
      %v10185 = vrot.slane %v10183, 4
      %v10186 = vshll.u32 %v9987, 16
      %v10188 = vrot.slane %v10186, 5
      %v10189 = vor.u32 %v10185, %v10188
      %v10190 = vrot.slane %v10189, 4
      %v10192 = vshll.u32 %v9988, 16
      %v10194 = vrot.slane %v10192, 5
      %v10195 = vsel %vm1274, %v10190, %v10194
      %v10196 = vshrl.u32 %v9988, 16
      %v10198 = vrot.slane %v10196, 4
      %v10199 = vor.u32 %v10198, %v10194
      %v10200 = vrot.slane %v10199, 4
      %v10202 = vshll.u32 %v9989, 16
      %v10204 = vrot.slane %v10202, 5
      %v10205 = vsel %vm1274, %v10200, %v10204
      %v10207 = vshrl.u32 %v9990, 16
      %v10209 = vrot.slane %v10207, 4
      %v10210 = vshll.u32 %v9990, 16
      %v10212 = vrot.slane %v10210, 5
      %v10213 = vor.u32 %v10209, %v10212
      %v10214 = vrot.slane %v10213, 4
      %v10216 = vshll.u32 %v9991, 16
      %v10218 = vrot.slane %v10216, 5
      %v10219 = vsel %vm1274, %v10214, %v10218
      %v10220 = vshrl.u32 %v9991, 16
      %v10222 = vrot.slane %v10220, 4
      %v10223 = vor.u32 %v10222, %v10218
      %v10224 = vrot.slane %v10223, 4
      %v10226 = vshll.u32 %v9992, 16
      %v10228 = vrot.slane %v10226, 5
      %v10229 = vsel %vm1274, %v10224, %v10228
      %v10231 = vshrl.u32 %v9993, 16
      %v10233 = vrot.slane %v10231, 4
      %v10234 = vshll.u32 %v9993, 16
      %v10236 = vrot.slane %v10234, 5
      %v10237 = vor.u32 %v10233, %v10236
      %v10238 = vrot.slane %v10237, 4
      %v10240 = vshll.u32 %v9994, 16
      %v10242 = vrot.slane %v10240, 5
      %v10243 = vsel %vm1274, %v10238, %v10242
      %v10244 = vshrl.u32 %v9994, 16
      %v10246 = vrot.slane %v10244, 4
      %v10247 = vor.u32 %v10246, %v10242
      %v10248 = vrot.slane %v10247, 4
      %v10250 = vshll.u32 %v9995, 16
      %v10252 = vrot.slane %v10250, 5
      %v10253 = vsel %vm1274, %v10248, %v10252
      %v10255 = vshrl.u32 %v9996, 16
      %v10257 = vrot.slane %v10255, 4
      %v10258 = vshll.u32 %v9996, 16
      %v10260 = vrot.slane %v10258, 5
      %v10261 = vor.u32 %v10257, %v10260
      %v10262 = vrot.slane %v10261, 4
      %v10264 = vshll.u32 %v9997, 16
      %v10266 = vrot.slane %v10264, 5
      %v10267 = vsel %vm1274, %v10262, %v10266
      %v10268 = vshrl.u32 %v9997, 16
      %v10270 = vrot.slane %v10268, 4
      %v10271 = vor.u32 %v10270, %v10266
      %v10272 = vrot.slane %v10271, 4
      %v10274 = vshll.u32 %v9998, 16
      %v10276 = vrot.slane %v10274, 5
      %v10277 = vsel %vm1274, %v10272, %v10276
      %v10279 = vshrl.u32 %v9999, 16
      %v10281 = vrot.slane %v10279, 4
      %v10282 = vshll.u32 %v9999, 16
      %v10284 = vrot.slane %v10282, 5
      %v10285 = vor.u32 %v10281, %v10284
      %v10286 = vrot.slane %v10285, 4
      %v10288 = vshll.u32 %v10000, 16
      %v10290 = vrot.slane %v10288, 5
      %v10291 = vsel %vm1274, %v10286, %v10290
      %v10292 = vshrl.u32 %v10000, 16
      %v10294 = vrot.slane %v10292, 4
      %v10295 = vor.u32 %v10294, %v10290
      %v10296 = vrot.slane %v10295, 4
      %v10298 = vshll.u32 %v10001, 16
      %v10300 = vrot.slane %v10298, 5
      %v10301 = vsel %vm1274, %v10296, %v10300
      %v10303 = vshrl.u32 %v10002, 16
      %v10305 = vrot.slane %v10303, 4
      %v10306 = vshll.u32 %v10002, 16
      %v10308 = vrot.slane %v10306, 5
      %v10309 = vor.u32 %v10305, %v10308
      %v10310 = vrot.slane %v10309, 4
      %v10312 = vshll.u32 %v10003, 16
      %v10314 = vrot.slane %v10312, 5
      %v10315 = vsel %vm1274, %v10310, %v10314
      %v10316 = vshrl.u32 %v10003, 16
      %v10318 = vrot.slane %v10316, 4
      %v10319 = vor.u32 %v10318, %v10314
      %v10320 = vrot.slane %v10319, 4
      %v10322 = vshll.u32 %v10004, 16
      %v10324 = vrot.slane %v10322, 5
      %v10325 = vsel %vm1274, %v10320, %v10324
      %v10327 = vshrl.u32 %v10005, 16
      %v10329 = vrot.slane %v10327, 4
      %v10330 = vshll.u32 %v10005, 16
      %v10332 = vrot.slane %v10330, 5
      %v10333 = vor.u32 %v10329, %v10332
      %v10334 = vrot.slane %v10333, 4
      %v10336 = vshll.u32 %v10006, 16
      %v10338 = vrot.slane %v10336, 5
      %v10339 = vsel %vm1274, %v10334, %v10338
      %v10340 = vshrl.u32 %v10006, 16
      %v10342 = vrot.slane %v10340, 4
      %v10343 = vor.u32 %v10342, %v10338
      %v10344 = vrot.slane %v10343, 4
      %v10346 = vshll.u32 %v10007, 16
      %v10348 = vrot.slane %v10346, 5
      %v10349 = vsel %vm1274, %v10344, %v10348
      %v10351 = vshrl.u32 %v10008, 16
      %v10353 = vrot.slane %v10351, 4
      %v10354 = vshll.u32 %v10008, 16
      %v10356 = vrot.slane %v10354, 5
      %v10357 = vor.u32 %v10353, %v10356
      %v10358 = vrot.slane %v10357, 4
      %v10360 = vshll.u32 %v10009, 16
      %v10362 = vrot.slane %v10360, 5
      %v10363 = vsel %vm1274, %v10358, %v10362
      %v10364 = vshrl.u32 %v10009, 16
      %v10366 = vrot.slane %v10364, 4
      %v10367 = vor.u32 %v10366, %v10362
      %v10368 = vrot.slane %v10367, 4
      %v10370 = vshll.u32 %v10010, 16
      %v10372 = vrot.slane %v10370, 5
      %v10373 = vsel %vm1274, %v10368, %v10372
      %v10375 = vshrl.u32 %v10011, 16
      %v10377 = vrot.slane %v10375, 4
      %v10378 = vshll.u32 %v10011, 16
      %v10380 = vrot.slane %v10378, 5
      %v10381 = vor.u32 %v10377, %v10380
      %v10382 = vrot.slane %v10381, 4
      %v10384 = vshll.u32 %v10012, 16
      %v10386 = vrot.slane %v10384, 5
      %v10387 = vsel %vm1274, %v10382, %v10386
      %v10388 = vshrl.u32 %v10012, 16
      %v10390 = vrot.slane %v10388, 4
      %v10391 = vor.u32 %v10390, %v10386
      %v10392 = vrot.slane %v10391, 4
      %v10394 = vshll.u32 %v10013, 16
      %v10396 = vrot.slane %v10394, 5
      %v10397 = vsel %vm1274, %v10392, %v10396
      %s10398 = scalar_lea.vmem %s2, 28
      %v10399 = vld [vmem:[%s10398] sm:$0xf]
      %v10400 = vunpack.c.l.b16 %v10027
      %v10401 = vunpack.c.l.b16 %v10037
      %v10402 = vunpack.c.l.b16 %v10051
      %v10403 = vunpack.c.l.b16 %v10061
      %v10404 = vunpack.c.l.b16 %v10075
      %v10405 = vunpack.c.l.b16 %v10085
      %v10406 = vunpack.c.l.b16 %v10099
      %v10407 = vunpack.c.l.b16 %v10109
      %v10408 = vunpack.c.l.b16 %v10123
      %v10409 = vunpack.c.l.b16 %v10133
      %v10410 = vunpack.c.l.b16 %v10147
      %v10411 = vunpack.c.l.b16 %v10157
      %v10412 = vunpack.c.l.b16 %v10171
      %v10413 = vunpack.c.l.b16 %v10181
      %v10414 = vunpack.c.l.b16 %v10195
      %v10415 = vunpack.c.l.b16 %v10205
      %v10416 = vunpack.c.l.b16 %v10219
      %v10417 = vunpack.c.l.b16 %v10229
      %v10418 = vunpack.c.l.b16 %v10243
      %v10419 = vunpack.c.l.b16 %v10253
      %v10420 = vunpack.c.l.b16 %v10267
      %v10421 = vunpack.c.l.b16 %v10277
      %v10422 = vunpack.c.l.b16 %v10291
      %v10423 = vunpack.c.l.b16 %v10301
      %v10424 = vunpack.c.l.b16 %v10315
      %v10425 = vunpack.c.l.b16 %v10325
      %v10426 = vunpack.c.l.b16 %v10339
      %v10427 = vunpack.c.l.b16 %v10349
      %v10428 = vunpack.c.l.b16 %v10363
      %v10429 = vunpack.c.l.b16 %v10373
      %v10430 = vunpack.c.l.b16 %v10387
      %v10431 = vunpack.c.l.b16 %v10397
      %v10432 = vpack.c.b16 %v10401, %v10400
      %v10433 = vpack.c.b16 %v10403, %v10402
      %v10434 = vpack.c.b16 %v10405, %v10404
      %v10435 = vpack.c.b16 %v10407, %v10406
      %v10436 = vpack.c.b16 %v10409, %v10408
      %v10437 = vpack.c.b16 %v10411, %v10410
      %v10438 = vpack.c.b16 %v10413, %v10412
      %v10439 = vpack.c.b16 %v10415, %v10414
      %v10440 = vpack.c.b16 %v10417, %v10416
      %v10441 = vpack.c.b16 %v10419, %v10418
      %v10442 = vpack.c.b16 %v10421, %v10420
      %v10443 = vpack.c.b16 %v10423, %v10422
      %v10444 = vpack.c.b16 %v10425, %v10424
      %v10445 = vpack.c.b16 %v10427, %v10426
      %v10446 = vpack.c.b16 %v10429, %v10428
      %v10447 = vpack.c.b16 %v10431, %v10430
      %v10449 = vsel %vm5780, %v10432, 0
      %v10452 = vsel %vm5780, %v10433, 0
      %v10455 = vsel %vm5780, %v10434, 0
      %v10458 = vsel %vm5780, %v10435, 0
      %v10461 = vsel %vm5780, %v10436, 0
      %v10464 = vsel %vm5780, %v10437, 0
      %v10467 = vsel %vm5780, %v10438, 0
      %v10470 = vsel %vm5780, %v10439, 0
      %v10473 = vsel %vm5780, %v10440, 0
      %v10476 = vsel %vm5780, %v10441, 0
      %v10479 = vsel %vm5780, %v10442, 0
      %v10482 = vsel %vm5780, %v10443, 0
      %v10485 = vsel %vm5780, %v10444, 0
      %v10488 = vsel %vm5780, %v10445, 0
      %v10491 = vsel %vm5780, %v10446, 0
      %v10494 = vsel %vm5780, %v10447, 0
      %v10497 = vsel %vm7143, %v10399, 0
      %10499 = vmatprep.subr.bf16.mxu0 0
      %10500 = vmatpush1.bf16.msra.mxu0 %v10497
      %10501 = vmatprep.subr.bf16.mxu0 0
      %10502 = vmatpush1.bf16.msra.mxu0 0
      %10503 = vmatprep.subr.bf16.mxu0 0
      %10504 = vmatpush1.bf16.msra.mxu0 0
      %10505 = vmatprep.subr.bf16.mxu0 0
      %10506 = vmatpush1.bf16.msra.mxu0 0
      %10507 = vmatprep.subr.bf16.mxu0 0
      %10508 = vmatpush1.bf16.msra.mxu0 0
      %10509 = vmatprep.subr.bf16.mxu0 0
      %10510 = vmatpush1.bf16.msra.mxu0 0
      %10511 = vmatprep.subr.bf16.mxu0 0
      %10512 = vmatpush1.bf16.msra.mxu0 0
      %10513 = vmatprep.subr.bf16.mxu0 0
      %10514 = vmatpush1.bf16.msra.mxu0 0
      %10515 = vmatprep.subr.bf16.mxu0 0
      %10516 = vmatpush1.bf16.msra.mxu0 0
      %10517 = vmatprep.subr.bf16.mxu0 0
      %10518 = vmatpush1.bf16.msra.mxu0 0
      %10519 = vmatprep.subr.bf16.mxu0 0
      %10520 = vmatpush1.bf16.msra.mxu0 0
      %10521 = vmatprep.subr.bf16.mxu0 0
      %10522 = vmatpush1.bf16.msra.mxu0 0
      %10523 = vmatprep.subr.bf16.mxu0 0
      %10524 = vmatpush1.bf16.msra.mxu0 0
      %10525 = vmatprep.subr.bf16.mxu0 0
      %10526 = vmatpush1.bf16.msra.mxu0 0
      %10527 = vmatprep.subr.bf16.mxu0 0
      %10528 = vmatpush1.bf16.msra.mxu0 0
      %10529 = vmatprep.subr.bf16.mxu0 0
      %10530 = vmatpush1.bf16.msra.mxu0 0
      %10531 = vmatprep.mubr.bf16.mxu0 0
      %10532 = vmatmul.mubr.bf16.gmra.mrb[0].mxu0 %v10449
      %v10533 = vpop.f32.mrb[0].mxu0
      %v10534 = vadd.f32 0.0, %v10533
      %v10535 = vpop.f32.mrb[0].mxu0
      %v10536 = vpop.f32.mrb[0].mxu0
      %v10537 = vadd.f32 0.0, %v10536
      %v10538 = vpop.f32.mrb[0].mxu0
      %10539 = vmatprep.mubr.bf16.mxu0 0
      %10540 = vmatmul.mubr.bf16.gmra.mrb[0].mxu0 %v10452
      %v10541 = vpop.f32.mrb[0].mxu0
      %v10542 = vadd.f32 0.0, %v10541
      %v10543 = vpop.f32.mrb[0].mxu0
      %v10544 = vpop.f32.mrb[0].mxu0
      %v10545 = vadd.f32 0.0, %v10544
      %v10546 = vpop.f32.mrb[0].mxu0
      %10547 = vmatprep.mubr.bf16.mxu0 0
      %10548 = vmatmul.mubr.bf16.gmra.mrb[0].mxu0 %v10455
      %v10549 = vpop.f32.mrb[0].mxu0
      %v10550 = vadd.f32 0.0, %v10549
      %v10551 = vpop.f32.mrb[0].mxu0
      %v10552 = vpop.f32.mrb[0].mxu0
      %v10553 = vadd.f32 0.0, %v10552
      %v10554 = vpop.f32.mrb[0].mxu0
      %10555 = vmatprep.mubr.bf16.mxu0 0
      %10556 = vmatmul.mubr.bf16.gmra.mrb[0].mxu0 %v10458
      %v10557 = vpop.f32.mrb[0].mxu0
      %v10558 = vadd.f32 0.0, %v10557
      %v10559 = vpop.f32.mrb[0].mxu0
      %v10560 = vpop.f32.mrb[0].mxu0
      %v10561 = vadd.f32 0.0, %v10560
      %v10562 = vpop.f32.mrb[0].mxu0
      %10563 = vmatprep.mubr.bf16.mxu0 0
      %10564 = vmatmul.mubr.bf16.gmra.mrb[0].mxu0 %v10461
      %v10565 = vpop.f32.mrb[0].mxu0
      %v10566 = vadd.f32 0.0, %v10565
      %v10567 = vpop.f32.mrb[0].mxu0
      %v10568 = vpop.f32.mrb[0].mxu0
      %v10569 = vadd.f32 0.0, %v10568
      %v10570 = vpop.f32.mrb[0].mxu0
      %10571 = vmatprep.mubr.bf16.mxu0 0
      %10572 = vmatmul.mubr.bf16.gmra.mrb[0].mxu0 %v10464
      %v10573 = vpop.f32.mrb[0].mxu0
      %v10574 = vadd.f32 0.0, %v10573
      %v10575 = vpop.f32.mrb[0].mxu0
      %v10576 = vpop.f32.mrb[0].mxu0
      %v10577 = vadd.f32 0.0, %v10576
      %v10578 = vpop.f32.mrb[0].mxu0
      %10579 = vmatprep.mubr.bf16.mxu0 0
      %10580 = vmatmul.mubr.bf16.gmra.mrb[0].mxu0 %v10467
      %v10581 = vpop.f32.mrb[0].mxu0
      %v10582 = vadd.f32 0.0, %v10581
      %v10583 = vpop.f32.mrb[0].mxu0
      %v10584 = vpop.f32.mrb[0].mxu0
      %v10585 = vadd.f32 0.0, %v10584
      %v10586 = vpop.f32.mrb[0].mxu0
      %10587 = vmatprep.mubr.bf16.mxu0 0
      %10588 = vmatmul.mubr.bf16.gmra.mrb[0].mxu0 %v10470
      %v10589 = vpop.f32.mrb[0].mxu0
      %v10590 = vadd.f32 0.0, %v10589
      %v10591 = vpop.f32.mrb[0].mxu0
      %v10592 = vpop.f32.mrb[0].mxu0
      %v10593 = vadd.f32 0.0, %v10592
      %v10594 = vpop.f32.mrb[0].mxu0
      %10595 = vmatprep.mubr.bf16.mxu0 0
      %10596 = vmatmul.mubr.bf16.gmra.mrb[0].mxu0 %v10473
      %v10597 = vpop.f32.mrb[0].mxu0
      %v10598 = vadd.f32 0.0, %v10597
      %v10599 = vpop.f32.mrb[0].mxu0
      %v10600 = vpop.f32.mrb[0].mxu0
      %v10601 = vadd.f32 0.0, %v10600
      %v10602 = vpop.f32.mrb[0].mxu0
      %10603 = vmatprep.mubr.bf16.mxu0 0
      %10604 = vmatmul.mubr.bf16.gmra.mrb[0].mxu0 %v10476
      %v10605 = vpop.f32.mrb[0].mxu0
      %v10606 = vadd.f32 0.0, %v10605
      %v10607 = vpop.f32.mrb[0].mxu0
      %v10608 = vpop.f32.mrb[0].mxu0
      %v10609 = vadd.f32 0.0, %v10608
      %v10610 = vpop.f32.mrb[0].mxu0
      %10611 = vmatprep.mubr.bf16.mxu0 0
      %10612 = vmatmul.mubr.bf16.gmra.mrb[0].mxu0 %v10479
      %v10613 = vpop.f32.mrb[0].mxu0
      %v10614 = vadd.f32 0.0, %v10613
      %v10615 = vpop.f32.mrb[0].mxu0
      %v10616 = vpop.f32.mrb[0].mxu0
      %v10617 = vadd.f32 0.0, %v10616
      %v10618 = vpop.f32.mrb[0].mxu0
      %10619 = vmatprep.mubr.bf16.mxu0 0
      %10620 = vmatmul.mubr.bf16.gmra.mrb[0].mxu0 %v10482
      %v10621 = vpop.f32.mrb[0].mxu0
      %v10622 = vadd.f32 0.0, %v10621
      %v10623 = vpop.f32.mrb[0].mxu0
      %v10624 = vpop.f32.mrb[0].mxu0
      %v10625 = vadd.f32 0.0, %v10624
      %v10626 = vpop.f32.mrb[0].mxu0
      %10627 = vmatprep.mubr.bf16.mxu0 0
      %10628 = vmatmul.mubr.bf16.gmra.mrb[0].mxu0 %v10485
      %v10629 = vpop.f32.mrb[0].mxu0
      %v10630 = vadd.f32 0.0, %v10629
      %v10631 = vpop.f32.mrb[0].mxu0
      %v10632 = vpop.f32.mrb[0].mxu0
      %v10633 = vadd.f32 0.0, %v10632
      %v10634 = vpop.f32.mrb[0].mxu0
      %10635 = vmatprep.mubr.bf16.mxu0 0
      %10636 = vmatmul.mubr.bf16.gmra.mrb[0].mxu0 %v10488
      %v10637 = vpop.f32.mrb[0].mxu0
      %v10638 = vadd.f32 0.0, %v10637
      %v10639 = vpop.f32.mrb[0].mxu0
      %v10640 = vpop.f32.mrb[0].mxu0
      %v10641 = vadd.f32 0.0, %v10640
      %v10642 = vpop.f32.mrb[0].mxu0
      %10643 = vmatprep.mubr.bf16.mxu0 0
      %10644 = vmatmul.mubr.bf16.gmra.mrb[0].mxu0 %v10491
      %v10645 = vpop.f32.mrb[0].mxu0
      %v10646 = vadd.f32 0.0, %v10645
      %v10647 = vpop.f32.mrb[0].mxu0
      %v10648 = vpop.f32.mrb[0].mxu0
      %v10649 = vadd.f32 0.0, %v10648
      %v10650 = vpop.f32.mrb[0].mxu0
      %10651 = vmatprep.mubr.bf16.mxu0 0
      %10652 = vmatmul.mubr.bf16.gmra.mrb[0].mxu0 %v10494
      %v10653 = vpop.f32.mrb[0].mxu0
      %v10654 = vadd.f32 0.0, %v10653
      %v10655 = vpop.f32.mrb[0].mxu0
      %v10656 = vpop.f32.mrb[0].mxu0
      %v10657 = vadd.f32 0.0, %v10656
      %v10658 = vpop.f32.mrb[0].mxu0
      %10659 = vdwg.mxu0
      %v10660 = vadd.f32 %v9934, %v10534
      %v10661 = vadd.f32 %v9935, %v10537
      %v10662 = vadd.f32 %v9936, %v10542
      %v10663 = vadd.f32 %v9937, %v10545
      %v10664 = vadd.f32 %v9938, %v10550
      %v10665 = vadd.f32 %v9939, %v10553
      %v10666 = vadd.f32 %v9940, %v10558
      %v10667 = vadd.f32 %v9941, %v10561
      %v10668 = vadd.f32 %v9942, %v10566
      %v10669 = vadd.f32 %v9943, %v10569
      %v10670 = vadd.f32 %v9944, %v10574
      %v10671 = vadd.f32 %v9945, %v10577
      %v10672 = vadd.f32 %v9946, %v10582
      %v10673 = vadd.f32 %v9947, %v10585
      %v10674 = vadd.f32 %v9948, %v10590
      %v10675 = vadd.f32 %v9949, %v10593
      %v10676 = vadd.f32 %v9950, %v10598
      %v10677 = vadd.f32 %v9951, %v10601
      %v10678 = vadd.f32 %v9952, %v10606
      %v10679 = vadd.f32 %v9953, %v10609
      %v10680 = vadd.f32 %v9954, %v10614
      %v10681 = vadd.f32 %v9955, %v10617
      %v10682 = vadd.f32 %v9956, %v10622
      %v10683 = vadd.f32 %v9957, %v10625
      %v10684 = vadd.f32 %v9958, %v10630
      %v10685 = vadd.f32 %v9959, %v10633
      %v10686 = vadd.f32 %v9960, %v10638
      %v10687 = vadd.f32 %v9961, %v10641
      %v10688 = vadd.f32 %v9962, %v10646
      %v10689 = vadd.f32 %v9963, %v10649
      %v10690 = vadd.f32 %v9964, %v10654
      %v10691 = vadd.f32 %v9965, %v10657
      %v10692 = vld [vmem:[%s4225] sm:$0xe]
      %v10693 = vld [vmem:[%s4225 + $0xc] sm:$0xe]
      %v10694 = vld [vmem:[%s4225 + $0x18] sm:$0xe]
      %v10695 = vld [vmem:[%s4225 + $0x24] sm:$0xe]
      %v10696 = vld [vmem:[%s4225 + $0x30] sm:$0xe]
      %v10697 = vld [vmem:[%s4225 + $0x3c] sm:$0xe]
      %v10698 = vld [vmem:[%s4225 + $0x48] sm:$0xe]
      %v10699 = vld [vmem:[%s4225 + $0x54] sm:$0xe]
      %v10700 = vld [vmem:[%s4225 + $0x60] sm:$0xe]
      %v10701 = vld [vmem:[%s4225 + $0x6c] sm:$0xe]
      %v10702 = vld [vmem:[%s4225 + $0x78] sm:$0xe]
      %v10703 = vld [vmem:[%s4225 + $0x84] sm:$0xe]
      %v10704 = vld [vmem:[%s4225 + $0x90] sm:$0xe]
      %v10705 = vld [vmem:[%s4225 + $0x9c] sm:$0xe]
      %v10706 = vld [vmem:[%s4225 + $0xa8] sm:$0xe]
      %v10707 = vld [vmem:[%s4225 + $0xb4] sm:$0xe]
      %v10756 = vrot.slane %v10692, 5
      %v10757 = vrot.slane %v10756, 4
      %v10758 = vrot.slane %v9967, 5
      %v10759 = vsel %vm2264, %v10757, %v10758
      %v10760 = vrot.slane %v10758, 4
      %v10761 = vrot.slane %v9968, 5
      %v10762 = vsel %vm2264, %v10760, %v10761
      %v10763 = vrot.slane %v10693, 5
      %v10764 = vrot.slane %v10763, 4
      %v10765 = vrot.slane %v9970, 5
      %v10766 = vsel %vm2264, %v10764, %v10765
      %v10767 = vrot.slane %v10765, 4
      %v10768 = vrot.slane %v9971, 5
      %v10769 = vsel %vm2264, %v10767, %v10768
      %v10770 = vrot.slane %v10694, 5
      %v10771 = vrot.slane %v10770, 4
      %v10772 = vrot.slane %v9973, 5
      %v10773 = vsel %vm2264, %v10771, %v10772
      %v10774 = vrot.slane %v10772, 4
      %v10775 = vrot.slane %v9974, 5
      %v10776 = vsel %vm2264, %v10774, %v10775
      %v10777 = vrot.slane %v10695, 5
      %v10778 = vrot.slane %v10777, 4
      %v10779 = vrot.slane %v9976, 5
      %v10780 = vsel %vm2264, %v10778, %v10779
      %v10781 = vrot.slane %v10779, 4
      %v10782 = vrot.slane %v9977, 5
      %v10783 = vsel %vm2264, %v10781, %v10782
      %v10784 = vrot.slane %v10696, 5
      %v10785 = vrot.slane %v10784, 4
      %v10786 = vrot.slane %v9979, 5
      %v10787 = vsel %vm2264, %v10785, %v10786
      %v10788 = vrot.slane %v10786, 4
      %v10789 = vrot.slane %v9980, 5
      %v10790 = vsel %vm2264, %v10788, %v10789
      %v10791 = vrot.slane %v10697, 5
      %v10792 = vrot.slane %v10791, 4
      %v10793 = vrot.slane %v9982, 5
      %v10794 = vsel %vm2264, %v10792, %v10793
      %v10795 = vrot.slane %v10793, 4
      %v10796 = vrot.slane %v9983, 5
      %v10797 = vsel %vm2264, %v10795, %v10796
      %v10798 = vrot.slane %v10698, 5
      %v10799 = vrot.slane %v10798, 4
      %v10800 = vrot.slane %v9985, 5
      %v10801 = vsel %vm2264, %v10799, %v10800
      %v10802 = vrot.slane %v10800, 4
      %v10803 = vrot.slane %v9986, 5
      %v10804 = vsel %vm2264, %v10802, %v10803
      %v10805 = vrot.slane %v10699, 5
      %v10806 = vrot.slane %v10805, 4
      %v10807 = vrot.slane %v9988, 5
      %v10808 = vsel %vm2264, %v10806, %v10807
      %v10809 = vrot.slane %v10807, 4
      %v10810 = vrot.slane %v9989, 5
      %v10811 = vsel %vm2264, %v10809, %v10810
      %v10812 = vrot.slane %v10700, 5
      %v10813 = vrot.slane %v10812, 4
      %v10814 = vrot.slane %v9991, 5
      %v10815 = vsel %vm2264, %v10813, %v10814
      %v10816 = vrot.slane %v10814, 4
      %v10817 = vrot.slane %v9992, 5
      %v10818 = vsel %vm2264, %v10816, %v10817
      %v10819 = vrot.slane %v10701, 5
      %v10820 = vrot.slane %v10819, 4
      %v10821 = vrot.slane %v9994, 5
      %v10822 = vsel %vm2264, %v10820, %v10821
      %v10823 = vrot.slane %v10821, 4
      %v10824 = vrot.slane %v9995, 5
      %v10825 = vsel %vm2264, %v10823, %v10824
      %v10826 = vrot.slane %v10702, 5
      %v10827 = vrot.slane %v10826, 4
      %v10828 = vrot.slane %v9997, 5
      %v10829 = vsel %vm2264, %v10827, %v10828
      %v10830 = vrot.slane %v10828, 4
      %v10831 = vrot.slane %v9998, 5
      %v10832 = vsel %vm2264, %v10830, %v10831
      %v10833 = vrot.slane %v10703, 5
      %v10834 = vrot.slane %v10833, 4
      %v10835 = vrot.slane %v10000, 5
      %v10836 = vsel %vm2264, %v10834, %v10835
      %v10837 = vrot.slane %v10835, 4
      %v10838 = vrot.slane %v10001, 5
      %v10839 = vsel %vm2264, %v10837, %v10838
      %v10840 = vrot.slane %v10704, 5
      %v10841 = vrot.slane %v10840, 4
      %v10842 = vrot.slane %v10003, 5
      %v10843 = vsel %vm2264, %v10841, %v10842
      %v10844 = vrot.slane %v10842, 4
      %v10845 = vrot.slane %v10004, 5
      %v10846 = vsel %vm2264, %v10844, %v10845
      %v10847 = vrot.slane %v10705, 5
      %v10848 = vrot.slane %v10847, 4
      %v10849 = vrot.slane %v10006, 5
      %v10850 = vsel %vm2264, %v10848, %v10849
      %v10851 = vrot.slane %v10849, 4
      %v10852 = vrot.slane %v10007, 5
      %v10853 = vsel %vm2264, %v10851, %v10852
      %v10854 = vrot.slane %v10706, 5
      %v10855 = vrot.slane %v10854, 4
      %v10856 = vrot.slane %v10009, 5
      %v10857 = vsel %vm2264, %v10855, %v10856
      %v10858 = vrot.slane %v10856, 4
      %v10859 = vrot.slane %v10010, 5
      %v10860 = vsel %vm2264, %v10858, %v10859
      %v10861 = vrot.slane %v10707, 5
      %v10862 = vrot.slane %v10861, 4
      %v10863 = vrot.slane %v10012, 5
      %v10864 = vsel %vm2264, %v10862, %v10863
      %v10865 = vrot.slane %v10863, 4
      %v10866 = vrot.slane %v10013, 5
      %v10867 = vsel %vm2264, %v10865, %v10866
      %s10868 = scalar_lea.vmem %s2, 32
      %v10869 = vld [vmem:[%s10868] sm:$0xf]
      %v10870 = vunpack.c.l.b16 %v10759
      %v10871 = vunpack.c.l.b16 %v10762
      %v10872 = vunpack.c.l.b16 %v10766
      %v10873 = vunpack.c.l.b16 %v10769
      %v10874 = vunpack.c.l.b16 %v10773
      %v10875 = vunpack.c.l.b16 %v10776
      %v10876 = vunpack.c.l.b16 %v10780
      %v10877 = vunpack.c.l.b16 %v10783
      %v10878 = vunpack.c.l.b16 %v10787
      %v10879 = vunpack.c.l.b16 %v10790
      %v10880 = vunpack.c.l.b16 %v10794
      %v10881 = vunpack.c.l.b16 %v10797
      %v10882 = vunpack.c.l.b16 %v10801
      %v10883 = vunpack.c.l.b16 %v10804
      %v10884 = vunpack.c.l.b16 %v10808
      %v10885 = vunpack.c.l.b16 %v10811
      %v10886 = vunpack.c.l.b16 %v10815
      %v10887 = vunpack.c.l.b16 %v10818
      %v10888 = vunpack.c.l.b16 %v10822
      %v10889 = vunpack.c.l.b16 %v10825
      %v10890 = vunpack.c.l.b16 %v10829
      %v10891 = vunpack.c.l.b16 %v10832
      %v10892 = vunpack.c.l.b16 %v10836
      %v10893 = vunpack.c.l.b16 %v10839
      %v10894 = vunpack.c.l.b16 %v10843
      %v10895 = vunpack.c.l.b16 %v10846
      %v10896 = vunpack.c.l.b16 %v10850
      %v10897 = vunpack.c.l.b16 %v10853
      %v10898 = vunpack.c.l.b16 %v10857
      %v10899 = vunpack.c.l.b16 %v10860
      %v10900 = vunpack.c.l.b16 %v10864
      %v10901 = vunpack.c.l.b16 %v10867
      %v10902 = vpack.c.b16 %v10871, %v10870
      %v10903 = vpack.c.b16 %v10873, %v10872
      %v10904 = vpack.c.b16 %v10875, %v10874
      %v10905 = vpack.c.b16 %v10877, %v10876
      %v10906 = vpack.c.b16 %v10879, %v10878
      %v10907 = vpack.c.b16 %v10881, %v10880
      %v10908 = vpack.c.b16 %v10883, %v10882
      %v10909 = vpack.c.b16 %v10885, %v10884
      %v10910 = vpack.c.b16 %v10887, %v10886
      %v10911 = vpack.c.b16 %v10889, %v10888
      %v10912 = vpack.c.b16 %v10891, %v10890
      %v10913 = vpack.c.b16 %v10893, %v10892
      %v10914 = vpack.c.b16 %v10895, %v10894
      %v10915 = vpack.c.b16 %v10897, %v10896
      %v10916 = vpack.c.b16 %v10899, %v10898
      %v10917 = vpack.c.b16 %v10901, %v10900
      %v10919 = vsel %vm5780, %v10902, 0
      %v10922 = vsel %vm5780, %v10903, 0
      %v10925 = vsel %vm5780, %v10904, 0
      %v10928 = vsel %vm5780, %v10905, 0
      %v10931 = vsel %vm5780, %v10906, 0
      %v10934 = vsel %vm5780, %v10907, 0
      %v10937 = vsel %vm5780, %v10908, 0
      %v10940 = vsel %vm5780, %v10909, 0
      %v10943 = vsel %vm5780, %v10910, 0
      %v10946 = vsel %vm5780, %v10911, 0
      %v10949 = vsel %vm5780, %v10912, 0
      %v10952 = vsel %vm5780, %v10913, 0
      %v10955 = vsel %vm5780, %v10914, 0
      %v10958 = vsel %vm5780, %v10915, 0
      %v10961 = vsel %vm5780, %v10916, 0
      %v10964 = vsel %vm5780, %v10917, 0
      %v10967 = vsel %vm7143, %v10869, 0
      %10969 = vmatprep.subr.bf16.mxu0 0
      %10970 = vmatpush1.bf16.msra.mxu0 %v10967
      %10971 = vmatprep.subr.bf16.mxu0 0
      %10972 = vmatpush1.bf16.msra.mxu0 0
      %10973 = vmatprep.subr.bf16.mxu0 0
      %10974 = vmatpush1.bf16.msra.mxu0 0
      %10975 = vmatprep.subr.bf16.mxu0 0
      %10976 = vmatpush1.bf16.msra.mxu0 0
      %10977 = vmatprep.subr.bf16.mxu0 0
      %10978 = vmatpush1.bf16.msra.mxu0 0
      %10979 = vmatprep.subr.bf16.mxu0 0
      %10980 = vmatpush1.bf16.msra.mxu0 0
      %10981 = vmatprep.subr.bf16.mxu0 0
      %10982 = vmatpush1.bf16.msra.mxu0 0
      %10983 = vmatprep.subr.bf16.mxu0 0
      %10984 = vmatpush1.bf16.msra.mxu0 0
      %10985 = vmatprep.subr.bf16.mxu0 0
      %10986 = vmatpush1.bf16.msra.mxu0 0
      %10987 = vmatprep.subr.bf16.mxu0 0
      %10988 = vmatpush1.bf16.msra.mxu0 0
      %10989 = vmatprep.subr.bf16.mxu0 0
      %10990 = vmatpush1.bf16.msra.mxu0 0
      %10991 = vmatprep.subr.bf16.mxu0 0
      %10992 = vmatpush1.bf16.msra.mxu0 0
      %10993 = vmatprep.subr.bf16.mxu0 0
      %10994 = vmatpush1.bf16.msra.mxu0 0
      %10995 = vmatprep.subr.bf16.mxu0 0
      %10996 = vmatpush1.bf16.msra.mxu0 0
      %10997 = vmatprep.subr.bf16.mxu0 0
      %10998 = vmatpush1.bf16.msra.mxu0 0
      %10999 = vmatprep.subr.bf16.mxu0 0
      %11000 = vmatpush1.bf16.msra.mxu0 0
      %11001 = vmatprep.mubr.bf16.mxu0 0
      %11002 = vmatmul.mubr.bf16.gmra.mrb[0].mxu0 %v10919
      %v11003 = vpop.f32.mrb[0].mxu0
      %v11004 = vadd.f32 0.0, %v11003
      %v11005 = vpop.f32.mrb[0].mxu0
      %v11006 = vpop.f32.mrb[0].mxu0
      %v11007 = vadd.f32 0.0, %v11006
      %v11008 = vpop.f32.mrb[0].mxu0
      %11009 = vmatprep.mubr.bf16.mxu0 0
      %11010 = vmatmul.mubr.bf16.gmra.mrb[0].mxu0 %v10922
      %v11011 = vpop.f32.mrb[0].mxu0
      %v11012 = vadd.f32 0.0, %v11011
      %v11013 = vpop.f32.mrb[0].mxu0
      %v11014 = vpop.f32.mrb[0].mxu0
      %v11015 = vadd.f32 0.0, %v11014
      %v11016 = vpop.f32.mrb[0].mxu0
      %11017 = vmatprep.mubr.bf16.mxu0 0
      %11018 = vmatmul.mubr.bf16.gmra.mrb[0].mxu0 %v10925
      %v11019 = vpop.f32.mrb[0].mxu0
      %v11020 = vadd.f32 0.0, %v11019
      %v11021 = vpop.f32.mrb[0].mxu0
      %v11022 = vpop.f32.mrb[0].mxu0
      %v11023 = vadd.f32 0.0, %v11022
      %v11024 = vpop.f32.mrb[0].mxu0
      %11025 = vmatprep.mubr.bf16.mxu0 0
      %11026 = vmatmul.mubr.bf16.gmra.mrb[0].mxu0 %v10928
      %v11027 = vpop.f32.mrb[0].mxu0
      %v11028 = vadd.f32 0.0, %v11027
      %v11029 = vpop.f32.mrb[0].mxu0
      %v11030 = vpop.f32.mrb[0].mxu0
      %v11031 = vadd.f32 0.0, %v11030
      %v11032 = vpop.f32.mrb[0].mxu0
      %11033 = vmatprep.mubr.bf16.mxu0 0
      %11034 = vmatmul.mubr.bf16.gmra.mrb[0].mxu0 %v10931
      %v11035 = vpop.f32.mrb[0].mxu0
      %v11036 = vadd.f32 0.0, %v11035
      %v11037 = vpop.f32.mrb[0].mxu0
      %v11038 = vpop.f32.mrb[0].mxu0
      %v11039 = vadd.f32 0.0, %v11038
      %v11040 = vpop.f32.mrb[0].mxu0
      %11041 = vmatprep.mubr.bf16.mxu0 0
      %11042 = vmatmul.mubr.bf16.gmra.mrb[0].mxu0 %v10934
      %v11043 = vpop.f32.mrb[0].mxu0
      %v11044 = vadd.f32 0.0, %v11043
      %v11045 = vpop.f32.mrb[0].mxu0
      %v11046 = vpop.f32.mrb[0].mxu0
      %v11047 = vadd.f32 0.0, %v11046
      %v11048 = vpop.f32.mrb[0].mxu0
      %11049 = vmatprep.mubr.bf16.mxu0 0
      %11050 = vmatmul.mubr.bf16.gmra.mrb[0].mxu0 %v10937
      %v11051 = vpop.f32.mrb[0].mxu0
      %v11052 = vadd.f32 0.0, %v11051
      %v11053 = vpop.f32.mrb[0].mxu0
      %v11054 = vpop.f32.mrb[0].mxu0
      %v11055 = vadd.f32 0.0, %v11054
      %v11056 = vpop.f32.mrb[0].mxu0
      %11057 = vmatprep.mubr.bf16.mxu0 0
      %11058 = vmatmul.mubr.bf16.gmra.mrb[0].mxu0 %v10940
      %v11059 = vpop.f32.mrb[0].mxu0
      %v11060 = vadd.f32 0.0, %v11059
      %v11061 = vpop.f32.mrb[0].mxu0
      %v11062 = vpop.f32.mrb[0].mxu0
      %v11063 = vadd.f32 0.0, %v11062
      %v11064 = vpop.f32.mrb[0].mxu0
      %11065 = vmatprep.mubr.bf16.mxu0 0
      %11066 = vmatmul.mubr.bf16.gmra.mrb[0].mxu0 %v10943
      %v11067 = vpop.f32.mrb[0].mxu0
      %v11068 = vadd.f32 0.0, %v11067
      %v11069 = vpop.f32.mrb[0].mxu0
      %v11070 = vpop.f32.mrb[0].mxu0
      %v11071 = vadd.f32 0.0, %v11070
      %v11072 = vpop.f32.mrb[0].mxu0
      %11073 = vmatprep.mubr.bf16.mxu0 0
      %11074 = vmatmul.mubr.bf16.gmra.mrb[0].mxu0 %v10946
      %v11075 = vpop.f32.mrb[0].mxu0
      %v11076 = vadd.f32 0.0, %v11075
      %v11077 = vpop.f32.mrb[0].mxu0
      %v11078 = vpop.f32.mrb[0].mxu0
      %v11079 = vadd.f32 0.0, %v11078
      %v11080 = vpop.f32.mrb[0].mxu0
      %11081 = vmatprep.mubr.bf16.mxu0 0
      %11082 = vmatmul.mubr.bf16.gmra.mrb[0].mxu0 %v10949
      %v11083 = vpop.f32.mrb[0].mxu0
      %v11084 = vadd.f32 0.0, %v11083
      %v11085 = vpop.f32.mrb[0].mxu0
      %v11086 = vpop.f32.mrb[0].mxu0
      %v11087 = vadd.f32 0.0, %v11086
      %v11088 = vpop.f32.mrb[0].mxu0
      %11089 = vmatprep.mubr.bf16.mxu0 0
      %11090 = vmatmul.mubr.bf16.gmra.mrb[0].mxu0 %v10952
      %v11091 = vpop.f32.mrb[0].mxu0
      %v11092 = vadd.f32 0.0, %v11091
      %v11093 = vpop.f32.mrb[0].mxu0
      %v11094 = vpop.f32.mrb[0].mxu0
      %v11095 = vadd.f32 0.0, %v11094
      %v11096 = vpop.f32.mrb[0].mxu0
      %11097 = vmatprep.mubr.bf16.mxu0 0
      %11098 = vmatmul.mubr.bf16.gmra.mrb[0].mxu0 %v10955
      %v11099 = vpop.f32.mrb[0].mxu0
      %v11100 = vadd.f32 0.0, %v11099
      %v11101 = vpop.f32.mrb[0].mxu0
      %v11102 = vpop.f32.mrb[0].mxu0
      %v11103 = vadd.f32 0.0, %v11102
      %v11104 = vpop.f32.mrb[0].mxu0
      %11105 = vmatprep.mubr.bf16.mxu0 0
      %11106 = vmatmul.mubr.bf16.gmra.mrb[0].mxu0 %v10958
      %v11107 = vpop.f32.mrb[0].mxu0
      %v11108 = vadd.f32 0.0, %v11107
      %v11109 = vpop.f32.mrb[0].mxu0
      %v11110 = vpop.f32.mrb[0].mxu0
      %v11111 = vadd.f32 0.0, %v11110
      %v11112 = vpop.f32.mrb[0].mxu0
      %11113 = vmatprep.mubr.bf16.mxu0 0
      %11114 = vmatmul.mubr.bf16.gmra.mrb[0].mxu0 %v10961
      %v11115 = vpop.f32.mrb[0].mxu0
      %v11116 = vadd.f32 0.0, %v11115
      %v11117 = vpop.f32.mrb[0].mxu0
      %v11118 = vpop.f32.mrb[0].mxu0
      %v11119 = vadd.f32 0.0, %v11118
      %v11120 = vpop.f32.mrb[0].mxu0
      %11121 = vmatprep.mubr.bf16.mxu0 0
      %11122 = vmatmul.mubr.bf16.gmra.mrb[0].mxu0 %v10964
      %v11123 = vpop.f32.mrb[0].mxu0
      %v11124 = vadd.f32 0.0, %v11123
      %v11125 = vpop.f32.mrb[0].mxu0
      %v11126 = vpop.f32.mrb[0].mxu0
      %v11127 = vadd.f32 0.0, %v11126
      %v11128 = vpop.f32.mrb[0].mxu0
      %11129 = vdwg.mxu0
      %v11130 = vadd.f32 %v10660, %v11004
      %v11131 = vadd.f32 %v10661, %v11007
      %v11132 = vadd.f32 %v10662, %v11012
      %v11133 = vadd.f32 %v10663, %v11015
      %v11134 = vadd.f32 %v10664, %v11020
      %v11135 = vadd.f32 %v10665, %v11023
      %v11136 = vadd.f32 %v10666, %v11028
      %v11137 = vadd.f32 %v10667, %v11031
      %v11138 = vadd.f32 %v10668, %v11036
      %v11139 = vadd.f32 %v10669, %v11039
      %v11140 = vadd.f32 %v10670, %v11044
      %v11141 = vadd.f32 %v10671, %v11047
      %v11142 = vadd.f32 %v10672, %v11052
      %v11143 = vadd.f32 %v10673, %v11055
      %v11144 = vadd.f32 %v10674, %v11060
      %v11145 = vadd.f32 %v10675, %v11063
      %v11146 = vadd.f32 %v10676, %v11068
      %v11147 = vadd.f32 %v10677, %v11071
      %v11148 = vadd.f32 %v10678, %v11076
      %v11149 = vadd.f32 %v10679, %v11079
      %v11150 = vadd.f32 %v10680, %v11084
      %v11151 = vadd.f32 %v10681, %v11087
      %v11152 = vadd.f32 %v10682, %v11092
      %v11153 = vadd.f32 %v10683, %v11095
      %v11154 = vadd.f32 %v10684, %v11100
      %v11155 = vadd.f32 %v10685, %v11103
      %v11156 = vadd.f32 %v10686, %v11108
      %v11157 = vadd.f32 %v10687, %v11111
      %v11158 = vadd.f32 %v10688, %v11116
      %v11159 = vadd.f32 %v10689, %v11119
      %v11160 = vadd.f32 %v10690, %v11124
      %v11161 = vadd.f32 %v10691, %v11127
      %v11162 = vld [vmem:[%s3] sm:$0x3]
      %v11195 = vunpack.c.l.b16 %v320
      %v11196 = vunpack.c.l.b16 %v321
      %v11197 = vunpack.c.l.b16 %v322
      %v11198 = vunpack.c.l.b16 %v323
      %v11199 = vunpack.c.l.b16 %v324
      %v11200 = vunpack.c.l.b16 %v325
      %v11201 = vunpack.c.l.b16 %v326
      %v11202 = vunpack.c.l.b16 %v327
      %v11203 = vunpack.c.l.b16 %v328
      %v11204 = vunpack.c.l.b16 %v329
      %v11205 = vunpack.c.l.b16 %v330
      %v11206 = vunpack.c.l.b16 %v331
      %v11207 = vunpack.c.l.b16 %v332
      %v11208 = vunpack.c.l.b16 %v333
      %v11209 = vunpack.c.l.b16 %v334
      %v11210 = vunpack.c.l.b16 %v335
      %v11211 = vunpack.c.l.b16 %v336
      %v11212 = vunpack.c.l.b16 %v337
      %v11213 = vunpack.c.l.b16 %v338
      %v11214 = vunpack.c.l.b16 %v339
      %v11215 = vunpack.c.l.b16 %v340
      %v11216 = vunpack.c.l.b16 %v341
      %v11217 = vunpack.c.l.b16 %v342
      %v11218 = vunpack.c.l.b16 %v343
      %v11219 = vunpack.c.l.b16 %v344
      %v11220 = vunpack.c.l.b16 %v345
      %v11221 = vunpack.c.l.b16 %v346
      %v11222 = vunpack.c.l.b16 %v347
      %v11223 = vunpack.c.l.b16 %v348
      %v11224 = vunpack.c.l.b16 %v349
      %v11225 = vunpack.c.l.b16 %v350
      %v11226 = vunpack.c.l.b16 %v351
      %v11227 = vpack.c.b16 %v11196, %v11195
      %v11228 = vpack.c.b16 %v11198, %v11197
      %v11229 = vpack.c.b16 %v11200, %v11199
      %v11230 = vpack.c.b16 %v11202, %v11201
      %v11231 = vpack.c.b16 %v11204, %v11203
      %v11232 = vpack.c.b16 %v11206, %v11205
      %v11233 = vpack.c.b16 %v11208, %v11207
      %v11234 = vpack.c.b16 %v11210, %v11209
      %v11235 = vpack.c.b16 %v11212, %v11211
      %v11236 = vpack.c.b16 %v11214, %v11213
      %v11237 = vpack.c.b16 %v11216, %v11215
      %v11238 = vpack.c.b16 %v11218, %v11217
      %v11239 = vpack.c.b16 %v11220, %v11219
      %v11240 = vpack.c.b16 %v11222, %v11221
      %v11241 = vpack.c.b16 %v11224, %v11223
      %v11242 = vpack.c.b16 %v11226, %v11225
      %v11244 = vsel %vm384, %v11227, 0
      %v11247 = vsel %vm384, %v11228, 0
      %v11250 = vsel %vm384, %v11229, 0
      %v11253 = vsel %vm384, %v11230, 0
      %v11256 = vsel %vm384, %v11231, 0
      %v11259 = vsel %vm384, %v11232, 0
      %v11262 = vsel %vm384, %v11233, 0
      %v11265 = vsel %vm384, %v11234, 0
      %v11268 = vsel %vm384, %v11235, 0
      %v11271 = vsel %vm384, %v11236, 0
      %v11274 = vsel %vm384, %v11237, 0
      %v11277 = vsel %vm384, %v11238, 0
      %v11280 = vsel %vm384, %v11239, 0
      %v11283 = vsel %vm384, %v11240, 0
      %v11286 = vsel %vm384, %v11241, 0
      %v11289 = vsel %vm384, %v11242, 0
      %v11292 = vsel %vm1757, %v11162, 0
      %11294 = vmatprep.subr.bf16.mxu0 0
      %11295 = vmatpush1.bf16.msra.mxu0 %v11292
      %11296 = vmatprep.subr.bf16.mxu0 0
      %11297 = vmatpush1.bf16.msra.mxu0 0
      %11298 = vmatprep.subr.bf16.mxu0 0
      %11299 = vmatpush1.bf16.msra.mxu0 0
      %11300 = vmatprep.subr.bf16.mxu0 0
      %11301 = vmatpush1.bf16.msra.mxu0 0
      %11302 = vmatprep.subr.bf16.mxu0 0
      %11303 = vmatpush1.bf16.msra.mxu0 0
      %11304 = vmatprep.subr.bf16.mxu0 0
      %11305 = vmatpush1.bf16.msra.mxu0 0
      %11306 = vmatprep.subr.bf16.mxu0 0
      %11307 = vmatpush1.bf16.msra.mxu0 0
      %11308 = vmatprep.subr.bf16.mxu0 0
      %11309 = vmatpush1.bf16.msra.mxu0 0
      %11310 = vmatprep.subr.bf16.mxu0 0
      %11311 = vmatpush1.bf16.msra.mxu0 0
      %11312 = vmatprep.subr.bf16.mxu0 0
      %11313 = vmatpush1.bf16.msra.mxu0 0
      %11314 = vmatprep.subr.bf16.mxu0 0
      %11315 = vmatpush1.bf16.msra.mxu0 0
      %11316 = vmatprep.subr.bf16.mxu0 0
      %11317 = vmatpush1.bf16.msra.mxu0 0
      %11318 = vmatprep.subr.bf16.mxu0 0
      %11319 = vmatpush1.bf16.msra.mxu0 0
      %11320 = vmatprep.subr.bf16.mxu0 0
      %11321 = vmatpush1.bf16.msra.mxu0 0
      %11322 = vmatprep.subr.bf16.mxu0 0
      %11323 = vmatpush1.bf16.msra.mxu0 0
      %11324 = vmatprep.subr.bf16.mxu0 0
      %11325 = vmatpush1.bf16.msra.mxu0 0
      %11326 = vmatprep.mubr.bf16.mxu0 0
      %11327 = vmatmul.mubr.bf16.gmra.mrb[0].mxu0 %v11244
      %v11328 = vpop.f32.mrb[0].mxu0
      %v11329 = vadd.f32 0.0, %v11328
      %v11330 = vpop.f32.mrb[0].mxu0
      %v11331 = vpop.f32.mrb[0].mxu0
      %v11332 = vadd.f32 0.0, %v11331
      %v11333 = vpop.f32.mrb[0].mxu0
      %11334 = vmatprep.mubr.bf16.mxu0 0
      %11335 = vmatmul.mubr.bf16.gmra.mrb[0].mxu0 %v11247
      %v11336 = vpop.f32.mrb[0].mxu0
      %v11337 = vadd.f32 0.0, %v11336
      %v11338 = vpop.f32.mrb[0].mxu0
      %v11339 = vpop.f32.mrb[0].mxu0
      %v11340 = vadd.f32 0.0, %v11339
      %v11341 = vpop.f32.mrb[0].mxu0
      %11342 = vmatprep.mubr.bf16.mxu0 0
      %11343 = vmatmul.mubr.bf16.gmra.mrb[0].mxu0 %v11250
      %v11344 = vpop.f32.mrb[0].mxu0
      %v11345 = vadd.f32 0.0, %v11344
      %v11346 = vpop.f32.mrb[0].mxu0
      %v11347 = vpop.f32.mrb[0].mxu0
      %v11348 = vadd.f32 0.0, %v11347
      %v11349 = vpop.f32.mrb[0].mxu0
      %11350 = vmatprep.mubr.bf16.mxu0 0
      %11351 = vmatmul.mubr.bf16.gmra.mrb[0].mxu0 %v11253
      %v11352 = vpop.f32.mrb[0].mxu0
      %v11353 = vadd.f32 0.0, %v11352
      %v11354 = vpop.f32.mrb[0].mxu0
      %v11355 = vpop.f32.mrb[0].mxu0
      %v11356 = vadd.f32 0.0, %v11355
      %v11357 = vpop.f32.mrb[0].mxu0
      %11358 = vmatprep.mubr.bf16.mxu0 0
      %11359 = vmatmul.mubr.bf16.gmra.mrb[0].mxu0 %v11256
      %v11360 = vpop.f32.mrb[0].mxu0
      %v11361 = vadd.f32 0.0, %v11360
      %v11362 = vpop.f32.mrb[0].mxu0
      %v11363 = vpop.f32.mrb[0].mxu0
      %v11364 = vadd.f32 0.0, %v11363
      %v11365 = vpop.f32.mrb[0].mxu0
      %11366 = vmatprep.mubr.bf16.mxu0 0
      %11367 = vmatmul.mubr.bf16.gmra.mrb[0].mxu0 %v11259
      %v11368 = vpop.f32.mrb[0].mxu0
      %v11369 = vadd.f32 0.0, %v11368
      %v11370 = vpop.f32.mrb[0].mxu0
      %v11371 = vpop.f32.mrb[0].mxu0
      %v11372 = vadd.f32 0.0, %v11371
      %v11373 = vpop.f32.mrb[0].mxu0
      %11374 = vmatprep.mubr.bf16.mxu0 0
      %11375 = vmatmul.mubr.bf16.gmra.mrb[0].mxu0 %v11262
      %v11376 = vpop.f32.mrb[0].mxu0
      %v11377 = vadd.f32 0.0, %v11376
      %v11378 = vpop.f32.mrb[0].mxu0
      %v11379 = vpop.f32.mrb[0].mxu0
      %v11380 = vadd.f32 0.0, %v11379
      %v11381 = vpop.f32.mrb[0].mxu0
      %11382 = vmatprep.mubr.bf16.mxu0 0
      %11383 = vmatmul.mubr.bf16.gmra.mrb[0].mxu0 %v11265
      %v11384 = vpop.f32.mrb[0].mxu0
      %v11385 = vadd.f32 0.0, %v11384
      %v11386 = vpop.f32.mrb[0].mxu0
      %v11387 = vpop.f32.mrb[0].mxu0
      %v11388 = vadd.f32 0.0, %v11387
      %v11389 = vpop.f32.mrb[0].mxu0
      %11390 = vmatprep.mubr.bf16.mxu0 0
      %11391 = vmatmul.mubr.bf16.gmra.mrb[0].mxu0 %v11268
      %v11392 = vpop.f32.mrb[0].mxu0
      %v11393 = vadd.f32 0.0, %v11392
      %v11394 = vpop.f32.mrb[0].mxu0
      %v11395 = vpop.f32.mrb[0].mxu0
      %v11396 = vadd.f32 0.0, %v11395
      %v11397 = vpop.f32.mrb[0].mxu0
      %11398 = vmatprep.mubr.bf16.mxu0 0
      %11399 = vmatmul.mubr.bf16.gmra.mrb[0].mxu0 %v11271
      %v11400 = vpop.f32.mrb[0].mxu0
      %v11401 = vadd.f32 0.0, %v11400
      %v11402 = vpop.f32.mrb[0].mxu0
      %v11403 = vpop.f32.mrb[0].mxu0
      %v11404 = vadd.f32 0.0, %v11403
      %v11405 = vpop.f32.mrb[0].mxu0
      %11406 = vmatprep.mubr.bf16.mxu0 0
      %11407 = vmatmul.mubr.bf16.gmra.mrb[0].mxu0 %v11274
      %v11408 = vpop.f32.mrb[0].mxu0
      %v11409 = vadd.f32 0.0, %v11408
      %v11410 = vpop.f32.mrb[0].mxu0
      %v11411 = vpop.f32.mrb[0].mxu0
      %v11412 = vadd.f32 0.0, %v11411
      %v11413 = vpop.f32.mrb[0].mxu0
      %11414 = vmatprep.mubr.bf16.mxu0 0
      %11415 = vmatmul.mubr.bf16.gmra.mrb[0].mxu0 %v11277
      %v11416 = vpop.f32.mrb[0].mxu0
      %v11417 = vadd.f32 0.0, %v11416
      %v11418 = vpop.f32.mrb[0].mxu0
      %v11419 = vpop.f32.mrb[0].mxu0
      %v11420 = vadd.f32 0.0, %v11419
      %v11421 = vpop.f32.mrb[0].mxu0
      %11422 = vmatprep.mubr.bf16.mxu0 0
      %11423 = vmatmul.mubr.bf16.gmra.mrb[0].mxu0 %v11280
      %v11424 = vpop.f32.mrb[0].mxu0
      %v11425 = vadd.f32 0.0, %v11424
      %v11426 = vpop.f32.mrb[0].mxu0
      %v11427 = vpop.f32.mrb[0].mxu0
      %v11428 = vadd.f32 0.0, %v11427
      %v11429 = vpop.f32.mrb[0].mxu0
      %11430 = vmatprep.mubr.bf16.mxu0 0
      %11431 = vmatmul.mubr.bf16.gmra.mrb[0].mxu0 %v11283
      %v11432 = vpop.f32.mrb[0].mxu0
      %v11433 = vadd.f32 0.0, %v11432
      %v11434 = vpop.f32.mrb[0].mxu0
      %v11435 = vpop.f32.mrb[0].mxu0
      %v11436 = vadd.f32 0.0, %v11435
      %v11437 = vpop.f32.mrb[0].mxu0
      %11438 = vmatprep.mubr.bf16.mxu0 0
      %11439 = vmatmul.mubr.bf16.gmra.mrb[0].mxu0 %v11286
      %v11440 = vpop.f32.mrb[0].mxu0
      %v11441 = vadd.f32 0.0, %v11440
      %v11442 = vpop.f32.mrb[0].mxu0
      %v11443 = vpop.f32.mrb[0].mxu0
      %v11444 = vadd.f32 0.0, %v11443
      %v11445 = vpop.f32.mrb[0].mxu0
      %11446 = vmatprep.mubr.bf16.mxu0 0
      %11447 = vmatmul.mubr.bf16.gmra.mrb[0].mxu0 %v11289
      %v11448 = vpop.f32.mrb[0].mxu0
      %v11449 = vadd.f32 0.0, %v11448
      %v11450 = vpop.f32.mrb[0].mxu0
      %v11451 = vpop.f32.mrb[0].mxu0
      %v11452 = vadd.f32 0.0, %v11451
      %v11453 = vpop.f32.mrb[0].mxu0
      %11454 = vdwg.mxu0
      %v11455 = vadd.f32 %v11130, %v11329
      %v11456 = vadd.f32 %v11131, %v11332
      %v11457 = vadd.f32 %v11132, %v11337
      %v11458 = vadd.f32 %v11133, %v11340
      %v11459 = vadd.f32 %v11134, %v11345
      %v11460 = vadd.f32 %v11135, %v11348
      %v11461 = vadd.f32 %v11136, %v11353
      %v11462 = vadd.f32 %v11137, %v11356
      %v11463 = vadd.f32 %v11138, %v11361
      %v11464 = vadd.f32 %v11139, %v11364
      %v11465 = vadd.f32 %v11140, %v11369
      %v11466 = vadd.f32 %v11141, %v11372
      %v11467 = vadd.f32 %v11142, %v11377
      %v11468 = vadd.f32 %v11143, %v11380
      %v11469 = vadd.f32 %v11144, %v11385
      %v11470 = vadd.f32 %v11145, %v11388
      %v11471 = vadd.f32 %v11146, %v11393
      %v11472 = vadd.f32 %v11147, %v11396
      %v11473 = vadd.f32 %v11148, %v11401
      %v11474 = vadd.f32 %v11149, %v11404
      %v11475 = vadd.f32 %v11150, %v11409
      %v11476 = vadd.f32 %v11151, %v11412
      %v11477 = vadd.f32 %v11152, %v11417
      %v11478 = vadd.f32 %v11153, %v11420
      %v11479 = vadd.f32 %v11154, %v11425
      %v11480 = vadd.f32 %v11155, %v11428
      %v11481 = vadd.f32 %v11156, %v11433
      %v11482 = vadd.f32 %v11157, %v11436
      %v11483 = vadd.f32 %v11158, %v11441
      %v11484 = vadd.f32 %v11159, %v11444
      %v11485 = vadd.f32 %v11160, %v11449
      %v11486 = vadd.f32 %v11161, %v11452
      %11487 = vst.msk [vmem:[%s197] sm:$0xff] %vm5780, %v11455
      %11488 = vst.msk [vmem:[%s197 + $0x8] sm:$0xff] %vm5780, %v11456
      %11489 = vst.msk [vmem:[%s197 + $0x10] sm:$0xff] %vm5780, %v11457
      %11490 = vst.msk [vmem:[%s197 + $0x18] sm:$0xff] %vm5780, %v11458
      %11491 = vst.msk [vmem:[%s197 + $0x20] sm:$0xff] %vm5780, %v11459
      %11492 = vst.msk [vmem:[%s197 + $0x28] sm:$0xff] %vm5780, %v11460
      %11493 = vst.msk [vmem:[%s197 + $0x30] sm:$0xff] %vm5780, %v11461
      %11494 = vst.msk [vmem:[%s197 + $0x38] sm:$0xff] %vm5780, %v11462
      %11495 = vst.msk [vmem:[%s197 + $0x40] sm:$0xff] %vm5780, %v11463
      %11496 = vst.msk [vmem:[%s197 + $0x48] sm:$0xff] %vm5780, %v11464
      %11497 = vst.msk [vmem:[%s197 + $0x50] sm:$0xff] %vm5780, %v11465
      %11498 = vst.msk [vmem:[%s197 + $0x58] sm:$0xff] %vm5780, %v11466
      %11499 = vst.msk [vmem:[%s197 + $0x60] sm:$0xff] %vm5780, %v11467
      %11500 = vst.msk [vmem:[%s197 + $0x68] sm:$0xff] %vm5780, %v11468
      %11501 = vst.msk [vmem:[%s197 + $0x70] sm:$0xff] %vm5780, %v11469
      %11502 = vst.msk [vmem:[%s197 + $0x78] sm:$0xff] %vm5780, %v11470
      %11503 = vst.msk [vmem:[%s197 + $0x80] sm:$0xff] %vm5780, %v11471
      %11504 = vst.msk [vmem:[%s197 + $0x88] sm:$0xff] %vm5780, %v11472
      %11505 = vst.msk [vmem:[%s197 + $0x90] sm:$0xff] %vm5780, %v11473
      %11506 = vst.msk [vmem:[%s197 + $0x98] sm:$0xff] %vm5780, %v11474
      %11507 = vst.msk [vmem:[%s197 + $0xa0] sm:$0xff] %vm5780, %v11475
      %11508 = vst.msk [vmem:[%s197 + $0xa8] sm:$0xff] %vm5780, %v11476
      %11509 = vst.msk [vmem:[%s197 + $0xb0] sm:$0xff] %vm5780, %v11477
      %11510 = vst.msk [vmem:[%s197 + $0xb8] sm:$0xff] %vm5780, %v11478
      %11511 = vst.msk [vmem:[%s197 + $0xc0] sm:$0xff] %vm5780, %v11479
      %11512 = vst.msk [vmem:[%s197 + $0xc8] sm:$0xff] %vm5780, %v11480
      %11513 = vst.msk [vmem:[%s197 + $0xd0] sm:$0xff] %vm5780, %v11481
      %11514 = vst.msk [vmem:[%s197 + $0xd8] sm:$0xff] %vm5780, %v11482
      %11515 = vst.msk [vmem:[%s197 + $0xe0] sm:$0xff] %vm5780, %v11483
      %11516 = vst.msk [vmem:[%s197 + $0xe8] sm:$0xff] %vm5780, %v11484
      %11517 = vst.msk [vmem:[%s197 + $0xf0] sm:$0xff] %vm5780, %v11485
      %11518 = vst.msk [vmem:[%s197 + $0xf8] sm:$0xff] %vm5780, %v11486
      %p11519 = scmp.lt.s32.totalorder %s15, 1
      %s11520 = scalar_select %p11519, %s15, 1
      %s11521 = smul.addr %s11520, 32
      %s11522 = smul.addr %s11521, 8
      %s11523 = scalar_lea.vmem %s4, %s11522
      // Predicated region
      $region37: #{tpu_custom_call.1} parent=35 // pred_check
        %p11524 = pneg %p122
      $region38: #{tpu_custom_call.1} parent=35 // pred_check_branch
        %11526 = sbr.rel (%p11524) target = $region40
      $region39: #{tpu_custom_call.1} parent=35 // pred_region
        _
      $region40: #{tpu_custom_call.1} parent=35 // pred_fallthru
        _
    $region36: #{tpu_custom_call.1} parent=5 // pred_fallthru
      _
    %p11527 = scmp.le.s32.totalorder 2, %s10
    // Predicated region
    $region41: #{tpu_custom_call.1} parent=5 // pred_check
      %p11528 = pneg %p11527
    $region42: #{tpu_custom_call.1} parent=5 // pred_check_branch
      %11530 = sbr.rel (%p11528) target = $region44
    $region43: #{tpu_custom_call.1} parent=5 // pred_region
      %s11531 = ssub.s32 %s10, 2
      // Predicated region
      $region45: #{tpu_custom_call.1} parent=43 // pred_check
        %p11532 = pneg %p128
      $region46: #{tpu_custom_call.1} parent=43 // pred_check_branch
        %11534 = sbr.rel (%p11532) target = $region48
      $region47: #{tpu_custom_call.1} parent=43 // pred_region
        %p11535 = scmp.lt.s32.totalorder %s16, 1
        %s11536 = scalar_select %p11535, %s16, 1
        %s11537 = smul.addr %s11536, 32
        %s11538 = smul.addr %s11537, 8
        %s11539 = scalar_lea.vmem %s4, %s11538
      $region48: #{tpu_custom_call.1} parent=43 // pred_fallthru
        _
    $region44: #{tpu_custom_call.1} parent=5 // pred_fallthru
      _
  $region6: #{tpu_custom_call.1} parent=0 // loop_footer
    %s14 = sadd.s32 1, %s10
  $region7: #{tpu_custom_call.1} parent=0 // loop_footer_branch
    %9 = sbr.rel target = $region3
  $region8: #{tpu_custom_call.1} parent=0 // loop_exit
    _

</llo_original>
